<compile_context>
chip_gen: v6e
topology: v6e:2x2x1
jax: 0.10.0
libtpu: 0.0.40
codegen_flags: <defaults>
</compile_context>

<pallas_src>
import math
import functools

import jax
import jax.numpy as jnp
from jax.experimental import pallas as pl
from jax.experimental.pallas import tpu as pltpu


# --------------------------------------------------------------------------
# Slab layouts (shared by the packer and the kernel; all offsets are static)
# --------------------------------------------------------------------------
def _wslab_offsets(L, D, F, kh, C, n_pad):
    off = {'qkv': 0}                        # per layer: [3D, D]  (Wq;Wk;Wv)
    off['wo'] = off['qkv'] + L * 3 * D      # per layer: [D, D]   (W_o^T)
    off['w1'] = off['wo'] + L * D           # per layer: [F, D]
    off['w2'] = off['w1'] + L * F           # per layer: [D, F]
    off['conv'] = off['w2'] + L * D         # kh blocks of [C, D]
    off['dec'] = off['conv'] + kh * C       # [n_pad, D]
    off['total'] = off['dec'] + n_pad
    return off


def _fslab_layout(L, max_len, ntoken):
    # f32 slab rows (width 128); 8 rows per layer:
    #   +0 qkv bias | +1 out-proj bias | +2 b1 | +3 b2 | +4 g1 | +5 be1 | +6 g2 | +7 be2
    # then one 8-row head block (conv bias, decoder bias), the PE table and the
    # embedding table (row count padded to a multiple of 8).
    max_len = ((max_len + 7) // 8) * 8
    head_row = 8 * L
    pe_row = head_row + 8
    emb_row = pe_row + max_len
    total = emb_row + ((ntoken + 7) // 8) * 8
    return head_row, pe_row, emb_row, total


# --------------------------------------------------------------------------
# Fused forward kernel
# --------------------------------------------------------------------------
def _layernorm(x, g, b):
    # x: [B, S, D] f32, g/b: [1, D] f32 (PyTorch eps=1e-5)
    mu = jnp.mean(x, axis=-1, keepdims=True)
    xc = x - mu
    var = jnp.mean(xc * xc, axis=-1, keepdims=True)
    return xc * jax.lax.rsqrt(var + 1e-5) * g + b


def fused_transformer_kernel(src_ref, mask_ref, wslab_ref, fslab_ref, out_ref,
                             *, nhead, num_layers, conv_kh, ntoken, max_len):
    f32, bf16 = jnp.float32, jnp.bfloat16
    B, S = src_ref.shape
    D = wslab_ref.shape[1]
    F = C = D                       # d_hid == d_model (asserted at init)
    H, L, kh = nhead, num_layers, conv_kh
    dh = D // H
    n_pad = out_ref.shape[1]
    sm_scale = 1.0 / math.sqrt(dh)

    woff = _wslab_offsets(L, D, F, kh, C, n_pad)
    head_row, pe_row, emb_row, f_rows = _fslab_layout(L, max_len, ntoken)
    n_emb = f_rows - emb_row        # ntoken rounded up to a multiple of 8

    def frow(r, w):                 # one f32 parameter row -> [1, w]
        return fslab_ref[r:r + 1, 0:w]

    # ---- embedding lookup in-kernel (one-hot MXU matmul) + scale + PE ----
    tok = src_ref[...]                                            # [B, S] int32
    onehot = (tok[:, :, None] ==
              jax.lax.broadcasted_iota(jnp.int32, (B, S, n_emb), 2)).astype(f32)
    emb_tbl = fslab_ref[emb_row:emb_row + n_emb, 0:D]             # [n_emb, D] f32
    x = jnp.einsum('bsn,nd->bsd', onehot, emb_tbl,
                   preferred_element_type=f32) * math.sqrt(D)
    x = x + fslab_ref[pe_row:pe_row + S, 0:D]                     # + PE (bcast B)
    # TODO(synk): dropout (pos-enc and encoder, p=0.5) is identity (eval mode).

    # hoisted: mask broadcast reused by every layer / head (no per-use bcast)
    mask_b = jnp.broadcast_to(mask_ref[...], (B, S, S))

    # ---- encoder layers (post-norm, relu FFN), statically unrolled ----
    for l in range(L):
        prow = 8 * l
        xb = x.astype(bf16)
        wqkv = wslab_ref[woff['qkv'] + l * 3 * D:
                         woff['qkv'] + (l + 1) * 3 * D, :]        # [3D, D] bf16
        qkv = jnp.einsum('bsd,ed->bse', xb, wqkv,
                         preferred_element_type=f32) + frow(prow + 0, 3 * D)

        attn = None
        for h in range(H):      # per-head; merge folded into out-proj accumulate
            q_h = qkv[:, :, h * dh:(h + 1) * dh]                  # [B,S,dh] f32
            k_h = qkv[:, :, D + h * dh:D + (h + 1) * dh]
            v_h = qkv[:, :, 2 * D + h * dh:2 * D + (h + 1) * dh]
            s = jnp.einsum('bqd,bkd->bqk', q_h, k_h,
                           preferred_element_type=f32) * sm_scale + mask_b
            s = s - jnp.max(s, axis=-1, keepdims=True)
            p = jnp.exp(s)
            p = p * pl.reciprocal(jnp.sum(p, axis=-1, keepdims=True), approx=True)
            ctx = jnp.einsum('bqk,bkd->bqd', p, v_h, preferred_element_type=f32)
            wo_h = wslab_ref[woff['wo'] + l * D + h * dh:
                             woff['wo'] + l * D + (h + 1) * dh, :]  # [dh, D] = W_o^T slice
            o_h = jnp.einsum('bqc,ce->bqe', ctx.astype(bf16), wo_h,
                             preferred_element_type=f32)
            attn = o_h if attn is None else attn + o_h
        attn = attn + frow(prow + 1, D)
        x = _layernorm(x + attn, frow(prow + 4, D), frow(prow + 5, D))

        w1 = wslab_ref[woff['w1'] + l * F: woff['w1'] + (l + 1) * F, :]
        hid = jnp.einsum('bsd,fd->bsf', x.astype(bf16), w1,
                         preferred_element_type=f32) + frow(prow + 2, F)
        hid = jnp.maximum(hid, 0.0)
        w2 = wslab_ref[woff['w2'] + l * D: woff['w2'] + (l + 1) * D, :]
        ff = jnp.einsum('bsf,df->bsd', hid.astype(bf16), w2,
                        preferred_element_type=f32) + frow(prow + 3, D)
        x = _layernorm(x + ff, frow(prow + 6, D), frow(prow + 7, D))

    # ---- Conv2d(1, C, (kh, D)) over batch axis as a sum of kh shifted matmuls,
    #      then relu + max-pool over H_out + decoder Linear (lane-dense) ----
    hout = B - kh + 1
    xb = x.astype(bf16)
    acc = None
    for i in range(kh):
        wci = wslab_ref[woff['conv'] + i * C: woff['conv'] + (i + 1) * C, :]  # [C, D]
        part = jnp.einsum('hsd,cd->hsc', xb[i:i + hout], wci,
                          preferred_element_type=f32)
        acc = part if acc is None else acc + part
    acc = jnp.maximum(acc + frow(head_row + 0, C), 0.0)           # + bias, relu
    pooled = jnp.max(acc, axis=0)                                 # [S, C]

    wdec = wslab_ref[woff['dec']: woff['dec'] + n_pad, :]         # [n_pad, D]
    out_ref[...] = (jnp.einsum('sc,nc->sn', pooled.astype(bf16), wdec,
                               preferred_element_type=f32)
                    + frow(head_row + 1, n_pad))


# --------------------------------------------------------------------------
# Wrapper
# --------------------------------------------------------------------------
def _vmem_spec():
    return pl.BlockSpec(memory_space=pltpu.MemorySpace.VMEM)


@functools.partial(jax.jit, static_argnames=('nhead_attn', 'num_layers',
                                             'conv_kh', 'ntoken', 'nlayers',
                                             'max_len'))
def transformer_model_forward(src, src_mask, params, *, nhead_attn, num_layers,
                              conv_kh, ntoken, nlayers, max_len):
    S, B = src.shape
    n_pad = max(128, ((nlayers + 127) // 128) * 128)
    # Only pre-kernel XLA work left: a 128-byte [S,B]->[B,S] int transpose; the
    # embedding gather / *sqrt(D) / PE add all happen inside the fused kernel.
    src_bs = jnp.transpose(src).astype(jnp.int32)

    out_pad = pl.pallas_call(
        functools.partial(fused_transformer_kernel, nhead=nhead_attn,
                          num_layers=num_layers, conv_kh=conv_kh,
                          ntoken=ntoken, max_len=max_len),
        out_shape=jax.ShapeDtypeStruct((S, n_pad), jnp.float32),
        in_specs=[_vmem_spec() for _ in range(4)],
        out_specs=_vmem_spec(),
        # TODO(synk): for real throughput, stack many (src, mask) problems and
        # add a grid over the request axis marked "parallel" (engages v7x's
        # second TensorCore and amortizes launch/DMA overhead).
    )(src_bs, src_mask.astype(jnp.float32), params['wslab'], params['fslab'])
    return out_pad[:, :nlayers]


# --------------------------------------------------------------------------
# Deterministic parameter construction (packed into the two slabs)
# --------------------------------------------------------------------------
def make_pe_table(max_len, d_model):
    position = jnp.arange(max_len, dtype=jnp.float32)[:, None]
    div_term = jnp.exp(jnp.arange(0, d_model, 2, dtype=jnp.float32)
                       * (-math.log(10000.0) / d_model))
    pe = jnp.zeros((max_len, d_model), jnp.float32)
    pe = pe.at[:, 0::2].set(jnp.sin(position * div_term))
    pe = pe.at[:, 1::2].set(jnp.cos(position * div_term))
    return pe


def init_params(key, ntoken, d_model, nhead, d_hid, nlayers, max_len=64):
    nhead_attn, num_layers, conv_kh = nhead
    D, F, C, L, kh = d_model, d_hid, d_hid, num_layers, conv_kh
    assert D % nhead_attn == 0
    # the decoder Linear(d_model, nlayers) consumes the pooled conv channels (=d_hid)
    assert d_hid == d_model, "d_hid must equal d_model for the decoder Linear"
    assert 3 * D <= 128 and F <= 128, "bias rows must fit a 128-lane f32 slab row"

    n_pad = max(128, ((nlayers + 127) // 128) * 128)
    woff = _wslab_offsets(L, D, F, kh, C, n_pad)
    head_row, pe_row, emb_row, f_rows = _fslab_layout(L, max_len, ntoken)
    fwidth = 128 * ((max(3 * D, n_pad) + 127) // 128)

    initrange = 0.1
    lb = 1.0 / math.sqrt(D)
    fb = 1.0 / math.sqrt(F)
    cb = 1.0 / math.sqrt(kh * D)

    keys = iter(jax.random.split(key, 8 * L + 4))

    def u(shape, bound):
        return jax.random.uniform(next(keys), shape, jnp.float32, -bound, bound)

    qkv_b, woT_b, w1_b, w2_b, b1_r, b2_r = [], [], [], [], [], []
    for _ in range(L):
        qkv_b.append(jnp.concatenate([u((D, D), lb), u((D, D), lb),
                                      u((D, D), lb)], axis=0))      # [3D, D]
        woT_b.append(u((D, D), lb).T)        # stored as W_o^T (rows = in-chan)
        w1_b.append(u((F, D), lb))
        w2_b.append(u((D, F), fb))
        b1_r.append(u((F,), lb))
        b2_r.append(u((D,), fb))
    wconv = u((C, kh, D), cb)                # Conv2d weight [C,1,kh,D] -> [C,kh,D]
    bconv = u((C,), cb)
    wdec = u((nlayers, D), initrange)        # decoder weight (bias zero, init_weights)
    emb = u((ntoken, D), initrange)          # embedding weight

    wslab = jnp.concatenate(
        qkv_b + woT_b + w1_b + w2_b
        + [wconv[:, i, :] for i in range(kh)]
        + [jnp.zeros((n_pad, D), jnp.float32).at[:nlayers].set(wdec)],
        axis=0).astype(jnp.bfloat16)
    assert wslab.shape[0] == woff['total']

    fslab = jnp.zeros((f_rows, fwidth), jnp.float32)
    for l in range(L):
        base = 8 * l
        # base+0 (qkv bias) and base+1 (out-proj bias) stay zero (PyTorch MHA init)
        fslab = fslab.at[base + 2, :F].set(b1_r[l])
        fslab = fslab.at[base + 3, :D].set(b2_r[l])
        fslab = fslab.at[base + 4, :D].set(1.0)     # ln1 gamma
        fslab = fslab.at[base + 6, :D].set(1.0)     # ln2 gamma
        # base+5 / base+7: ln betas stay zero
    fslab = fslab.at[head_row + 0, :C].set(bconv)
    # head_row+1: decoder bias stays zero (init_weights)
    fslab = fslab.at[pe_row:emb_row, :D].set(make_pe_table(emb_row - pe_row, D))
    fslab = fslab.at[emb_row:emb_row + ntoken, :D].set(emb)

    return {'wslab': wslab, 'fslab': fslab}


# --------------------------------------------------------------------------
if __name__ == "__main__":
    # Module hyper-parameters (nhead is a tuple in this module:
    # nhead[0]=attention heads, nhead[1]=num encoder layers, nhead[2]=conv kernel height)
    ntoken = 50
    d_model = 32
    nhead = (4, 2, 2)
    d_hid = 32          # must equal d_model for the decoder Linear to be shape-consistent
    nlayers = 5         # output dim of the decoder Linear
    seq_len = 8
    batch = 4
    max_len = 64        # PE table length packed into the f32 slab (>= seq_len)

    key = jax.random.PRNGKey(0)
    kp, ks = jax.random.split(key)
    params = init_params(kp, ntoken, d_model, nhead, d_hid, nlayers, max_len=max_len)

    src = jax.random.randint(ks, (seq_len, batch), 0, ntoken, dtype=jnp.int32)
    # additive causal mask (finite -1e9 instead of -inf for TPU safety)
    idx = jnp.arange(seq_len)
    src_mask = jnp.where(idx[None, :] <= idx[:, None], 0.0, -1e9).astype(jnp.float32)

    out = transformer_model_forward(src, src_mask, params,
                                    nhead_attn=nhead[0],
                                    num_layers=nhead[1],
                                    conv_kh=nhead[2],
                                    ntoken=ntoken,
                                    nlayers=nlayers,
                                    max_len=max_len)
    out = jax.block_until_ready(out)
    assert out.shape == (seq_len, nlayers)
    print("KERNEL_OK")
</pallas_src>

<mosaic_0001>
module attributes {stable_mosaic.version = 11 : i64} {
  func.func @fused_transformer_kernel(%arg0: memref<4x8xi32, #tpu.memory_space<vmem>>, %arg1: memref<8x8xf32, #tpu.memory_space<vmem>>, %arg2: memref<576x32xbf16, #tpu.memory_space<vmem>>, %arg3: memref<144x128xf32, #tpu.memory_space<vmem>>, %arg4: memref<8x128xf32, #tpu.memory_space<vmem>>) attributes {dimension_semantics = [], scalar_prefetch = 0 : i64, scratch_operands = 0 : i64, tpu.core_type = #tpu.core_type<tc>} {
    %c0 = arith.constant 0 : index
    %c0_0 = arith.constant 0 : index
    %0 = vector.load %arg0[%c0, %c0_0] : memref<4x8xi32, #tpu.memory_space<vmem>>, vector<4x8xi32>
    %1 = vector.shape_cast %0 : vector<4x8xi32> to vector<4x8x1xi32>
    %2 = tpu.iota {dimensions = array<i32: 2>} : vector<4x8x56xi32>
    %3 = vector.broadcast %1 : vector<4x8x1xi32> to vector<4x8x56xi32>
    %4 = arith.cmpi eq, %3, %2 : vector<4x8x56xi32>
    %5 = arith.extui %4 : vector<4x8x56xi1> to vector<4x8x56xi32>
    %6 = arith.sitofp %5 : vector<4x8x56xi32> to vector<4x8x56xf32>
    %c88 = arith.constant 88 : index
    %c0_1 = arith.constant 0 : index
    %7 = vector.load %arg3[%c88, %c0_1] : memref<144x128xf32, #tpu.memory_space<vmem>>, vector<56x32xf32>
    "tpu.trace_start"() <{level = 10 : i32, message = "bsn,nd->bsd"}> : () -> ()
    %cst = arith.constant dense<0.000000e+00> : vector<4x8x32xf32>
    %8 = tpu.matmul %6, %7, %cst {dimension_numbers = #tpu.dot_dimension_numbers<[2], [0], [0, 1], [1], [0, 0, 0, 1, 1, 1], [], []>} : vector<4x8x56xf32>, vector<56x32xf32>, vector<4x8x32xf32> -> vector<4x8x32xf32>
    "tpu.trace_stop"() : () -> ()
    %cst_2 = arith.constant 5.65685415 : f32
    %9 = vector.broadcast %cst_2 : f32 to vector<4x8x32xf32>
    %10 = arith.mulf %8, %9 : vector<4x8x32xf32>
    %c24 = arith.constant 24 : index
    %c0_3 = arith.constant 0 : index
    %11 = vector.load %arg3[%c24, %c0_3] : memref<144x128xf32, #tpu.memory_space<vmem>>, vector<8x32xf32>
    %12 = vector.shape_cast %11 : vector<8x32xf32> to vector<1x8x32xf32>
    %13 = vector.broadcast %12 : vector<1x8x32xf32> to vector<4x8x32xf32>
    %14 = arith.addf %10, %13 : vector<4x8x32xf32>
    %c0_4 = arith.constant 0 : index
    %c0_5 = arith.constant 0 : index
    %15 = vector.load %arg1[%c0_4, %c0_5] : memref<8x8xf32, #tpu.memory_space<vmem>>, vector<8x8xf32>
    %16 = vector.shape_cast %15 : vector<8x8xf32> to vector<1x8x8xf32>
    %17 = vector.broadcast %16 : vector<1x8x8xf32> to vector<4x8x8xf32>
    %18 = arith.truncf %14 : vector<4x8x32xf32> to vector<4x8x32xbf16>
    %c0_6 = arith.constant 0 : index
    %c0_7 = arith.constant 0 : index
    %19 = vector.load %arg2[%c0_6, %c0_7] : memref<576x32xbf16, #tpu.memory_space<vmem>>, vector<96x32xbf16>
    "tpu.trace_start"() <{level = 10 : i32, message = "bsd,ed->bse"}> : () -> ()
    %cst_8 = arith.constant dense<0.000000e+00> : vector<4x8x96xf32>
    %20 = tpu.matmul %18, %19, %cst_8 {dimension_numbers = #tpu.dot_dimension_numbers<[2], [1], [0, 1], [0], [0, 0, 0, 1, 1, 0], [], []>} : vector<4x8x32xbf16>, vector<96x32xbf16>, vector<4x8x96xf32> -> vector<4x8x96xf32>
    "tpu.trace_stop"() : () -> ()
    %c0_9 = arith.constant 0 : index
    %c0_10 = arith.constant 0 : index
    %21 = vector.load %arg3[%c0_9, %c0_10] : memref<144x128xf32, #tpu.memory_space<vmem>>, vector<1x96xf32>
    %22 = vector.shape_cast %21 : vector<1x96xf32> to vector<1x1x96xf32>
    %23 = vector.broadcast %22 : vector<1x1x96xf32> to vector<4x8x96xf32>
    %24 = arith.addf %20, %23 : vector<4x8x96xf32>
    %25 = vector.extract_strided_slice %24 {offsets = [0, 0, 0], sizes = [4, 8, 8], strides = [1, 1, 1]} : vector<4x8x96xf32> to vector<4x8x8xf32>
    %26 = vector.extract_strided_slice %24 {offsets = [0, 0, 32], sizes = [4, 8, 8], strides = [1, 1, 1]} : vector<4x8x96xf32> to vector<4x8x8xf32>
    %27 = vector.extract_strided_slice %24 {offsets = [0, 0, 64], sizes = [4, 8, 8], strides = [1, 1, 1]} : vector<4x8x96xf32> to vector<4x8x8xf32>
    "tpu.trace_start"() <{level = 10 : i32, message = "bqd,bkd->bqk"}> : () -> ()
    %cst_11 = arith.constant dense<0.000000e+00> : vector<4x8x8xf32>
    %28 = tpu.matmul %25, %26, %cst_11 {dimension_numbers = #tpu.dot_dimension_numbers<[2], [2], [1], [1], [0, 0, 0, 1, 1, 1], [0], [0]>} : vector<4x8x8xf32>, vector<4x8x8xf32>, vector<4x8x8xf32> -> vector<4x8x8xf32>
    "tpu.trace_stop"() : () -> ()
    %cst_12 = arith.constant 0.353553385 : f32
    %29 = vector.broadcast %cst_12 : f32 to vector<4x8x8xf32>
    %30 = arith.mulf %28, %29 : vector<4x8x8xf32>
    %31 = arith.addf %30, %17 : vector<4x8x8xf32>
    %cst_13 = arith.constant dense<0xFF800000> : vector<4x8xf32>
    %32 = vector.multi_reduction <maximumf>, %31, %cst_13 [2] : vector<4x8x8xf32> to vector<4x8xf32>
    %33 = vector.shape_cast %32 : vector<4x8xf32> to vector<4x8x1xf32>
    %34 = vector.broadcast %33 : vector<4x8x1xf32> to vector<4x8x8xf32>
    %35 = arith.subf %31, %34 : vector<4x8x8xf32>
    %36 = math.exp %35 : vector<4x8x8xf32>
    %cst_14 = arith.constant dense<0.000000e+00> : vector<4x8xf32>
    %37 = vector.multi_reduction <add>, %36, %cst_14 [2] : vector<4x8x8xf32> to vector<4x8xf32>
    %38 = vector.shape_cast %37 : vector<4x8xf32> to vector<4x8x1xf32>
    %39 = tpu.reciprocal %38 {approx = true} : vector<4x8x1xf32> -> vector<4x8x1xf32>
    %40 = vector.broadcast %39 : vector<4x8x1xf32> to vector<4x8x8xf32>
    %41 = arith.mulf %36, %40 : vector<4x8x8xf32>
    "tpu.trace_start"() <{level = 10 : i32, message = "bqk,bkd->bqd"}> : () -> ()
    %cst_15 = arith.constant dense<0.000000e+00> : vector<4x8x8xf32>
    %42 = tpu.matmul %41, %27, %cst_15 {dimension_numbers = #tpu.dot_dimension_numbers<[2], [1], [1], [2], [0, 0, 0, 1, 1, 2], [0], [0]>} : vector<4x8x8xf32>, vector<4x8x8xf32>, vector<4x8x8xf32> -> vector<4x8x8xf32>
    "tpu.trace_stop"() : () -> ()
    %c192 = arith.constant 192 : index
    %c0_16 = arith.constant 0 : index
    %43 = vector.load %arg2[%c192, %c0_16] : memref<576x32xbf16, #tpu.memory_space<vmem>>, vector<8x32xbf16>
    %44 = arith.truncf %42 : vector<4x8x8xf32> to vector<4x8x8xbf16>
    "tpu.trace_start"() <{level = 10 : i32, message = "bqc,ce->bqe"}> : () -> ()
    %cst_17 = arith.constant dense<0.000000e+00> : vector<4x8x32xf32>
    %45 = tpu.matmul %44, %43, %cst_17 {dimension_numbers = #tpu.dot_dimension_numbers<[2], [0], [0, 1], [1], [0, 0, 0, 1, 1, 1], [], []>} : vector<4x8x8xbf16>, vector<8x32xbf16>, vector<4x8x32xf32> -> vector<4x8x32xf32>
    "tpu.trace_stop"() : () -> ()
    %46 = vector.extract_strided_slice %24 {offsets = [0, 0, 8], sizes = [4, 8, 8], strides = [1, 1, 1]} : vector<4x8x96xf32> to vector<4x8x8xf32>
    %47 = vector.extract_strided_slice %24 {offsets = [0, 0, 40], sizes = [4, 8, 8], strides = [1, 1, 1]} : vector<4x8x96xf32> to vector<4x8x8xf32>
    %48 = vector.extract_strided_slice %24 {offsets = [0, 0, 72], sizes = [4, 8, 8], strides = [1, 1, 1]} : vector<4x8x96xf32> to vector<4x8x8xf32>
    "tpu.trace_start"() <{level = 10 : i32, message = "bqd,bkd->bqk"}> : () -> ()
    %cst_18 = arith.constant dense<0.000000e+00> : vector<4x8x8xf32>
    %49 = tpu.matmul %46, %47, %cst_18 {dimension_numbers = #tpu.dot_dimension_numbers<[2], [2], [1], [1], [0, 0, 0, 1, 1, 1], [0], [0]>} : vector<4x8x8xf32>, vector<4x8x8xf32>, vector<4x8x8xf32> -> vector<4x8x8xf32>
    "tpu.trace_stop"() : () -> ()
    %cst_19 = arith.constant 0.353553385 : f32
    %50 = vector.broadcast %cst_19 : f32 to vector<4x8x8xf32>
    %51 = arith.mulf %49, %50 : vector<4x8x8xf32>
    %52 = arith.addf %51, %17 : vector<4x8x8xf32>
    %cst_20 = arith.constant dense<0xFF800000> : vector<4x8xf32>
    %53 = vector.multi_reduction <maximumf>, %52, %cst_20 [2] : vector<4x8x8xf32> to vector<4x8xf32>
    %54 = vector.shape_cast %53 : vector<4x8xf32> to vector<4x8x1xf32>
    %55 = vector.broadcast %54 : vector<4x8x1xf32> to vector<4x8x8xf32>
    %56 = arith.subf %52, %55 : vector<4x8x8xf32>
    %57 = math.exp %56 : vector<4x8x8xf32>
    %cst_21 = arith.constant dense<0.000000e+00> : vector<4x8xf32>
    %58 = vector.multi_reduction <add>, %57, %cst_21 [2] : vector<4x8x8xf32> to vector<4x8xf32>
    %59 = vector.shape_cast %58 : vector<4x8xf32> to vector<4x8x1xf32>
    %60 = tpu.reciprocal %59 {approx = true} : vector<4x8x1xf32> -> vector<4x8x1xf32>
    %61 = vector.broadcast %60 : vector<4x8x1xf32> to vector<4x8x8xf32>
    %62 = arith.mulf %57, %61 : vector<4x8x8xf32>
    "tpu.trace_start"() <{level = 10 : i32, message = "bqk,bkd->bqd"}> : () -> ()
    %cst_22 = arith.constant dense<0.000000e+00> : vector<4x8x8xf32>
    %63 = tpu.matmul %62, %48, %cst_22 {dimension_numbers = #tpu.dot_dimension_numbers<[2], [1], [1], [2], [0, 0, 0, 1, 1, 2], [0], [0]>} : vector<4x8x8xf32>, vector<4x8x8xf32>, vector<4x8x8xf32> -> vector<4x8x8xf32>
    "tpu.trace_stop"() : () -> ()
    %c200 = arith.constant 200 : index
    %c0_23 = arith.constant 0 : index
    %64 = vector.load %arg2[%c200, %c0_23] : memref<576x32xbf16, #tpu.memory_space<vmem>>, vector<8x32xbf16>
    %65 = arith.truncf %63 : vector<4x8x8xf32> to vector<4x8x8xbf16>
    "tpu.trace_start"() <{level = 10 : i32, message = "bqc,ce->bqe"}> : () -> ()
    %cst_24 = arith.constant dense<0.000000e+00> : vector<4x8x32xf32>
    %66 = tpu.matmul %65, %64, %cst_24 {dimension_numbers = #tpu.dot_dimension_numbers<[2], [0], [0, 1], [1], [0, 0, 0, 1, 1, 1], [], []>} : vector<4x8x8xbf16>, vector<8x32xbf16>, vector<4x8x32xf32> -> vector<4x8x32xf32>
    "tpu.trace_stop"() : () -> ()
    %67 = arith.addf %45, %66 : vector<4x8x32xf32>
    %68 = vector.extract_strided_slice %24 {offsets = [0, 0, 16], sizes = [4, 8, 8], strides = [1, 1, 1]} : vector<4x8x96xf32> to vector<4x8x8xf32>
    %69 = vector.extract_strided_slice %24 {offsets = [0, 0, 48], sizes = [4, 8, 8], strides = [1, 1, 1]} : vector<4x8x96xf32> to vector<4x8x8xf32>
    %70 = vector.extract_strided_slice %24 {offsets = [0, 0, 80], sizes = [4, 8, 8], strides = [1, 1, 1]} : vector<4x8x96xf32> to vector<4x8x8xf32>
    "tpu.trace_start"() <{level = 10 : i32, message = "bqd,bkd->bqk"}> : () -> ()
    %cst_25 = arith.constant dense<0.000000e+00> : vector<4x8x8xf32>
    %71 = tpu.matmul %68, %69, %cst_25 {dimension_numbers = #tpu.dot_dimension_numbers<[2], [2], [1], [1], [0, 0, 0, 1, 1, 1], [0], [0]>} : vector<4x8x8xf32>, vector<4x8x8xf32>, vector<4x8x8xf32> -> vector<4x8x8xf32>
    "tpu.trace_stop"() : () -> ()
    %cst_26 = arith.constant 0.353553385 : f32
    %72 = vector.broadcast %cst_26 : f32 to vector<4x8x8xf32>
    %73 = arith.mulf %71, %72 : vector<4x8x8xf32>
    %74 = arith.addf %73, %17 : vector<4x8x8xf32>
    %cst_27 = arith.constant dense<0xFF800000> : vector<4x8xf32>
    %75 = vector.multi_reduction <maximumf>, %74, %cst_27 [2] : vector<4x8x8xf32> to vector<4x8xf32>
    %76 = vector.shape_cast %75 : vector<4x8xf32> to vector<4x8x1xf32>
    %77 = vector.broadcast %76 : vector<4x8x1xf32> to vector<4x8x8xf32>
    %78 = arith.subf %74, %77 : vector<4x8x8xf32>
    %79 = math.exp %78 : vector<4x8x8xf32>
    %cst_28 = arith.constant dense<0.000000e+00> : vector<4x8xf32>
    %80 = vector.multi_reduction <add>, %79, %cst_28 [2] : vector<4x8x8xf32> to vector<4x8xf32>
    %81 = vector.shape_cast %80 : vector<4x8xf32> to vector<4x8x1xf32>
    %82 = tpu.reciprocal %81 {approx = true} : vector<4x8x1xf32> -> vector<4x8x1xf32>
    %83 = vector.broadcast %82 : vector<4x8x1xf32> to vector<4x8x8xf32>
    %84 = arith.mulf %79, %83 : vector<4x8x8xf32>
    "tpu.trace_start"() <{level = 10 : i32, message = "bqk,bkd->bqd"}> : () -> ()
    %cst_29 = arith.constant dense<0.000000e+00> : vector<4x8x8xf32>
    %85 = tpu.matmul %84, %70, %cst_29 {dimension_numbers = #tpu.dot_dimension_numbers<[2], [1], [1], [2], [0, 0, 0, 1, 1, 2], [0], [0]>} : vector<4x8x8xf32>, vector<4x8x8xf32>, vector<4x8x8xf32> -> vector<4x8x8xf32>
    "tpu.trace_stop"() : () -> ()
    %c208 = arith.constant 208 : index
    %c0_30 = arith.constant 0 : index
    %86 = vector.load %arg2[%c208, %c0_30] : memref<576x32xbf16, #tpu.memory_space<vmem>>, vector<8x32xbf16>
    %87 = arith.truncf %85 : vector<4x8x8xf32> to vector<4x8x8xbf16>
    "tpu.trace_start"() <{level = 10 : i32, message = "bqc,ce->bqe"}> : () -> ()
    %cst_31 = arith.constant dense<0.000000e+00> : vector<4x8x32xf32>
    %88 = tpu.matmul %87, %86, %cst_31 {dimension_numbers = #tpu.dot_dimension_numbers<[2], [0], [0, 1], [1], [0, 0, 0, 1, 1, 1], [], []>} : vector<4x8x8xbf16>, vector<8x32xbf16>, vector<4x8x32xf32> -> vector<4x8x32xf32>
    "tpu.trace_stop"() : () -> ()
    %89 = arith.addf %67, %88 : vector<4x8x32xf32>
    %90 = vector.extract_strided_slice %24 {offsets = [0, 0, 24], sizes = [4, 8, 8], strides = [1, 1, 1]} : vector<4x8x96xf32> to vector<4x8x8xf32>
    %91 = vector.extract_strided_slice %24 {offsets = [0, 0, 56], sizes = [4, 8, 8], strides = [1, 1, 1]} : vector<4x8x96xf32> to vector<4x8x8xf32>
    %92 = vector.extract_strided_slice %24 {offsets = [0, 0, 88], sizes = [4, 8, 8], strides = [1, 1, 1]} : vector<4x8x96xf32> to vector<4x8x8xf32>
    "tpu.trace_start"() <{level = 10 : i32, message = "bqd,bkd->bqk"}> : () -> ()
    %cst_32 = arith.constant dense<0.000000e+00> : vector<4x8x8xf32>
    %93 = tpu.matmul %90, %91, %cst_32 {dimension_numbers = #tpu.dot_dimension_numbers<[2], [2], [1], [1], [0, 0, 0, 1, 1, 1], [0], [0]>} : vector<4x8x8xf32>, vector<4x8x8xf32>, vector<4x8x8xf32> -> vector<4x8x8xf32>
    "tpu.trace_stop"() : () -> ()
    %cst_33 = arith.constant 0.353553385 : f32
    %94 = vector.broadcast %cst_33 : f32 to vector<4x8x8xf32>
    %95 = arith.mulf %93, %94 : vector<4x8x8xf32>
    %96 = arith.addf %95, %17 : vector<4x8x8xf32>
    %cst_34 = arith.constant dense<0xFF800000> : vector<4x8xf32>
    %97 = vector.multi_reduction <maximumf>, %96, %cst_34 [2] : vector<4x8x8xf32> to vector<4x8xf32>
    %98 = vector.shape_cast %97 : vector<4x8xf32> to vector<4x8x1xf32>
    %99 = vector.broadcast %98 : vector<4x8x1xf32> to vector<4x8x8xf32>
    %100 = arith.subf %96, %99 : vector<4x8x8xf32>
    %101 = math.exp %100 : vector<4x8x8xf32>
    %cst_35 = arith.constant dense<0.000000e+00> : vector<4x8xf32>
    %102 = vector.multi_reduction <add>, %101, %cst_35 [2] : vector<4x8x8xf32> to vector<4x8xf32>
    %103 = vector.shape_cast %102 : vector<4x8xf32> to vector<4x8x1xf32>
    %104 = tpu.reciprocal %103 {approx = true} : vector<4x8x1xf32> -> vector<4x8x1xf32>
    %105 = vector.broadcast %104 : vector<4x8x1xf32> to vector<4x8x8xf32>
    %106 = arith.mulf %101, %105 : vector<4x8x8xf32>
    "tpu.trace_start"() <{level = 10 : i32, message = "bqk,bkd->bqd"}> : () -> ()
    %cst_36 = arith.constant dense<0.000000e+00> : vector<4x8x8xf32>
    %107 = tpu.matmul %106, %92, %cst_36 {dimension_numbers = #tpu.dot_dimension_numbers<[2], [1], [1], [2], [0, 0, 0, 1, 1, 2], [0], [0]>} : vector<4x8x8xf32>, vector<4x8x8xf32>, vector<4x8x8xf32> -> vector<4x8x8xf32>
    "tpu.trace_stop"() : () -> ()
    %c216 = arith.constant 216 : index
    %c0_37 = arith.constant 0 : index
    %108 = vector.load %arg2[%c216, %c0_37] : memref<576x32xbf16, #tpu.memory_space<vmem>>, vector<8x32xbf16>
    %109 = arith.truncf %107 : vector<4x8x8xf32> to vector<4x8x8xbf16>
    "tpu.trace_start"() <{level = 10 : i32, message = "bqc,ce->bqe"}> : () -> ()
    %cst_38 = arith.constant dense<0.000000e+00> : vector<4x8x32xf32>
    %110 = tpu.matmul %109, %108, %cst_38 {dimension_numbers = #tpu.dot_dimension_numbers<[2], [0], [0, 1], [1], [0, 0, 0, 1, 1, 1], [], []>} : vector<4x8x8xbf16>, vector<8x32xbf16>, vector<4x8x32xf32> -> vector<4x8x32xf32>
    "tpu.trace_stop"() : () -> ()
    %111 = arith.addf %89, %110 : vector<4x8x32xf32>
    %c1 = arith.constant 1 : index
    %c0_39 = arith.constant 0 : index
    %112 = vector.load %arg3[%c1, %c0_39] : memref<144x128xf32, #tpu.memory_space<vmem>>, vector<1x32xf32>
    %113 = vector.shape_cast %112 : vector<1x32xf32> to vector<1x1x32xf32>
    %114 = vector.broadcast %113 : vector<1x1x32xf32> to vector<4x8x32xf32>
    %115 = arith.addf %111, %114 : vector<4x8x32xf32>
    %116 = arith.addf %14, %115 : vector<4x8x32xf32>
    %c4 = arith.constant 4 : index
    %c0_40 = arith.constant 0 : index
    %117 = vector.load %arg3[%c4, %c0_40] : memref<144x128xf32, #tpu.memory_space<vmem>>, vector<1x32xf32>
    %c5 = arith.constant 5 : index
    %c0_41 = arith.constant 0 : index
    %118 = vector.load %arg3[%c5, %c0_41] : memref<144x128xf32, #tpu.memory_space<vmem>>, vector<1x32xf32>
    %cst_42 = arith.constant dense<0.000000e+00> : vector<4x8xf32>
    %119 = vector.multi_reduction <add>, %116, %cst_42 [2] : vector<4x8x32xf32> to vector<4x8xf32>
    %120 = vector.shape_cast %119 : vector<4x8xf32> to vector<4x8x1xf32>
    %cst_43 = arith.constant 3.200000e+01 : f32
    %121 = vector.broadcast %cst_43 : f32 to vector<4x8x1xf32>
    %122 = arith.divf %120, %121 : vector<4x8x1xf32>
    %123 = vector.broadcast %122 : vector<4x8x1xf32> to vector<4x8x32xf32>
    %124 = arith.subf %116, %123 : vector<4x8x32xf32>
    %125 = arith.mulf %124, %124 : vector<4x8x32xf32>
    %cst_44 = arith.constant dense<0.000000e+00> : vector<4x8xf32>
    %126 = vector.multi_reduction <add>, %125, %cst_44 [2] : vector<4x8x32xf32> to vector<4x8xf32>
    %127 = vector.shape_cast %126 : vector<4x8xf32> to vector<4x8x1xf32>
    %cst_45 = arith.constant 3.200000e+01 : f32
    %128 = vector.broadcast %cst_45 : f32 to vector<4x8x1xf32>
    %129 = arith.divf %127, %128 : vector<4x8x1xf32>
    %cst_46 = arith.constant 9.99999974E-6 : f32
    %130 = vector.broadcast %cst_46 : f32 to vector<4x8x1xf32>
    %131 = arith.addf %129, %130 : vector<4x8x1xf32>
    %132 = math.rsqrt %131 : vector<4x8x1xf32>
    %133 = vector.broadcast %132 : vector<4x8x1xf32> to vector<4x8x32xf32>
    %134 = arith.mulf %124, %133 : vector<4x8x32xf32>
    %135 = vector.shape_cast %117 : vector<1x32xf32> to vector<1x1x32xf32>
    %136 = vector.broadcast %135 : vector<1x1x32xf32> to vector<4x8x32xf32>
    %137 = arith.mulf %134, %136 : vector<4x8x32xf32>
    %138 = vector.shape_cast %118 : vector<1x32xf32> to vector<1x1x32xf32>
    %139 = vector.broadcast %138 : vector<1x1x32xf32> to vector<4x8x32xf32>
    %140 = arith.addf %137, %139 : vector<4x8x32xf32>
    %c256 = arith.constant 256 : index
    %c0_47 = arith.constant 0 : index
    %141 = vector.load %arg2[%c256, %c0_47] : memref<576x32xbf16, #tpu.memory_space<vmem>>, vector<32x32xbf16>
    %142 = arith.truncf %140 : vector<4x8x32xf32> to vector<4x8x32xbf16>
    "tpu.trace_start"() <{level = 10 : i32, message = "bsd,fd->bsf"}> : () -> ()
    %cst_48 = arith.constant dense<0.000000e+00> : vector<4x8x32xf32>
    %143 = tpu.matmul %142, %141, %cst_48 {dimension_numbers = #tpu.dot_dimension_numbers<[2], [1], [0, 1], [0], [0, 0, 0, 1, 1, 0], [], []>} : vector<4x8x32xbf16>, vector<32x32xbf16>, vector<4x8x32xf32> -> vector<4x8x32xf32>
    "tpu.trace_stop"() : () -> ()
    %c2 = arith.constant 2 : index
    %c0_49 = arith.constant 0 : index
    %144 = vector.load %arg3[%c2, %c0_49] : memref<144x128xf32, #tpu.memory_space<vmem>>, vector<1x32xf32>
    %145 = vector.shape_cast %144 : vector<1x32xf32> to vector<1x1x32xf32>
    %146 = vector.broadcast %145 : vector<1x1x32xf32> to vector<4x8x32xf32>
    %147 = arith.addf %143, %146 : vector<4x8x32xf32>
    %cst_50 = arith.constant 0.000000e+00 : f32
    %148 = vector.broadcast %cst_50 : f32 to vector<4x8x32xf32>
    %149 = arith.maximumf %147, %148 : vector<4x8x32xf32>
    %c320 = arith.constant 320 : index
    %c0_51 = arith.constant 0 : index
    %150 = vector.load %arg2[%c320, %c0_51] : memref<576x32xbf16, #tpu.memory_space<vmem>>, vector<32x32xbf16>
    %151 = arith.truncf %149 : vector<4x8x32xf32> to vector<4x8x32xbf16>
    "tpu.trace_start"() <{level = 10 : i32, message = "bsf,df->bsd"}> : () -> ()
    %cst_52 = arith.constant dense<0.000000e+00> : vector<4x8x32xf32>
    %152 = tpu.matmul %151, %150, %cst_52 {dimension_numbers = #tpu.dot_dimension_numbers<[2], [1], [0, 1], [0], [0, 0, 0, 1, 1, 0], [], []>} : vector<4x8x32xbf16>, vector<32x32xbf16>, vector<4x8x32xf32> -> vector<4x8x32xf32>
    "tpu.trace_stop"() : () -> ()
    %c3 = arith.constant 3 : index
    %c0_53 = arith.constant 0 : index
    %153 = vector.load %arg3[%c3, %c0_53] : memref<144x128xf32, #tpu.memory_space<vmem>>, vector<1x32xf32>
    %154 = vector.shape_cast %153 : vector<1x32xf32> to vector<1x1x32xf32>
    %155 = vector.broadcast %154 : vector<1x1x32xf32> to vector<4x8x32xf32>
    %156 = arith.addf %152, %155 : vector<4x8x32xf32>
    %157 = arith.addf %140, %156 : vector<4x8x32xf32>
    %c6 = arith.constant 6 : index
    %c0_54 = arith.constant 0 : index
    %158 = vector.load %arg3[%c6, %c0_54] : memref<144x128xf32, #tpu.memory_space<vmem>>, vector<1x32xf32>
    %c7 = arith.constant 7 : index
    %c0_55 = arith.constant 0 : index
    %159 = vector.load %arg3[%c7, %c0_55] : memref<144x128xf32, #tpu.memory_space<vmem>>, vector<1x32xf32>
    %cst_56 = arith.constant dense<0.000000e+00> : vector<4x8xf32>
    %160 = vector.multi_reduction <add>, %157, %cst_56 [2] : vector<4x8x32xf32> to vector<4x8xf32>
    %161 = vector.shape_cast %160 : vector<4x8xf32> to vector<4x8x1xf32>
    %cst_57 = arith.constant 3.200000e+01 : f32
    %162 = vector.broadcast %cst_57 : f32 to vector<4x8x1xf32>
    %163 = arith.divf %161, %162 : vector<4x8x1xf32>
    %164 = vector.broadcast %163 : vector<4x8x1xf32> to vector<4x8x32xf32>
    %165 = arith.subf %157, %164 : vector<4x8x32xf32>
    %166 = arith.mulf %165, %165 : vector<4x8x32xf32>
    %cst_58 = arith.constant dense<0.000000e+00> : vector<4x8xf32>
    %167 = vector.multi_reduction <add>, %166, %cst_58 [2] : vector<4x8x32xf32> to vector<4x8xf32>
    %168 = vector.shape_cast %167 : vector<4x8xf32> to vector<4x8x1xf32>
    %cst_59 = arith.constant 3.200000e+01 : f32
    %169 = vector.broadcast %cst_59 : f32 to vector<4x8x1xf32>
    %170 = arith.divf %168, %169 : vector<4x8x1xf32>
    %cst_60 = arith.constant 9.99999974E-6 : f32
    %171 = vector.broadcast %cst_60 : f32 to vector<4x8x1xf32>
    %172 = arith.addf %170, %171 : vector<4x8x1xf32>
    %173 = math.rsqrt %172 : vector<4x8x1xf32>
    %174 = vector.broadcast %173 : vector<4x8x1xf32> to vector<4x8x32xf32>
    %175 = arith.mulf %165, %174 : vector<4x8x32xf32>
    %176 = vector.shape_cast %158 : vector<1x32xf32> to vector<1x1x32xf32>
    %177 = vector.broadcast %176 : vector<1x1x32xf32> to vector<4x8x32xf32>
    %178 = arith.mulf %175, %177 : vector<4x8x32xf32>
    %179 = vector.shape_cast %159 : vector<1x32xf32> to vector<1x1x32xf32>
    %180 = vector.broadcast %179 : vector<1x1x32xf32> to vector<4x8x32xf32>
    %181 = arith.addf %178, %180 : vector<4x8x32xf32>
    %182 = arith.truncf %181 : vector<4x8x32xf32> to vector<4x8x32xbf16>
    %c96 = arith.constant 96 : index
    %c0_61 = arith.constant 0 : index
    %183 = vector.load %arg2[%c96, %c0_61] : memref<576x32xbf16, #tpu.memory_space<vmem>>, vector<96x32xbf16>
    "tpu.trace_start"() <{level = 10 : i32, message = "bsd,ed->bse"}> : () -> ()
    %cst_62 = arith.constant dense<0.000000e+00> : vector<4x8x96xf32>
    %184 = tpu.matmul %182, %183, %cst_62 {dimension_numbers = #tpu.dot_dimension_numbers<[2], [1], [0, 1], [0], [0, 0, 0, 1, 1, 0], [], []>} : vector<4x8x32xbf16>, vector<96x32xbf16>, vector<4x8x96xf32> -> vector<4x8x96xf32>
    "tpu.trace_stop"() : () -> ()
    %c8 = arith.constant 8 : index
    %c0_63 = arith.constant 0 : index
    %185 = vector.load %arg3[%c8, %c0_63] : memref<144x128xf32, #tpu.memory_space<vmem>>, vector<1x96xf32>
    %186 = vector.shape_cast %185 : vector<1x96xf32> to vector<1x1x96xf32>
    %187 = vector.broadcast %186 : vector<1x1x96xf32> to vector<4x8x96xf32>
    %188 = arith.addf %184, %187 : vector<4x8x96xf32>
    %189 = vector.extract_strided_slice %188 {offsets = [0, 0, 0], sizes = [4, 8, 8], strides = [1, 1, 1]} : vector<4x8x96xf32> to vector<4x8x8xf32>
    %190 = vector.extract_strided_slice %188 {offsets = [0, 0, 32], sizes = [4, 8, 8], strides = [1, 1, 1]} : vector<4x8x96xf32> to vector<4x8x8xf32>
    %191 = vector.extract_strided_slice %188 {offsets = [0, 0, 64], sizes = [4, 8, 8], strides = [1, 1, 1]} : vector<4x8x96xf32> to vector<4x8x8xf32>
    "tpu.trace_start"() <{level = 10 : i32, message = "bqd,bkd->bqk"}> : () -> ()
    %cst_64 = arith.constant dense<0.000000e+00> : vector<4x8x8xf32>
    %192 = tpu.matmul %189, %190, %cst_64 {dimension_numbers = #tpu.dot_dimension_numbers<[2], [2], [1], [1], [0, 0, 0, 1, 1, 1], [0], [0]>} : vector<4x8x8xf32>, vector<4x8x8xf32>, vector<4x8x8xf32> -> vector<4x8x8xf32>
    "tpu.trace_stop"() : () -> ()
    %cst_65 = arith.constant 0.353553385 : f32
    %193 = vector.broadcast %cst_65 : f32 to vector<4x8x8xf32>
    %194 = arith.mulf %192, %193 : vector<4x8x8xf32>
    %195 = arith.addf %194, %17 : vector<4x8x8xf32>
    %cst_66 = arith.constant dense<0xFF800000> : vector<4x8xf32>
    %196 = vector.multi_reduction <maximumf>, %195, %cst_66 [2] : vector<4x8x8xf32> to vector<4x8xf32>
    %197 = vector.shape_cast %196 : vector<4x8xf32> to vector<4x8x1xf32>
    %198 = vector.broadcast %197 : vector<4x8x1xf32> to vector<4x8x8xf32>
    %199 = arith.subf %195, %198 : vector<4x8x8xf32>
    %200 = math.exp %199 : vector<4x8x8xf32>
    %cst_67 = arith.constant dense<0.000000e+00> : vector<4x8xf32>
    %201 = vector.multi_reduction <add>, %200, %cst_67 [2] : vector<4x8x8xf32> to vector<4x8xf32>
    %202 = vector.shape_cast %201 : vector<4x8xf32> to vector<4x8x1xf32>
    %203 = tpu.reciprocal %202 {approx = true} : vector<4x8x1xf32> -> vector<4x8x1xf32>
    %204 = vector.broadcast %203 : vector<4x8x1xf32> to vector<4x8x8xf32>
    %205 = arith.mulf %200, %204 : vector<4x8x8xf32>
    "tpu.trace_start"() <{level = 10 : i32, message = "bqk,bkd->bqd"}> : () -> ()
    %cst_68 = arith.constant dense<0.000000e+00> : vector<4x8x8xf32>
    %206 = tpu.matmul %205, %191, %cst_68 {dimension_numbers = #tpu.dot_dimension_numbers<[2], [1], [1], [2], [0, 0, 0, 1, 1, 2], [0], [0]>} : vector<4x8x8xf32>, vector<4x8x8xf32>, vector<4x8x8xf32> -> vector<4x8x8xf32>
    "tpu.trace_stop"() : () -> ()
    %c224 = arith.constant 224 : index
    %c0_69 = arith.constant 0 : index
    %207 = vector.load %arg2[%c224, %c0_69] : memref<576x32xbf16, #tpu.memory_space<vmem>>, vector<8x32xbf16>
    %208 = arith.truncf %206 : vector<4x8x8xf32> to vector<4x8x8xbf16>
    "tpu.trace_start"() <{level = 10 : i32, message = "bqc,ce->bqe"}> : () -> ()
    %cst_70 = arith.constant dense<0.000000e+00> : vector<4x8x32xf32>
    %209 = tpu.matmul %208, %207, %cst_70 {dimension_numbers = #tpu.dot_dimension_numbers<[2], [0], [0, 1], [1], [0, 0, 0, 1, 1, 1], [], []>} : vector<4x8x8xbf16>, vector<8x32xbf16>, vector<4x8x32xf32> -> vector<4x8x32xf32>
    "tpu.trace_stop"() : () -> ()
    %210 = vector.extract_strided_slice %188 {offsets = [0, 0, 8], sizes = [4, 8, 8], strides = [1, 1, 1]} : vector<4x8x96xf32> to vector<4x8x8xf32>
    %211 = vector.extract_strided_slice %188 {offsets = [0, 0, 40], sizes = [4, 8, 8], strides = [1, 1, 1]} : vector<4x8x96xf32> to vector<4x8x8xf32>
    %212 = vector.extract_strided_slice %188 {offsets = [0, 0, 72], sizes = [4, 8, 8], strides = [1, 1, 1]} : vector<4x8x96xf32> to vector<4x8x8xf32>
    "tpu.trace_start"() <{level = 10 : i32, message = "bqd,bkd->bqk"}> : () -> ()
    %cst_71 = arith.constant dense<0.000000e+00> : vector<4x8x8xf32>
    %213 = tpu.matmul %210, %211, %cst_71 {dimension_numbers = #tpu.dot_dimension_numbers<[2], [2], [1], [1], [0, 0, 0, 1, 1, 1], [0], [0]>} : vector<4x8x8xf32>, vector<4x8x8xf32>, vector<4x8x8xf32> -> vector<4x8x8xf32>
    "tpu.trace_stop"() : () -> ()
    %cst_72 = arith.constant 0.353553385 : f32
    %214 = vector.broadcast %cst_72 : f32 to vector<4x8x8xf32>
    %215 = arith.mulf %213, %214 : vector<4x8x8xf32>
    %216 = arith.addf %215, %17 : vector<4x8x8xf32>
    %cst_73 = arith.constant dense<0xFF800000> : vector<4x8xf32>
    %217 = vector.multi_reduction <maximumf>, %216, %cst_73 [2] : vector<4x8x8xf32> to vector<4x8xf32>
    %218 = vector.shape_cast %217 : vector<4x8xf32> to vector<4x8x1xf32>
    %219 = vector.broadcast %218 : vector<4x8x1xf32> to vector<4x8x8xf32>
    %220 = arith.subf %216, %219 : vector<4x8x8xf32>
    %221 = math.exp %220 : vector<4x8x8xf32>
    %cst_74 = arith.constant dense<0.000000e+00> : vector<4x8xf32>
    %222 = vector.multi_reduction <add>, %221, %cst_74 [2] : vector<4x8x8xf32> to vector<4x8xf32>
    %223 = vector.shape_cast %222 : vector<4x8xf32> to vector<4x8x1xf32>
    %224 = tpu.reciprocal %223 {approx = true} : vector<4x8x1xf32> -> vector<4x8x1xf32>
    %225 = vector.broadcast %224 : vector<4x8x1xf32> to vector<4x8x8xf32>
    %226 = arith.mulf %221, %225 : vector<4x8x8xf32>
    "tpu.trace_start"() <{level = 10 : i32, message = "bqk,bkd->bqd"}> : () -> ()
    %cst_75 = arith.constant dense<0.000000e+00> : vector<4x8x8xf32>
    %227 = tpu.matmul %226, %212, %cst_75 {dimension_numbers = #tpu.dot_dimension_numbers<[2], [1], [1], [2], [0, 0, 0, 1, 1, 2], [0], [0]>} : vector<4x8x8xf32>, vector<4x8x8xf32>, vector<4x8x8xf32> -> vector<4x8x8xf32>
    "tpu.trace_stop"() : () -> ()
    %c232 = arith.constant 232 : index
    %c0_76 = arith.constant 0 : index
    %228 = vector.load %arg2[%c232, %c0_76] : memref<576x32xbf16, #tpu.memory_space<vmem>>, vector<8x32xbf16>
    %229 = arith.truncf %227 : vector<4x8x8xf32> to vector<4x8x8xbf16>
    "tpu.trace_start"() <{level = 10 : i32, message = "bqc,ce->bqe"}> : () -> ()
    %cst_77 = arith.constant dense<0.000000e+00> : vector<4x8x32xf32>
    %230 = tpu.matmul %229, %228, %cst_77 {dimension_numbers = #tpu.dot_dimension_numbers<[2], [0], [0, 1], [1], [0, 0, 0, 1, 1, 1], [], []>} : vector<4x8x8xbf16>, vector<8x32xbf16>, vector<4x8x32xf32> -> vector<4x8x32xf32>
    "tpu.trace_stop"() : () -> ()
    %231 = arith.addf %209, %230 : vector<4x8x32xf32>
    %232 = vector.extract_strided_slice %188 {offsets = [0, 0, 16], sizes = [4, 8, 8], strides = [1, 1, 1]} : vector<4x8x96xf32> to vector<4x8x8xf32>
    %233 = vector.extract_strided_slice %188 {offsets = [0, 0, 48], sizes = [4, 8, 8], strides = [1, 1, 1]} : vector<4x8x96xf32> to vector<4x8x8xf32>
    %234 = vector.extract_strided_slice %188 {offsets = [0, 0, 80], sizes = [4, 8, 8], strides = [1, 1, 1]} : vector<4x8x96xf32> to vector<4x8x8xf32>
    "tpu.trace_start"() <{level = 10 : i32, message = "bqd,bkd->bqk"}> : () -> ()
    %cst_78 = arith.constant dense<0.000000e+00> : vector<4x8x8xf32>
    %235 = tpu.matmul %232, %233, %cst_78 {dimension_numbers = #tpu.dot_dimension_numbers<[2], [2], [1], [1], [0, 0, 0, 1, 1, 1], [0], [0]>} : vector<4x8x8xf32>, vector<4x8x8xf32>, vector<4x8x8xf32> -> vector<4x8x8xf32>
    "tpu.trace_stop"() : () -> ()
    %cst_79 = arith.constant 0.353553385 : f32
    %236 = vector.broadcast %cst_79 : f32 to vector<4x8x8xf32>
    %237 = arith.mulf %235, %236 : vector<4x8x8xf32>
    %238 = arith.addf %237, %17 : vector<4x8x8xf32>
    %cst_80 = arith.constant dense<0xFF800000> : vector<4x8xf32>
    %239 = vector.multi_reduction <maximumf>, %238, %cst_80 [2] : vector<4x8x8xf32> to vector<4x8xf32>
    %240 = vector.shape_cast %239 : vector<4x8xf32> to vector<4x8x1xf32>
    %241 = vector.broadcast %240 : vector<4x8x1xf32> to vector<4x8x8xf32>
    %242 = arith.subf %238, %241 : vector<4x8x8xf32>
    %243 = math.exp %242 : vector<4x8x8xf32>
    %cst_81 = arith.constant dense<0.000000e+00> : vector<4x8xf32>
    %244 = vector.multi_reduction <add>, %243, %cst_81 [2] : vector<4x8x8xf32> to vector<4x8xf32>
    %245 = vector.shape_cast %244 : vector<4x8xf32> to vector<4x8x1xf32>
    %246 = tpu.reciprocal %245 {approx = true} : vector<4x8x1xf32> -> vector<4x8x1xf32>
    %247 = vector.broadcast %246 : vector<4x8x1xf32> to vector<4x8x8xf32>
    %248 = arith.mulf %243, %247 : vector<4x8x8xf32>
    "tpu.trace_start"() <{level = 10 : i32, message = "bqk,bkd->bqd"}> : () -> ()
    %cst_82 = arith.constant dense<0.000000e+00> : vector<4x8x8xf32>
    %249 = tpu.matmul %248, %234, %cst_82 {dimension_numbers = #tpu.dot_dimension_numbers<[2], [1], [1], [2], [0, 0, 0, 1, 1, 2], [0], [0]>} : vector<4x8x8xf32>, vector<4x8x8xf32>, vector<4x8x8xf32> -> vector<4x8x8xf32>
    "tpu.trace_stop"() : () -> ()
    %c240 = arith.constant 240 : index
    %c0_83 = arith.constant 0 : index
    %250 = vector.load %arg2[%c240, %c0_83] : memref<576x32xbf16, #tpu.memory_space<vmem>>, vector<8x32xbf16>
    %251 = arith.truncf %249 : vector<4x8x8xf32> to vector<4x8x8xbf16>
    "tpu.trace_start"() <{level = 10 : i32, message = "bqc,ce->bqe"}> : () -> ()
    %cst_84 = arith.constant dense<0.000000e+00> : vector<4x8x32xf32>
    %252 = tpu.matmul %251, %250, %cst_84 {dimension_numbers = #tpu.dot_dimension_numbers<[2], [0], [0, 1], [1], [0, 0, 0, 1, 1, 1], [], []>} : vector<4x8x8xbf16>, vector<8x32xbf16>, vector<4x8x32xf32> -> vector<4x8x32xf32>
    "tpu.trace_stop"() : () -> ()
    %253 = arith.addf %231, %252 : vector<4x8x32xf32>
    %254 = vector.extract_strided_slice %188 {offsets = [0, 0, 24], sizes = [4, 8, 8], strides = [1, 1, 1]} : vector<4x8x96xf32> to vector<4x8x8xf32>
    %255 = vector.extract_strided_slice %188 {offsets = [0, 0, 56], sizes = [4, 8, 8], strides = [1, 1, 1]} : vector<4x8x96xf32> to vector<4x8x8xf32>
    %256 = vector.extract_strided_slice %188 {offsets = [0, 0, 88], sizes = [4, 8, 8], strides = [1, 1, 1]} : vector<4x8x96xf32> to vector<4x8x8xf32>
    "tpu.trace_start"() <{level = 10 : i32, message = "bqd,bkd->bqk"}> : () -> ()
    %cst_85 = arith.constant dense<0.000000e+00> : vector<4x8x8xf32>
    %257 = tpu.matmul %254, %255, %cst_85 {dimension_numbers = #tpu.dot_dimension_numbers<[2], [2], [1], [1], [0, 0, 0, 1, 1, 1], [0], [0]>} : vector<4x8x8xf32>, vector<4x8x8xf32>, vector<4x8x8xf32> -> vector<4x8x8xf32>
    "tpu.trace_stop"() : () -> ()
    %cst_86 = arith.constant 0.353553385 : f32
    %258 = vector.broadcast %cst_86 : f32 to vector<4x8x8xf32>
    %259 = arith.mulf %257, %258 : vector<4x8x8xf32>
    %260 = arith.addf %259, %17 : vector<4x8x8xf32>
    %cst_87 = arith.constant dense<0xFF800000> : vector<4x8xf32>
    %261 = vector.multi_reduction <maximumf>, %260, %cst_87 [2] : vector<4x8x8xf32> to vector<4x8xf32>
    %262 = vector.shape_cast %261 : vector<4x8xf32> to vector<4x8x1xf32>
    %263 = vector.broadcast %262 : vector<4x8x1xf32> to vector<4x8x8xf32>
    %264 = arith.subf %260, %263 : vector<4x8x8xf32>
    %265 = math.exp %264 : vector<4x8x8xf32>
    %cst_88 = arith.constant dense<0.000000e+00> : vector<4x8xf32>
    %266 = vector.multi_reduction <add>, %265, %cst_88 [2] : vector<4x8x8xf32> to vector<4x8xf32>
    %267 = vector.shape_cast %266 : vector<4x8xf32> to vector<4x8x1xf32>
    %268 = tpu.reciprocal %267 {approx = true} : vector<4x8x1xf32> -> vector<4x8x1xf32>
    %269 = vector.broadcast %268 : vector<4x8x1xf32> to vector<4x8x8xf32>
    %270 = arith.mulf %265, %269 : vector<4x8x8xf32>
    "tpu.trace_start"() <{level = 10 : i32, message = "bqk,bkd->bqd"}> : () -> ()
    %cst_89 = arith.constant dense<0.000000e+00> : vector<4x8x8xf32>
    %271 = tpu.matmul %270, %256, %cst_89 {dimension_numbers = #tpu.dot_dimension_numbers<[2], [1], [1], [2], [0, 0, 0, 1, 1, 2], [0], [0]>} : vector<4x8x8xf32>, vector<4x8x8xf32>, vector<4x8x8xf32> -> vector<4x8x8xf32>
    "tpu.trace_stop"() : () -> ()
    %c248 = arith.constant 248 : index
    %c0_90 = arith.constant 0 : index
    %272 = vector.load %arg2[%c248, %c0_90] : memref<576x32xbf16, #tpu.memory_space<vmem>>, vector<8x32xbf16>
    %273 = arith.truncf %271 : vector<4x8x8xf32> to vector<4x8x8xbf16>
    "tpu.trace_start"() <{level = 10 : i32, message = "bqc,ce->bqe"}> : () -> ()
    %cst_91 = arith.constant dense<0.000000e+00> : vector<4x8x32xf32>
    %274 = tpu.matmul %273, %272, %cst_91 {dimension_numbers = #tpu.dot_dimension_numbers<[2], [0], [0, 1], [1], [0, 0, 0, 1, 1, 1], [], []>} : vector<4x8x8xbf16>, vector<8x32xbf16>, vector<4x8x32xf32> -> vector<4x8x32xf32>
    "tpu.trace_stop"() : () -> ()
    %275 = arith.addf %253, %274 : vector<4x8x32xf32>
    %c9 = arith.constant 9 : index
    %c0_92 = arith.constant 0 : index
    %276 = vector.load %arg3[%c9, %c0_92] : memref<144x128xf32, #tpu.memory_space<vmem>>, vector<1x32xf32>
    %277 = vector.shape_cast %276 : vector<1x32xf32> to vector<1x1x32xf32>
    %278 = vector.broadcast %277 : vector<1x1x32xf32> to vector<4x8x32xf32>
    %279 = arith.addf %275, %278 : vector<4x8x32xf32>
    %280 = arith.addf %181, %279 : vector<4x8x32xf32>
    %c12 = arith.constant 12 : index
    %c0_93 = arith.constant 0 : index
    %281 = vector.load %arg3[%c12, %c0_93] : memref<144x128xf32, #tpu.memory_space<vmem>>, vector<1x32xf32>
    %c13 = arith.constant 13 : index
    %c0_94 = arith.constant 0 : index
    %282 = vector.load %arg3[%c13, %c0_94] : memref<144x128xf32, #tpu.memory_space<vmem>>, vector<1x32xf32>
    %cst_95 = arith.constant dense<0.000000e+00> : vector<4x8xf32>
    %283 = vector.multi_reduction <add>, %280, %cst_95 [2] : vector<4x8x32xf32> to vector<4x8xf32>
    %284 = vector.shape_cast %283 : vector<4x8xf32> to vector<4x8x1xf32>
    %cst_96 = arith.constant 3.200000e+01 : f32
    %285 = vector.broadcast %cst_96 : f32 to vector<4x8x1xf32>
    %286 = arith.divf %284, %285 : vector<4x8x1xf32>
    %287 = vector.broadcast %286 : vector<4x8x1xf32> to vector<4x8x32xf32>
    %288 = arith.subf %280, %287 : vector<4x8x32xf32>
    %289 = arith.mulf %288, %288 : vector<4x8x32xf32>
    %cst_97 = arith.constant dense<0.000000e+00> : vector<4x8xf32>
    %290 = vector.multi_reduction <add>, %289, %cst_97 [2] : vector<4x8x32xf32> to vector<4x8xf32>
    %291 = vector.shape_cast %290 : vector<4x8xf32> to vector<4x8x1xf32>
    %cst_98 = arith.constant 3.200000e+01 : f32
    %292 = vector.broadcast %cst_98 : f32 to vector<4x8x1xf32>
    %293 = arith.divf %291, %292 : vector<4x8x1xf32>
    %cst_99 = arith.constant 9.99999974E-6 : f32
    %294 = vector.broadcast %cst_99 : f32 to vector<4x8x1xf32>
    %295 = arith.addf %293, %294 : vector<4x8x1xf32>
    %296 = math.rsqrt %295 : vector<4x8x1xf32>
    %297 = vector.broadcast %296 : vector<4x8x1xf32> to vector<4x8x32xf32>
    %298 = arith.mulf %288, %297 : vector<4x8x32xf32>
    %299 = vector.shape_cast %281 : vector<1x32xf32> to vector<1x1x32xf32>
    %300 = vector.broadcast %299 : vector<1x1x32xf32> to vector<4x8x32xf32>
    %301 = arith.mulf %298, %300 : vector<4x8x32xf32>
    %302 = vector.shape_cast %282 : vector<1x32xf32> to vector<1x1x32xf32>
    %303 = vector.broadcast %302 : vector<1x1x32xf32> to vector<4x8x32xf32>
    %304 = arith.addf %301, %303 : vector<4x8x32xf32>
    %c288 = arith.constant 288 : index
    %c0_100 = arith.constant 0 : index
    %305 = vector.load %arg2[%c288, %c0_100] : memref<576x32xbf16, #tpu.memory_space<vmem>>, vector<32x32xbf16>
    %306 = arith.truncf %304 : vector<4x8x32xf32> to vector<4x8x32xbf16>
    "tpu.trace_start"() <{level = 10 : i32, message = "bsd,fd->bsf"}> : () -> ()
    %cst_101 = arith.constant dense<0.000000e+00> : vector<4x8x32xf32>
    %307 = tpu.matmul %306, %305, %cst_101 {dimension_numbers = #tpu.dot_dimension_numbers<[2], [1], [0, 1], [0], [0, 0, 0, 1, 1, 0], [], []>} : vector<4x8x32xbf16>, vector<32x32xbf16>, vector<4x8x32xf32> -> vector<4x8x32xf32>
    "tpu.trace_stop"() : () -> ()
    %c10 = arith.constant 10 : index
    %c0_102 = arith.constant 0 : index
    %308 = vector.load %arg3[%c10, %c0_102] : memref<144x128xf32, #tpu.memory_space<vmem>>, vector<1x32xf32>
    %309 = vector.shape_cast %308 : vector<1x32xf32> to vector<1x1x32xf32>
    %310 = vector.broadcast %309 : vector<1x1x32xf32> to vector<4x8x32xf32>
    %311 = arith.addf %307, %310 : vector<4x8x32xf32>
    %cst_103 = arith.constant 0.000000e+00 : f32
    %312 = vector.broadcast %cst_103 : f32 to vector<4x8x32xf32>
    %313 = arith.maximumf %311, %312 : vector<4x8x32xf32>
    %c352 = arith.constant 352 : index
    %c0_104 = arith.constant 0 : index
    %314 = vector.load %arg2[%c352, %c0_104] : memref<576x32xbf16, #tpu.memory_space<vmem>>, vector<32x32xbf16>
    %315 = arith.truncf %313 : vector<4x8x32xf32> to vector<4x8x32xbf16>
    "tpu.trace_start"() <{level = 10 : i32, message = "bsf,df->bsd"}> : () -> ()
    %cst_105 = arith.constant dense<0.000000e+00> : vector<4x8x32xf32>
    %316 = tpu.matmul %315, %314, %cst_105 {dimension_numbers = #tpu.dot_dimension_numbers<[2], [1], [0, 1], [0], [0, 0, 0, 1, 1, 0], [], []>} : vector<4x8x32xbf16>, vector<32x32xbf16>, vector<4x8x32xf32> -> vector<4x8x32xf32>
    "tpu.trace_stop"() : () -> ()
    %c11 = arith.constant 11 : index
    %c0_106 = arith.constant 0 : index
    %317 = vector.load %arg3[%c11, %c0_106] : memref<144x128xf32, #tpu.memory_space<vmem>>, vector<1x32xf32>
    %318 = vector.shape_cast %317 : vector<1x32xf32> to vector<1x1x32xf32>
    %319 = vector.broadcast %318 : vector<1x1x32xf32> to vector<4x8x32xf32>
    %320 = arith.addf %316, %319 : vector<4x8x32xf32>
    %321 = arith.addf %304, %320 : vector<4x8x32xf32>
    %c14 = arith.constant 14 : index
    %c0_107 = arith.constant 0 : index
    %322 = vector.load %arg3[%c14, %c0_107] : memref<144x128xf32, #tpu.memory_space<vmem>>, vector<1x32xf32>
    %c15 = arith.constant 15 : index
    %c0_108 = arith.constant 0 : index
    %323 = vector.load %arg3[%c15, %c0_108] : memref<144x128xf32, #tpu.memory_space<vmem>>, vector<1x32xf32>
    %cst_109 = arith.constant dense<0.000000e+00> : vector<4x8xf32>
    %324 = vector.multi_reduction <add>, %321, %cst_109 [2] : vector<4x8x32xf32> to vector<4x8xf32>
    %325 = vector.shape_cast %324 : vector<4x8xf32> to vector<4x8x1xf32>
    %cst_110 = arith.constant 3.200000e+01 : f32
    %326 = vector.broadcast %cst_110 : f32 to vector<4x8x1xf32>
    %327 = arith.divf %325, %326 : vector<4x8x1xf32>
    %328 = vector.broadcast %327 : vector<4x8x1xf32> to vector<4x8x32xf32>
    %329 = arith.subf %321, %328 : vector<4x8x32xf32>
    %330 = arith.mulf %329, %329 : vector<4x8x32xf32>
    %cst_111 = arith.constant dense<0.000000e+00> : vector<4x8xf32>
    %331 = vector.multi_reduction <add>, %330, %cst_111 [2] : vector<4x8x32xf32> to vector<4x8xf32>
    %332 = vector.shape_cast %331 : vector<4x8xf32> to vector<4x8x1xf32>
    %cst_112 = arith.constant 3.200000e+01 : f32
    %333 = vector.broadcast %cst_112 : f32 to vector<4x8x1xf32>
    %334 = arith.divf %332, %333 : vector<4x8x1xf32>
    %cst_113 = arith.constant 9.99999974E-6 : f32
    %335 = vector.broadcast %cst_113 : f32 to vector<4x8x1xf32>
    %336 = arith.addf %334, %335 : vector<4x8x1xf32>
    %337 = math.rsqrt %336 : vector<4x8x1xf32>
    %338 = vector.broadcast %337 : vector<4x8x1xf32> to vector<4x8x32xf32>
    %339 = arith.mulf %329, %338 : vector<4x8x32xf32>
    %340 = vector.shape_cast %322 : vector<1x32xf32> to vector<1x1x32xf32>
    %341 = vector.broadcast %340 : vector<1x1x32xf32> to vector<4x8x32xf32>
    %342 = arith.mulf %339, %341 : vector<4x8x32xf32>
    %343 = vector.shape_cast %323 : vector<1x32xf32> to vector<1x1x32xf32>
    %344 = vector.broadcast %343 : vector<1x1x32xf32> to vector<4x8x32xf32>
    %345 = arith.addf %342, %344 : vector<4x8x32xf32>
    %346 = arith.truncf %345 : vector<4x8x32xf32> to vector<4x8x32xbf16>
    %c384 = arith.constant 384 : index
    %c0_114 = arith.constant 0 : index
    %347 = vector.load %arg2[%c384, %c0_114] : memref<576x32xbf16, #tpu.memory_space<vmem>>, vector<32x32xbf16>
    %348 = vector.extract_strided_slice %346 {offsets = [0, 0, 0], sizes = [3, 8, 32], strides = [1, 1, 1]} : vector<4x8x32xbf16> to vector<3x8x32xbf16>
    "tpu.trace_start"() <{level = 10 : i32, message = "hsd,cd->hsc"}> : () -> ()
    %cst_115 = arith.constant dense<0.000000e+00> : vector<3x8x32xf32>
    %349 = tpu.matmul %348, %347, %cst_115 {dimension_numbers = #tpu.dot_dimension_numbers<[2], [1], [0, 1], [0], [0, 0, 0, 1, 1, 0], [], []>} : vector<3x8x32xbf16>, vector<32x32xbf16>, vector<3x8x32xf32> -> vector<3x8x32xf32>
    "tpu.trace_stop"() : () -> ()
    %c416 = arith.constant 416 : index
    %c0_116 = arith.constant 0 : index
    %350 = vector.load %arg2[%c416, %c0_116] : memref<576x32xbf16, #tpu.memory_space<vmem>>, vector<32x32xbf16>
    %351 = vector.extract_strided_slice %346 {offsets = [1, 0, 0], sizes = [3, 8, 32], strides = [1, 1, 1]} : vector<4x8x32xbf16> to vector<3x8x32xbf16>
    "tpu.trace_start"() <{level = 10 : i32, message = "hsd,cd->hsc"}> : () -> ()
    %cst_117 = arith.constant dense<0.000000e+00> : vector<3x8x32xf32>
    %352 = tpu.matmul %351, %350, %cst_117 {dimension_numbers = #tpu.dot_dimension_numbers<[2], [1], [0, 1], [0], [0, 0, 0, 1, 1, 0], [], []>} : vector<3x8x32xbf16>, vector<32x32xbf16>, vector<3x8x32xf32> -> vector<3x8x32xf32>
    "tpu.trace_stop"() : () -> ()
    %353 = arith.addf %349, %352 : vector<3x8x32xf32>
    %c16 = arith.constant 16 : index
    %c0_118 = arith.constant 0 : index
    %354 = vector.load %arg3[%c16, %c0_118] : memref<144x128xf32, #tpu.memory_space<vmem>>, vector<1x32xf32>
    %355 = vector.shape_cast %354 : vector<1x32xf32> to vector<1x1x32xf32>
    %356 = vector.broadcast %355 : vector<1x1x32xf32> to vector<3x8x32xf32>
    %357 = arith.addf %353, %356 : vector<3x8x32xf32>
    %cst_119 = arith.constant 0.000000e+00 : f32
    %358 = vector.broadcast %cst_119 : f32 to vector<3x8x32xf32>
    %359 = arith.maximumf %357, %358 : vector<3x8x32xf32>
    %cst_120 = arith.constant dense<0xFF800000> : vector<8x32xf32>
    %360 = vector.multi_reduction <maximumf>, %359, %cst_120 [0] : vector<3x8x32xf32> to vector<8x32xf32>
    %c448 = arith.constant 448 : index
    %c0_121 = arith.constant 0 : index
    %361 = vector.load %arg2[%c448, %c0_121] : memref<576x32xbf16, #tpu.memory_space<vmem>>, vector<128x32xbf16>
    %362 = arith.truncf %360 : vector<8x32xf32> to vector<8x32xbf16>
    "tpu.trace_start"() <{level = 10 : i32, message = "sc,nc->sn"}> : () -> ()
    %cst_122 = arith.constant dense<0.000000e+00> : vector<8x128xf32>
    %363 = tpu.matmul %362, %361, %cst_122 {dimension_numbers = #tpu.dot_dimension_numbers<[1], [1], [0], [0], [0, 0, 1, 0], [], []>} : vector<8x32xbf16>, vector<128x32xbf16>, vector<8x128xf32> -> vector<8x128xf32>
    "tpu.trace_stop"() : () -> ()
    %c17 = arith.constant 17 : index
    %c0_123 = arith.constant 0 : index
    %364 = vector.load %arg3[%c17, %c0_123] : memref<144x128xf32, #tpu.memory_space<vmem>>, vector<1x128xf32>
    %365 = vector.broadcast %364 : vector<1x128xf32> to vector<8x128xf32>
    %366 = arith.addf %363, %365 : vector<8x128xf32>
    %c0_124 = arith.constant 0 : index
    %c0_125 = arith.constant 0 : index
    %367 = vector.load %arg4[%c0_124, %c0_125] : memref<8x128xf32, #tpu.memory_space<vmem>>, vector<8x128xf32>
    tpu.vector_store %arg4[%c0_124, %c0_125], %366 {strides = array<i32>} : memref<8x128xf32, #tpu.memory_space<vmem>>, vector<8x128xf32>,
    return
  }
}

</mosaic_0001>

<llo_original>
// kernel: transformer_model_forward.1
$region0: #{transformer_model_forward.1}
  #allocation0 [shape = 'u32[]', space=smem, size = 0x4, offset = 0x4, fixed_abs, tag = 'smem constant byte address 0x4 - core index']
  #allocation1 [shape = 'u32[144,128]{1,0:T(1,128)}', space=vmem, size = 0x12000, scoped, tag = 'internal scratch']
  %s0 = inlined_call_operand.vmem [shape: s32[4,8], index: 0, kind: input, shape index: {}]
  %s1 = inlined_call_operand.vmem [shape: f32[8,8], index: 1, kind: input, shape index: {}]
  %s2 = inlined_call_operand.vmem [shape: bf16[576,32], index: 2, kind: input, shape index: {}]
  %s3 = inlined_call_operand.vmem [shape: f32[144,128], index: 3, kind: input, shape index: {}]
  %s4 = inlined_call_operand.hbm [shape: f32[8,128], index: 4, kind: output, shape index: {}]
  %s5 = sld [smem:[#allocation0]]
  $region26: #{transformer_model_forward.1} parent=0
    _
  %s7 = ssub.s32 1, %s5
  %s8 = scalar_select 0, %s7, %s5
  $region1: #{transformer_model_forward.1} parent=0
    #allocation2 [shape = 'u8[4096]{0}', space=vmem, size = 0x1000, scoped, tag = 'output window, operand 0, single buffered']
    #allocation3 [shape = 's32[1]{0}', space=sflag, size = 0x4, scoped, tag = 'scoped memory for transformer_model_forward.1']
    %9 = vsyncpa [#allocation3], 0
    // Predicated region
    $region2: #{transformer_model_forward.1} parent=1 // pred_check
      _
    $region3: #{transformer_model_forward.1} parent=1 // pred_check_branch
      %11 = sbr.rel (0) target = $region5
    $region4: #{transformer_model_forward.1} parent=1 // pred_region
      _
    $region5: #{transformer_model_forward.1} parent=1 // pred_fallthru
      _
    // Predicated region
    $region6: #{transformer_model_forward.1} parent=1 // pred_check
      _
    $region7: #{transformer_model_forward.1} parent=1 // pred_check_branch
      %13 = sbr.rel (0) target = $region9
    $region8: #{transformer_model_forward.1} parent=1 // pred_region
      _
    $region9: #{transformer_model_forward.1} parent=1 // pred_fallthru
      _
    // Predicated region
    $region10: #{transformer_model_forward.1} parent=1 // pred_check
      _
    $region11: #{transformer_model_forward.1} parent=1 // pred_check_branch
      %15 = sbr.rel (0) target = $region13
    $region12: #{transformer_model_forward.1} parent=1 // pred_region
      _
    $region13: #{transformer_model_forward.1} parent=1 // pred_fallthru
      _
    // Predicated region
    $region14: #{transformer_model_forward.1} parent=1 // pred_check
      _
    $region15: #{transformer_model_forward.1} parent=1 // pred_check_branch
      %17 = sbr.rel (0) target = $region17
    $region16: #{transformer_model_forward.1} parent=1 // pred_region
      _
    $region17: #{transformer_model_forward.1} parent=1 // pred_fallthru
      _
    %v19 = vld [vmem:[%s0] sm:$0xf]
    %v20 = vlaneseq
    %v21 = vshrl.u32 %v20, 7
    %v22 = vsub.s32 0, %v21
    %v23 = vrot.slane %v19, %v22
    %25 = vbcast.lane.b32.xlu0 %v23, 256
    %v26 = vpop.permute.xlu0 %25
    %v27 = vlaneseq
    %v28 = vshrl.u32 %v27, 7
    %v29 = vsub.s32 1, %v28
    %v30 = vrot.slane %v19, %v29
    %32 = vbcast.lane.b32.xlu0 %v30, 256
    %v33 = vpop.permute.xlu0 %32
    %v34 = vlaneseq
    %v35 = vshrl.u32 %v34, 7
    %v36 = vsub.s32 2, %v35
    %v37 = vrot.slane %v19, %v36
    %39 = vbcast.lane.b32.xlu0 %v37, 256
    %v40 = vpop.permute.xlu0 %39
    %v41 = vlaneseq
    %v42 = vshrl.u32 %v41, 7
    %v43 = vsub.s32 3, %v42
    %v44 = vrot.slane %v19, %v43
    %46 = vbcast.lane.b32.xlu0 %v44, 256
    %v47 = vpop.permute.xlu0 %46
    %v48 = vlaneseq
    %v49 = vand.u32 %v48, 127
    %vm50 = vcmp.eq.s32.totalorder %v26, %v49
    %vm51 = vcmp.eq.s32.totalorder %v33, %v49
    %vm52 = vcmp.eq.s32.totalorder %v40, %v49
    %vm53 = vcmp.eq.s32.totalorder %v47, %v49
    %v54 = vsel %vm50, 1, 0
    %v55 = vsel %vm51, 1, 0
    %v56 = vsel %vm52, 1, 0
    %v57 = vsel %vm53, 1, 0
    %v58 = vcvt.s32.f32 %v54
    %v59 = vcvt.s32.f32 %v55
    %v60 = vcvt.s32.f32 %v56
    %v61 = vcvt.s32.f32 %v57
    %v62 = vld [vmem:[%s3 + $0x58] sm:$0xff]
    %v63 = vld [vmem:[%s3 + $0x60] sm:$0xff]
    %v64 = vld [vmem:[%s3 + $0x68] sm:$0xff]
    %v65 = vld [vmem:[%s3 + $0x70] sm:$0xff]
    %v66 = vld [vmem:[%s3 + $0x78] sm:$0xff]
    %v67 = vld [vmem:[%s3 + $0x80] sm:$0xff]
    %v68 = vld [vmem:[%s3 + $0x88] sm:$0xff]
    %vm69 = vcmask 457728
    %v71 = vsel %vm69, %v58, 0
    %v74 = vsel %vm69, %v59, 0
    %v77 = vsel %vm69, %v60, 0
    %v80 = vsel %vm69, %v61, 0
    %82 = vmatprep.subr.mxu0 0.0
    %83 = vmatpush1.msra.mxu0 0.0
    %84 = vmatprep.subr.mxu0 0.0
    %85 = vmatpush1.msra.mxu0 0.0
    %86 = vmatprep.subr.mxu0 0.0
    %87 = vmatpush1.msra.mxu0 0.0
    %88 = vmatprep.subr.mxu0 0.0
    %89 = vmatpush1.msra.mxu0 0.0
    %90 = vmatprep.subr.mxu0 0.0
    %91 = vmatpush1.msra.mxu0 0.0
    %92 = vmatprep.subr.mxu0 0.0
    %93 = vmatpush1.msra.mxu0 0.0
    %94 = vmatprep.subr.mxu0 0.0
    %95 = vmatpush1.msra.mxu0 0.0
    %96 = vmatprep.subr.mxu0 0.0
    %97 = vmatpush1.msra.mxu0 0.0
    %98 = vmatprep.subr.mxu0 0.0
    %99 = vmatpush1.msra.mxu0 0.0
    %100 = vmatprep.subr.mxu0 0.0
    %101 = vmatpush1.msra.mxu0 %v68
    %102 = vmatprep.subr.mxu0 0.0
    %103 = vmatpush1.msra.mxu0 %v67
    %104 = vmatprep.subr.mxu0 0.0
    %105 = vmatpush1.msra.mxu0 %v66
    %106 = vmatprep.subr.mxu0 0.0
    %107 = vmatpush1.msra.mxu0 %v65
    %108 = vmatprep.subr.mxu0 0.0
    %109 = vmatpush1.msra.mxu0 %v64
    %110 = vmatprep.subr.mxu0 0.0
    %111 = vmatpush1.msra.mxu0 %v63
    %112 = vmatprep.subr.mxu0 0.0
    %113 = vmatpush1.msra.mxu0 %v62
    %114 = vmatprep.subr.mxu0 0.0
    %115 = vmatpush2.msra.mxu0 0.0
    %116 = vmatprep.subr.mxu0 0.0
    %117 = vmatpush2.msra.mxu0 0.0
    %118 = vmatprep.subr.mxu0 0.0
    %119 = vmatpush2.msra.mxu0 0.0
    %120 = vmatprep.subr.mxu0 0.0
    %121 = vmatpush2.msra.mxu0 0.0
    %122 = vmatprep.subr.mxu0 0.0
    %123 = vmatpush2.msra.mxu0 0.0
    %124 = vmatprep.subr.mxu0 0.0
    %125 = vmatpush2.msra.mxu0 0.0
    %126 = vmatprep.subr.mxu0 0.0
    %127 = vmatpush2.msra.mxu0 0.0
    %128 = vmatprep.subr.mxu0 0.0
    %129 = vmatpush2.msra.mxu0 0.0
    %130 = vmatprep.subr.mxu0 0.0
    %131 = vmatpush2.msra.mxu0 0.0
    %132 = vmatprep.subr.mxu0 0.0
    %133 = vmatpush2.msra.mxu0 0.0
    %134 = vmatprep.subr.mxu0 0.0
    %135 = vmatpush2.msra.mxu0 0.0
    %136 = vmatprep.subr.mxu0 0.0
    %137 = vmatpush2.msra.mxu0 0.0
    %138 = vmatprep.subr.mxu0 0.0
    %139 = vmatpush2.msra.mxu0 0.0
    %140 = vmatprep.subr.mxu0 0.0
    %141 = vmatpush2.msra.mxu0 0.0
    %142 = vmatprep.subr.mxu0 0.0
    %143 = vmatpush2.msra.mxu0 0.0
    %144 = vmatprep.subr.mxu0 0.0
    %145 = vmatpush2.msra.mxu0 0.0
    %146 = vmatprep.mubr.f32.mxu0 0.0
    %147 = vmatmul.mubr.f32.gmra.mxu0 %v71
    %v148 = vpop.f32.mrf.mxu0
    %v149 = vadd.f32 0.0, %v148
    %v150 = vpop.f32.mrf.mxu0
    %151 = vmatprep.mubr.f32.mxu0 0.0
    %152 = vmatmul.mubr.f32.gmra.mxu0 %v74
    %v153 = vpop.f32.mrf.mxu0
    %v154 = vadd.f32 0.0, %v153
    %v155 = vpop.f32.mrf.mxu0
    %156 = vmatprep.mubr.f32.mxu0 0.0
    %157 = vmatmul.mubr.f32.gmra.mxu0 %v77
    %v158 = vpop.f32.mrf.mxu0
    %v159 = vadd.f32 0.0, %v158
    %v160 = vpop.f32.mrf.mxu0
    %161 = vmatprep.mubr.f32.mxu0 0.0
    %162 = vmatmul.mubr.f32.gmra.mxu0 %v80
    %v163 = vpop.f32.mrf.mxu0
    %v164 = vadd.f32 0.0, %v163
    %v165 = vpop.f32.mrf.mxu0
    %166 = vdwg.mxu0
    %v167 = vmul.f32 %v149, 5.656854
    %v168 = vmul.f32 %v154, 5.656854
    %v169 = vmul.f32 %v159, 5.656854
    %v170 = vmul.f32 %v164, 5.656854
    %v171 = vld [vmem:[%s3 + $0x18] sm:$0xff]
    %v172 = vadd.f32 %v167, %v171
    %v173 = vadd.f32 %v168, %v171
    %v174 = vadd.f32 %v169, %v171
    %v175 = vadd.f32 %v170, %v171
    %v176 = vld [vmem:[%s1] sm:$0xff]
    %v177 = vpack.c.bf16 %v172, %v172
    %v178 = vpack.c.bf16 %v173, %v173
    %v179 = vpack.c.bf16 %v174, %v174
    %v180 = vpack.c.bf16 %v175, %v175
    %v181 = vld [vmem:[%s2] sm:$0xf]
    %v182 = vld [vmem:[%s2 + $0x4] sm:$0xf]
    %v183 = vld [vmem:[%s2 + $0x8] sm:$0xf]
    %v184 = vld [vmem:[%s2 + $0xc] sm:$0xf]
    %v185 = vld [vmem:[%s2 + $0x10] sm:$0xf]
    %v186 = vld [vmem:[%s2 + $0x14] sm:$0xf]
    %v187 = vld [vmem:[%s2 + $0x18] sm:$0xf]
    %v188 = vld [vmem:[%s2 + $0x1c] sm:$0xf]
    %v189 = vld [vmem:[%s2 + $0x20] sm:$0xf]
    %v190 = vld [vmem:[%s2 + $0x24] sm:$0xf]
    %v191 = vld [vmem:[%s2 + $0x28] sm:$0xf]
    %v192 = vld [vmem:[%s2 + $0x2c] sm:$0xf]
    %v193 = vld [vmem:[%s3] sm:$0x1]
    %v194 = vlaneseq
    %v195 = vshrl.u32 %v194, 7
    %v196 = vsub.s32 0, %v195
    %v197 = vrot.slane %v193, %v196
    %v202 = vunpack.c.l.b16 %v177
    %v203 = vunpack.c.l.b16 %v178
    %v204 = vunpack.c.l.b16 %v179
    %v205 = vunpack.c.l.b16 %v180
    %v206 = vpack.c.b16 %v203, %v202
    %v207 = vpack.c.b16 %v205, %v204
    %v220 = vunpack.c.l.b16 %v181
    %v221 = vunpack.c.l.b16 %v182
    %v222 = vunpack.c.l.b16 %v183
    %v223 = vunpack.c.l.b16 %v184
    %v224 = vunpack.c.l.b16 %v185
    %v225 = vunpack.c.l.b16 %v186
    %v226 = vunpack.c.l.b16 %v187
    %v227 = vunpack.c.l.b16 %v188
    %v228 = vunpack.c.l.b16 %v189
    %v229 = vunpack.c.l.b16 %v190
    %v230 = vunpack.c.l.b16 %v191
    %v231 = vunpack.c.l.b16 %v192
    %v232 = vpack.c.b16 %v221, %v220
    %v233 = vpack.c.b16 %v223, %v222
    %v234 = vpack.c.b16 %v225, %v224
    %v235 = vpack.c.b16 %v227, %v226
    %v236 = vpack.c.b16 %v229, %v228
    %v237 = vpack.c.b16 %v231, %v230
    %vm238 = vcmask 261120
    %v240 = vsel %vm238, %v206, 0
    %v243 = vsel %vm238, %v207, 0
    %v246 = vsel %vm238, %v232, 0
    %v249 = vsel %vm238, %v233, 0
    %v252 = vsel %vm238, %v234, 0
    %v255 = vsel %vm238, %v235, 0
    %v258 = vsel %vm238, %v236, 0
    %v261 = vsel %vm238, %v237, 0
    %263 = vmatprep.subr.bf16.mxu0 0
    %264 = vmatpush1.bf16.xpose.msra.mxu0 0
    %265 = vmatprep.subr.bf16.mxu0 0
    %266 = vmatpush1.bf16.xpose.msra.mxu0 0
    %267 = vmatprep.subr.bf16.mxu0 0
    %268 = vmatpush1.bf16.xpose.msra.mxu0 %v261
    %269 = vmatprep.subr.bf16.mxu0 0
    %270 = vmatpush1.bf16.xpose.msra.mxu0 %v258
    %271 = vmatprep.subr.bf16.mxu0 0
    %272 = vmatpush1.bf16.xpose.msra.mxu0 %v255
    %273 = vmatprep.subr.bf16.mxu0 0
    %274 = vmatpush1.bf16.xpose.msra.mxu0 %v252
    %275 = vmatprep.subr.bf16.mxu0 0
    %276 = vmatpush1.bf16.xpose.msra.mxu0 %v249
    %277 = vmatprep.subr.bf16.mxu0 0
    %278 = vmatpush1.bf16.xpose.msra.mxu0 %v246
    %279 = vmatprep.subr.bf16.mxu0 0
    %280 = vmatpush2.bf16.xpose.msra.mxu0 0
    %281 = vmatprep.subr.bf16.mxu0 0
    %282 = vmatpush2.bf16.xpose.msra.mxu0 0
    %283 = vmatprep.subr.bf16.mxu0 0
    %284 = vmatpush2.bf16.xpose.msra.mxu0 0
    %285 = vmatprep.subr.bf16.mxu0 0
    %286 = vmatpush2.bf16.xpose.msra.mxu0 0
    %287 = vmatprep.subr.bf16.mxu0 0
    %288 = vmatpush2.bf16.xpose.msra.mxu0 0
    %289 = vmatprep.subr.bf16.mxu0 0
    %290 = vmatpush2.bf16.xpose.msra.mxu0 0
    %291 = vmatprep.subr.bf16.mxu0 0
    %292 = vmatpush2.bf16.xpose.msra.mxu0 0
    %293 = vmatprep.subr.bf16.mxu0 0
    %294 = vmatpush2.bf16.xpose.msra.mxu0 0
    %295 = vmatprep.mubr.bf16.mxu0 0
    %296 = vmatmul.mubr.bf16.gmra.mxu0 %v240
    %v297 = vpop.f32.mrf.mxu0
    %v298 = vadd.f32 %v197, %v297
    %v299 = vpop.f32.mrf.mxu0
    %v300 = vpop.f32.mrf.mxu0
    %v301 = vadd.f32 %v197, %v300
    %v302 = vpop.f32.mrf.mxu0
    %303 = vmatprep.mubr.bf16.mxu0 0
    %304 = vmatmul.mubr.bf16.gmra.mxu0 %v243
    %v305 = vpop.f32.mrf.mxu0
    %v306 = vadd.f32 %v197, %v305
    %v307 = vpop.f32.mrf.mxu0
    %v308 = vpop.f32.mrf.mxu0
    %v309 = vadd.f32 %v197, %v308
    %v310 = vpop.f32.mrf.mxu0
    %311 = vdwg.mxu0
    %313 = vrot.lane.b32.xlu0 %v298, 96
    %v314 = vpop.permute.xlu0 %313
    %vm315 = vcmask 64512
    %v316 = vsel %vm315, %v298, 0
    %v318 = vsel %vm315, %v314, 0
    %320 = vmatprep.subr.mxu0 0.0
    %321 = vmatpush1.xpose.msra.mxu0 0.0
    %322 = vmatprep.subr.mxu0 0.0
    %323 = vmatpush1.xpose.msra.mxu0 0.0
    %324 = vmatprep.subr.mxu0 0.0
    %325 = vmatpush1.xpose.msra.mxu0 0.0
    %326 = vmatprep.subr.mxu0 0.0
    %327 = vmatpush1.xpose.msra.mxu0 0.0
    %328 = vmatprep.subr.mxu0 0.0
    %329 = vmatpush1.xpose.msra.mxu0 0.0
    %330 = vmatprep.subr.mxu0 0.0
    %331 = vmatpush1.xpose.msra.mxu0 0.0
    %332 = vmatprep.subr.mxu0 0.0
    %333 = vmatpush1.xpose.msra.mxu0 0.0
    %334 = vmatprep.subr.mxu0 0.0
    %335 = vmatpush1.xpose.msra.mxu0 0.0
    %336 = vmatprep.subr.mxu0 0.0
    %337 = vmatpush1.xpose.msra.mxu0 0.0
    %338 = vmatprep.subr.mxu0 0.0
    %339 = vmatpush1.xpose.msra.mxu0 0.0
    %340 = vmatprep.subr.mxu0 0.0
    %341 = vmatpush1.xpose.msra.mxu0 0.0
    %342 = vmatprep.subr.mxu0 0.0
    %343 = vmatpush1.xpose.msra.mxu0 0.0
    %344 = vmatprep.subr.mxu0 0.0
    %345 = vmatpush1.xpose.msra.mxu0 0.0
    %346 = vmatprep.subr.mxu0 0.0
    %347 = vmatpush1.xpose.msra.mxu0 0.0
    %348 = vmatprep.subr.mxu0 0.0
    %349 = vmatpush1.xpose.msra.mxu0 0.0
    %350 = vmatprep.subr.mxu0 0.0
    %351 = vmatpush1.xpose.msra.mxu0 %v318
    %352 = vmatprep.subr.mxu0 0.0
    %353 = vmatpush2.xpose.msra.mxu0 0.0
    %354 = vmatprep.subr.mxu0 0.0
    %355 = vmatpush2.xpose.msra.mxu0 0.0
    %356 = vmatprep.subr.mxu0 0.0
    %357 = vmatpush2.xpose.msra.mxu0 0.0
    %358 = vmatprep.subr.mxu0 0.0
    %359 = vmatpush2.xpose.msra.mxu0 0.0
    %360 = vmatprep.subr.mxu0 0.0
    %361 = vmatpush2.xpose.msra.mxu0 0.0
    %362 = vmatprep.subr.mxu0 0.0
    %363 = vmatpush2.xpose.msra.mxu0 0.0
    %364 = vmatprep.subr.mxu0 0.0
    %365 = vmatpush2.xpose.msra.mxu0 0.0
    %366 = vmatprep.subr.mxu0 0.0
    %367 = vmatpush2.xpose.msra.mxu0 0.0
    %368 = vmatprep.subr.mxu0 0.0
    %369 = vmatpush2.xpose.msra.mxu0 0.0
    %370 = vmatprep.subr.mxu0 0.0
    %371 = vmatpush2.xpose.msra.mxu0 0.0
    %372 = vmatprep.subr.mxu0 0.0
    %373 = vmatpush2.xpose.msra.mxu0 0.0
    %374 = vmatprep.subr.mxu0 0.0
    %375 = vmatpush2.xpose.msra.mxu0 0.0
    %376 = vmatprep.subr.mxu0 0.0
    %377 = vmatpush2.xpose.msra.mxu0 0.0
    %378 = vmatprep.subr.mxu0 0.0
    %379 = vmatpush2.xpose.msra.mxu0 0.0
    %380 = vmatprep.subr.mxu0 0.0
    %381 = vmatpush2.xpose.msra.mxu0 0.0
    %382 = vmatprep.subr.mxu0 0.0
    %383 = vmatpush2.xpose.msra.mxu0 0.0
    %384 = vmatprep.mubr.f32.mxu0 0.0
    %385 = vmatmul.mubr.f32.gmra.mxu0 %v316
    %v386 = vpop.f32.mrf.mxu0
    %v387 = vadd.f32 0.0, %v386
    %v388 = vpop.f32.mrf.mxu0
    %389 = vdwg.mxu0
    %391 = vrot.lane.b32.xlu0 %v301, 96
    %v392 = vpop.permute.xlu0 %391
    %v393 = vsel %vm315, %v301, 0
    %v395 = vsel %vm315, %v392, 0
    %397 = vmatprep.subr.mxu0 0.0
    %398 = vmatpush1.xpose.msra.mxu0 0.0
    %399 = vmatprep.subr.mxu0 0.0
    %400 = vmatpush1.xpose.msra.mxu0 0.0
    %401 = vmatprep.subr.mxu0 0.0
    %402 = vmatpush1.xpose.msra.mxu0 0.0
    %403 = vmatprep.subr.mxu0 0.0
    %404 = vmatpush1.xpose.msra.mxu0 0.0
    %405 = vmatprep.subr.mxu0 0.0
    %406 = vmatpush1.xpose.msra.mxu0 0.0
    %407 = vmatprep.subr.mxu0 0.0
    %408 = vmatpush1.xpose.msra.mxu0 0.0
    %409 = vmatprep.subr.mxu0 0.0
    %410 = vmatpush1.xpose.msra.mxu0 0.0
    %411 = vmatprep.subr.mxu0 0.0
    %412 = vmatpush1.xpose.msra.mxu0 0.0
    %413 = vmatprep.subr.mxu0 0.0
    %414 = vmatpush1.xpose.msra.mxu0 0.0
    %415 = vmatprep.subr.mxu0 0.0
    %416 = vmatpush1.xpose.msra.mxu0 0.0
    %417 = vmatprep.subr.mxu0 0.0
    %418 = vmatpush1.xpose.msra.mxu0 0.0
    %419 = vmatprep.subr.mxu0 0.0
    %420 = vmatpush1.xpose.msra.mxu0 0.0
    %421 = vmatprep.subr.mxu0 0.0
    %422 = vmatpush1.xpose.msra.mxu0 0.0
    %423 = vmatprep.subr.mxu0 0.0
    %424 = vmatpush1.xpose.msra.mxu0 0.0
    %425 = vmatprep.subr.mxu0 0.0
    %426 = vmatpush1.xpose.msra.mxu0 0.0
    %427 = vmatprep.subr.mxu0 0.0
    %428 = vmatpush1.xpose.msra.mxu0 %v395
    %429 = vmatprep.subr.mxu0 0.0
    %430 = vmatpush2.xpose.msra.mxu0 0.0
    %431 = vmatprep.subr.mxu0 0.0
    %432 = vmatpush2.xpose.msra.mxu0 0.0
    %433 = vmatprep.subr.mxu0 0.0
    %434 = vmatpush2.xpose.msra.mxu0 0.0
    %435 = vmatprep.subr.mxu0 0.0
    %436 = vmatpush2.xpose.msra.mxu0 0.0
    %437 = vmatprep.subr.mxu0 0.0
    %438 = vmatpush2.xpose.msra.mxu0 0.0
    %439 = vmatprep.subr.mxu0 0.0
    %440 = vmatpush2.xpose.msra.mxu0 0.0
    %441 = vmatprep.subr.mxu0 0.0
    %442 = vmatpush2.xpose.msra.mxu0 0.0
    %443 = vmatprep.subr.mxu0 0.0
    %444 = vmatpush2.xpose.msra.mxu0 0.0
    %445 = vmatprep.subr.mxu0 0.0
    %446 = vmatpush2.xpose.msra.mxu0 0.0
    %447 = vmatprep.subr.mxu0 0.0
    %448 = vmatpush2.xpose.msra.mxu0 0.0
    %449 = vmatprep.subr.mxu0 0.0
    %450 = vmatpush2.xpose.msra.mxu0 0.0
    %451 = vmatprep.subr.mxu0 0.0
    %452 = vmatpush2.xpose.msra.mxu0 0.0
    %453 = vmatprep.subr.mxu0 0.0
    %454 = vmatpush2.xpose.msra.mxu0 0.0
    %455 = vmatprep.subr.mxu0 0.0
    %456 = vmatpush2.xpose.msra.mxu0 0.0
    %457 = vmatprep.subr.mxu0 0.0
    %458 = vmatpush2.xpose.msra.mxu0 0.0
    %459 = vmatprep.subr.mxu0 0.0
    %460 = vmatpush2.xpose.msra.mxu0 0.0
    %461 = vmatprep.mubr.f32.mxu0 0.0
    %462 = vmatmul.mubr.f32.gmra.mxu0 %v393
    %v463 = vpop.f32.mrf.mxu0
    %v464 = vadd.f32 0.0, %v463
    %v465 = vpop.f32.mrf.mxu0
    %466 = vdwg.mxu0
    %468 = vrot.lane.b32.xlu0 %v306, 96
    %v469 = vpop.permute.xlu0 %468
    %v470 = vsel %vm315, %v306, 0
    %v472 = vsel %vm315, %v469, 0
    %474 = vmatprep.subr.mxu0 0.0
    %475 = vmatpush1.xpose.msra.mxu0 0.0
    %476 = vmatprep.subr.mxu0 0.0
    %477 = vmatpush1.xpose.msra.mxu0 0.0
    %478 = vmatprep.subr.mxu0 0.0
    %479 = vmatpush1.xpose.msra.mxu0 0.0
    %480 = vmatprep.subr.mxu0 0.0
    %481 = vmatpush1.xpose.msra.mxu0 0.0
    %482 = vmatprep.subr.mxu0 0.0
    %483 = vmatpush1.xpose.msra.mxu0 0.0
    %484 = vmatprep.subr.mxu0 0.0
    %485 = vmatpush1.xpose.msra.mxu0 0.0
    %486 = vmatprep.subr.mxu0 0.0
    %487 = vmatpush1.xpose.msra.mxu0 0.0
    %488 = vmatprep.subr.mxu0 0.0
    %489 = vmatpush1.xpose.msra.mxu0 0.0
    %490 = vmatprep.subr.mxu0 0.0
    %491 = vmatpush1.xpose.msra.mxu0 0.0
    %492 = vmatprep.subr.mxu0 0.0
    %493 = vmatpush1.xpose.msra.mxu0 0.0
    %494 = vmatprep.subr.mxu0 0.0
    %495 = vmatpush1.xpose.msra.mxu0 0.0
    %496 = vmatprep.subr.mxu0 0.0
    %497 = vmatpush1.xpose.msra.mxu0 0.0
    %498 = vmatprep.subr.mxu0 0.0
    %499 = vmatpush1.xpose.msra.mxu0 0.0
    %500 = vmatprep.subr.mxu0 0.0
    %501 = vmatpush1.xpose.msra.mxu0 0.0
    %502 = vmatprep.subr.mxu0 0.0
    %503 = vmatpush1.xpose.msra.mxu0 0.0
    %504 = vmatprep.subr.mxu0 0.0
    %505 = vmatpush1.xpose.msra.mxu0 %v472
    %506 = vmatprep.subr.mxu0 0.0
    %507 = vmatpush2.xpose.msra.mxu0 0.0
    %508 = vmatprep.subr.mxu0 0.0
    %509 = vmatpush2.xpose.msra.mxu0 0.0
    %510 = vmatprep.subr.mxu0 0.0
    %511 = vmatpush2.xpose.msra.mxu0 0.0
    %512 = vmatprep.subr.mxu0 0.0
    %513 = vmatpush2.xpose.msra.mxu0 0.0
    %514 = vmatprep.subr.mxu0 0.0
    %515 = vmatpush2.xpose.msra.mxu0 0.0
    %516 = vmatprep.subr.mxu0 0.0
    %517 = vmatpush2.xpose.msra.mxu0 0.0
    %518 = vmatprep.subr.mxu0 0.0
    %519 = vmatpush2.xpose.msra.mxu0 0.0
    %520 = vmatprep.subr.mxu0 0.0
    %521 = vmatpush2.xpose.msra.mxu0 0.0
    %522 = vmatprep.subr.mxu0 0.0
    %523 = vmatpush2.xpose.msra.mxu0 0.0
    %524 = vmatprep.subr.mxu0 0.0
    %525 = vmatpush2.xpose.msra.mxu0 0.0
    %526 = vmatprep.subr.mxu0 0.0
    %527 = vmatpush2.xpose.msra.mxu0 0.0
    %528 = vmatprep.subr.mxu0 0.0
    %529 = vmatpush2.xpose.msra.mxu0 0.0
    %530 = vmatprep.subr.mxu0 0.0
    %531 = vmatpush2.xpose.msra.mxu0 0.0
    %532 = vmatprep.subr.mxu0 0.0
    %533 = vmatpush2.xpose.msra.mxu0 0.0
    %534 = vmatprep.subr.mxu0 0.0
    %535 = vmatpush2.xpose.msra.mxu0 0.0
    %536 = vmatprep.subr.mxu0 0.0
    %537 = vmatpush2.xpose.msra.mxu0 0.0
    %538 = vmatprep.mubr.f32.mxu0 0.0
    %539 = vmatmul.mubr.f32.gmra.mxu0 %v470
    %v540 = vpop.f32.mrf.mxu0
    %v541 = vadd.f32 0.0, %v540
    %v542 = vpop.f32.mrf.mxu0
    %543 = vdwg.mxu0
    %545 = vrot.lane.b32.xlu0 %v309, 96
    %v546 = vpop.permute.xlu0 %545
    %v547 = vsel %vm315, %v309, 0
    %v549 = vsel %vm315, %v546, 0
    %551 = vmatprep.subr.mxu0 0.0
    %552 = vmatpush1.xpose.msra.mxu0 0.0
    %553 = vmatprep.subr.mxu0 0.0
    %554 = vmatpush1.xpose.msra.mxu0 0.0
    %555 = vmatprep.subr.mxu0 0.0
    %556 = vmatpush1.xpose.msra.mxu0 0.0
    %557 = vmatprep.subr.mxu0 0.0
    %558 = vmatpush1.xpose.msra.mxu0 0.0
    %559 = vmatprep.subr.mxu0 0.0
    %560 = vmatpush1.xpose.msra.mxu0 0.0
    %561 = vmatprep.subr.mxu0 0.0
    %562 = vmatpush1.xpose.msra.mxu0 0.0
    %563 = vmatprep.subr.mxu0 0.0
    %564 = vmatpush1.xpose.msra.mxu0 0.0
    %565 = vmatprep.subr.mxu0 0.0
    %566 = vmatpush1.xpose.msra.mxu0 0.0
    %567 = vmatprep.subr.mxu0 0.0
    %568 = vmatpush1.xpose.msra.mxu0 0.0
    %569 = vmatprep.subr.mxu0 0.0
    %570 = vmatpush1.xpose.msra.mxu0 0.0
    %571 = vmatprep.subr.mxu0 0.0
    %572 = vmatpush1.xpose.msra.mxu0 0.0
    %573 = vmatprep.subr.mxu0 0.0
    %574 = vmatpush1.xpose.msra.mxu0 0.0
    %575 = vmatprep.subr.mxu0 0.0
    %576 = vmatpush1.xpose.msra.mxu0 0.0
    %577 = vmatprep.subr.mxu0 0.0
    %578 = vmatpush1.xpose.msra.mxu0 0.0
    %579 = vmatprep.subr.mxu0 0.0
    %580 = vmatpush1.xpose.msra.mxu0 0.0
    %581 = vmatprep.subr.mxu0 0.0
    %582 = vmatpush1.xpose.msra.mxu0 %v549
    %583 = vmatprep.subr.mxu0 0.0
    %584 = vmatpush2.xpose.msra.mxu0 0.0
    %585 = vmatprep.subr.mxu0 0.0
    %586 = vmatpush2.xpose.msra.mxu0 0.0
    %587 = vmatprep.subr.mxu0 0.0
    %588 = vmatpush2.xpose.msra.mxu0 0.0
    %589 = vmatprep.subr.mxu0 0.0
    %590 = vmatpush2.xpose.msra.mxu0 0.0
    %591 = vmatprep.subr.mxu0 0.0
    %592 = vmatpush2.xpose.msra.mxu0 0.0
    %593 = vmatprep.subr.mxu0 0.0
    %594 = vmatpush2.xpose.msra.mxu0 0.0
    %595 = vmatprep.subr.mxu0 0.0
    %596 = vmatpush2.xpose.msra.mxu0 0.0
    %597 = vmatprep.subr.mxu0 0.0
    %598 = vmatpush2.xpose.msra.mxu0 0.0
    %599 = vmatprep.subr.mxu0 0.0
    %600 = vmatpush2.xpose.msra.mxu0 0.0
    %601 = vmatprep.subr.mxu0 0.0
    %602 = vmatpush2.xpose.msra.mxu0 0.0
    %603 = vmatprep.subr.mxu0 0.0
    %604 = vmatpush2.xpose.msra.mxu0 0.0
    %605 = vmatprep.subr.mxu0 0.0
    %606 = vmatpush2.xpose.msra.mxu0 0.0
    %607 = vmatprep.subr.mxu0 0.0
    %608 = vmatpush2.xpose.msra.mxu0 0.0
    %609 = vmatprep.subr.mxu0 0.0
    %610 = vmatpush2.xpose.msra.mxu0 0.0
    %611 = vmatprep.subr.mxu0 0.0
    %612 = vmatpush2.xpose.msra.mxu0 0.0
    %613 = vmatprep.subr.mxu0 0.0
    %614 = vmatpush2.xpose.msra.mxu0 0.0
    %615 = vmatprep.mubr.f32.mxu0 0.0
    %616 = vmatmul.mubr.f32.gmra.mxu0 %v547
    %v617 = vpop.f32.mrf.mxu0
    %v618 = vadd.f32 0.0, %v617
    %v619 = vpop.f32.mrf.mxu0
    %620 = vdwg.mxu0
    %v621 = vmul.f32 %v387, 0.35355338
    %v622 = vmul.f32 %v464, 0.35355338
    %v623 = vmul.f32 %v541, 0.35355338
    %v624 = vmul.f32 %v618, 0.35355338
    %v625 = vadd.f32 %v621, %v176
    %v626 = vadd.f32 %v622, %v176
    %v627 = vadd.f32 %v623, %v176
    %v628 = vadd.f32 %v624, %v176
    %v629 = vsel %vm315, %v625, -inf
    %630 = vmax.xlane.f32.xlu0 %v629
    %v631 = vpop.xlane.xlu0 %630
    %v632 = vsel %vm315, %v626, -inf
    %633 = vmax.xlane.f32.xlu0 %v632
    %v634 = vpop.xlane.xlu0 %633
    %v635 = vsel %vm315, %v627, -inf
    %636 = vmax.xlane.f32.xlu0 %v635
    %v637 = vpop.xlane.xlu0 %636
    %v638 = vsel %vm315, %v628, -inf
    %639 = vmax.xlane.f32.xlu0 %v638
    %v640 = vpop.xlane.xlu0 %639
    %v641 = vsub.f32 %v625, %v631
    %v642 = vsub.f32 %v626, %v634
    %v643 = vsub.f32 %v627, %v637
    %v644 = vsub.f32 %v628, %v640
    %v645 = vmul.f32 %v641, 1.442695
    %v646 = vpow.pop %v645
    %v647 = vmul.f32 %v642, 1.442695
    %v648 = vpow.pop %v647
    %v649 = vmul.f32 %v643, 1.442695
    %v650 = vpow.pop %v649
    %v651 = vmul.f32 %v644, 1.442695
    %v652 = vpow.pop %v651
    %v653 = vsel %vm315, %v646, 0.0
    %654 = vadd.xlane.f32.xlu0 %v653
    %v655 = vpop.xlane.xlu0 %654
    %v656 = vsel %vm315, %v648, 0.0
    %657 = vadd.xlane.f32.xlu0 %v656
    %v658 = vpop.xlane.xlu0 %657
    %v659 = vsel %vm315, %v650, 0.0
    %660 = vadd.xlane.f32.xlu0 %v659
    %v661 = vpop.xlane.xlu0 %660
    %v662 = vsel %vm315, %v652, 0.0
    %663 = vadd.xlane.f32.xlu0 %v662
    %v664 = vpop.xlane.xlu0 %663
    %v665 = vrcp.pop %v655
    %v666 = vrcp.pop %v658
    %v667 = vrcp.pop %v661
    %v668 = vrcp.pop %v664
    %v669 = vmul.f32 %v646, %v665
    %v670 = vmul.f32 %v648, %v666
    %v671 = vmul.f32 %v650, %v667
    %v672 = vmul.f32 %v652, %v668
    %673 = vrot.lane.b32.xlu0 %v298, 64
    %v674 = vpop.permute.xlu0 %673
    %v677 = vsel %vm315, %v669, 0
    %679 = vmatprep.subr.mxu0 0.0
    %680 = vmatpush1.msra.mxu0 0.0
    %681 = vmatprep.subr.mxu0 0.0
    %682 = vmatpush1.msra.mxu0 0.0
    %683 = vmatprep.subr.mxu0 0.0
    %684 = vmatpush1.msra.mxu0 0.0
    %685 = vmatprep.subr.mxu0 0.0
    %686 = vmatpush1.msra.mxu0 0.0
    %687 = vmatprep.subr.mxu0 0.0
    %688 = vmatpush1.msra.mxu0 0.0
    %689 = vmatprep.subr.mxu0 0.0
    %690 = vmatpush1.msra.mxu0 0.0
    %691 = vmatprep.subr.mxu0 0.0
    %692 = vmatpush1.msra.mxu0 0.0
    %693 = vmatprep.subr.mxu0 0.0
    %694 = vmatpush1.msra.mxu0 0.0
    %695 = vmatprep.subr.mxu0 0.0
    %696 = vmatpush1.msra.mxu0 0.0
    %697 = vmatprep.subr.mxu0 0.0
    %698 = vmatpush1.msra.mxu0 0.0
    %699 = vmatprep.subr.mxu0 0.0
    %700 = vmatpush1.msra.mxu0 0.0
    %701 = vmatprep.subr.mxu0 0.0
    %702 = vmatpush1.msra.mxu0 0.0
    %703 = vmatprep.subr.mxu0 0.0
    %704 = vmatpush1.msra.mxu0 0.0
    %705 = vmatprep.subr.mxu0 0.0
    %706 = vmatpush1.msra.mxu0 0.0
    %707 = vmatprep.subr.mxu0 0.0
    %708 = vmatpush1.msra.mxu0 0.0
    %709 = vmatprep.subr.mxu0 0.0
    %710 = vmatpush1.msra.mxu0 %v674
    %711 = vmatprep.subr.mxu0 0.0
    %712 = vmatpush2.msra.mxu0 0.0
    %713 = vmatprep.subr.mxu0 0.0
    %714 = vmatpush2.msra.mxu0 0.0
    %715 = vmatprep.subr.mxu0 0.0
    %716 = vmatpush2.msra.mxu0 0.0
    %717 = vmatprep.subr.mxu0 0.0
    %718 = vmatpush2.msra.mxu0 0.0
    %719 = vmatprep.subr.mxu0 0.0
    %720 = vmatpush2.msra.mxu0 0.0
    %721 = vmatprep.subr.mxu0 0.0
    %722 = vmatpush2.msra.mxu0 0.0
    %723 = vmatprep.subr.mxu0 0.0
    %724 = vmatpush2.msra.mxu0 0.0
    %725 = vmatprep.subr.mxu0 0.0
    %726 = vmatpush2.msra.mxu0 0.0
    %727 = vmatprep.subr.mxu0 0.0
    %728 = vmatpush2.msra.mxu0 0.0
    %729 = vmatprep.subr.mxu0 0.0
    %730 = vmatpush2.msra.mxu0 0.0
    %731 = vmatprep.subr.mxu0 0.0
    %732 = vmatpush2.msra.mxu0 0.0
    %733 = vmatprep.subr.mxu0 0.0
    %734 = vmatpush2.msra.mxu0 0.0
    %735 = vmatprep.subr.mxu0 0.0
    %736 = vmatpush2.msra.mxu0 0.0
    %737 = vmatprep.subr.mxu0 0.0
    %738 = vmatpush2.msra.mxu0 0.0
    %739 = vmatprep.subr.mxu0 0.0
    %740 = vmatpush2.msra.mxu0 0.0
    %741 = vmatprep.subr.mxu0 0.0
    %742 = vmatpush2.msra.mxu0 0.0
    %743 = vmatprep.mubr.f32.mxu0 0.0
    %744 = vmatmul.mubr.f32.gmra.mxu0 %v677
    %v745 = vpop.f32.mrf.mxu0
    %v746 = vadd.f32 0.0, %v745
    %v747 = vpop.f32.mrf.mxu0
    %748 = vdwg.mxu0
    %749 = vrot.lane.b32.xlu0 %v301, 64
    %v750 = vpop.permute.xlu0 %749
    %v753 = vsel %vm315, %v670, 0
    %755 = vmatprep.subr.mxu0 0.0
    %756 = vmatpush1.msra.mxu0 0.0
    %757 = vmatprep.subr.mxu0 0.0
    %758 = vmatpush1.msra.mxu0 0.0
    %759 = vmatprep.subr.mxu0 0.0
    %760 = vmatpush1.msra.mxu0 0.0
    %761 = vmatprep.subr.mxu0 0.0
    %762 = vmatpush1.msra.mxu0 0.0
    %763 = vmatprep.subr.mxu0 0.0
    %764 = vmatpush1.msra.mxu0 0.0
    %765 = vmatprep.subr.mxu0 0.0
    %766 = vmatpush1.msra.mxu0 0.0
    %767 = vmatprep.subr.mxu0 0.0
    %768 = vmatpush1.msra.mxu0 0.0
    %769 = vmatprep.subr.mxu0 0.0
    %770 = vmatpush1.msra.mxu0 0.0
    %771 = vmatprep.subr.mxu0 0.0
    %772 = vmatpush1.msra.mxu0 0.0
    %773 = vmatprep.subr.mxu0 0.0
    %774 = vmatpush1.msra.mxu0 0.0
    %775 = vmatprep.subr.mxu0 0.0
    %776 = vmatpush1.msra.mxu0 0.0
    %777 = vmatprep.subr.mxu0 0.0
    %778 = vmatpush1.msra.mxu0 0.0
    %779 = vmatprep.subr.mxu0 0.0
    %780 = vmatpush1.msra.mxu0 0.0
    %781 = vmatprep.subr.mxu0 0.0
    %782 = vmatpush1.msra.mxu0 0.0
    %783 = vmatprep.subr.mxu0 0.0
    %784 = vmatpush1.msra.mxu0 0.0
    %785 = vmatprep.subr.mxu0 0.0
    %786 = vmatpush1.msra.mxu0 %v750
    %787 = vmatprep.subr.mxu0 0.0
    %788 = vmatpush2.msra.mxu0 0.0
    %789 = vmatprep.subr.mxu0 0.0
    %790 = vmatpush2.msra.mxu0 0.0
    %791 = vmatprep.subr.mxu0 0.0
    %792 = vmatpush2.msra.mxu0 0.0
    %793 = vmatprep.subr.mxu0 0.0
    %794 = vmatpush2.msra.mxu0 0.0
    %795 = vmatprep.subr.mxu0 0.0
    %796 = vmatpush2.msra.mxu0 0.0
    %797 = vmatprep.subr.mxu0 0.0
    %798 = vmatpush2.msra.mxu0 0.0
    %799 = vmatprep.subr.mxu0 0.0
    %800 = vmatpush2.msra.mxu0 0.0
    %801 = vmatprep.subr.mxu0 0.0
    %802 = vmatpush2.msra.mxu0 0.0
    %803 = vmatprep.subr.mxu0 0.0
    %804 = vmatpush2.msra.mxu0 0.0
    %805 = vmatprep.subr.mxu0 0.0
    %806 = vmatpush2.msra.mxu0 0.0
    %807 = vmatprep.subr.mxu0 0.0
    %808 = vmatpush2.msra.mxu0 0.0
    %809 = vmatprep.subr.mxu0 0.0
    %810 = vmatpush2.msra.mxu0 0.0
    %811 = vmatprep.subr.mxu0 0.0
    %812 = vmatpush2.msra.mxu0 0.0
    %813 = vmatprep.subr.mxu0 0.0
    %814 = vmatpush2.msra.mxu0 0.0
    %815 = vmatprep.subr.mxu0 0.0
    %816 = vmatpush2.msra.mxu0 0.0
    %817 = vmatprep.subr.mxu0 0.0
    %818 = vmatpush2.msra.mxu0 0.0
    %819 = vmatprep.mubr.f32.mxu0 0.0
    %820 = vmatmul.mubr.f32.gmra.mxu0 %v753
    %v821 = vpop.f32.mrf.mxu0
    %v822 = vadd.f32 0.0, %v821
    %v823 = vpop.f32.mrf.mxu0
    %824 = vdwg.mxu0
    %825 = vrot.lane.b32.xlu0 %v306, 64
    %v826 = vpop.permute.xlu0 %825
    %v829 = vsel %vm315, %v671, 0
    %831 = vmatprep.subr.mxu0 0.0
    %832 = vmatpush1.msra.mxu0 0.0
    %833 = vmatprep.subr.mxu0 0.0
    %834 = vmatpush1.msra.mxu0 0.0
    %835 = vmatprep.subr.mxu0 0.0
    %836 = vmatpush1.msra.mxu0 0.0
    %837 = vmatprep.subr.mxu0 0.0
    %838 = vmatpush1.msra.mxu0 0.0
    %839 = vmatprep.subr.mxu0 0.0
    %840 = vmatpush1.msra.mxu0 0.0
    %841 = vmatprep.subr.mxu0 0.0
    %842 = vmatpush1.msra.mxu0 0.0
    %843 = vmatprep.subr.mxu0 0.0
    %844 = vmatpush1.msra.mxu0 0.0
    %845 = vmatprep.subr.mxu0 0.0
    %846 = vmatpush1.msra.mxu0 0.0
    %847 = vmatprep.subr.mxu0 0.0
    %848 = vmatpush1.msra.mxu0 0.0
    %849 = vmatprep.subr.mxu0 0.0
    %850 = vmatpush1.msra.mxu0 0.0
    %851 = vmatprep.subr.mxu0 0.0
    %852 = vmatpush1.msra.mxu0 0.0
    %853 = vmatprep.subr.mxu0 0.0
    %854 = vmatpush1.msra.mxu0 0.0
    %855 = vmatprep.subr.mxu0 0.0
    %856 = vmatpush1.msra.mxu0 0.0
    %857 = vmatprep.subr.mxu0 0.0
    %858 = vmatpush1.msra.mxu0 0.0
    %859 = vmatprep.subr.mxu0 0.0
    %860 = vmatpush1.msra.mxu0 0.0
    %861 = vmatprep.subr.mxu0 0.0
    %862 = vmatpush1.msra.mxu0 %v826
    %863 = vmatprep.subr.mxu0 0.0
    %864 = vmatpush2.msra.mxu0 0.0
    %865 = vmatprep.subr.mxu0 0.0
    %866 = vmatpush2.msra.mxu0 0.0
    %867 = vmatprep.subr.mxu0 0.0
    %868 = vmatpush2.msra.mxu0 0.0
    %869 = vmatprep.subr.mxu0 0.0
    %870 = vmatpush2.msra.mxu0 0.0
    %871 = vmatprep.subr.mxu0 0.0
    %872 = vmatpush2.msra.mxu0 0.0
    %873 = vmatprep.subr.mxu0 0.0
    %874 = vmatpush2.msra.mxu0 0.0
    %875 = vmatprep.subr.mxu0 0.0
    %876 = vmatpush2.msra.mxu0 0.0
    %877 = vmatprep.subr.mxu0 0.0
    %878 = vmatpush2.msra.mxu0 0.0
    %879 = vmatprep.subr.mxu0 0.0
    %880 = vmatpush2.msra.mxu0 0.0
    %881 = vmatprep.subr.mxu0 0.0
    %882 = vmatpush2.msra.mxu0 0.0
    %883 = vmatprep.subr.mxu0 0.0
    %884 = vmatpush2.msra.mxu0 0.0
    %885 = vmatprep.subr.mxu0 0.0
    %886 = vmatpush2.msra.mxu0 0.0
    %887 = vmatprep.subr.mxu0 0.0
    %888 = vmatpush2.msra.mxu0 0.0
    %889 = vmatprep.subr.mxu0 0.0
    %890 = vmatpush2.msra.mxu0 0.0
    %891 = vmatprep.subr.mxu0 0.0
    %892 = vmatpush2.msra.mxu0 0.0
    %893 = vmatprep.subr.mxu0 0.0
    %894 = vmatpush2.msra.mxu0 0.0
    %895 = vmatprep.mubr.f32.mxu0 0.0
    %896 = vmatmul.mubr.f32.gmra.mxu0 %v829
    %v897 = vpop.f32.mrf.mxu0
    %v898 = vadd.f32 0.0, %v897
    %v899 = vpop.f32.mrf.mxu0
    %900 = vdwg.mxu0
    %901 = vrot.lane.b32.xlu0 %v309, 64
    %v902 = vpop.permute.xlu0 %901
    %v905 = vsel %vm315, %v672, 0
    %907 = vmatprep.subr.mxu0 0.0
    %908 = vmatpush1.msra.mxu0 0.0
    %909 = vmatprep.subr.mxu0 0.0
    %910 = vmatpush1.msra.mxu0 0.0
    %911 = vmatprep.subr.mxu0 0.0
    %912 = vmatpush1.msra.mxu0 0.0
    %913 = vmatprep.subr.mxu0 0.0
    %914 = vmatpush1.msra.mxu0 0.0
    %915 = vmatprep.subr.mxu0 0.0
    %916 = vmatpush1.msra.mxu0 0.0
    %917 = vmatprep.subr.mxu0 0.0
    %918 = vmatpush1.msra.mxu0 0.0
    %919 = vmatprep.subr.mxu0 0.0
    %920 = vmatpush1.msra.mxu0 0.0
    %921 = vmatprep.subr.mxu0 0.0
    %922 = vmatpush1.msra.mxu0 0.0
    %923 = vmatprep.subr.mxu0 0.0
    %924 = vmatpush1.msra.mxu0 0.0
    %925 = vmatprep.subr.mxu0 0.0
    %926 = vmatpush1.msra.mxu0 0.0
    %927 = vmatprep.subr.mxu0 0.0
    %928 = vmatpush1.msra.mxu0 0.0
    %929 = vmatprep.subr.mxu0 0.0
    %930 = vmatpush1.msra.mxu0 0.0
    %931 = vmatprep.subr.mxu0 0.0
    %932 = vmatpush1.msra.mxu0 0.0
    %933 = vmatprep.subr.mxu0 0.0
    %934 = vmatpush1.msra.mxu0 0.0
    %935 = vmatprep.subr.mxu0 0.0
    %936 = vmatpush1.msra.mxu0 0.0
    %937 = vmatprep.subr.mxu0 0.0
    %938 = vmatpush1.msra.mxu0 %v902
    %939 = vmatprep.subr.mxu0 0.0
    %940 = vmatpush2.msra.mxu0 0.0
    %941 = vmatprep.subr.mxu0 0.0
    %942 = vmatpush2.msra.mxu0 0.0
    %943 = vmatprep.subr.mxu0 0.0
    %944 = vmatpush2.msra.mxu0 0.0
    %945 = vmatprep.subr.mxu0 0.0
    %946 = vmatpush2.msra.mxu0 0.0
    %947 = vmatprep.subr.mxu0 0.0
    %948 = vmatpush2.msra.mxu0 0.0
    %949 = vmatprep.subr.mxu0 0.0
    %950 = vmatpush2.msra.mxu0 0.0
    %951 = vmatprep.subr.mxu0 0.0
    %952 = vmatpush2.msra.mxu0 0.0
    %953 = vmatprep.subr.mxu0 0.0
    %954 = vmatpush2.msra.mxu0 0.0
    %955 = vmatprep.subr.mxu0 0.0
    %956 = vmatpush2.msra.mxu0 0.0
    %957 = vmatprep.subr.mxu0 0.0
    %958 = vmatpush2.msra.mxu0 0.0
    %959 = vmatprep.subr.mxu0 0.0
    %960 = vmatpush2.msra.mxu0 0.0
    %961 = vmatprep.subr.mxu0 0.0
    %962 = vmatpush2.msra.mxu0 0.0
    %963 = vmatprep.subr.mxu0 0.0
    %964 = vmatpush2.msra.mxu0 0.0
    %965 = vmatprep.subr.mxu0 0.0
    %966 = vmatpush2.msra.mxu0 0.0
    %967 = vmatprep.subr.mxu0 0.0
    %968 = vmatpush2.msra.mxu0 0.0
    %969 = vmatprep.subr.mxu0 0.0
    %970 = vmatpush2.msra.mxu0 0.0
    %971 = vmatprep.mubr.f32.mxu0 0.0
    %972 = vmatmul.mubr.f32.gmra.mxu0 %v905
    %v973 = vpop.f32.mrf.mxu0
    %v974 = vadd.f32 0.0, %v973
    %v975 = vpop.f32.mrf.mxu0
    %976 = vdwg.mxu0
    %v977 = vld [vmem:[%s2 + $0x60] sm:$0xf]
    %v978 = vpack.c.bf16 %v746, %v746
    %v979 = vpack.c.bf16 %v822, %v822
    %v980 = vpack.c.bf16 %v898, %v898
    %v981 = vpack.c.bf16 %v974, %v974
    %982 = vrot.lane.b32.xlu0 %v298, 120
    %v983 = vpop.permute.xlu0 %982
    %984 = vrot.lane.b32.xlu0 %v298, 88
    %v985 = vpop.permute.xlu0 %984
    %v986 = vsel %vm315, %v983, 0
    %v988 = vsel %vm315, %v985, 0
    %990 = vmatprep.subr.mxu0 0.0
    %991 = vmatpush1.xpose.msra.mxu0 0.0
    %992 = vmatprep.subr.mxu0 0.0
    %993 = vmatpush1.xpose.msra.mxu0 0.0
    %994 = vmatprep.subr.mxu0 0.0
    %995 = vmatpush1.xpose.msra.mxu0 0.0
    %996 = vmatprep.subr.mxu0 0.0
    %997 = vmatpush1.xpose.msra.mxu0 0.0
    %998 = vmatprep.subr.mxu0 0.0
    %999 = vmatpush1.xpose.msra.mxu0 0.0
    %1000 = vmatprep.subr.mxu0 0.0
    %1001 = vmatpush1.xpose.msra.mxu0 0.0
    %1002 = vmatprep.subr.mxu0 0.0
    %1003 = vmatpush1.xpose.msra.mxu0 0.0
    %1004 = vmatprep.subr.mxu0 0.0
    %1005 = vmatpush1.xpose.msra.mxu0 0.0
    %1006 = vmatprep.subr.mxu0 0.0
    %1007 = vmatpush1.xpose.msra.mxu0 0.0
    %1008 = vmatprep.subr.mxu0 0.0
    %1009 = vmatpush1.xpose.msra.mxu0 0.0
    %1010 = vmatprep.subr.mxu0 0.0
    %1011 = vmatpush1.xpose.msra.mxu0 0.0
    %1012 = vmatprep.subr.mxu0 0.0
    %1013 = vmatpush1.xpose.msra.mxu0 0.0
    %1014 = vmatprep.subr.mxu0 0.0
    %1015 = vmatpush1.xpose.msra.mxu0 0.0
    %1016 = vmatprep.subr.mxu0 0.0
    %1017 = vmatpush1.xpose.msra.mxu0 0.0
    %1018 = vmatprep.subr.mxu0 0.0
    %1019 = vmatpush1.xpose.msra.mxu0 0.0
    %1020 = vmatprep.subr.mxu0 0.0
    %1021 = vmatpush1.xpose.msra.mxu0 %v988
    %1022 = vmatprep.subr.mxu0 0.0
    %1023 = vmatpush2.xpose.msra.mxu0 0.0
    %1024 = vmatprep.subr.mxu0 0.0
    %1025 = vmatpush2.xpose.msra.mxu0 0.0
    %1026 = vmatprep.subr.mxu0 0.0
    %1027 = vmatpush2.xpose.msra.mxu0 0.0
    %1028 = vmatprep.subr.mxu0 0.0
    %1029 = vmatpush2.xpose.msra.mxu0 0.0
    %1030 = vmatprep.subr.mxu0 0.0
    %1031 = vmatpush2.xpose.msra.mxu0 0.0
    %1032 = vmatprep.subr.mxu0 0.0
    %1033 = vmatpush2.xpose.msra.mxu0 0.0
    %1034 = vmatprep.subr.mxu0 0.0
    %1035 = vmatpush2.xpose.msra.mxu0 0.0
    %1036 = vmatprep.subr.mxu0 0.0
    %1037 = vmatpush2.xpose.msra.mxu0 0.0
    %1038 = vmatprep.subr.mxu0 0.0
    %1039 = vmatpush2.xpose.msra.mxu0 0.0
    %1040 = vmatprep.subr.mxu0 0.0
    %1041 = vmatpush2.xpose.msra.mxu0 0.0
    %1042 = vmatprep.subr.mxu0 0.0
    %1043 = vmatpush2.xpose.msra.mxu0 0.0
    %1044 = vmatprep.subr.mxu0 0.0
    %1045 = vmatpush2.xpose.msra.mxu0 0.0
    %1046 = vmatprep.subr.mxu0 0.0
    %1047 = vmatpush2.xpose.msra.mxu0 0.0
    %1048 = vmatprep.subr.mxu0 0.0
    %1049 = vmatpush2.xpose.msra.mxu0 0.0
    %1050 = vmatprep.subr.mxu0 0.0
    %1051 = vmatpush2.xpose.msra.mxu0 0.0
    %1052 = vmatprep.subr.mxu0 0.0
    %1053 = vmatpush2.xpose.msra.mxu0 0.0
    %1054 = vmatprep.mubr.f32.mxu0 0.0
    %1055 = vmatmul.mubr.f32.gmra.mxu0 %v986
    %v1056 = vpop.f32.mrf.mxu0
    %v1057 = vadd.f32 0.0, %v1056
    %v1058 = vpop.f32.mrf.mxu0
    %1059 = vdwg.mxu0
    %1060 = vrot.lane.b32.xlu0 %v301, 120
    %v1061 = vpop.permute.xlu0 %1060
    %1062 = vrot.lane.b32.xlu0 %v301, 88
    %v1063 = vpop.permute.xlu0 %1062
    %v1064 = vsel %vm315, %v1061, 0
    %v1066 = vsel %vm315, %v1063, 0
    %1068 = vmatprep.subr.mxu0 0.0
    %1069 = vmatpush1.xpose.msra.mxu0 0.0
    %1070 = vmatprep.subr.mxu0 0.0
    %1071 = vmatpush1.xpose.msra.mxu0 0.0
    %1072 = vmatprep.subr.mxu0 0.0
    %1073 = vmatpush1.xpose.msra.mxu0 0.0
    %1074 = vmatprep.subr.mxu0 0.0
    %1075 = vmatpush1.xpose.msra.mxu0 0.0
    %1076 = vmatprep.subr.mxu0 0.0
    %1077 = vmatpush1.xpose.msra.mxu0 0.0
    %1078 = vmatprep.subr.mxu0 0.0
    %1079 = vmatpush1.xpose.msra.mxu0 0.0
    %1080 = vmatprep.subr.mxu0 0.0
    %1081 = vmatpush1.xpose.msra.mxu0 0.0
    %1082 = vmatprep.subr.mxu0 0.0
    %1083 = vmatpush1.xpose.msra.mxu0 0.0
    %1084 = vmatprep.subr.mxu0 0.0
    %1085 = vmatpush1.xpose.msra.mxu0 0.0
    %1086 = vmatprep.subr.mxu0 0.0
    %1087 = vmatpush1.xpose.msra.mxu0 0.0
    %1088 = vmatprep.subr.mxu0 0.0
    %1089 = vmatpush1.xpose.msra.mxu0 0.0
    %1090 = vmatprep.subr.mxu0 0.0
    %1091 = vmatpush1.xpose.msra.mxu0 0.0
    %1092 = vmatprep.subr.mxu0 0.0
    %1093 = vmatpush1.xpose.msra.mxu0 0.0
    %1094 = vmatprep.subr.mxu0 0.0
    %1095 = vmatpush1.xpose.msra.mxu0 0.0
    %1096 = vmatprep.subr.mxu0 0.0
    %1097 = vmatpush1.xpose.msra.mxu0 0.0
    %1098 = vmatprep.subr.mxu0 0.0
    %1099 = vmatpush1.xpose.msra.mxu0 %v1066
    %1100 = vmatprep.subr.mxu0 0.0
    %1101 = vmatpush2.xpose.msra.mxu0 0.0
    %1102 = vmatprep.subr.mxu0 0.0
    %1103 = vmatpush2.xpose.msra.mxu0 0.0
    %1104 = vmatprep.subr.mxu0 0.0
    %1105 = vmatpush2.xpose.msra.mxu0 0.0
    %1106 = vmatprep.subr.mxu0 0.0
    %1107 = vmatpush2.xpose.msra.mxu0 0.0
    %1108 = vmatprep.subr.mxu0 0.0
    %1109 = vmatpush2.xpose.msra.mxu0 0.0
    %1110 = vmatprep.subr.mxu0 0.0
    %1111 = vmatpush2.xpose.msra.mxu0 0.0
    %1112 = vmatprep.subr.mxu0 0.0
    %1113 = vmatpush2.xpose.msra.mxu0 0.0
    %1114 = vmatprep.subr.mxu0 0.0
    %1115 = vmatpush2.xpose.msra.mxu0 0.0
    %1116 = vmatprep.subr.mxu0 0.0
    %1117 = vmatpush2.xpose.msra.mxu0 0.0
    %1118 = vmatprep.subr.mxu0 0.0
    %1119 = vmatpush2.xpose.msra.mxu0 0.0
    %1120 = vmatprep.subr.mxu0 0.0
    %1121 = vmatpush2.xpose.msra.mxu0 0.0
    %1122 = vmatprep.subr.mxu0 0.0
    %1123 = vmatpush2.xpose.msra.mxu0 0.0
    %1124 = vmatprep.subr.mxu0 0.0
    %1125 = vmatpush2.xpose.msra.mxu0 0.0
    %1126 = vmatprep.subr.mxu0 0.0
    %1127 = vmatpush2.xpose.msra.mxu0 0.0
    %1128 = vmatprep.subr.mxu0 0.0
    %1129 = vmatpush2.xpose.msra.mxu0 0.0
    %1130 = vmatprep.subr.mxu0 0.0
    %1131 = vmatpush2.xpose.msra.mxu0 0.0
    %1132 = vmatprep.mubr.f32.mxu0 0.0
    %1133 = vmatmul.mubr.f32.gmra.mxu0 %v1064
    %v1134 = vpop.f32.mrf.mxu0
    %v1135 = vadd.f32 0.0, %v1134
    %v1136 = vpop.f32.mrf.mxu0
    %1137 = vdwg.mxu0
    %1138 = vrot.lane.b32.xlu0 %v306, 120
    %v1139 = vpop.permute.xlu0 %1138
    %1140 = vrot.lane.b32.xlu0 %v306, 88
    %v1141 = vpop.permute.xlu0 %1140
    %v1142 = vsel %vm315, %v1139, 0
    %v1144 = vsel %vm315, %v1141, 0
    %1146 = vmatprep.subr.mxu0 0.0
    %1147 = vmatpush1.xpose.msra.mxu0 0.0
    %1148 = vmatprep.subr.mxu0 0.0
    %1149 = vmatpush1.xpose.msra.mxu0 0.0
    %1150 = vmatprep.subr.mxu0 0.0
    %1151 = vmatpush1.xpose.msra.mxu0 0.0
    %1152 = vmatprep.subr.mxu0 0.0
    %1153 = vmatpush1.xpose.msra.mxu0 0.0
    %1154 = vmatprep.subr.mxu0 0.0
    %1155 = vmatpush1.xpose.msra.mxu0 0.0
    %1156 = vmatprep.subr.mxu0 0.0
    %1157 = vmatpush1.xpose.msra.mxu0 0.0
    %1158 = vmatprep.subr.mxu0 0.0
    %1159 = vmatpush1.xpose.msra.mxu0 0.0
    %1160 = vmatprep.subr.mxu0 0.0
    %1161 = vmatpush1.xpose.msra.mxu0 0.0
    %1162 = vmatprep.subr.mxu0 0.0
    %1163 = vmatpush1.xpose.msra.mxu0 0.0
    %1164 = vmatprep.subr.mxu0 0.0
    %1165 = vmatpush1.xpose.msra.mxu0 0.0
    %1166 = vmatprep.subr.mxu0 0.0
    %1167 = vmatpush1.xpose.msra.mxu0 0.0
    %1168 = vmatprep.subr.mxu0 0.0
    %1169 = vmatpush1.xpose.msra.mxu0 0.0
    %1170 = vmatprep.subr.mxu0 0.0
    %1171 = vmatpush1.xpose.msra.mxu0 0.0
    %1172 = vmatprep.subr.mxu0 0.0
    %1173 = vmatpush1.xpose.msra.mxu0 0.0
    %1174 = vmatprep.subr.mxu0 0.0
    %1175 = vmatpush1.xpose.msra.mxu0 0.0
    %1176 = vmatprep.subr.mxu0 0.0
    %1177 = vmatpush1.xpose.msra.mxu0 %v1144
    %1178 = vmatprep.subr.mxu0 0.0
    %1179 = vmatpush2.xpose.msra.mxu0 0.0
    %1180 = vmatprep.subr.mxu0 0.0
    %1181 = vmatpush2.xpose.msra.mxu0 0.0
    %1182 = vmatprep.subr.mxu0 0.0
    %1183 = vmatpush2.xpose.msra.mxu0 0.0
    %1184 = vmatprep.subr.mxu0 0.0
    %1185 = vmatpush2.xpose.msra.mxu0 0.0
    %1186 = vmatprep.subr.mxu0 0.0
    %1187 = vmatpush2.xpose.msra.mxu0 0.0
    %1188 = vmatprep.subr.mxu0 0.0
    %1189 = vmatpush2.xpose.msra.mxu0 0.0
    %1190 = vmatprep.subr.mxu0 0.0
    %1191 = vmatpush2.xpose.msra.mxu0 0.0
    %1192 = vmatprep.subr.mxu0 0.0
    %1193 = vmatpush2.xpose.msra.mxu0 0.0
    %1194 = vmatprep.subr.mxu0 0.0
    %1195 = vmatpush2.xpose.msra.mxu0 0.0
    %1196 = vmatprep.subr.mxu0 0.0
    %1197 = vmatpush2.xpose.msra.mxu0 0.0
    %1198 = vmatprep.subr.mxu0 0.0
    %1199 = vmatpush2.xpose.msra.mxu0 0.0
    %1200 = vmatprep.subr.mxu0 0.0
    %1201 = vmatpush2.xpose.msra.mxu0 0.0
    %1202 = vmatprep.subr.mxu0 0.0
    %1203 = vmatpush2.xpose.msra.mxu0 0.0
    %1204 = vmatprep.subr.mxu0 0.0
    %1205 = vmatpush2.xpose.msra.mxu0 0.0
    %1206 = vmatprep.subr.mxu0 0.0
    %1207 = vmatpush2.xpose.msra.mxu0 0.0
    %1208 = vmatprep.subr.mxu0 0.0
    %1209 = vmatpush2.xpose.msra.mxu0 0.0
    %1210 = vmatprep.mubr.f32.mxu0 0.0
    %1211 = vmatmul.mubr.f32.gmra.mxu0 %v1142
    %v1212 = vpop.f32.mrf.mxu0
    %v1213 = vadd.f32 0.0, %v1212
    %v1214 = vpop.f32.mrf.mxu0
    %1215 = vdwg.mxu0
    %1216 = vrot.lane.b32.xlu0 %v309, 120
    %v1217 = vpop.permute.xlu0 %1216
    %1218 = vrot.lane.b32.xlu0 %v309, 88
    %v1219 = vpop.permute.xlu0 %1218
    %v1220 = vsel %vm315, %v1217, 0
    %v1222 = vsel %vm315, %v1219, 0
    %1224 = vmatprep.subr.mxu0 0.0
    %1225 = vmatpush1.xpose.msra.mxu0 0.0
    %1226 = vmatprep.subr.mxu0 0.0
    %1227 = vmatpush1.xpose.msra.mxu0 0.0
    %1228 = vmatprep.subr.mxu0 0.0
    %1229 = vmatpush1.xpose.msra.mxu0 0.0
    %1230 = vmatprep.subr.mxu0 0.0
    %1231 = vmatpush1.xpose.msra.mxu0 0.0
    %1232 = vmatprep.subr.mxu0 0.0
    %1233 = vmatpush1.xpose.msra.mxu0 0.0
    %1234 = vmatprep.subr.mxu0 0.0
    %1235 = vmatpush1.xpose.msra.mxu0 0.0
    %1236 = vmatprep.subr.mxu0 0.0
    %1237 = vmatpush1.xpose.msra.mxu0 0.0
    %1238 = vmatprep.subr.mxu0 0.0
    %1239 = vmatpush1.xpose.msra.mxu0 0.0
    %1240 = vmatprep.subr.mxu0 0.0
    %1241 = vmatpush1.xpose.msra.mxu0 0.0
    %1242 = vmatprep.subr.mxu0 0.0
    %1243 = vmatpush1.xpose.msra.mxu0 0.0
    %1244 = vmatprep.subr.mxu0 0.0
    %1245 = vmatpush1.xpose.msra.mxu0 0.0
    %1246 = vmatprep.subr.mxu0 0.0
    %1247 = vmatpush1.xpose.msra.mxu0 0.0
    %1248 = vmatprep.subr.mxu0 0.0
    %1249 = vmatpush1.xpose.msra.mxu0 0.0
    %1250 = vmatprep.subr.mxu0 0.0
    %1251 = vmatpush1.xpose.msra.mxu0 0.0
    %1252 = vmatprep.subr.mxu0 0.0
    %1253 = vmatpush1.xpose.msra.mxu0 0.0
    %1254 = vmatprep.subr.mxu0 0.0
    %1255 = vmatpush1.xpose.msra.mxu0 %v1222
    %1256 = vmatprep.subr.mxu0 0.0
    %1257 = vmatpush2.xpose.msra.mxu0 0.0
    %1258 = vmatprep.subr.mxu0 0.0
    %1259 = vmatpush2.xpose.msra.mxu0 0.0
    %1260 = vmatprep.subr.mxu0 0.0
    %1261 = vmatpush2.xpose.msra.mxu0 0.0
    %1262 = vmatprep.subr.mxu0 0.0
    %1263 = vmatpush2.xpose.msra.mxu0 0.0
    %1264 = vmatprep.subr.mxu0 0.0
    %1265 = vmatpush2.xpose.msra.mxu0 0.0
    %1266 = vmatprep.subr.mxu0 0.0
    %1267 = vmatpush2.xpose.msra.mxu0 0.0
    %1268 = vmatprep.subr.mxu0 0.0
    %1269 = vmatpush2.xpose.msra.mxu0 0.0
    %1270 = vmatprep.subr.mxu0 0.0
    %1271 = vmatpush2.xpose.msra.mxu0 0.0
    %1272 = vmatprep.subr.mxu0 0.0
    %1273 = vmatpush2.xpose.msra.mxu0 0.0
    %1274 = vmatprep.subr.mxu0 0.0
    %1275 = vmatpush2.xpose.msra.mxu0 0.0
    %1276 = vmatprep.subr.mxu0 0.0
    %1277 = vmatpush2.xpose.msra.mxu0 0.0
    %1278 = vmatprep.subr.mxu0 0.0
    %1279 = vmatpush2.xpose.msra.mxu0 0.0
    %1280 = vmatprep.subr.mxu0 0.0
    %1281 = vmatpush2.xpose.msra.mxu0 0.0
    %1282 = vmatprep.subr.mxu0 0.0
    %1283 = vmatpush2.xpose.msra.mxu0 0.0
    %1284 = vmatprep.subr.mxu0 0.0
    %1285 = vmatpush2.xpose.msra.mxu0 0.0
    %1286 = vmatprep.subr.mxu0 0.0
    %1287 = vmatpush2.xpose.msra.mxu0 0.0
    %1288 = vmatprep.mubr.f32.mxu0 0.0
    %1289 = vmatmul.mubr.f32.gmra.mxu0 %v1220
    %v1290 = vpop.f32.mrf.mxu0
    %v1291 = vadd.f32 0.0, %v1290
    %v1292 = vpop.f32.mrf.mxu0
    %1293 = vdwg.mxu0
    %v1294 = vmul.f32 %v1057, 0.35355338
    %v1295 = vmul.f32 %v1135, 0.35355338
    %v1296 = vmul.f32 %v1213, 0.35355338
    %v1297 = vmul.f32 %v1291, 0.35355338
    %v1298 = vadd.f32 %v1294, %v176
    %v1299 = vadd.f32 %v1295, %v176
    %v1300 = vadd.f32 %v1296, %v176
    %v1301 = vadd.f32 %v1297, %v176
    %v1302 = vsel %vm315, %v1298, -inf
    %1303 = vmax.xlane.f32.xlu0 %v1302
    %v1304 = vpop.xlane.xlu0 %1303
    %v1305 = vsel %vm315, %v1299, -inf
    %1306 = vmax.xlane.f32.xlu0 %v1305
    %v1307 = vpop.xlane.xlu0 %1306
    %v1308 = vsel %vm315, %v1300, -inf
    %1309 = vmax.xlane.f32.xlu0 %v1308
    %v1310 = vpop.xlane.xlu0 %1309
    %v1311 = vsel %vm315, %v1301, -inf
    %1312 = vmax.xlane.f32.xlu0 %v1311
    %v1313 = vpop.xlane.xlu0 %1312
    %v1314 = vsub.f32 %v1298, %v1304
    %v1315 = vsub.f32 %v1299, %v1307
    %v1316 = vsub.f32 %v1300, %v1310
    %v1317 = vsub.f32 %v1301, %v1313
    %v1318 = vmul.f32 %v1314, 1.442695
    %v1319 = vpow.pop %v1318
    %v1320 = vmul.f32 %v1315, 1.442695
    %v1321 = vpow.pop %v1320
    %v1322 = vmul.f32 %v1316, 1.442695
    %v1323 = vpow.pop %v1322
    %v1324 = vmul.f32 %v1317, 1.442695
    %v1325 = vpow.pop %v1324
    %v1326 = vsel %vm315, %v1319, 0.0
    %1327 = vadd.xlane.f32.xlu0 %v1326
    %v1328 = vpop.xlane.xlu0 %1327
    %v1329 = vsel %vm315, %v1321, 0.0
    %1330 = vadd.xlane.f32.xlu0 %v1329
    %v1331 = vpop.xlane.xlu0 %1330
    %v1332 = vsel %vm315, %v1323, 0.0
    %1333 = vadd.xlane.f32.xlu0 %v1332
    %v1334 = vpop.xlane.xlu0 %1333
    %v1335 = vsel %vm315, %v1325, 0.0
    %1336 = vadd.xlane.f32.xlu0 %v1335
    %v1337 = vpop.xlane.xlu0 %1336
    %v1338 = vrcp.pop %v1328
    %v1339 = vrcp.pop %v1331
    %v1340 = vrcp.pop %v1334
    %v1341 = vrcp.pop %v1337
    %v1342 = vmul.f32 %v1319, %v1338
    %v1343 = vmul.f32 %v1321, %v1339
    %v1344 = vmul.f32 %v1323, %v1340
    %v1345 = vmul.f32 %v1325, %v1341
    %1346 = vrot.lane.b32.xlu0 %v298, 56
    %v1347 = vpop.permute.xlu0 %1346
    %v1350 = vsel %vm315, %v1342, 0
    %1352 = vmatprep.subr.mxu0 0.0
    %1353 = vmatpush1.msra.mxu0 0.0
    %1354 = vmatprep.subr.mxu0 0.0
    %1355 = vmatpush1.msra.mxu0 0.0
    %1356 = vmatprep.subr.mxu0 0.0
    %1357 = vmatpush1.msra.mxu0 0.0
    %1358 = vmatprep.subr.mxu0 0.0
    %1359 = vmatpush1.msra.mxu0 0.0
    %1360 = vmatprep.subr.mxu0 0.0
    %1361 = vmatpush1.msra.mxu0 0.0
    %1362 = vmatprep.subr.mxu0 0.0
    %1363 = vmatpush1.msra.mxu0 0.0
    %1364 = vmatprep.subr.mxu0 0.0
    %1365 = vmatpush1.msra.mxu0 0.0
    %1366 = vmatprep.subr.mxu0 0.0
    %1367 = vmatpush1.msra.mxu0 0.0
    %1368 = vmatprep.subr.mxu0 0.0
    %1369 = vmatpush1.msra.mxu0 0.0
    %1370 = vmatprep.subr.mxu0 0.0
    %1371 = vmatpush1.msra.mxu0 0.0
    %1372 = vmatprep.subr.mxu0 0.0
    %1373 = vmatpush1.msra.mxu0 0.0
    %1374 = vmatprep.subr.mxu0 0.0
    %1375 = vmatpush1.msra.mxu0 0.0
    %1376 = vmatprep.subr.mxu0 0.0
    %1377 = vmatpush1.msra.mxu0 0.0
    %1378 = vmatprep.subr.mxu0 0.0
    %1379 = vmatpush1.msra.mxu0 0.0
    %1380 = vmatprep.subr.mxu0 0.0
    %1381 = vmatpush1.msra.mxu0 0.0
    %1382 = vmatprep.subr.mxu0 0.0
    %1383 = vmatpush1.msra.mxu0 %v1347
    %1384 = vmatprep.subr.mxu0 0.0
    %1385 = vmatpush2.msra.mxu0 0.0
    %1386 = vmatprep.subr.mxu0 0.0
    %1387 = vmatpush2.msra.mxu0 0.0
    %1388 = vmatprep.subr.mxu0 0.0
    %1389 = vmatpush2.msra.mxu0 0.0
    %1390 = vmatprep.subr.mxu0 0.0
    %1391 = vmatpush2.msra.mxu0 0.0
    %1392 = vmatprep.subr.mxu0 0.0
    %1393 = vmatpush2.msra.mxu0 0.0
    %1394 = vmatprep.subr.mxu0 0.0
    %1395 = vmatpush2.msra.mxu0 0.0
    %1396 = vmatprep.subr.mxu0 0.0
    %1397 = vmatpush2.msra.mxu0 0.0
    %1398 = vmatprep.subr.mxu0 0.0
    %1399 = vmatpush2.msra.mxu0 0.0
    %1400 = vmatprep.subr.mxu0 0.0
    %1401 = vmatpush2.msra.mxu0 0.0
    %1402 = vmatprep.subr.mxu0 0.0
    %1403 = vmatpush2.msra.mxu0 0.0
    %1404 = vmatprep.subr.mxu0 0.0
    %1405 = vmatpush2.msra.mxu0 0.0
    %1406 = vmatprep.subr.mxu0 0.0
    %1407 = vmatpush2.msra.mxu0 0.0
    %1408 = vmatprep.subr.mxu0 0.0
    %1409 = vmatpush2.msra.mxu0 0.0
    %1410 = vmatprep.subr.mxu0 0.0
    %1411 = vmatpush2.msra.mxu0 0.0
    %1412 = vmatprep.subr.mxu0 0.0
    %1413 = vmatpush2.msra.mxu0 0.0
    %1414 = vmatprep.subr.mxu0 0.0
    %1415 = vmatpush2.msra.mxu0 0.0
    %1416 = vmatprep.mubr.f32.mxu0 0.0
    %1417 = vmatmul.mubr.f32.gmra.mxu0 %v1350
    %v1418 = vpop.f32.mrf.mxu0
    %v1419 = vadd.f32 0.0, %v1418
    %v1420 = vpop.f32.mrf.mxu0
    %1421 = vdwg.mxu0
    %1422 = vrot.lane.b32.xlu0 %v301, 56
    %v1423 = vpop.permute.xlu0 %1422
    %v1426 = vsel %vm315, %v1343, 0
    %1428 = vmatprep.subr.mxu0 0.0
    %1429 = vmatpush1.msra.mxu0 0.0
    %1430 = vmatprep.subr.mxu0 0.0
    %1431 = vmatpush1.msra.mxu0 0.0
    %1432 = vmatprep.subr.mxu0 0.0
    %1433 = vmatpush1.msra.mxu0 0.0
    %1434 = vmatprep.subr.mxu0 0.0
    %1435 = vmatpush1.msra.mxu0 0.0
    %1436 = vmatprep.subr.mxu0 0.0
    %1437 = vmatpush1.msra.mxu0 0.0
    %1438 = vmatprep.subr.mxu0 0.0
    %1439 = vmatpush1.msra.mxu0 0.0
    %1440 = vmatprep.subr.mxu0 0.0
    %1441 = vmatpush1.msra.mxu0 0.0
    %1442 = vmatprep.subr.mxu0 0.0
    %1443 = vmatpush1.msra.mxu0 0.0
    %1444 = vmatprep.subr.mxu0 0.0
    %1445 = vmatpush1.msra.mxu0 0.0
    %1446 = vmatprep.subr.mxu0 0.0
    %1447 = vmatpush1.msra.mxu0 0.0
    %1448 = vmatprep.subr.mxu0 0.0
    %1449 = vmatpush1.msra.mxu0 0.0
    %1450 = vmatprep.subr.mxu0 0.0
    %1451 = vmatpush1.msra.mxu0 0.0
    %1452 = vmatprep.subr.mxu0 0.0
    %1453 = vmatpush1.msra.mxu0 0.0
    %1454 = vmatprep.subr.mxu0 0.0
    %1455 = vmatpush1.msra.mxu0 0.0
    %1456 = vmatprep.subr.mxu0 0.0
    %1457 = vmatpush1.msra.mxu0 0.0
    %1458 = vmatprep.subr.mxu0 0.0
    %1459 = vmatpush1.msra.mxu0 %v1423
    %1460 = vmatprep.subr.mxu0 0.0
    %1461 = vmatpush2.msra.mxu0 0.0
    %1462 = vmatprep.subr.mxu0 0.0
    %1463 = vmatpush2.msra.mxu0 0.0
    %1464 = vmatprep.subr.mxu0 0.0
    %1465 = vmatpush2.msra.mxu0 0.0
    %1466 = vmatprep.subr.mxu0 0.0
    %1467 = vmatpush2.msra.mxu0 0.0
    %1468 = vmatprep.subr.mxu0 0.0
    %1469 = vmatpush2.msra.mxu0 0.0
    %1470 = vmatprep.subr.mxu0 0.0
    %1471 = vmatpush2.msra.mxu0 0.0
    %1472 = vmatprep.subr.mxu0 0.0
    %1473 = vmatpush2.msra.mxu0 0.0
    %1474 = vmatprep.subr.mxu0 0.0
    %1475 = vmatpush2.msra.mxu0 0.0
    %1476 = vmatprep.subr.mxu0 0.0
    %1477 = vmatpush2.msra.mxu0 0.0
    %1478 = vmatprep.subr.mxu0 0.0
    %1479 = vmatpush2.msra.mxu0 0.0
    %1480 = vmatprep.subr.mxu0 0.0
    %1481 = vmatpush2.msra.mxu0 0.0
    %1482 = vmatprep.subr.mxu0 0.0
    %1483 = vmatpush2.msra.mxu0 0.0
    %1484 = vmatprep.subr.mxu0 0.0
    %1485 = vmatpush2.msra.mxu0 0.0
    %1486 = vmatprep.subr.mxu0 0.0
    %1487 = vmatpush2.msra.mxu0 0.0
    %1488 = vmatprep.subr.mxu0 0.0
    %1489 = vmatpush2.msra.mxu0 0.0
    %1490 = vmatprep.subr.mxu0 0.0
    %1491 = vmatpush2.msra.mxu0 0.0
    %1492 = vmatprep.mubr.f32.mxu0 0.0
    %1493 = vmatmul.mubr.f32.gmra.mxu0 %v1426
    %v1494 = vpop.f32.mrf.mxu0
    %v1495 = vadd.f32 0.0, %v1494
    %v1496 = vpop.f32.mrf.mxu0
    %1497 = vdwg.mxu0
    %1498 = vrot.lane.b32.xlu0 %v306, 56
    %v1499 = vpop.permute.xlu0 %1498
    %v1502 = vsel %vm315, %v1344, 0
    %1504 = vmatprep.subr.mxu0 0.0
    %1505 = vmatpush1.msra.mxu0 0.0
    %1506 = vmatprep.subr.mxu0 0.0
    %1507 = vmatpush1.msra.mxu0 0.0
    %1508 = vmatprep.subr.mxu0 0.0
    %1509 = vmatpush1.msra.mxu0 0.0
    %1510 = vmatprep.subr.mxu0 0.0
    %1511 = vmatpush1.msra.mxu0 0.0
    %1512 = vmatprep.subr.mxu0 0.0
    %1513 = vmatpush1.msra.mxu0 0.0
    %1514 = vmatprep.subr.mxu0 0.0
    %1515 = vmatpush1.msra.mxu0 0.0
    %1516 = vmatprep.subr.mxu0 0.0
    %1517 = vmatpush1.msra.mxu0 0.0
    %1518 = vmatprep.subr.mxu0 0.0
    %1519 = vmatpush1.msra.mxu0 0.0
    %1520 = vmatprep.subr.mxu0 0.0
    %1521 = vmatpush1.msra.mxu0 0.0
    %1522 = vmatprep.subr.mxu0 0.0
    %1523 = vmatpush1.msra.mxu0 0.0
    %1524 = vmatprep.subr.mxu0 0.0
    %1525 = vmatpush1.msra.mxu0 0.0
    %1526 = vmatprep.subr.mxu0 0.0
    %1527 = vmatpush1.msra.mxu0 0.0
    %1528 = vmatprep.subr.mxu0 0.0
    %1529 = vmatpush1.msra.mxu0 0.0
    %1530 = vmatprep.subr.mxu0 0.0
    %1531 = vmatpush1.msra.mxu0 0.0
    %1532 = vmatprep.subr.mxu0 0.0
    %1533 = vmatpush1.msra.mxu0 0.0
    %1534 = vmatprep.subr.mxu0 0.0
    %1535 = vmatpush1.msra.mxu0 %v1499
    %1536 = vmatprep.subr.mxu0 0.0
    %1537 = vmatpush2.msra.mxu0 0.0
    %1538 = vmatprep.subr.mxu0 0.0
    %1539 = vmatpush2.msra.mxu0 0.0
    %1540 = vmatprep.subr.mxu0 0.0
    %1541 = vmatpush2.msra.mxu0 0.0
    %1542 = vmatprep.subr.mxu0 0.0
    %1543 = vmatpush2.msra.mxu0 0.0
    %1544 = vmatprep.subr.mxu0 0.0
    %1545 = vmatpush2.msra.mxu0 0.0
    %1546 = vmatprep.subr.mxu0 0.0
    %1547 = vmatpush2.msra.mxu0 0.0
    %1548 = vmatprep.subr.mxu0 0.0
    %1549 = vmatpush2.msra.mxu0 0.0
    %1550 = vmatprep.subr.mxu0 0.0
    %1551 = vmatpush2.msra.mxu0 0.0
    %1552 = vmatprep.subr.mxu0 0.0
    %1553 = vmatpush2.msra.mxu0 0.0
    %1554 = vmatprep.subr.mxu0 0.0
    %1555 = vmatpush2.msra.mxu0 0.0
    %1556 = vmatprep.subr.mxu0 0.0
    %1557 = vmatpush2.msra.mxu0 0.0
    %1558 = vmatprep.subr.mxu0 0.0
    %1559 = vmatpush2.msra.mxu0 0.0
    %1560 = vmatprep.subr.mxu0 0.0
    %1561 = vmatpush2.msra.mxu0 0.0
    %1562 = vmatprep.subr.mxu0 0.0
    %1563 = vmatpush2.msra.mxu0 0.0
    %1564 = vmatprep.subr.mxu0 0.0
    %1565 = vmatpush2.msra.mxu0 0.0
    %1566 = vmatprep.subr.mxu0 0.0
    %1567 = vmatpush2.msra.mxu0 0.0
    %1568 = vmatprep.mubr.f32.mxu0 0.0
    %1569 = vmatmul.mubr.f32.gmra.mxu0 %v1502
    %v1570 = vpop.f32.mrf.mxu0
    %v1571 = vadd.f32 0.0, %v1570
    %v1572 = vpop.f32.mrf.mxu0
    %1573 = vdwg.mxu0
    %1574 = vrot.lane.b32.xlu0 %v309, 56
    %v1575 = vpop.permute.xlu0 %1574
    %v1578 = vsel %vm315, %v1345, 0
    %1580 = vmatprep.subr.mxu0 0.0
    %1581 = vmatpush1.msra.mxu0 0.0
    %1582 = vmatprep.subr.mxu0 0.0
    %1583 = vmatpush1.msra.mxu0 0.0
    %1584 = vmatprep.subr.mxu0 0.0
    %1585 = vmatpush1.msra.mxu0 0.0
    %1586 = vmatprep.subr.mxu0 0.0
    %1587 = vmatpush1.msra.mxu0 0.0
    %1588 = vmatprep.subr.mxu0 0.0
    %1589 = vmatpush1.msra.mxu0 0.0
    %1590 = vmatprep.subr.mxu0 0.0
    %1591 = vmatpush1.msra.mxu0 0.0
    %1592 = vmatprep.subr.mxu0 0.0
    %1593 = vmatpush1.msra.mxu0 0.0
    %1594 = vmatprep.subr.mxu0 0.0
    %1595 = vmatpush1.msra.mxu0 0.0
    %1596 = vmatprep.subr.mxu0 0.0
    %1597 = vmatpush1.msra.mxu0 0.0
    %1598 = vmatprep.subr.mxu0 0.0
    %1599 = vmatpush1.msra.mxu0 0.0
    %1600 = vmatprep.subr.mxu0 0.0
    %1601 = vmatpush1.msra.mxu0 0.0
    %1602 = vmatprep.subr.mxu0 0.0
    %1603 = vmatpush1.msra.mxu0 0.0
    %1604 = vmatprep.subr.mxu0 0.0
    %1605 = vmatpush1.msra.mxu0 0.0
    %1606 = vmatprep.subr.mxu0 0.0
    %1607 = vmatpush1.msra.mxu0 0.0
    %1608 = vmatprep.subr.mxu0 0.0
    %1609 = vmatpush1.msra.mxu0 0.0
    %1610 = vmatprep.subr.mxu0 0.0
    %1611 = vmatpush1.msra.mxu0 %v1575
    %1612 = vmatprep.subr.mxu0 0.0
    %1613 = vmatpush2.msra.mxu0 0.0
    %1614 = vmatprep.subr.mxu0 0.0
    %1615 = vmatpush2.msra.mxu0 0.0
    %1616 = vmatprep.subr.mxu0 0.0
    %1617 = vmatpush2.msra.mxu0 0.0
    %1618 = vmatprep.subr.mxu0 0.0
    %1619 = vmatpush2.msra.mxu0 0.0
    %1620 = vmatprep.subr.mxu0 0.0
    %1621 = vmatpush2.msra.mxu0 0.0
    %1622 = vmatprep.subr.mxu0 0.0
    %1623 = vmatpush2.msra.mxu0 0.0
    %1624 = vmatprep.subr.mxu0 0.0
    %1625 = vmatpush2.msra.mxu0 0.0
    %1626 = vmatprep.subr.mxu0 0.0
    %1627 = vmatpush2.msra.mxu0 0.0
    %1628 = vmatprep.subr.mxu0 0.0
    %1629 = vmatpush2.msra.mxu0 0.0
    %1630 = vmatprep.subr.mxu0 0.0
    %1631 = vmatpush2.msra.mxu0 0.0
    %1632 = vmatprep.subr.mxu0 0.0
    %1633 = vmatpush2.msra.mxu0 0.0
    %1634 = vmatprep.subr.mxu0 0.0
    %1635 = vmatpush2.msra.mxu0 0.0
    %1636 = vmatprep.subr.mxu0 0.0
    %1637 = vmatpush2.msra.mxu0 0.0
    %1638 = vmatprep.subr.mxu0 0.0
    %1639 = vmatpush2.msra.mxu0 0.0
    %1640 = vmatprep.subr.mxu0 0.0
    %1641 = vmatpush2.msra.mxu0 0.0
    %1642 = vmatprep.subr.mxu0 0.0
    %1643 = vmatpush2.msra.mxu0 0.0
    %1644 = vmatprep.mubr.f32.mxu0 0.0
    %1645 = vmatmul.mubr.f32.gmra.mxu0 %v1578
    %v1646 = vpop.f32.mrf.mxu0
    %v1647 = vadd.f32 0.0, %v1646
    %v1648 = vpop.f32.mrf.mxu0
    %1649 = vdwg.mxu0
    %v1650 = vld [vmem:[%s2 + $0x64] sm:$0xf]
    %v1651 = vpack.c.bf16 %v1419, %v1419
    %v1652 = vpack.c.bf16 %v1495, %v1495
    %v1653 = vpack.c.bf16 %v1571, %v1571
    %v1654 = vpack.c.bf16 %v1647, %v1647
    %v1659 = vunpack.c.l.b16 %v1651
    %v1660 = vunpack.c.l.b16 %v1652
    %v1661 = vunpack.c.l.b16 %v1653
    %v1662 = vunpack.c.l.b16 %v1654
    %v1663 = vpack.c.b16 %v1660, %v1659
    %v1664 = vpack.c.b16 %v1662, %v1661
    %v1666 = vsel %vm315, %v1663, 0
    %v1669 = vsel %vm315, %v1664, 0
    %vm1671 = vcmask 1043456
    %v1673 = vsel %vm1671, %v1650, 0
    %1675 = vmatprep.subr.bf16.mxu0 0
    %1676 = vmatpush1.bf16.msra.mxu0 0
    %1677 = vmatprep.subr.bf16.mxu0 0
    %1678 = vmatpush1.bf16.msra.mxu0 0
    %1679 = vmatprep.subr.bf16.mxu0 0
    %1680 = vmatpush1.bf16.msra.mxu0 0
    %1681 = vmatprep.subr.bf16.mxu0 0
    %1682 = vmatpush1.bf16.msra.mxu0 0
    %1683 = vmatprep.subr.bf16.mxu0 0
    %1684 = vmatpush1.bf16.msra.mxu0 0
    %1685 = vmatprep.subr.bf16.mxu0 0
    %1686 = vmatpush1.bf16.msra.mxu0 0
    %1687 = vmatprep.subr.bf16.mxu0 0
    %1688 = vmatpush1.bf16.msra.mxu0 0
    %1689 = vmatprep.subr.bf16.mxu0 0
    %1690 = vmatpush1.bf16.msra.mxu0 %v1673
    %1691 = vmatprep.subr.bf16.mxu0 0
    %1692 = vmatpush2.bf16.msra.mxu0 0
    %1693 = vmatprep.subr.bf16.mxu0 0
    %1694 = vmatpush2.bf16.msra.mxu0 0
    %1695 = vmatprep.subr.bf16.mxu0 0
    %1696 = vmatpush2.bf16.msra.mxu0 0
    %1697 = vmatprep.subr.bf16.mxu0 0
    %1698 = vmatpush2.bf16.msra.mxu0 0
    %1699 = vmatprep.subr.bf16.mxu0 0
    %1700 = vmatpush2.bf16.msra.mxu0 0
    %1701 = vmatprep.subr.bf16.mxu0 0
    %1702 = vmatpush2.bf16.msra.mxu0 0
    %1703 = vmatprep.subr.bf16.mxu0 0
    %1704 = vmatpush2.bf16.msra.mxu0 0
    %1705 = vmatprep.subr.bf16.mxu0 0
    %1706 = vmatpush2.bf16.msra.mxu0 0
    %1707 = vmatprep.mubr.bf16.mxu0 0
    %1708 = vmatmul.mubr.bf16.gmra.mxu0 %v1666
    %v1709 = vpop.f32.mrf.mxu0
    %v1710 = vadd.f32 0.0, %v1709
    %v1711 = vpop.f32.mrf.mxu0
    %v1712 = vpop.f32.mrf.mxu0
    %v1713 = vadd.f32 0.0, %v1712
    %v1714 = vpop.f32.mrf.mxu0
    %1715 = vmatprep.mubr.bf16.mxu0 0
    %1716 = vmatmul.mubr.bf16.gmra.mxu0 %v1669
    %v1717 = vpop.f32.mrf.mxu0
    %v1718 = vadd.f32 0.0, %v1717
    %v1719 = vpop.f32.mrf.mxu0
    %v1720 = vpop.f32.mrf.mxu0
    %v1721 = vadd.f32 0.0, %v1720
    %v1722 = vpop.f32.mrf.mxu0
    %1723 = vdwg.mxu0
    %v1728 = vunpack.c.l.b16 %v978
    %v1729 = vunpack.c.l.b16 %v979
    %v1730 = vunpack.c.l.b16 %v980
    %v1731 = vunpack.c.l.b16 %v981
    %v1732 = vpack.c.b16 %v1729, %v1728
    %v1733 = vpack.c.b16 %v1731, %v1730
    %v1735 = vsel %vm315, %v1732, 0
    %v1738 = vsel %vm315, %v1733, 0
    %v1741 = vsel %vm1671, %v977, 0
    %1743 = vmatprep.subr.bf16.mxu0 0
    %1744 = vmatpush1.bf16.msra.mxu0 0
    %1745 = vmatprep.subr.bf16.mxu0 0
    %1746 = vmatpush1.bf16.msra.mxu0 0
    %1747 = vmatprep.subr.bf16.mxu0 0
    %1748 = vmatpush1.bf16.msra.mxu0 0
    %1749 = vmatprep.subr.bf16.mxu0 0
    %1750 = vmatpush1.bf16.msra.mxu0 0
    %1751 = vmatprep.subr.bf16.mxu0 0
    %1752 = vmatpush1.bf16.msra.mxu0 0
    %1753 = vmatprep.subr.bf16.mxu0 0
    %1754 = vmatpush1.bf16.msra.mxu0 0
    %1755 = vmatprep.subr.bf16.mxu0 0
    %1756 = vmatpush1.bf16.msra.mxu0 0
    %1757 = vmatprep.subr.bf16.mxu0 0
    %1758 = vmatpush1.bf16.msra.mxu0 %v1741
    %1759 = vmatprep.subr.bf16.mxu0 0
    %1760 = vmatpush2.bf16.msra.mxu0 0
    %1761 = vmatprep.subr.bf16.mxu0 0
    %1762 = vmatpush2.bf16.msra.mxu0 0
    %1763 = vmatprep.subr.bf16.mxu0 0
    %1764 = vmatpush2.bf16.msra.mxu0 0
    %1765 = vmatprep.subr.bf16.mxu0 0
    %1766 = vmatpush2.bf16.msra.mxu0 0
    %1767 = vmatprep.subr.bf16.mxu0 0
    %1768 = vmatpush2.bf16.msra.mxu0 0
    %1769 = vmatprep.subr.bf16.mxu0 0
    %1770 = vmatpush2.bf16.msra.mxu0 0
    %1771 = vmatprep.subr.bf16.mxu0 0
    %1772 = vmatpush2.bf16.msra.mxu0 0
    %1773 = vmatprep.subr.bf16.mxu0 0
    %1774 = vmatpush2.bf16.msra.mxu0 0
    %1775 = vmatprep.mubr.bf16.mxu0 0
    %1776 = vmatmul.mubr.bf16.gmra.mxu0 %v1735
    %v1777 = vpop.f32.mrf.mxu0
    %v1778 = vadd.f32 %v1710, %v1777
    %v1779 = vpop.f32.mrf.mxu0
    %v1780 = vpop.f32.mrf.mxu0
    %v1781 = vadd.f32 %v1713, %v1780
    %v1782 = vpop.f32.mrf.mxu0
    %1783 = vmatprep.mubr.bf16.mxu0 0
    %1784 = vmatmul.mubr.bf16.gmra.mxu0 %v1738
    %v1785 = vpop.f32.mrf.mxu0
    %v1786 = vadd.f32 %v1718, %v1785
    %v1787 = vpop.f32.mrf.mxu0
    %v1788 = vpop.f32.mrf.mxu0
    %v1789 = vadd.f32 %v1721, %v1788
    %v1790 = vpop.f32.mrf.mxu0
    %1791 = vdwg.mxu0
    %1792 = vrot.lane.b32.xlu0 %v298, 112
    %v1793 = vpop.permute.xlu0 %1792
    %1794 = vrot.lane.b32.xlu0 %v298, 80
    %v1795 = vpop.permute.xlu0 %1794
    %v1796 = vsel %vm315, %v1793, 0
    %v1798 = vsel %vm315, %v1795, 0
    %1800 = vmatprep.subr.mxu0 0.0
    %1801 = vmatpush1.xpose.msra.mxu0 0.0
    %1802 = vmatprep.subr.mxu0 0.0
    %1803 = vmatpush1.xpose.msra.mxu0 0.0
    %1804 = vmatprep.subr.mxu0 0.0
    %1805 = vmatpush1.xpose.msra.mxu0 0.0
    %1806 = vmatprep.subr.mxu0 0.0
    %1807 = vmatpush1.xpose.msra.mxu0 0.0
    %1808 = vmatprep.subr.mxu0 0.0
    %1809 = vmatpush1.xpose.msra.mxu0 0.0
    %1810 = vmatprep.subr.mxu0 0.0
    %1811 = vmatpush1.xpose.msra.mxu0 0.0
    %1812 = vmatprep.subr.mxu0 0.0
    %1813 = vmatpush1.xpose.msra.mxu0 0.0
    %1814 = vmatprep.subr.mxu0 0.0
    %1815 = vmatpush1.xpose.msra.mxu0 0.0
    %1816 = vmatprep.subr.mxu0 0.0
    %1817 = vmatpush1.xpose.msra.mxu0 0.0
    %1818 = vmatprep.subr.mxu0 0.0
    %1819 = vmatpush1.xpose.msra.mxu0 0.0
    %1820 = vmatprep.subr.mxu0 0.0
    %1821 = vmatpush1.xpose.msra.mxu0 0.0
    %1822 = vmatprep.subr.mxu0 0.0
    %1823 = vmatpush1.xpose.msra.mxu0 0.0
    %1824 = vmatprep.subr.mxu0 0.0
    %1825 = vmatpush1.xpose.msra.mxu0 0.0
    %1826 = vmatprep.subr.mxu0 0.0
    %1827 = vmatpush1.xpose.msra.mxu0 0.0
    %1828 = vmatprep.subr.mxu0 0.0
    %1829 = vmatpush1.xpose.msra.mxu0 0.0
    %1830 = vmatprep.subr.mxu0 0.0
    %1831 = vmatpush1.xpose.msra.mxu0 %v1798
    %1832 = vmatprep.subr.mxu0 0.0
    %1833 = vmatpush2.xpose.msra.mxu0 0.0
    %1834 = vmatprep.subr.mxu0 0.0
    %1835 = vmatpush2.xpose.msra.mxu0 0.0
    %1836 = vmatprep.subr.mxu0 0.0
    %1837 = vmatpush2.xpose.msra.mxu0 0.0
    %1838 = vmatprep.subr.mxu0 0.0
    %1839 = vmatpush2.xpose.msra.mxu0 0.0
    %1840 = vmatprep.subr.mxu0 0.0
    %1841 = vmatpush2.xpose.msra.mxu0 0.0
    %1842 = vmatprep.subr.mxu0 0.0
    %1843 = vmatpush2.xpose.msra.mxu0 0.0
    %1844 = vmatprep.subr.mxu0 0.0
    %1845 = vmatpush2.xpose.msra.mxu0 0.0
    %1846 = vmatprep.subr.mxu0 0.0
    %1847 = vmatpush2.xpose.msra.mxu0 0.0
    %1848 = vmatprep.subr.mxu0 0.0
    %1849 = vmatpush2.xpose.msra.mxu0 0.0
    %1850 = vmatprep.subr.mxu0 0.0
    %1851 = vmatpush2.xpose.msra.mxu0 0.0
    %1852 = vmatprep.subr.mxu0 0.0
    %1853 = vmatpush2.xpose.msra.mxu0 0.0
    %1854 = vmatprep.subr.mxu0 0.0
    %1855 = vmatpush2.xpose.msra.mxu0 0.0
    %1856 = vmatprep.subr.mxu0 0.0
    %1857 = vmatpush2.xpose.msra.mxu0 0.0
    %1858 = vmatprep.subr.mxu0 0.0
    %1859 = vmatpush2.xpose.msra.mxu0 0.0
    %1860 = vmatprep.subr.mxu0 0.0
    %1861 = vmatpush2.xpose.msra.mxu0 0.0
    %1862 = vmatprep.subr.mxu0 0.0
    %1863 = vmatpush2.xpose.msra.mxu0 0.0
    %1864 = vmatprep.mubr.f32.mxu0 0.0
    %1865 = vmatmul.mubr.f32.gmra.mxu0 %v1796
    %v1866 = vpop.f32.mrf.mxu0
    %v1867 = vadd.f32 0.0, %v1866
    %v1868 = vpop.f32.mrf.mxu0
    %1869 = vdwg.mxu0
    %1870 = vrot.lane.b32.xlu0 %v301, 112
    %v1871 = vpop.permute.xlu0 %1870
    %1872 = vrot.lane.b32.xlu0 %v301, 80
    %v1873 = vpop.permute.xlu0 %1872
    %v1874 = vsel %vm315, %v1871, 0
    %v1876 = vsel %vm315, %v1873, 0
    %1878 = vmatprep.subr.mxu0 0.0
    %1879 = vmatpush1.xpose.msra.mxu0 0.0
    %1880 = vmatprep.subr.mxu0 0.0
    %1881 = vmatpush1.xpose.msra.mxu0 0.0
    %1882 = vmatprep.subr.mxu0 0.0
    %1883 = vmatpush1.xpose.msra.mxu0 0.0
    %1884 = vmatprep.subr.mxu0 0.0
    %1885 = vmatpush1.xpose.msra.mxu0 0.0
    %1886 = vmatprep.subr.mxu0 0.0
    %1887 = vmatpush1.xpose.msra.mxu0 0.0
    %1888 = vmatprep.subr.mxu0 0.0
    %1889 = vmatpush1.xpose.msra.mxu0 0.0
    %1890 = vmatprep.subr.mxu0 0.0
    %1891 = vmatpush1.xpose.msra.mxu0 0.0
    %1892 = vmatprep.subr.mxu0 0.0
    %1893 = vmatpush1.xpose.msra.mxu0 0.0
    %1894 = vmatprep.subr.mxu0 0.0
    %1895 = vmatpush1.xpose.msra.mxu0 0.0
    %1896 = vmatprep.subr.mxu0 0.0
    %1897 = vmatpush1.xpose.msra.mxu0 0.0
    %1898 = vmatprep.subr.mxu0 0.0
    %1899 = vmatpush1.xpose.msra.mxu0 0.0
    %1900 = vmatprep.subr.mxu0 0.0
    %1901 = vmatpush1.xpose.msra.mxu0 0.0
    %1902 = vmatprep.subr.mxu0 0.0
    %1903 = vmatpush1.xpose.msra.mxu0 0.0
    %1904 = vmatprep.subr.mxu0 0.0
    %1905 = vmatpush1.xpose.msra.mxu0 0.0
    %1906 = vmatprep.subr.mxu0 0.0
    %1907 = vmatpush1.xpose.msra.mxu0 0.0
    %1908 = vmatprep.subr.mxu0 0.0
    %1909 = vmatpush1.xpose.msra.mxu0 %v1876
    %1910 = vmatprep.subr.mxu0 0.0
    %1911 = vmatpush2.xpose.msra.mxu0 0.0
    %1912 = vmatprep.subr.mxu0 0.0
    %1913 = vmatpush2.xpose.msra.mxu0 0.0
    %1914 = vmatprep.subr.mxu0 0.0
    %1915 = vmatpush2.xpose.msra.mxu0 0.0
    %1916 = vmatprep.subr.mxu0 0.0
    %1917 = vmatpush2.xpose.msra.mxu0 0.0
    %1918 = vmatprep.subr.mxu0 0.0
    %1919 = vmatpush2.xpose.msra.mxu0 0.0
    %1920 = vmatprep.subr.mxu0 0.0
    %1921 = vmatpush2.xpose.msra.mxu0 0.0
    %1922 = vmatprep.subr.mxu0 0.0
    %1923 = vmatpush2.xpose.msra.mxu0 0.0
    %1924 = vmatprep.subr.mxu0 0.0
    %1925 = vmatpush2.xpose.msra.mxu0 0.0
    %1926 = vmatprep.subr.mxu0 0.0
    %1927 = vmatpush2.xpose.msra.mxu0 0.0
    %1928 = vmatprep.subr.mxu0 0.0
    %1929 = vmatpush2.xpose.msra.mxu0 0.0
    %1930 = vmatprep.subr.mxu0 0.0
    %1931 = vmatpush2.xpose.msra.mxu0 0.0
    %1932 = vmatprep.subr.mxu0 0.0
    %1933 = vmatpush2.xpose.msra.mxu0 0.0
    %1934 = vmatprep.subr.mxu0 0.0
    %1935 = vmatpush2.xpose.msra.mxu0 0.0
    %1936 = vmatprep.subr.mxu0 0.0
    %1937 = vmatpush2.xpose.msra.mxu0 0.0
    %1938 = vmatprep.subr.mxu0 0.0
    %1939 = vmatpush2.xpose.msra.mxu0 0.0
    %1940 = vmatprep.subr.mxu0 0.0
    %1941 = vmatpush2.xpose.msra.mxu0 0.0
    %1942 = vmatprep.mubr.f32.mxu0 0.0
    %1943 = vmatmul.mubr.f32.gmra.mxu0 %v1874
    %v1944 = vpop.f32.mrf.mxu0
    %v1945 = vadd.f32 0.0, %v1944
    %v1946 = vpop.f32.mrf.mxu0
    %1947 = vdwg.mxu0
    %1948 = vrot.lane.b32.xlu0 %v306, 112
    %v1949 = vpop.permute.xlu0 %1948
    %1950 = vrot.lane.b32.xlu0 %v306, 80
    %v1951 = vpop.permute.xlu0 %1950
    %v1952 = vsel %vm315, %v1949, 0
    %v1954 = vsel %vm315, %v1951, 0
    %1956 = vmatprep.subr.mxu0 0.0
    %1957 = vmatpush1.xpose.msra.mxu0 0.0
    %1958 = vmatprep.subr.mxu0 0.0
    %1959 = vmatpush1.xpose.msra.mxu0 0.0
    %1960 = vmatprep.subr.mxu0 0.0
    %1961 = vmatpush1.xpose.msra.mxu0 0.0
    %1962 = vmatprep.subr.mxu0 0.0
    %1963 = vmatpush1.xpose.msra.mxu0 0.0
    %1964 = vmatprep.subr.mxu0 0.0
    %1965 = vmatpush1.xpose.msra.mxu0 0.0
    %1966 = vmatprep.subr.mxu0 0.0
    %1967 = vmatpush1.xpose.msra.mxu0 0.0
    %1968 = vmatprep.subr.mxu0 0.0
    %1969 = vmatpush1.xpose.msra.mxu0 0.0
    %1970 = vmatprep.subr.mxu0 0.0
    %1971 = vmatpush1.xpose.msra.mxu0 0.0
    %1972 = vmatprep.subr.mxu0 0.0
    %1973 = vmatpush1.xpose.msra.mxu0 0.0
    %1974 = vmatprep.subr.mxu0 0.0
    %1975 = vmatpush1.xpose.msra.mxu0 0.0
    %1976 = vmatprep.subr.mxu0 0.0
    %1977 = vmatpush1.xpose.msra.mxu0 0.0
    %1978 = vmatprep.subr.mxu0 0.0
    %1979 = vmatpush1.xpose.msra.mxu0 0.0
    %1980 = vmatprep.subr.mxu0 0.0
    %1981 = vmatpush1.xpose.msra.mxu0 0.0
    %1982 = vmatprep.subr.mxu0 0.0
    %1983 = vmatpush1.xpose.msra.mxu0 0.0
    %1984 = vmatprep.subr.mxu0 0.0
    %1985 = vmatpush1.xpose.msra.mxu0 0.0
    %1986 = vmatprep.subr.mxu0 0.0
    %1987 = vmatpush1.xpose.msra.mxu0 %v1954
    %1988 = vmatprep.subr.mxu0 0.0
    %1989 = vmatpush2.xpose.msra.mxu0 0.0
    %1990 = vmatprep.subr.mxu0 0.0
    %1991 = vmatpush2.xpose.msra.mxu0 0.0
    %1992 = vmatprep.subr.mxu0 0.0
    %1993 = vmatpush2.xpose.msra.mxu0 0.0
    %1994 = vmatprep.subr.mxu0 0.0
    %1995 = vmatpush2.xpose.msra.mxu0 0.0
    %1996 = vmatprep.subr.mxu0 0.0
    %1997 = vmatpush2.xpose.msra.mxu0 0.0
    %1998 = vmatprep.subr.mxu0 0.0
    %1999 = vmatpush2.xpose.msra.mxu0 0.0
    %2000 = vmatprep.subr.mxu0 0.0
    %2001 = vmatpush2.xpose.msra.mxu0 0.0
    %2002 = vmatprep.subr.mxu0 0.0
    %2003 = vmatpush2.xpose.msra.mxu0 0.0
    %2004 = vmatprep.subr.mxu0 0.0
    %2005 = vmatpush2.xpose.msra.mxu0 0.0
    %2006 = vmatprep.subr.mxu0 0.0
    %2007 = vmatpush2.xpose.msra.mxu0 0.0
    %2008 = vmatprep.subr.mxu0 0.0
    %2009 = vmatpush2.xpose.msra.mxu0 0.0
    %2010 = vmatprep.subr.mxu0 0.0
    %2011 = vmatpush2.xpose.msra.mxu0 0.0
    %2012 = vmatprep.subr.mxu0 0.0
    %2013 = vmatpush2.xpose.msra.mxu0 0.0
    %2014 = vmatprep.subr.mxu0 0.0
    %2015 = vmatpush2.xpose.msra.mxu0 0.0
    %2016 = vmatprep.subr.mxu0 0.0
    %2017 = vmatpush2.xpose.msra.mxu0 0.0
    %2018 = vmatprep.subr.mxu0 0.0
    %2019 = vmatpush2.xpose.msra.mxu0 0.0
    %2020 = vmatprep.mubr.f32.mxu0 0.0
    %2021 = vmatmul.mubr.f32.gmra.mxu0 %v1952
    %v2022 = vpop.f32.mrf.mxu0
    %v2023 = vadd.f32 0.0, %v2022
    %v2024 = vpop.f32.mrf.mxu0
    %2025 = vdwg.mxu0
    %2026 = vrot.lane.b32.xlu0 %v309, 112
    %v2027 = vpop.permute.xlu0 %2026
    %2028 = vrot.lane.b32.xlu0 %v309, 80
    %v2029 = vpop.permute.xlu0 %2028
    %v2030 = vsel %vm315, %v2027, 0
    %v2032 = vsel %vm315, %v2029, 0
    %2034 = vmatprep.subr.mxu0 0.0
    %2035 = vmatpush1.xpose.msra.mxu0 0.0
    %2036 = vmatprep.subr.mxu0 0.0
    %2037 = vmatpush1.xpose.msra.mxu0 0.0
    %2038 = vmatprep.subr.mxu0 0.0
    %2039 = vmatpush1.xpose.msra.mxu0 0.0
    %2040 = vmatprep.subr.mxu0 0.0
    %2041 = vmatpush1.xpose.msra.mxu0 0.0
    %2042 = vmatprep.subr.mxu0 0.0
    %2043 = vmatpush1.xpose.msra.mxu0 0.0
    %2044 = vmatprep.subr.mxu0 0.0
    %2045 = vmatpush1.xpose.msra.mxu0 0.0
    %2046 = vmatprep.subr.mxu0 0.0
    %2047 = vmatpush1.xpose.msra.mxu0 0.0
    %2048 = vmatprep.subr.mxu0 0.0
    %2049 = vmatpush1.xpose.msra.mxu0 0.0
    %2050 = vmatprep.subr.mxu0 0.0
    %2051 = vmatpush1.xpose.msra.mxu0 0.0
    %2052 = vmatprep.subr.mxu0 0.0
    %2053 = vmatpush1.xpose.msra.mxu0 0.0
    %2054 = vmatprep.subr.mxu0 0.0
    %2055 = vmatpush1.xpose.msra.mxu0 0.0
    %2056 = vmatprep.subr.mxu0 0.0
    %2057 = vmatpush1.xpose.msra.mxu0 0.0
    %2058 = vmatprep.subr.mxu0 0.0
    %2059 = vmatpush1.xpose.msra.mxu0 0.0
    %2060 = vmatprep.subr.mxu0 0.0
    %2061 = vmatpush1.xpose.msra.mxu0 0.0
    %2062 = vmatprep.subr.mxu0 0.0
    %2063 = vmatpush1.xpose.msra.mxu0 0.0
    %2064 = vmatprep.subr.mxu0 0.0
    %2065 = vmatpush1.xpose.msra.mxu0 %v2032
    %2066 = vmatprep.subr.mxu0 0.0
    %2067 = vmatpush2.xpose.msra.mxu0 0.0
    %2068 = vmatprep.subr.mxu0 0.0
    %2069 = vmatpush2.xpose.msra.mxu0 0.0
    %2070 = vmatprep.subr.mxu0 0.0
    %2071 = vmatpush2.xpose.msra.mxu0 0.0
    %2072 = vmatprep.subr.mxu0 0.0
    %2073 = vmatpush2.xpose.msra.mxu0 0.0
    %2074 = vmatprep.subr.mxu0 0.0
    %2075 = vmatpush2.xpose.msra.mxu0 0.0
    %2076 = vmatprep.subr.mxu0 0.0
    %2077 = vmatpush2.xpose.msra.mxu0 0.0
    %2078 = vmatprep.subr.mxu0 0.0
    %2079 = vmatpush2.xpose.msra.mxu0 0.0
    %2080 = vmatprep.subr.mxu0 0.0
    %2081 = vmatpush2.xpose.msra.mxu0 0.0
    %2082 = vmatprep.subr.mxu0 0.0
    %2083 = vmatpush2.xpose.msra.mxu0 0.0
    %2084 = vmatprep.subr.mxu0 0.0
    %2085 = vmatpush2.xpose.msra.mxu0 0.0
    %2086 = vmatprep.subr.mxu0 0.0
    %2087 = vmatpush2.xpose.msra.mxu0 0.0
    %2088 = vmatprep.subr.mxu0 0.0
    %2089 = vmatpush2.xpose.msra.mxu0 0.0
    %2090 = vmatprep.subr.mxu0 0.0
    %2091 = vmatpush2.xpose.msra.mxu0 0.0
    %2092 = vmatprep.subr.mxu0 0.0
    %2093 = vmatpush2.xpose.msra.mxu0 0.0
    %2094 = vmatprep.subr.mxu0 0.0
    %2095 = vmatpush2.xpose.msra.mxu0 0.0
    %2096 = vmatprep.subr.mxu0 0.0
    %2097 = vmatpush2.xpose.msra.mxu0 0.0
    %2098 = vmatprep.mubr.f32.mxu0 0.0
    %2099 = vmatmul.mubr.f32.gmra.mxu0 %v2030
    %v2100 = vpop.f32.mrf.mxu0
    %v2101 = vadd.f32 0.0, %v2100
    %v2102 = vpop.f32.mrf.mxu0
    %2103 = vdwg.mxu0
    %v2104 = vmul.f32 %v1867, 0.35355338
    %v2105 = vmul.f32 %v1945, 0.35355338
    %v2106 = vmul.f32 %v2023, 0.35355338
    %v2107 = vmul.f32 %v2101, 0.35355338
    %v2108 = vadd.f32 %v2104, %v176
    %v2109 = vadd.f32 %v2105, %v176
    %v2110 = vadd.f32 %v2106, %v176
    %v2111 = vadd.f32 %v2107, %v176
    %v2112 = vsel %vm315, %v2108, -inf
    %2113 = vmax.xlane.f32.xlu0 %v2112
    %v2114 = vpop.xlane.xlu0 %2113
    %v2115 = vsel %vm315, %v2109, -inf
    %2116 = vmax.xlane.f32.xlu0 %v2115
    %v2117 = vpop.xlane.xlu0 %2116
    %v2118 = vsel %vm315, %v2110, -inf
    %2119 = vmax.xlane.f32.xlu0 %v2118
    %v2120 = vpop.xlane.xlu0 %2119
    %v2121 = vsel %vm315, %v2111, -inf
    %2122 = vmax.xlane.f32.xlu0 %v2121
    %v2123 = vpop.xlane.xlu0 %2122
    %v2124 = vsub.f32 %v2108, %v2114
    %v2125 = vsub.f32 %v2109, %v2117
    %v2126 = vsub.f32 %v2110, %v2120
    %v2127 = vsub.f32 %v2111, %v2123
    %v2128 = vmul.f32 %v2124, 1.442695
    %v2129 = vpow.pop %v2128
    %v2130 = vmul.f32 %v2125, 1.442695
    %v2131 = vpow.pop %v2130
    %v2132 = vmul.f32 %v2126, 1.442695
    %v2133 = vpow.pop %v2132
    %v2134 = vmul.f32 %v2127, 1.442695
    %v2135 = vpow.pop %v2134
    %v2136 = vsel %vm315, %v2129, 0.0
    %2137 = vadd.xlane.f32.xlu0 %v2136
    %v2138 = vpop.xlane.xlu0 %2137
    %v2139 = vsel %vm315, %v2131, 0.0
    %2140 = vadd.xlane.f32.xlu0 %v2139
    %v2141 = vpop.xlane.xlu0 %2140
    %v2142 = vsel %vm315, %v2133, 0.0
    %2143 = vadd.xlane.f32.xlu0 %v2142
    %v2144 = vpop.xlane.xlu0 %2143
    %v2145 = vsel %vm315, %v2135, 0.0
    %2146 = vadd.xlane.f32.xlu0 %v2145
    %v2147 = vpop.xlane.xlu0 %2146
    %v2148 = vrcp.pop %v2138
    %v2149 = vrcp.pop %v2141
    %v2150 = vrcp.pop %v2144
    %v2151 = vrcp.pop %v2147
    %v2152 = vmul.f32 %v2129, %v2148
    %v2153 = vmul.f32 %v2131, %v2149
    %v2154 = vmul.f32 %v2133, %v2150
    %v2155 = vmul.f32 %v2135, %v2151
    %2156 = vrot.lane.b32.xlu0 %v298, 48
    %v2157 = vpop.permute.xlu0 %2156
    %v2160 = vsel %vm315, %v2152, 0
    %2162 = vmatprep.subr.mxu0 0.0
    %2163 = vmatpush1.msra.mxu0 0.0
    %2164 = vmatprep.subr.mxu0 0.0
    %2165 = vmatpush1.msra.mxu0 0.0
    %2166 = vmatprep.subr.mxu0 0.0
    %2167 = vmatpush1.msra.mxu0 0.0
    %2168 = vmatprep.subr.mxu0 0.0
    %2169 = vmatpush1.msra.mxu0 0.0
    %2170 = vmatprep.subr.mxu0 0.0
    %2171 = vmatpush1.msra.mxu0 0.0
    %2172 = vmatprep.subr.mxu0 0.0
    %2173 = vmatpush1.msra.mxu0 0.0
    %2174 = vmatprep.subr.mxu0 0.0
    %2175 = vmatpush1.msra.mxu0 0.0
    %2176 = vmatprep.subr.mxu0 0.0
    %2177 = vmatpush1.msra.mxu0 0.0
    %2178 = vmatprep.subr.mxu0 0.0
    %2179 = vmatpush1.msra.mxu0 0.0
    %2180 = vmatprep.subr.mxu0 0.0
    %2181 = vmatpush1.msra.mxu0 0.0
    %2182 = vmatprep.subr.mxu0 0.0
    %2183 = vmatpush1.msra.mxu0 0.0
    %2184 = vmatprep.subr.mxu0 0.0
    %2185 = vmatpush1.msra.mxu0 0.0
    %2186 = vmatprep.subr.mxu0 0.0
    %2187 = vmatpush1.msra.mxu0 0.0
    %2188 = vmatprep.subr.mxu0 0.0
    %2189 = vmatpush1.msra.mxu0 0.0
    %2190 = vmatprep.subr.mxu0 0.0
    %2191 = vmatpush1.msra.mxu0 0.0
    %2192 = vmatprep.subr.mxu0 0.0
    %2193 = vmatpush1.msra.mxu0 %v2157
    %2194 = vmatprep.subr.mxu0 0.0
    %2195 = vmatpush2.msra.mxu0 0.0
    %2196 = vmatprep.subr.mxu0 0.0
    %2197 = vmatpush2.msra.mxu0 0.0
    %2198 = vmatprep.subr.mxu0 0.0
    %2199 = vmatpush2.msra.mxu0 0.0
    %2200 = vmatprep.subr.mxu0 0.0
    %2201 = vmatpush2.msra.mxu0 0.0
    %2202 = vmatprep.subr.mxu0 0.0
    %2203 = vmatpush2.msra.mxu0 0.0
    %2204 = vmatprep.subr.mxu0 0.0
    %2205 = vmatpush2.msra.mxu0 0.0
    %2206 = vmatprep.subr.mxu0 0.0
    %2207 = vmatpush2.msra.mxu0 0.0
    %2208 = vmatprep.subr.mxu0 0.0
    %2209 = vmatpush2.msra.mxu0 0.0
    %2210 = vmatprep.subr.mxu0 0.0
    %2211 = vmatpush2.msra.mxu0 0.0
    %2212 = vmatprep.subr.mxu0 0.0
    %2213 = vmatpush2.msra.mxu0 0.0
    %2214 = vmatprep.subr.mxu0 0.0
    %2215 = vmatpush2.msra.mxu0 0.0
    %2216 = vmatprep.subr.mxu0 0.0
    %2217 = vmatpush2.msra.mxu0 0.0
    %2218 = vmatprep.subr.mxu0 0.0
    %2219 = vmatpush2.msra.mxu0 0.0
    %2220 = vmatprep.subr.mxu0 0.0
    %2221 = vmatpush2.msra.mxu0 0.0
    %2222 = vmatprep.subr.mxu0 0.0
    %2223 = vmatpush2.msra.mxu0 0.0
    %2224 = vmatprep.subr.mxu0 0.0
    %2225 = vmatpush2.msra.mxu0 0.0
    %2226 = vmatprep.mubr.f32.mxu0 0.0
    %2227 = vmatmul.mubr.f32.gmra.mxu0 %v2160
    %v2228 = vpop.f32.mrf.mxu0
    %v2229 = vadd.f32 0.0, %v2228
    %v2230 = vpop.f32.mrf.mxu0
    %2231 = vdwg.mxu0
    %2232 = vrot.lane.b32.xlu0 %v301, 48
    %v2233 = vpop.permute.xlu0 %2232
    %v2236 = vsel %vm315, %v2153, 0
    %2238 = vmatprep.subr.mxu0 0.0
    %2239 = vmatpush1.msra.mxu0 0.0
    %2240 = vmatprep.subr.mxu0 0.0
    %2241 = vmatpush1.msra.mxu0 0.0
    %2242 = vmatprep.subr.mxu0 0.0
    %2243 = vmatpush1.msra.mxu0 0.0
    %2244 = vmatprep.subr.mxu0 0.0
    %2245 = vmatpush1.msra.mxu0 0.0
    %2246 = vmatprep.subr.mxu0 0.0
    %2247 = vmatpush1.msra.mxu0 0.0
    %2248 = vmatprep.subr.mxu0 0.0
    %2249 = vmatpush1.msra.mxu0 0.0
    %2250 = vmatprep.subr.mxu0 0.0
    %2251 = vmatpush1.msra.mxu0 0.0
    %2252 = vmatprep.subr.mxu0 0.0
    %2253 = vmatpush1.msra.mxu0 0.0
    %2254 = vmatprep.subr.mxu0 0.0
    %2255 = vmatpush1.msra.mxu0 0.0
    %2256 = vmatprep.subr.mxu0 0.0
    %2257 = vmatpush1.msra.mxu0 0.0
    %2258 = vmatprep.subr.mxu0 0.0
    %2259 = vmatpush1.msra.mxu0 0.0
    %2260 = vmatprep.subr.mxu0 0.0
    %2261 = vmatpush1.msra.mxu0 0.0
    %2262 = vmatprep.subr.mxu0 0.0
    %2263 = vmatpush1.msra.mxu0 0.0
    %2264 = vmatprep.subr.mxu0 0.0
    %2265 = vmatpush1.msra.mxu0 0.0
    %2266 = vmatprep.subr.mxu0 0.0
    %2267 = vmatpush1.msra.mxu0 0.0
    %2268 = vmatprep.subr.mxu0 0.0
    %2269 = vmatpush1.msra.mxu0 %v2233
    %2270 = vmatprep.subr.mxu0 0.0
    %2271 = vmatpush2.msra.mxu0 0.0
    %2272 = vmatprep.subr.mxu0 0.0
    %2273 = vmatpush2.msra.mxu0 0.0
    %2274 = vmatprep.subr.mxu0 0.0
    %2275 = vmatpush2.msra.mxu0 0.0
    %2276 = vmatprep.subr.mxu0 0.0
    %2277 = vmatpush2.msra.mxu0 0.0
    %2278 = vmatprep.subr.mxu0 0.0
    %2279 = vmatpush2.msra.mxu0 0.0
    %2280 = vmatprep.subr.mxu0 0.0
    %2281 = vmatpush2.msra.mxu0 0.0
    %2282 = vmatprep.subr.mxu0 0.0
    %2283 = vmatpush2.msra.mxu0 0.0
    %2284 = vmatprep.subr.mxu0 0.0
    %2285 = vmatpush2.msra.mxu0 0.0
    %2286 = vmatprep.subr.mxu0 0.0
    %2287 = vmatpush2.msra.mxu0 0.0
    %2288 = vmatprep.subr.mxu0 0.0
    %2289 = vmatpush2.msra.mxu0 0.0
    %2290 = vmatprep.subr.mxu0 0.0
    %2291 = vmatpush2.msra.mxu0 0.0
    %2292 = vmatprep.subr.mxu0 0.0
    %2293 = vmatpush2.msra.mxu0 0.0
    %2294 = vmatprep.subr.mxu0 0.0
    %2295 = vmatpush2.msra.mxu0 0.0
    %2296 = vmatprep.subr.mxu0 0.0
    %2297 = vmatpush2.msra.mxu0 0.0
    %2298 = vmatprep.subr.mxu0 0.0
    %2299 = vmatpush2.msra.mxu0 0.0
    %2300 = vmatprep.subr.mxu0 0.0
    %2301 = vmatpush2.msra.mxu0 0.0
    %2302 = vmatprep.mubr.f32.mxu0 0.0
    %2303 = vmatmul.mubr.f32.gmra.mxu0 %v2236
    %v2304 = vpop.f32.mrf.mxu0
    %v2305 = vadd.f32 0.0, %v2304
    %v2306 = vpop.f32.mrf.mxu0
    %2307 = vdwg.mxu0
    %2308 = vrot.lane.b32.xlu0 %v306, 48
    %v2309 = vpop.permute.xlu0 %2308
    %v2312 = vsel %vm315, %v2154, 0
    %2314 = vmatprep.subr.mxu0 0.0
    %2315 = vmatpush1.msra.mxu0 0.0
    %2316 = vmatprep.subr.mxu0 0.0
    %2317 = vmatpush1.msra.mxu0 0.0
    %2318 = vmatprep.subr.mxu0 0.0
    %2319 = vmatpush1.msra.mxu0 0.0
    %2320 = vmatprep.subr.mxu0 0.0
    %2321 = vmatpush1.msra.mxu0 0.0
    %2322 = vmatprep.subr.mxu0 0.0
    %2323 = vmatpush1.msra.mxu0 0.0
    %2324 = vmatprep.subr.mxu0 0.0
    %2325 = vmatpush1.msra.mxu0 0.0
    %2326 = vmatprep.subr.mxu0 0.0
    %2327 = vmatpush1.msra.mxu0 0.0
    %2328 = vmatprep.subr.mxu0 0.0
    %2329 = vmatpush1.msra.mxu0 0.0
    %2330 = vmatprep.subr.mxu0 0.0
    %2331 = vmatpush1.msra.mxu0 0.0
    %2332 = vmatprep.subr.mxu0 0.0
    %2333 = vmatpush1.msra.mxu0 0.0
    %2334 = vmatprep.subr.mxu0 0.0
    %2335 = vmatpush1.msra.mxu0 0.0
    %2336 = vmatprep.subr.mxu0 0.0
    %2337 = vmatpush1.msra.mxu0 0.0
    %2338 = vmatprep.subr.mxu0 0.0
    %2339 = vmatpush1.msra.mxu0 0.0
    %2340 = vmatprep.subr.mxu0 0.0
    %2341 = vmatpush1.msra.mxu0 0.0
    %2342 = vmatprep.subr.mxu0 0.0
    %2343 = vmatpush1.msra.mxu0 0.0
    %2344 = vmatprep.subr.mxu0 0.0
    %2345 = vmatpush1.msra.mxu0 %v2309
    %2346 = vmatprep.subr.mxu0 0.0
    %2347 = vmatpush2.msra.mxu0 0.0
    %2348 = vmatprep.subr.mxu0 0.0
    %2349 = vmatpush2.msra.mxu0 0.0
    %2350 = vmatprep.subr.mxu0 0.0
    %2351 = vmatpush2.msra.mxu0 0.0
    %2352 = vmatprep.subr.mxu0 0.0
    %2353 = vmatpush2.msra.mxu0 0.0
    %2354 = vmatprep.subr.mxu0 0.0
    %2355 = vmatpush2.msra.mxu0 0.0
    %2356 = vmatprep.subr.mxu0 0.0
    %2357 = vmatpush2.msra.mxu0 0.0
    %2358 = vmatprep.subr.mxu0 0.0
    %2359 = vmatpush2.msra.mxu0 0.0
    %2360 = vmatprep.subr.mxu0 0.0
    %2361 = vmatpush2.msra.mxu0 0.0
    %2362 = vmatprep.subr.mxu0 0.0
    %2363 = vmatpush2.msra.mxu0 0.0
    %2364 = vmatprep.subr.mxu0 0.0
    %2365 = vmatpush2.msra.mxu0 0.0
    %2366 = vmatprep.subr.mxu0 0.0
    %2367 = vmatpush2.msra.mxu0 0.0
    %2368 = vmatprep.subr.mxu0 0.0
    %2369 = vmatpush2.msra.mxu0 0.0
    %2370 = vmatprep.subr.mxu0 0.0
    %2371 = vmatpush2.msra.mxu0 0.0
    %2372 = vmatprep.subr.mxu0 0.0
    %2373 = vmatpush2.msra.mxu0 0.0
    %2374 = vmatprep.subr.mxu0 0.0
    %2375 = vmatpush2.msra.mxu0 0.0
    %2376 = vmatprep.subr.mxu0 0.0
    %2377 = vmatpush2.msra.mxu0 0.0
    %2378 = vmatprep.mubr.f32.mxu0 0.0
    %2379 = vmatmul.mubr.f32.gmra.mxu0 %v2312
    %v2380 = vpop.f32.mrf.mxu0
    %v2381 = vadd.f32 0.0, %v2380
    %v2382 = vpop.f32.mrf.mxu0
    %2383 = vdwg.mxu0
    %2384 = vrot.lane.b32.xlu0 %v309, 48
    %v2385 = vpop.permute.xlu0 %2384
    %v2388 = vsel %vm315, %v2155, 0
    %2390 = vmatprep.subr.mxu0 0.0
    %2391 = vmatpush1.msra.mxu0 0.0
    %2392 = vmatprep.subr.mxu0 0.0
    %2393 = vmatpush1.msra.mxu0 0.0
    %2394 = vmatprep.subr.mxu0 0.0
    %2395 = vmatpush1.msra.mxu0 0.0
    %2396 = vmatprep.subr.mxu0 0.0
    %2397 = vmatpush1.msra.mxu0 0.0
    %2398 = vmatprep.subr.mxu0 0.0
    %2399 = vmatpush1.msra.mxu0 0.0
    %2400 = vmatprep.subr.mxu0 0.0
    %2401 = vmatpush1.msra.mxu0 0.0
    %2402 = vmatprep.subr.mxu0 0.0
    %2403 = vmatpush1.msra.mxu0 0.0
    %2404 = vmatprep.subr.mxu0 0.0
    %2405 = vmatpush1.msra.mxu0 0.0
    %2406 = vmatprep.subr.mxu0 0.0
    %2407 = vmatpush1.msra.mxu0 0.0
    %2408 = vmatprep.subr.mxu0 0.0
    %2409 = vmatpush1.msra.mxu0 0.0
    %2410 = vmatprep.subr.mxu0 0.0
    %2411 = vmatpush1.msra.mxu0 0.0
    %2412 = vmatprep.subr.mxu0 0.0
    %2413 = vmatpush1.msra.mxu0 0.0
    %2414 = vmatprep.subr.mxu0 0.0
    %2415 = vmatpush1.msra.mxu0 0.0
    %2416 = vmatprep.subr.mxu0 0.0
    %2417 = vmatpush1.msra.mxu0 0.0
    %2418 = vmatprep.subr.mxu0 0.0
    %2419 = vmatpush1.msra.mxu0 0.0
    %2420 = vmatprep.subr.mxu0 0.0
    %2421 = vmatpush1.msra.mxu0 %v2385
    %2422 = vmatprep.subr.mxu0 0.0
    %2423 = vmatpush2.msra.mxu0 0.0
    %2424 = vmatprep.subr.mxu0 0.0
    %2425 = vmatpush2.msra.mxu0 0.0
    %2426 = vmatprep.subr.mxu0 0.0
    %2427 = vmatpush2.msra.mxu0 0.0
    %2428 = vmatprep.subr.mxu0 0.0
    %2429 = vmatpush2.msra.mxu0 0.0
    %2430 = vmatprep.subr.mxu0 0.0
    %2431 = vmatpush2.msra.mxu0 0.0
    %2432 = vmatprep.subr.mxu0 0.0
    %2433 = vmatpush2.msra.mxu0 0.0
    %2434 = vmatprep.subr.mxu0 0.0
    %2435 = vmatpush2.msra.mxu0 0.0
    %2436 = vmatprep.subr.mxu0 0.0
    %2437 = vmatpush2.msra.mxu0 0.0
    %2438 = vmatprep.subr.mxu0 0.0
    %2439 = vmatpush2.msra.mxu0 0.0
    %2440 = vmatprep.subr.mxu0 0.0
    %2441 = vmatpush2.msra.mxu0 0.0
    %2442 = vmatprep.subr.mxu0 0.0
    %2443 = vmatpush2.msra.mxu0 0.0
    %2444 = vmatprep.subr.mxu0 0.0
    %2445 = vmatpush2.msra.mxu0 0.0
    %2446 = vmatprep.subr.mxu0 0.0
    %2447 = vmatpush2.msra.mxu0 0.0
    %2448 = vmatprep.subr.mxu0 0.0
    %2449 = vmatpush2.msra.mxu0 0.0
    %2450 = vmatprep.subr.mxu0 0.0
    %2451 = vmatpush2.msra.mxu0 0.0
    %2452 = vmatprep.subr.mxu0 0.0
    %2453 = vmatpush2.msra.mxu0 0.0
    %2454 = vmatprep.mubr.f32.mxu0 0.0
    %2455 = vmatmul.mubr.f32.gmra.mxu0 %v2388
    %v2456 = vpop.f32.mrf.mxu0
    %v2457 = vadd.f32 0.0, %v2456
    %v2458 = vpop.f32.mrf.mxu0
    %2459 = vdwg.mxu0
    %v2460 = vld [vmem:[%s2 + $0x68] sm:$0xf]
    %v2461 = vpack.c.bf16 %v2229, %v2229
    %v2462 = vpack.c.bf16 %v2305, %v2305
    %v2463 = vpack.c.bf16 %v2381, %v2381
    %v2464 = vpack.c.bf16 %v2457, %v2457
    %v2469 = vunpack.c.l.b16 %v2461
    %v2470 = vunpack.c.l.b16 %v2462
    %v2471 = vunpack.c.l.b16 %v2463
    %v2472 = vunpack.c.l.b16 %v2464
    %v2473 = vpack.c.b16 %v2470, %v2469
    %v2474 = vpack.c.b16 %v2472, %v2471
    %v2476 = vsel %vm315, %v2473, 0
    %v2479 = vsel %vm315, %v2474, 0
    %v2482 = vsel %vm1671, %v2460, 0
    %2484 = vmatprep.subr.bf16.mxu0 0
    %2485 = vmatpush1.bf16.msra.mxu0 0
    %2486 = vmatprep.subr.bf16.mxu0 0
    %2487 = vmatpush1.bf16.msra.mxu0 0
    %2488 = vmatprep.subr.bf16.mxu0 0
    %2489 = vmatpush1.bf16.msra.mxu0 0
    %2490 = vmatprep.subr.bf16.mxu0 0
    %2491 = vmatpush1.bf16.msra.mxu0 0
    %2492 = vmatprep.subr.bf16.mxu0 0
    %2493 = vmatpush1.bf16.msra.mxu0 0
    %2494 = vmatprep.subr.bf16.mxu0 0
    %2495 = vmatpush1.bf16.msra.mxu0 0
    %2496 = vmatprep.subr.bf16.mxu0 0
    %2497 = vmatpush1.bf16.msra.mxu0 0
    %2498 = vmatprep.subr.bf16.mxu0 0
    %2499 = vmatpush1.bf16.msra.mxu0 %v2482
    %2500 = vmatprep.subr.bf16.mxu0 0
    %2501 = vmatpush2.bf16.msra.mxu0 0
    %2502 = vmatprep.subr.bf16.mxu0 0
    %2503 = vmatpush2.bf16.msra.mxu0 0
    %2504 = vmatprep.subr.bf16.mxu0 0
    %2505 = vmatpush2.bf16.msra.mxu0 0
    %2506 = vmatprep.subr.bf16.mxu0 0
    %2507 = vmatpush2.bf16.msra.mxu0 0
    %2508 = vmatprep.subr.bf16.mxu0 0
    %2509 = vmatpush2.bf16.msra.mxu0 0
    %2510 = vmatprep.subr.bf16.mxu0 0
    %2511 = vmatpush2.bf16.msra.mxu0 0
    %2512 = vmatprep.subr.bf16.mxu0 0
    %2513 = vmatpush2.bf16.msra.mxu0 0
    %2514 = vmatprep.subr.bf16.mxu0 0
    %2515 = vmatpush2.bf16.msra.mxu0 0
    %2516 = vmatprep.mubr.bf16.mxu0 0
    %2517 = vmatmul.mubr.bf16.gmra.mxu0 %v2476
    %v2518 = vpop.f32.mrf.mxu0
    %v2519 = vadd.f32 0.0, %v2518
    %v2520 = vpop.f32.mrf.mxu0
    %v2521 = vpop.f32.mrf.mxu0
    %v2522 = vadd.f32 0.0, %v2521
    %v2523 = vpop.f32.mrf.mxu0
    %2524 = vmatprep.mubr.bf16.mxu0 0
    %2525 = vmatmul.mubr.bf16.gmra.mxu0 %v2479
    %v2526 = vpop.f32.mrf.mxu0
    %v2527 = vadd.f32 0.0, %v2526
    %v2528 = vpop.f32.mrf.mxu0
    %v2529 = vpop.f32.mrf.mxu0
    %v2530 = vadd.f32 0.0, %v2529
    %v2531 = vpop.f32.mrf.mxu0
    %2532 = vdwg.mxu0
    %v2533 = vadd.f32 %v1778, %v2519
    %v2534 = vadd.f32 %v1781, %v2522
    %v2535 = vadd.f32 %v1786, %v2527
    %v2536 = vadd.f32 %v1789, %v2530
    %2537 = vrot.lane.b32.xlu0 %v298, 104
    %v2538 = vpop.permute.xlu0 %2537
    %2539 = vrot.lane.b32.xlu0 %v298, 72
    %v2540 = vpop.permute.xlu0 %2539
    %v2541 = vsel %vm315, %v2538, 0
    %v2543 = vsel %vm315, %v2540, 0
    %2545 = vmatprep.subr.mxu0 0.0
    %2546 = vmatpush1.xpose.msra.mxu0 0.0
    %2547 = vmatprep.subr.mxu0 0.0
    %2548 = vmatpush1.xpose.msra.mxu0 0.0
    %2549 = vmatprep.subr.mxu0 0.0
    %2550 = vmatpush1.xpose.msra.mxu0 0.0
    %2551 = vmatprep.subr.mxu0 0.0
    %2552 = vmatpush1.xpose.msra.mxu0 0.0
    %2553 = vmatprep.subr.mxu0 0.0
    %2554 = vmatpush1.xpose.msra.mxu0 0.0
    %2555 = vmatprep.subr.mxu0 0.0
    %2556 = vmatpush1.xpose.msra.mxu0 0.0
    %2557 = vmatprep.subr.mxu0 0.0
    %2558 = vmatpush1.xpose.msra.mxu0 0.0
    %2559 = vmatprep.subr.mxu0 0.0
    %2560 = vmatpush1.xpose.msra.mxu0 0.0
    %2561 = vmatprep.subr.mxu0 0.0
    %2562 = vmatpush1.xpose.msra.mxu0 0.0
    %2563 = vmatprep.subr.mxu0 0.0
    %2564 = vmatpush1.xpose.msra.mxu0 0.0
    %2565 = vmatprep.subr.mxu0 0.0
    %2566 = vmatpush1.xpose.msra.mxu0 0.0
    %2567 = vmatprep.subr.mxu0 0.0
    %2568 = vmatpush1.xpose.msra.mxu0 0.0
    %2569 = vmatprep.subr.mxu0 0.0
    %2570 = vmatpush1.xpose.msra.mxu0 0.0
    %2571 = vmatprep.subr.mxu0 0.0
    %2572 = vmatpush1.xpose.msra.mxu0 0.0
    %2573 = vmatprep.subr.mxu0 0.0
    %2574 = vmatpush1.xpose.msra.mxu0 0.0
    %2575 = vmatprep.subr.mxu0 0.0
    %2576 = vmatpush1.xpose.msra.mxu0 %v2543
    %2577 = vmatprep.subr.mxu0 0.0
    %2578 = vmatpush2.xpose.msra.mxu0 0.0
    %2579 = vmatprep.subr.mxu0 0.0
    %2580 = vmatpush2.xpose.msra.mxu0 0.0
    %2581 = vmatprep.subr.mxu0 0.0
    %2582 = vmatpush2.xpose.msra.mxu0 0.0
    %2583 = vmatprep.subr.mxu0 0.0
    %2584 = vmatpush2.xpose.msra.mxu0 0.0
    %2585 = vmatprep.subr.mxu0 0.0
    %2586 = vmatpush2.xpose.msra.mxu0 0.0
    %2587 = vmatprep.subr.mxu0 0.0
    %2588 = vmatpush2.xpose.msra.mxu0 0.0
    %2589 = vmatprep.subr.mxu0 0.0
    %2590 = vmatpush2.xpose.msra.mxu0 0.0
    %2591 = vmatprep.subr.mxu0 0.0
    %2592 = vmatpush2.xpose.msra.mxu0 0.0
    %2593 = vmatprep.subr.mxu0 0.0
    %2594 = vmatpush2.xpose.msra.mxu0 0.0
    %2595 = vmatprep.subr.mxu0 0.0
    %2596 = vmatpush2.xpose.msra.mxu0 0.0
    %2597 = vmatprep.subr.mxu0 0.0
    %2598 = vmatpush2.xpose.msra.mxu0 0.0
    %2599 = vmatprep.subr.mxu0 0.0
    %2600 = vmatpush2.xpose.msra.mxu0 0.0
    %2601 = vmatprep.subr.mxu0 0.0
    %2602 = vmatpush2.xpose.msra.mxu0 0.0
    %2603 = vmatprep.subr.mxu0 0.0
    %2604 = vmatpush2.xpose.msra.mxu0 0.0
    %2605 = vmatprep.subr.mxu0 0.0
    %2606 = vmatpush2.xpose.msra.mxu0 0.0
    %2607 = vmatprep.subr.mxu0 0.0
    %2608 = vmatpush2.xpose.msra.mxu0 0.0
    %2609 = vmatprep.mubr.f32.mxu0 0.0
    %2610 = vmatmul.mubr.f32.gmra.mxu0 %v2541
    %v2611 = vpop.f32.mrf.mxu0
    %v2612 = vadd.f32 0.0, %v2611
    %v2613 = vpop.f32.mrf.mxu0
    %2614 = vdwg.mxu0
    %2615 = vrot.lane.b32.xlu0 %v301, 104
    %v2616 = vpop.permute.xlu0 %2615
    %2617 = vrot.lane.b32.xlu0 %v301, 72
    %v2618 = vpop.permute.xlu0 %2617
    %v2619 = vsel %vm315, %v2616, 0
    %v2621 = vsel %vm315, %v2618, 0
    %2623 = vmatprep.subr.mxu0 0.0
    %2624 = vmatpush1.xpose.msra.mxu0 0.0
    %2625 = vmatprep.subr.mxu0 0.0
    %2626 = vmatpush1.xpose.msra.mxu0 0.0
    %2627 = vmatprep.subr.mxu0 0.0
    %2628 = vmatpush1.xpose.msra.mxu0 0.0
    %2629 = vmatprep.subr.mxu0 0.0
    %2630 = vmatpush1.xpose.msra.mxu0 0.0
    %2631 = vmatprep.subr.mxu0 0.0
    %2632 = vmatpush1.xpose.msra.mxu0 0.0
    %2633 = vmatprep.subr.mxu0 0.0
    %2634 = vmatpush1.xpose.msra.mxu0 0.0
    %2635 = vmatprep.subr.mxu0 0.0
    %2636 = vmatpush1.xpose.msra.mxu0 0.0
    %2637 = vmatprep.subr.mxu0 0.0
    %2638 = vmatpush1.xpose.msra.mxu0 0.0
    %2639 = vmatprep.subr.mxu0 0.0
    %2640 = vmatpush1.xpose.msra.mxu0 0.0
    %2641 = vmatprep.subr.mxu0 0.0
    %2642 = vmatpush1.xpose.msra.mxu0 0.0
    %2643 = vmatprep.subr.mxu0 0.0
    %2644 = vmatpush1.xpose.msra.mxu0 0.0
    %2645 = vmatprep.subr.mxu0 0.0
    %2646 = vmatpush1.xpose.msra.mxu0 0.0
    %2647 = vmatprep.subr.mxu0 0.0
    %2648 = vmatpush1.xpose.msra.mxu0 0.0
    %2649 = vmatprep.subr.mxu0 0.0
    %2650 = vmatpush1.xpose.msra.mxu0 0.0
    %2651 = vmatprep.subr.mxu0 0.0
    %2652 = vmatpush1.xpose.msra.mxu0 0.0
    %2653 = vmatprep.subr.mxu0 0.0
    %2654 = vmatpush1.xpose.msra.mxu0 %v2621
    %2655 = vmatprep.subr.mxu0 0.0
    %2656 = vmatpush2.xpose.msra.mxu0 0.0
    %2657 = vmatprep.subr.mxu0 0.0
    %2658 = vmatpush2.xpose.msra.mxu0 0.0
    %2659 = vmatprep.subr.mxu0 0.0
    %2660 = vmatpush2.xpose.msra.mxu0 0.0
    %2661 = vmatprep.subr.mxu0 0.0
    %2662 = vmatpush2.xpose.msra.mxu0 0.0
    %2663 = vmatprep.subr.mxu0 0.0
    %2664 = vmatpush2.xpose.msra.mxu0 0.0
    %2665 = vmatprep.subr.mxu0 0.0
    %2666 = vmatpush2.xpose.msra.mxu0 0.0
    %2667 = vmatprep.subr.mxu0 0.0
    %2668 = vmatpush2.xpose.msra.mxu0 0.0
    %2669 = vmatprep.subr.mxu0 0.0
    %2670 = vmatpush2.xpose.msra.mxu0 0.0
    %2671 = vmatprep.subr.mxu0 0.0
    %2672 = vmatpush2.xpose.msra.mxu0 0.0
    %2673 = vmatprep.subr.mxu0 0.0
    %2674 = vmatpush2.xpose.msra.mxu0 0.0
    %2675 = vmatprep.subr.mxu0 0.0
    %2676 = vmatpush2.xpose.msra.mxu0 0.0
    %2677 = vmatprep.subr.mxu0 0.0
    %2678 = vmatpush2.xpose.msra.mxu0 0.0
    %2679 = vmatprep.subr.mxu0 0.0
    %2680 = vmatpush2.xpose.msra.mxu0 0.0
    %2681 = vmatprep.subr.mxu0 0.0
    %2682 = vmatpush2.xpose.msra.mxu0 0.0
    %2683 = vmatprep.subr.mxu0 0.0
    %2684 = vmatpush2.xpose.msra.mxu0 0.0
    %2685 = vmatprep.subr.mxu0 0.0
    %2686 = vmatpush2.xpose.msra.mxu0 0.0
    %2687 = vmatprep.mubr.f32.mxu0 0.0
    %2688 = vmatmul.mubr.f32.gmra.mxu0 %v2619
    %v2689 = vpop.f32.mrf.mxu0
    %v2690 = vadd.f32 0.0, %v2689
    %v2691 = vpop.f32.mrf.mxu0
    %2692 = vdwg.mxu0
    %2693 = vrot.lane.b32.xlu0 %v306, 104
    %v2694 = vpop.permute.xlu0 %2693
    %2695 = vrot.lane.b32.xlu0 %v306, 72
    %v2696 = vpop.permute.xlu0 %2695
    %v2697 = vsel %vm315, %v2694, 0
    %v2699 = vsel %vm315, %v2696, 0
    %2701 = vmatprep.subr.mxu0 0.0
    %2702 = vmatpush1.xpose.msra.mxu0 0.0
    %2703 = vmatprep.subr.mxu0 0.0
    %2704 = vmatpush1.xpose.msra.mxu0 0.0
    %2705 = vmatprep.subr.mxu0 0.0
    %2706 = vmatpush1.xpose.msra.mxu0 0.0
    %2707 = vmatprep.subr.mxu0 0.0
    %2708 = vmatpush1.xpose.msra.mxu0 0.0
    %2709 = vmatprep.subr.mxu0 0.0
    %2710 = vmatpush1.xpose.msra.mxu0 0.0
    %2711 = vmatprep.subr.mxu0 0.0
    %2712 = vmatpush1.xpose.msra.mxu0 0.0
    %2713 = vmatprep.subr.mxu0 0.0
    %2714 = vmatpush1.xpose.msra.mxu0 0.0
    %2715 = vmatprep.subr.mxu0 0.0
    %2716 = vmatpush1.xpose.msra.mxu0 0.0
    %2717 = vmatprep.subr.mxu0 0.0
    %2718 = vmatpush1.xpose.msra.mxu0 0.0
    %2719 = vmatprep.subr.mxu0 0.0
    %2720 = vmatpush1.xpose.msra.mxu0 0.0
    %2721 = vmatprep.subr.mxu0 0.0
    %2722 = vmatpush1.xpose.msra.mxu0 0.0
    %2723 = vmatprep.subr.mxu0 0.0
    %2724 = vmatpush1.xpose.msra.mxu0 0.0
    %2725 = vmatprep.subr.mxu0 0.0
    %2726 = vmatpush1.xpose.msra.mxu0 0.0
    %2727 = vmatprep.subr.mxu0 0.0
    %2728 = vmatpush1.xpose.msra.mxu0 0.0
    %2729 = vmatprep.subr.mxu0 0.0
    %2730 = vmatpush1.xpose.msra.mxu0 0.0
    %2731 = vmatprep.subr.mxu0 0.0
    %2732 = vmatpush1.xpose.msra.mxu0 %v2699
    %2733 = vmatprep.subr.mxu0 0.0
    %2734 = vmatpush2.xpose.msra.mxu0 0.0
    %2735 = vmatprep.subr.mxu0 0.0
    %2736 = vmatpush2.xpose.msra.mxu0 0.0
    %2737 = vmatprep.subr.mxu0 0.0
    %2738 = vmatpush2.xpose.msra.mxu0 0.0
    %2739 = vmatprep.subr.mxu0 0.0
    %2740 = vmatpush2.xpose.msra.mxu0 0.0
    %2741 = vmatprep.subr.mxu0 0.0
    %2742 = vmatpush2.xpose.msra.mxu0 0.0
    %2743 = vmatprep.subr.mxu0 0.0
    %2744 = vmatpush2.xpose.msra.mxu0 0.0
    %2745 = vmatprep.subr.mxu0 0.0
    %2746 = vmatpush2.xpose.msra.mxu0 0.0
    %2747 = vmatprep.subr.mxu0 0.0
    %2748 = vmatpush2.xpose.msra.mxu0 0.0
    %2749 = vmatprep.subr.mxu0 0.0
    %2750 = vmatpush2.xpose.msra.mxu0 0.0
    %2751 = vmatprep.subr.mxu0 0.0
    %2752 = vmatpush2.xpose.msra.mxu0 0.0
    %2753 = vmatprep.subr.mxu0 0.0
    %2754 = vmatpush2.xpose.msra.mxu0 0.0
    %2755 = vmatprep.subr.mxu0 0.0
    %2756 = vmatpush2.xpose.msra.mxu0 0.0
    %2757 = vmatprep.subr.mxu0 0.0
    %2758 = vmatpush2.xpose.msra.mxu0 0.0
    %2759 = vmatprep.subr.mxu0 0.0
    %2760 = vmatpush2.xpose.msra.mxu0 0.0
    %2761 = vmatprep.subr.mxu0 0.0
    %2762 = vmatpush2.xpose.msra.mxu0 0.0
    %2763 = vmatprep.subr.mxu0 0.0
    %2764 = vmatpush2.xpose.msra.mxu0 0.0
    %2765 = vmatprep.mubr.f32.mxu0 0.0
    %2766 = vmatmul.mubr.f32.gmra.mxu0 %v2697
    %v2767 = vpop.f32.mrf.mxu0
    %v2768 = vadd.f32 0.0, %v2767
    %v2769 = vpop.f32.mrf.mxu0
    %2770 = vdwg.mxu0
    %2771 = vrot.lane.b32.xlu0 %v309, 104
    %v2772 = vpop.permute.xlu0 %2771
    %2773 = vrot.lane.b32.xlu0 %v309, 72
    %v2774 = vpop.permute.xlu0 %2773
    %v2775 = vsel %vm315, %v2772, 0
    %v2777 = vsel %vm315, %v2774, 0
    %2779 = vmatprep.subr.mxu0 0.0
    %2780 = vmatpush1.xpose.msra.mxu0 0.0
    %2781 = vmatprep.subr.mxu0 0.0
    %2782 = vmatpush1.xpose.msra.mxu0 0.0
    %2783 = vmatprep.subr.mxu0 0.0
    %2784 = vmatpush1.xpose.msra.mxu0 0.0
    %2785 = vmatprep.subr.mxu0 0.0
    %2786 = vmatpush1.xpose.msra.mxu0 0.0
    %2787 = vmatprep.subr.mxu0 0.0
    %2788 = vmatpush1.xpose.msra.mxu0 0.0
    %2789 = vmatprep.subr.mxu0 0.0
    %2790 = vmatpush1.xpose.msra.mxu0 0.0
    %2791 = vmatprep.subr.mxu0 0.0
    %2792 = vmatpush1.xpose.msra.mxu0 0.0
    %2793 = vmatprep.subr.mxu0 0.0
    %2794 = vmatpush1.xpose.msra.mxu0 0.0
    %2795 = vmatprep.subr.mxu0 0.0
    %2796 = vmatpush1.xpose.msra.mxu0 0.0
    %2797 = vmatprep.subr.mxu0 0.0
    %2798 = vmatpush1.xpose.msra.mxu0 0.0
    %2799 = vmatprep.subr.mxu0 0.0
    %2800 = vmatpush1.xpose.msra.mxu0 0.0
    %2801 = vmatprep.subr.mxu0 0.0
    %2802 = vmatpush1.xpose.msra.mxu0 0.0
    %2803 = vmatprep.subr.mxu0 0.0
    %2804 = vmatpush1.xpose.msra.mxu0 0.0
    %2805 = vmatprep.subr.mxu0 0.0
    %2806 = vmatpush1.xpose.msra.mxu0 0.0
    %2807 = vmatprep.subr.mxu0 0.0
    %2808 = vmatpush1.xpose.msra.mxu0 0.0
    %2809 = vmatprep.subr.mxu0 0.0
    %2810 = vmatpush1.xpose.msra.mxu0 %v2777
    %2811 = vmatprep.subr.mxu0 0.0
    %2812 = vmatpush2.xpose.msra.mxu0 0.0
    %2813 = vmatprep.subr.mxu0 0.0
    %2814 = vmatpush2.xpose.msra.mxu0 0.0
    %2815 = vmatprep.subr.mxu0 0.0
    %2816 = vmatpush2.xpose.msra.mxu0 0.0
    %2817 = vmatprep.subr.mxu0 0.0
    %2818 = vmatpush2.xpose.msra.mxu0 0.0
    %2819 = vmatprep.subr.mxu0 0.0
    %2820 = vmatpush2.xpose.msra.mxu0 0.0
    %2821 = vmatprep.subr.mxu0 0.0
    %2822 = vmatpush2.xpose.msra.mxu0 0.0
    %2823 = vmatprep.subr.mxu0 0.0
    %2824 = vmatpush2.xpose.msra.mxu0 0.0
    %2825 = vmatprep.subr.mxu0 0.0
    %2826 = vmatpush2.xpose.msra.mxu0 0.0
    %2827 = vmatprep.subr.mxu0 0.0
    %2828 = vmatpush2.xpose.msra.mxu0 0.0
    %2829 = vmatprep.subr.mxu0 0.0
    %2830 = vmatpush2.xpose.msra.mxu0 0.0
    %2831 = vmatprep.subr.mxu0 0.0
    %2832 = vmatpush2.xpose.msra.mxu0 0.0
    %2833 = vmatprep.subr.mxu0 0.0
    %2834 = vmatpush2.xpose.msra.mxu0 0.0
    %2835 = vmatprep.subr.mxu0 0.0
    %2836 = vmatpush2.xpose.msra.mxu0 0.0
    %2837 = vmatprep.subr.mxu0 0.0
    %2838 = vmatpush2.xpose.msra.mxu0 0.0
    %2839 = vmatprep.subr.mxu0 0.0
    %2840 = vmatpush2.xpose.msra.mxu0 0.0
    %2841 = vmatprep.subr.mxu0 0.0
    %2842 = vmatpush2.xpose.msra.mxu0 0.0
    %2843 = vmatprep.mubr.f32.mxu0 0.0
    %2844 = vmatmul.mubr.f32.gmra.mxu0 %v2775
    %v2845 = vpop.f32.mrf.mxu0
    %v2846 = vadd.f32 0.0, %v2845
    %v2847 = vpop.f32.mrf.mxu0
    %2848 = vdwg.mxu0
    %v2849 = vmul.f32 %v2612, 0.35355338
    %v2850 = vmul.f32 %v2690, 0.35355338
    %v2851 = vmul.f32 %v2768, 0.35355338
    %v2852 = vmul.f32 %v2846, 0.35355338
    %v2853 = vadd.f32 %v2849, %v176
    %v2854 = vadd.f32 %v2850, %v176
    %v2855 = vadd.f32 %v2851, %v176
    %v2856 = vadd.f32 %v2852, %v176
    %v2857 = vsel %vm315, %v2853, -inf
    %2858 = vmax.xlane.f32.xlu0 %v2857
    %v2859 = vpop.xlane.xlu0 %2858
    %v2860 = vsel %vm315, %v2854, -inf
    %2861 = vmax.xlane.f32.xlu0 %v2860
    %v2862 = vpop.xlane.xlu0 %2861
    %v2863 = vsel %vm315, %v2855, -inf
    %2864 = vmax.xlane.f32.xlu0 %v2863
    %v2865 = vpop.xlane.xlu0 %2864
    %v2866 = vsel %vm315, %v2856, -inf
    %2867 = vmax.xlane.f32.xlu0 %v2866
    %v2868 = vpop.xlane.xlu0 %2867
    %v2869 = vsub.f32 %v2853, %v2859
    %v2870 = vsub.f32 %v2854, %v2862
    %v2871 = vsub.f32 %v2855, %v2865
    %v2872 = vsub.f32 %v2856, %v2868
    %v2873 = vmul.f32 %v2869, 1.442695
    %v2874 = vpow.pop %v2873
    %v2875 = vmul.f32 %v2870, 1.442695
    %v2876 = vpow.pop %v2875
    %v2877 = vmul.f32 %v2871, 1.442695
    %v2878 = vpow.pop %v2877
    %v2879 = vmul.f32 %v2872, 1.442695
    %v2880 = vpow.pop %v2879
    %v2881 = vsel %vm315, %v2874, 0.0
    %2882 = vadd.xlane.f32.xlu0 %v2881
    %v2883 = vpop.xlane.xlu0 %2882
    %v2884 = vsel %vm315, %v2876, 0.0
    %2885 = vadd.xlane.f32.xlu0 %v2884
    %v2886 = vpop.xlane.xlu0 %2885
    %v2887 = vsel %vm315, %v2878, 0.0
    %2888 = vadd.xlane.f32.xlu0 %v2887
    %v2889 = vpop.xlane.xlu0 %2888
    %v2890 = vsel %vm315, %v2880, 0.0
    %2891 = vadd.xlane.f32.xlu0 %v2890
    %v2892 = vpop.xlane.xlu0 %2891
    %v2893 = vrcp.pop %v2883
    %v2894 = vrcp.pop %v2886
    %v2895 = vrcp.pop %v2889
    %v2896 = vrcp.pop %v2892
    %v2897 = vmul.f32 %v2874, %v2893
    %v2898 = vmul.f32 %v2876, %v2894
    %v2899 = vmul.f32 %v2878, %v2895
    %v2900 = vmul.f32 %v2880, %v2896
    %2901 = vrot.lane.b32.xlu0 %v298, 40
    %v2902 = vpop.permute.xlu0 %2901
    %v2905 = vsel %vm315, %v2897, 0
    %2907 = vmatprep.subr.mxu0 0.0
    %2908 = vmatpush1.msra.mxu0 0.0
    %2909 = vmatprep.subr.mxu0 0.0
    %2910 = vmatpush1.msra.mxu0 0.0
    %2911 = vmatprep.subr.mxu0 0.0
    %2912 = vmatpush1.msra.mxu0 0.0
    %2913 = vmatprep.subr.mxu0 0.0
    %2914 = vmatpush1.msra.mxu0 0.0
    %2915 = vmatprep.subr.mxu0 0.0
    %2916 = vmatpush1.msra.mxu0 0.0
    %2917 = vmatprep.subr.mxu0 0.0
    %2918 = vmatpush1.msra.mxu0 0.0
    %2919 = vmatprep.subr.mxu0 0.0
    %2920 = vmatpush1.msra.mxu0 0.0
    %2921 = vmatprep.subr.mxu0 0.0
    %2922 = vmatpush1.msra.mxu0 0.0
    %2923 = vmatprep.subr.mxu0 0.0
    %2924 = vmatpush1.msra.mxu0 0.0
    %2925 = vmatprep.subr.mxu0 0.0
    %2926 = vmatpush1.msra.mxu0 0.0
    %2927 = vmatprep.subr.mxu0 0.0
    %2928 = vmatpush1.msra.mxu0 0.0
    %2929 = vmatprep.subr.mxu0 0.0
    %2930 = vmatpush1.msra.mxu0 0.0
    %2931 = vmatprep.subr.mxu0 0.0
    %2932 = vmatpush1.msra.mxu0 0.0
    %2933 = vmatprep.subr.mxu0 0.0
    %2934 = vmatpush1.msra.mxu0 0.0
    %2935 = vmatprep.subr.mxu0 0.0
    %2936 = vmatpush1.msra.mxu0 0.0
    %2937 = vmatprep.subr.mxu0 0.0
    %2938 = vmatpush1.msra.mxu0 %v2902
    %2939 = vmatprep.subr.mxu0 0.0
    %2940 = vmatpush2.msra.mxu0 0.0
    %2941 = vmatprep.subr.mxu0 0.0
    %2942 = vmatpush2.msra.mxu0 0.0
    %2943 = vmatprep.subr.mxu0 0.0
    %2944 = vmatpush2.msra.mxu0 0.0
    %2945 = vmatprep.subr.mxu0 0.0
    %2946 = vmatpush2.msra.mxu0 0.0
    %2947 = vmatprep.subr.mxu0 0.0
    %2948 = vmatpush2.msra.mxu0 0.0
    %2949 = vmatprep.subr.mxu0 0.0
    %2950 = vmatpush2.msra.mxu0 0.0
    %2951 = vmatprep.subr.mxu0 0.0
    %2952 = vmatpush2.msra.mxu0 0.0
    %2953 = vmatprep.subr.mxu0 0.0
    %2954 = vmatpush2.msra.mxu0 0.0
    %2955 = vmatprep.subr.mxu0 0.0
    %2956 = vmatpush2.msra.mxu0 0.0
    %2957 = vmatprep.subr.mxu0 0.0
    %2958 = vmatpush2.msra.mxu0 0.0
    %2959 = vmatprep.subr.mxu0 0.0
    %2960 = vmatpush2.msra.mxu0 0.0
    %2961 = vmatprep.subr.mxu0 0.0
    %2962 = vmatpush2.msra.mxu0 0.0
    %2963 = vmatprep.subr.mxu0 0.0
    %2964 = vmatpush2.msra.mxu0 0.0
    %2965 = vmatprep.subr.mxu0 0.0
    %2966 = vmatpush2.msra.mxu0 0.0
    %2967 = vmatprep.subr.mxu0 0.0
    %2968 = vmatpush2.msra.mxu0 0.0
    %2969 = vmatprep.subr.mxu0 0.0
    %2970 = vmatpush2.msra.mxu0 0.0
    %2971 = vmatprep.mubr.f32.mxu0 0.0
    %2972 = vmatmul.mubr.f32.gmra.mxu0 %v2905
    %v2973 = vpop.f32.mrf.mxu0
    %v2974 = vadd.f32 0.0, %v2973
    %v2975 = vpop.f32.mrf.mxu0
    %2976 = vdwg.mxu0
    %2977 = vrot.lane.b32.xlu0 %v301, 40
    %v2978 = vpop.permute.xlu0 %2977
    %v2981 = vsel %vm315, %v2898, 0
    %2983 = vmatprep.subr.mxu0 0.0
    %2984 = vmatpush1.msra.mxu0 0.0
    %2985 = vmatprep.subr.mxu0 0.0
    %2986 = vmatpush1.msra.mxu0 0.0
    %2987 = vmatprep.subr.mxu0 0.0
    %2988 = vmatpush1.msra.mxu0 0.0
    %2989 = vmatprep.subr.mxu0 0.0
    %2990 = vmatpush1.msra.mxu0 0.0
    %2991 = vmatprep.subr.mxu0 0.0
    %2992 = vmatpush1.msra.mxu0 0.0
    %2993 = vmatprep.subr.mxu0 0.0
    %2994 = vmatpush1.msra.mxu0 0.0
    %2995 = vmatprep.subr.mxu0 0.0
    %2996 = vmatpush1.msra.mxu0 0.0
    %2997 = vmatprep.subr.mxu0 0.0
    %2998 = vmatpush1.msra.mxu0 0.0
    %2999 = vmatprep.subr.mxu0 0.0
    %3000 = vmatpush1.msra.mxu0 0.0
    %3001 = vmatprep.subr.mxu0 0.0
    %3002 = vmatpush1.msra.mxu0 0.0
    %3003 = vmatprep.subr.mxu0 0.0
    %3004 = vmatpush1.msra.mxu0 0.0
    %3005 = vmatprep.subr.mxu0 0.0
    %3006 = vmatpush1.msra.mxu0 0.0
    %3007 = vmatprep.subr.mxu0 0.0
    %3008 = vmatpush1.msra.mxu0 0.0
    %3009 = vmatprep.subr.mxu0 0.0
    %3010 = vmatpush1.msra.mxu0 0.0
    %3011 = vmatprep.subr.mxu0 0.0
    %3012 = vmatpush1.msra.mxu0 0.0
    %3013 = vmatprep.subr.mxu0 0.0
    %3014 = vmatpush1.msra.mxu0 %v2978
    %3015 = vmatprep.subr.mxu0 0.0
    %3016 = vmatpush2.msra.mxu0 0.0
    %3017 = vmatprep.subr.mxu0 0.0
    %3018 = vmatpush2.msra.mxu0 0.0
    %3019 = vmatprep.subr.mxu0 0.0
    %3020 = vmatpush2.msra.mxu0 0.0
    %3021 = vmatprep.subr.mxu0 0.0
    %3022 = vmatpush2.msra.mxu0 0.0
    %3023 = vmatprep.subr.mxu0 0.0
    %3024 = vmatpush2.msra.mxu0 0.0
    %3025 = vmatprep.subr.mxu0 0.0
    %3026 = vmatpush2.msra.mxu0 0.0
    %3027 = vmatprep.subr.mxu0 0.0
    %3028 = vmatpush2.msra.mxu0 0.0
    %3029 = vmatprep.subr.mxu0 0.0
    %3030 = vmatpush2.msra.mxu0 0.0
    %3031 = vmatprep.subr.mxu0 0.0
    %3032 = vmatpush2.msra.mxu0 0.0
    %3033 = vmatprep.subr.mxu0 0.0
    %3034 = vmatpush2.msra.mxu0 0.0
    %3035 = vmatprep.subr.mxu0 0.0
    %3036 = vmatpush2.msra.mxu0 0.0
    %3037 = vmatprep.subr.mxu0 0.0
    %3038 = vmatpush2.msra.mxu0 0.0
    %3039 = vmatprep.subr.mxu0 0.0
    %3040 = vmatpush2.msra.mxu0 0.0
    %3041 = vmatprep.subr.mxu0 0.0
    %3042 = vmatpush2.msra.mxu0 0.0
    %3043 = vmatprep.subr.mxu0 0.0
    %3044 = vmatpush2.msra.mxu0 0.0
    %3045 = vmatprep.subr.mxu0 0.0
    %3046 = vmatpush2.msra.mxu0 0.0
    %3047 = vmatprep.mubr.f32.mxu0 0.0
    %3048 = vmatmul.mubr.f32.gmra.mxu0 %v2981
    %v3049 = vpop.f32.mrf.mxu0
    %v3050 = vadd.f32 0.0, %v3049
    %v3051 = vpop.f32.mrf.mxu0
    %3052 = vdwg.mxu0
    %3053 = vrot.lane.b32.xlu0 %v306, 40
    %v3054 = vpop.permute.xlu0 %3053
    %v3057 = vsel %vm315, %v2899, 0
    %3059 = vmatprep.subr.mxu0 0.0
    %3060 = vmatpush1.msra.mxu0 0.0
    %3061 = vmatprep.subr.mxu0 0.0
    %3062 = vmatpush1.msra.mxu0 0.0
    %3063 = vmatprep.subr.mxu0 0.0
    %3064 = vmatpush1.msra.mxu0 0.0
    %3065 = vmatprep.subr.mxu0 0.0
    %3066 = vmatpush1.msra.mxu0 0.0
    %3067 = vmatprep.subr.mxu0 0.0
    %3068 = vmatpush1.msra.mxu0 0.0
    %3069 = vmatprep.subr.mxu0 0.0
    %3070 = vmatpush1.msra.mxu0 0.0
    %3071 = vmatprep.subr.mxu0 0.0
    %3072 = vmatpush1.msra.mxu0 0.0
    %3073 = vmatprep.subr.mxu0 0.0
    %3074 = vmatpush1.msra.mxu0 0.0
    %3075 = vmatprep.subr.mxu0 0.0
    %3076 = vmatpush1.msra.mxu0 0.0
    %3077 = vmatprep.subr.mxu0 0.0
    %3078 = vmatpush1.msra.mxu0 0.0
    %3079 = vmatprep.subr.mxu0 0.0
    %3080 = vmatpush1.msra.mxu0 0.0
    %3081 = vmatprep.subr.mxu0 0.0
    %3082 = vmatpush1.msra.mxu0 0.0
    %3083 = vmatprep.subr.mxu0 0.0
    %3084 = vmatpush1.msra.mxu0 0.0
    %3085 = vmatprep.subr.mxu0 0.0
    %3086 = vmatpush1.msra.mxu0 0.0
    %3087 = vmatprep.subr.mxu0 0.0
    %3088 = vmatpush1.msra.mxu0 0.0
    %3089 = vmatprep.subr.mxu0 0.0
    %3090 = vmatpush1.msra.mxu0 %v3054
    %3091 = vmatprep.subr.mxu0 0.0
    %3092 = vmatpush2.msra.mxu0 0.0
    %3093 = vmatprep.subr.mxu0 0.0
    %3094 = vmatpush2.msra.mxu0 0.0
    %3095 = vmatprep.subr.mxu0 0.0
    %3096 = vmatpush2.msra.mxu0 0.0
    %3097 = vmatprep.subr.mxu0 0.0
    %3098 = vmatpush2.msra.mxu0 0.0
    %3099 = vmatprep.subr.mxu0 0.0
    %3100 = vmatpush2.msra.mxu0 0.0
    %3101 = vmatprep.subr.mxu0 0.0
    %3102 = vmatpush2.msra.mxu0 0.0
    %3103 = vmatprep.subr.mxu0 0.0
    %3104 = vmatpush2.msra.mxu0 0.0
    %3105 = vmatprep.subr.mxu0 0.0
    %3106 = vmatpush2.msra.mxu0 0.0
    %3107 = vmatprep.subr.mxu0 0.0
    %3108 = vmatpush2.msra.mxu0 0.0
    %3109 = vmatprep.subr.mxu0 0.0
    %3110 = vmatpush2.msra.mxu0 0.0
    %3111 = vmatprep.subr.mxu0 0.0
    %3112 = vmatpush2.msra.mxu0 0.0
    %3113 = vmatprep.subr.mxu0 0.0
    %3114 = vmatpush2.msra.mxu0 0.0
    %3115 = vmatprep.subr.mxu0 0.0
    %3116 = vmatpush2.msra.mxu0 0.0
    %3117 = vmatprep.subr.mxu0 0.0
    %3118 = vmatpush2.msra.mxu0 0.0
    %3119 = vmatprep.subr.mxu0 0.0
    %3120 = vmatpush2.msra.mxu0 0.0
    %3121 = vmatprep.subr.mxu0 0.0
    %3122 = vmatpush2.msra.mxu0 0.0
    %3123 = vmatprep.mubr.f32.mxu0 0.0
    %3124 = vmatmul.mubr.f32.gmra.mxu0 %v3057
    %v3125 = vpop.f32.mrf.mxu0
    %v3126 = vadd.f32 0.0, %v3125
    %v3127 = vpop.f32.mrf.mxu0
    %3128 = vdwg.mxu0
    %3129 = vrot.lane.b32.xlu0 %v309, 40
    %v3130 = vpop.permute.xlu0 %3129
    %v3133 = vsel %vm315, %v2900, 0
    %3135 = vmatprep.subr.mxu0 0.0
    %3136 = vmatpush1.msra.mxu0 0.0
    %3137 = vmatprep.subr.mxu0 0.0
    %3138 = vmatpush1.msra.mxu0 0.0
    %3139 = vmatprep.subr.mxu0 0.0
    %3140 = vmatpush1.msra.mxu0 0.0
    %3141 = vmatprep.subr.mxu0 0.0
    %3142 = vmatpush1.msra.mxu0 0.0
    %3143 = vmatprep.subr.mxu0 0.0
    %3144 = vmatpush1.msra.mxu0 0.0
    %3145 = vmatprep.subr.mxu0 0.0
    %3146 = vmatpush1.msra.mxu0 0.0
    %3147 = vmatprep.subr.mxu0 0.0
    %3148 = vmatpush1.msra.mxu0 0.0
    %3149 = vmatprep.subr.mxu0 0.0
    %3150 = vmatpush1.msra.mxu0 0.0
    %3151 = vmatprep.subr.mxu0 0.0
    %3152 = vmatpush1.msra.mxu0 0.0
    %3153 = vmatprep.subr.mxu0 0.0
    %3154 = vmatpush1.msra.mxu0 0.0
    %3155 = vmatprep.subr.mxu0 0.0
    %3156 = vmatpush1.msra.mxu0 0.0
    %3157 = vmatprep.subr.mxu0 0.0
    %3158 = vmatpush1.msra.mxu0 0.0
    %3159 = vmatprep.subr.mxu0 0.0
    %3160 = vmatpush1.msra.mxu0 0.0
    %3161 = vmatprep.subr.mxu0 0.0
    %3162 = vmatpush1.msra.mxu0 0.0
    %3163 = vmatprep.subr.mxu0 0.0
    %3164 = vmatpush1.msra.mxu0 0.0
    %3165 = vmatprep.subr.mxu0 0.0
    %3166 = vmatpush1.msra.mxu0 %v3130
    %3167 = vmatprep.subr.mxu0 0.0
    %3168 = vmatpush2.msra.mxu0 0.0
    %3169 = vmatprep.subr.mxu0 0.0
    %3170 = vmatpush2.msra.mxu0 0.0
    %3171 = vmatprep.subr.mxu0 0.0
    %3172 = vmatpush2.msra.mxu0 0.0
    %3173 = vmatprep.subr.mxu0 0.0
    %3174 = vmatpush2.msra.mxu0 0.0
    %3175 = vmatprep.subr.mxu0 0.0
    %3176 = vmatpush2.msra.mxu0 0.0
    %3177 = vmatprep.subr.mxu0 0.0
    %3178 = vmatpush2.msra.mxu0 0.0
    %3179 = vmatprep.subr.mxu0 0.0
    %3180 = vmatpush2.msra.mxu0 0.0
    %3181 = vmatprep.subr.mxu0 0.0
    %3182 = vmatpush2.msra.mxu0 0.0
    %3183 = vmatprep.subr.mxu0 0.0
    %3184 = vmatpush2.msra.mxu0 0.0
    %3185 = vmatprep.subr.mxu0 0.0
    %3186 = vmatpush2.msra.mxu0 0.0
    %3187 = vmatprep.subr.mxu0 0.0
    %3188 = vmatpush2.msra.mxu0 0.0
    %3189 = vmatprep.subr.mxu0 0.0
    %3190 = vmatpush2.msra.mxu0 0.0
    %3191 = vmatprep.subr.mxu0 0.0
    %3192 = vmatpush2.msra.mxu0 0.0
    %3193 = vmatprep.subr.mxu0 0.0
    %3194 = vmatpush2.msra.mxu0 0.0
    %3195 = vmatprep.subr.mxu0 0.0
    %3196 = vmatpush2.msra.mxu0 0.0
    %3197 = vmatprep.subr.mxu0 0.0
    %3198 = vmatpush2.msra.mxu0 0.0
    %3199 = vmatprep.mubr.f32.mxu0 0.0
    %3200 = vmatmul.mubr.f32.gmra.mxu0 %v3133
    %v3201 = vpop.f32.mrf.mxu0
    %v3202 = vadd.f32 0.0, %v3201
    %v3203 = vpop.f32.mrf.mxu0
    %3204 = vdwg.mxu0
    %v3205 = vld [vmem:[%s2 + $0x6c] sm:$0xf]
    %v3206 = vpack.c.bf16 %v2974, %v2974
    %v3207 = vpack.c.bf16 %v3050, %v3050
    %v3208 = vpack.c.bf16 %v3126, %v3126
    %v3209 = vpack.c.bf16 %v3202, %v3202
    %v3214 = vunpack.c.l.b16 %v3206
    %v3215 = vunpack.c.l.b16 %v3207
    %v3216 = vunpack.c.l.b16 %v3208
    %v3217 = vunpack.c.l.b16 %v3209
    %v3218 = vpack.c.b16 %v3215, %v3214
    %v3219 = vpack.c.b16 %v3217, %v3216
    %v3221 = vsel %vm315, %v3218, 0
    %v3224 = vsel %vm315, %v3219, 0
    %v3227 = vsel %vm1671, %v3205, 0
    %3229 = vmatprep.subr.bf16.mxu0 0
    %3230 = vmatpush1.bf16.msra.mxu0 0
    %3231 = vmatprep.subr.bf16.mxu0 0
    %3232 = vmatpush1.bf16.msra.mxu0 0
    %3233 = vmatprep.subr.bf16.mxu0 0
    %3234 = vmatpush1.bf16.msra.mxu0 0
    %3235 = vmatprep.subr.bf16.mxu0 0
    %3236 = vmatpush1.bf16.msra.mxu0 0
    %3237 = vmatprep.subr.bf16.mxu0 0
    %3238 = vmatpush1.bf16.msra.mxu0 0
    %3239 = vmatprep.subr.bf16.mxu0 0
    %3240 = vmatpush1.bf16.msra.mxu0 0
    %3241 = vmatprep.subr.bf16.mxu0 0
    %3242 = vmatpush1.bf16.msra.mxu0 0
    %3243 = vmatprep.subr.bf16.mxu0 0
    %3244 = vmatpush1.bf16.msra.mxu0 %v3227
    %3245 = vmatprep.subr.bf16.mxu0 0
    %3246 = vmatpush2.bf16.msra.mxu0 0
    %3247 = vmatprep.subr.bf16.mxu0 0
    %3248 = vmatpush2.bf16.msra.mxu0 0
    %3249 = vmatprep.subr.bf16.mxu0 0
    %3250 = vmatpush2.bf16.msra.mxu0 0
    %3251 = vmatprep.subr.bf16.mxu0 0
    %3252 = vmatpush2.bf16.msra.mxu0 0
    %3253 = vmatprep.subr.bf16.mxu0 0
    %3254 = vmatpush2.bf16.msra.mxu0 0
    %3255 = vmatprep.subr.bf16.mxu0 0
    %3256 = vmatpush2.bf16.msra.mxu0 0
    %3257 = vmatprep.subr.bf16.mxu0 0
    %3258 = vmatpush2.bf16.msra.mxu0 0
    %3259 = vmatprep.subr.bf16.mxu0 0
    %3260 = vmatpush2.bf16.msra.mxu0 0
    %3261 = vmatprep.mubr.bf16.mxu0 0
    %3262 = vmatmul.mubr.bf16.gmra.mxu0 %v3221
    %v3263 = vpop.f32.mrf.mxu0
    %v3264 = vadd.f32 0.0, %v3263
    %v3265 = vpop.f32.mrf.mxu0
    %v3266 = vpop.f32.mrf.mxu0
    %v3267 = vadd.f32 0.0, %v3266
    %v3268 = vpop.f32.mrf.mxu0
    %3269 = vmatprep.mubr.bf16.mxu0 0
    %3270 = vmatmul.mubr.bf16.gmra.mxu0 %v3224
    %v3271 = vpop.f32.mrf.mxu0
    %v3272 = vadd.f32 0.0, %v3271
    %v3273 = vpop.f32.mrf.mxu0
    %v3274 = vpop.f32.mrf.mxu0
    %v3275 = vadd.f32 0.0, %v3274
    %v3276 = vpop.f32.mrf.mxu0
    %3277 = vdwg.mxu0
    %v3278 = vadd.f32 %v2533, %v3264
    %v3279 = vadd.f32 %v2534, %v3267
    %v3280 = vadd.f32 %v2535, %v3272
    %v3281 = vadd.f32 %v2536, %v3275
    %v3282 = vld [vmem:[%s3 + $0x1] sm:$0x1]
    %v3283 = vlaneseq
    %v3284 = vshrl.u32 %v3283, 7
    %v3285 = vsub.s32 0, %v3284
    %v3286 = vrot.slane %v3282, %v3285
    %v3287 = vadd.f32 %v3278, %v3286
    %v3288 = vadd.f32 %v3279, %v3286
    %v3289 = vadd.f32 %v3280, %v3286
    %v3290 = vadd.f32 %v3281, %v3286
    %v3291 = vadd.f32 %v172, %v3287
    %v3292 = vadd.f32 %v173, %v3288
    %v3293 = vadd.f32 %v174, %v3289
    %v3294 = vadd.f32 %v175, %v3290
    %v3295 = vld [vmem:[%s3 + $0x4] sm:$0x1]
    %v3296 = vld [vmem:[%s3 + $0x5] sm:$0x1]
    %v3297 = vsel %vm238, %v3291, 0.0
    %3298 = vadd.xlane.f32.xlu0 %v3297
    %v3299 = vpop.xlane.xlu0 %3298
    %v3300 = vsel %vm238, %v3292, 0.0
    %3301 = vadd.xlane.f32.xlu0 %v3300
    %v3302 = vpop.xlane.xlu0 %3301
    %v3303 = vsel %vm238, %v3293, 0.0
    %3304 = vadd.xlane.f32.xlu0 %v3303
    %v3305 = vpop.xlane.xlu0 %3304
    %v3306 = vsel %vm238, %v3294, 0.0
    %3307 = vadd.xlane.f32.xlu0 %v3306
    %v3308 = vpop.xlane.xlu0 %3307
    %v3309 = vrcp.pop 32.0
    %v3310 = vmul.f32 %v3299, %v3309
    %v3311 = vmul.f32 %v3302, %v3309
    %v3312 = vmul.f32 %v3305, %v3309
    %v3313 = vmul.f32 %v3308, %v3309
    %v3314 = vsub.f32 %v3291, %v3310
    %v3315 = vsub.f32 %v3292, %v3311
    %v3316 = vsub.f32 %v3293, %v3312
    %v3317 = vsub.f32 %v3294, %v3313
    %v3318 = vmul.f32 %v3314, %v3314
    %v3319 = vmul.f32 %v3315, %v3315
    %v3320 = vmul.f32 %v3316, %v3316
    %v3321 = vmul.f32 %v3317, %v3317
    %v3322 = vsel %vm238, %v3318, 0.0
    %3323 = vadd.xlane.f32.xlu0 %v3322
    %v3324 = vpop.xlane.xlu0 %3323
    %v3325 = vsel %vm238, %v3319, 0.0
    %3326 = vadd.xlane.f32.xlu0 %v3325
    %v3327 = vpop.xlane.xlu0 %3326
    %v3328 = vsel %vm238, %v3320, 0.0
    %3329 = vadd.xlane.f32.xlu0 %v3328
    %v3330 = vpop.xlane.xlu0 %3329
    %v3331 = vsel %vm238, %v3321, 0.0
    %3332 = vadd.xlane.f32.xlu0 %v3331
    %v3333 = vpop.xlane.xlu0 %3332
    %v3334 = vmul.f32 %v3324, %v3309
    %v3335 = vmul.f32 %v3327, %v3309
    %v3336 = vmul.f32 %v3330, %v3309
    %v3337 = vmul.f32 %v3333, %v3309
    %v3338 = vadd.f32 %v3334, 1e-05
    %v3339 = vadd.f32 %v3335, 1e-05
    %v3340 = vadd.f32 %v3336, 1e-05
    %v3341 = vadd.f32 %v3337, 1e-05
    %v3342 = vrsqrt.pop %v3338
    %v3343 = vrsqrt.pop %v3339
    %v3344 = vrsqrt.pop %v3340
    %v3345 = vrsqrt.pop %v3341
    %v3346 = vmul.f32 %v3314, %v3342
    %v3347 = vmul.f32 %v3315, %v3343
    %v3348 = vmul.f32 %v3316, %v3344
    %v3349 = vmul.f32 %v3317, %v3345
    %v3350 = vlaneseq
    %v3351 = vshrl.u32 %v3350, 7
    %v3352 = vsub.s32 0, %v3351
    %v3353 = vrot.slane %v3295, %v3352
    %v3354 = vmul.f32 %v3346, %v3353
    %v3355 = vmul.f32 %v3347, %v3353
    %v3356 = vmul.f32 %v3348, %v3353
    %v3357 = vmul.f32 %v3349, %v3353
    %v3358 = vlaneseq
    %v3359 = vshrl.u32 %v3358, 7
    %v3360 = vsub.s32 0, %v3359
    %v3361 = vrot.slane %v3296, %v3360
    %v3362 = vadd.f32 %v3354, %v3361
    %v3363 = vadd.f32 %v3355, %v3361
    %v3364 = vadd.f32 %v3356, %v3361
    %v3365 = vadd.f32 %v3357, %v3361
    %v3366 = vld [vmem:[%s2 + $0x80] sm:$0xf]
    %v3367 = vld [vmem:[%s2 + $0x84] sm:$0xf]
    %v3368 = vld [vmem:[%s2 + $0x88] sm:$0xf]
    %v3369 = vld [vmem:[%s2 + $0x8c] sm:$0xf]
    %v3370 = vpack.c.bf16 %v3362, %v3362
    %v3371 = vpack.c.bf16 %v3363, %v3363
    %v3372 = vpack.c.bf16 %v3364, %v3364
    %v3373 = vpack.c.bf16 %v3365, %v3365
    %v3374 = vld [vmem:[%s3 + $0x2] sm:$0x1]
    %v3375 = vlaneseq
    %v3376 = vshrl.u32 %v3375, 7
    %v3377 = vsub.s32 0, %v3376
    %v3378 = vrot.slane %v3374, %v3377
    %v3383 = vunpack.c.l.b16 %v3370
    %v3384 = vunpack.c.l.b16 %v3371
    %v3385 = vunpack.c.l.b16 %v3372
    %v3386 = vunpack.c.l.b16 %v3373
    %v3387 = vpack.c.b16 %v3384, %v3383
    %v3388 = vpack.c.b16 %v3386, %v3385
    %v3393 = vunpack.c.l.b16 %v3366
    %v3394 = vunpack.c.l.b16 %v3367
    %v3395 = vunpack.c.l.b16 %v3368
    %v3396 = vunpack.c.l.b16 %v3369
    %v3397 = vpack.c.b16 %v3394, %v3393
    %v3398 = vpack.c.b16 %v3396, %v3395
    %v3400 = vsel %vm238, %v3387, 0
    %v3403 = vsel %vm238, %v3388, 0
    %v3406 = vsel %vm238, %v3397, 0
    %v3409 = vsel %vm238, %v3398, 0
    %3411 = vmatprep.subr.bf16.mxu0 0
    %3412 = vmatpush1.bf16.xpose.msra.mxu0 0
    %3413 = vmatprep.subr.bf16.mxu0 0
    %3414 = vmatpush1.bf16.xpose.msra.mxu0 0
    %3415 = vmatprep.subr.bf16.mxu0 0
    %3416 = vmatpush1.bf16.xpose.msra.mxu0 0
    %3417 = vmatprep.subr.bf16.mxu0 0
    %3418 = vmatpush1.bf16.xpose.msra.mxu0 0
    %3419 = vmatprep.subr.bf16.mxu0 0
    %3420 = vmatpush1.bf16.xpose.msra.mxu0 0
    %3421 = vmatprep.subr.bf16.mxu0 0
    %3422 = vmatpush1.bf16.xpose.msra.mxu0 0
    %3423 = vmatprep.subr.bf16.mxu0 0
    %3424 = vmatpush1.bf16.xpose.msra.mxu0 %v3409
    %3425 = vmatprep.subr.bf16.mxu0 0
    %3426 = vmatpush1.bf16.xpose.msra.mxu0 %v3406
    %3427 = vmatprep.subr.bf16.mxu0 0
    %3428 = vmatpush2.bf16.xpose.msra.mxu0 0
    %3429 = vmatprep.subr.bf16.mxu0 0
    %3430 = vmatpush2.bf16.xpose.msra.mxu0 0
    %3431 = vmatprep.subr.bf16.mxu0 0
    %3432 = vmatpush2.bf16.xpose.msra.mxu0 0
    %3433 = vmatprep.subr.bf16.mxu0 0
    %3434 = vmatpush2.bf16.xpose.msra.mxu0 0
    %3435 = vmatprep.subr.bf16.mxu0 0
    %3436 = vmatpush2.bf16.xpose.msra.mxu0 0
    %3437 = vmatprep.subr.bf16.mxu0 0
    %3438 = vmatpush2.bf16.xpose.msra.mxu0 0
    %3439 = vmatprep.subr.bf16.mxu0 0
    %3440 = vmatpush2.bf16.xpose.msra.mxu0 0
    %3441 = vmatprep.subr.bf16.mxu0 0
    %3442 = vmatpush2.bf16.xpose.msra.mxu0 0
    %3443 = vmatprep.mubr.bf16.mxu0 0
    %3444 = vmatmul.mubr.bf16.gmra.mxu0 %v3400
    %v3445 = vpop.f32.mrf.mxu0
    %v3446 = vadd.f32 %v3378, %v3445
    %v3447 = vpop.f32.mrf.mxu0
    %v3448 = vpop.f32.mrf.mxu0
    %v3449 = vadd.f32 %v3378, %v3448
    %v3450 = vpop.f32.mrf.mxu0
    %3451 = vmatprep.mubr.bf16.mxu0 0
    %3452 = vmatmul.mubr.bf16.gmra.mxu0 %v3403
    %v3453 = vpop.f32.mrf.mxu0
    %v3454 = vadd.f32 %v3378, %v3453
    %v3455 = vpop.f32.mrf.mxu0
    %v3456 = vpop.f32.mrf.mxu0
    %v3457 = vadd.f32 %v3378, %v3456
    %v3458 = vpop.f32.mrf.mxu0
    %3459 = vdwg.mxu0
    %v3460 = vmax.f32 %v3446, 0.0
    %v3461 = vmax.f32 %v3449, 0.0
    %v3462 = vmax.f32 %v3454, 0.0
    %v3463 = vmax.f32 %v3457, 0.0
    %v3464 = vld [vmem:[%s2 + $0xa0] sm:$0xf]
    %v3465 = vld [vmem:[%s2 + $0xa4] sm:$0xf]
    %v3466 = vld [vmem:[%s2 + $0xa8] sm:$0xf]
    %v3467 = vld [vmem:[%s2 + $0xac] sm:$0xf]
    %v3468 = vpack.c.bf16 %v3460, %v3460
    %v3469 = vpack.c.bf16 %v3461, %v3461
    %v3470 = vpack.c.bf16 %v3462, %v3462
    %v3471 = vpack.c.bf16 %v3463, %v3463
    %v3472 = vld [vmem:[%s3 + $0x3] sm:$0x1]
    %v3473 = vlaneseq
    %v3474 = vshrl.u32 %v3473, 7
    %v3475 = vsub.s32 0, %v3474
    %v3476 = vrot.slane %v3472, %v3475
    %v3481 = vunpack.c.l.b16 %v3468
    %v3482 = vunpack.c.l.b16 %v3469
    %v3483 = vunpack.c.l.b16 %v3470
    %v3484 = vunpack.c.l.b16 %v3471
    %v3485 = vpack.c.b16 %v3482, %v3481
    %v3486 = vpack.c.b16 %v3484, %v3483
    %v3491 = vunpack.c.l.b16 %v3464
    %v3492 = vunpack.c.l.b16 %v3465
    %v3493 = vunpack.c.l.b16 %v3466
    %v3494 = vunpack.c.l.b16 %v3467
    %v3495 = vpack.c.b16 %v3492, %v3491
    %v3496 = vpack.c.b16 %v3494, %v3493
    %v3498 = vsel %vm238, %v3485, 0
    %v3501 = vsel %vm238, %v3486, 0
    %v3504 = vsel %vm238, %v3495, 0
    %v3507 = vsel %vm238, %v3496, 0
    %3509 = vmatprep.subr.bf16.mxu0 0
    %3510 = vmatpush1.bf16.xpose.msra.mxu0 0
    %3511 = vmatprep.subr.bf16.mxu0 0
    %3512 = vmatpush1.bf16.xpose.msra.mxu0 0
    %3513 = vmatprep.subr.bf16.mxu0 0
    %3514 = vmatpush1.bf16.xpose.msra.mxu0 0
    %3515 = vmatprep.subr.bf16.mxu0 0
    %3516 = vmatpush1.bf16.xpose.msra.mxu0 0
    %3517 = vmatprep.subr.bf16.mxu0 0
    %3518 = vmatpush1.bf16.xpose.msra.mxu0 0
    %3519 = vmatprep.subr.bf16.mxu0 0
    %3520 = vmatpush1.bf16.xpose.msra.mxu0 0
    %3521 = vmatprep.subr.bf16.mxu0 0
    %3522 = vmatpush1.bf16.xpose.msra.mxu0 %v3507
    %3523 = vmatprep.subr.bf16.mxu0 0
    %3524 = vmatpush1.bf16.xpose.msra.mxu0 %v3504
    %3525 = vmatprep.subr.bf16.mxu0 0
    %3526 = vmatpush2.bf16.xpose.msra.mxu0 0
    %3527 = vmatprep.subr.bf16.mxu0 0
    %3528 = vmatpush2.bf16.xpose.msra.mxu0 0
    %3529 = vmatprep.subr.bf16.mxu0 0
    %3530 = vmatpush2.bf16.xpose.msra.mxu0 0
    %3531 = vmatprep.subr.bf16.mxu0 0
    %3532 = vmatpush2.bf16.xpose.msra.mxu0 0
    %3533 = vmatprep.subr.bf16.mxu0 0
    %3534 = vmatpush2.bf16.xpose.msra.mxu0 0
    %3535 = vmatprep.subr.bf16.mxu0 0
    %3536 = vmatpush2.bf16.xpose.msra.mxu0 0
    %3537 = vmatprep.subr.bf16.mxu0 0
    %3538 = vmatpush2.bf16.xpose.msra.mxu0 0
    %3539 = vmatprep.subr.bf16.mxu0 0
    %3540 = vmatpush2.bf16.xpose.msra.mxu0 0
    %3541 = vmatprep.mubr.bf16.mxu0 0
    %3542 = vmatmul.mubr.bf16.gmra.mxu0 %v3498
    %v3543 = vpop.f32.mrf.mxu0
    %v3544 = vadd.f32 %v3476, %v3543
    %v3545 = vpop.f32.mrf.mxu0
    %v3546 = vpop.f32.mrf.mxu0
    %v3547 = vadd.f32 %v3476, %v3546
    %v3548 = vpop.f32.mrf.mxu0
    %3549 = vmatprep.mubr.bf16.mxu0 0
    %3550 = vmatmul.mubr.bf16.gmra.mxu0 %v3501
    %v3551 = vpop.f32.mrf.mxu0
    %v3552 = vadd.f32 %v3476, %v3551
    %v3553 = vpop.f32.mrf.mxu0
    %v3554 = vpop.f32.mrf.mxu0
    %v3555 = vadd.f32 %v3476, %v3554
    %v3556 = vpop.f32.mrf.mxu0
    %3557 = vdwg.mxu0
    %v3558 = vadd.f32 %v3362, %v3544
    %v3559 = vadd.f32 %v3363, %v3547
    %v3560 = vadd.f32 %v3364, %v3552
    %v3561 = vadd.f32 %v3365, %v3555
    %v3562 = vld [vmem:[%s3 + $0x6] sm:$0x1]
    %v3563 = vld [vmem:[%s3 + $0x7] sm:$0x1]
    %v3564 = vsel %vm238, %v3558, 0.0
    %3565 = vadd.xlane.f32.xlu0 %v3564
    %v3566 = vpop.xlane.xlu0 %3565
    %v3567 = vsel %vm238, %v3559, 0.0
    %3568 = vadd.xlane.f32.xlu0 %v3567
    %v3569 = vpop.xlane.xlu0 %3568
    %v3570 = vsel %vm238, %v3560, 0.0
    %3571 = vadd.xlane.f32.xlu0 %v3570
    %v3572 = vpop.xlane.xlu0 %3571
    %v3573 = vsel %vm238, %v3561, 0.0
    %3574 = vadd.xlane.f32.xlu0 %v3573
    %v3575 = vpop.xlane.xlu0 %3574
    %v3576 = vmul.f32 %v3566, %v3309
    %v3577 = vmul.f32 %v3569, %v3309
    %v3578 = vmul.f32 %v3572, %v3309
    %v3579 = vmul.f32 %v3575, %v3309
    %v3580 = vsub.f32 %v3558, %v3576
    %v3581 = vsub.f32 %v3559, %v3577
    %v3582 = vsub.f32 %v3560, %v3578
    %v3583 = vsub.f32 %v3561, %v3579
    %v3584 = vmul.f32 %v3580, %v3580
    %v3585 = vmul.f32 %v3581, %v3581
    %v3586 = vmul.f32 %v3582, %v3582
    %v3587 = vmul.f32 %v3583, %v3583
    %v3588 = vsel %vm238, %v3584, 0.0
    %3589 = vadd.xlane.f32.xlu0 %v3588
    %v3590 = vpop.xlane.xlu0 %3589
    %v3591 = vsel %vm238, %v3585, 0.0
    %3592 = vadd.xlane.f32.xlu0 %v3591
    %v3593 = vpop.xlane.xlu0 %3592
    %v3594 = vsel %vm238, %v3586, 0.0
    %3595 = vadd.xlane.f32.xlu0 %v3594
    %v3596 = vpop.xlane.xlu0 %3595
    %v3597 = vsel %vm238, %v3587, 0.0
    %3598 = vadd.xlane.f32.xlu0 %v3597
    %v3599 = vpop.xlane.xlu0 %3598
    %v3600 = vmul.f32 %v3590, %v3309
    %v3601 = vmul.f32 %v3593, %v3309
    %v3602 = vmul.f32 %v3596, %v3309
    %v3603 = vmul.f32 %v3599, %v3309
    %v3604 = vadd.f32 %v3600, 1e-05
    %v3605 = vadd.f32 %v3601, 1e-05
    %v3606 = vadd.f32 %v3602, 1e-05
    %v3607 = vadd.f32 %v3603, 1e-05
    %v3608 = vrsqrt.pop %v3604
    %v3609 = vrsqrt.pop %v3605
    %v3610 = vrsqrt.pop %v3606
    %v3611 = vrsqrt.pop %v3607
    %v3612 = vmul.f32 %v3580, %v3608
    %v3613 = vmul.f32 %v3581, %v3609
    %v3614 = vmul.f32 %v3582, %v3610
    %v3615 = vmul.f32 %v3583, %v3611
    %v3616 = vlaneseq
    %v3617 = vshrl.u32 %v3616, 7
    %v3618 = vsub.s32 0, %v3617
    %v3619 = vrot.slane %v3562, %v3618
    %v3620 = vmul.f32 %v3612, %v3619
    %v3621 = vmul.f32 %v3613, %v3619
    %v3622 = vmul.f32 %v3614, %v3619
    %v3623 = vmul.f32 %v3615, %v3619
    %v3624 = vlaneseq
    %v3625 = vshrl.u32 %v3624, 7
    %v3626 = vsub.s32 0, %v3625
    %v3627 = vrot.slane %v3563, %v3626
    %v3628 = vadd.f32 %v3620, %v3627
    %v3629 = vadd.f32 %v3621, %v3627
    %v3630 = vadd.f32 %v3622, %v3627
    %v3631 = vadd.f32 %v3623, %v3627
    %v3632 = vpack.c.bf16 %v3628, %v3628
    %v3633 = vpack.c.bf16 %v3629, %v3629
    %v3634 = vpack.c.bf16 %v3630, %v3630
    %v3635 = vpack.c.bf16 %v3631, %v3631
    %v3636 = vld [vmem:[%s2 + $0x30] sm:$0xf]
    %v3637 = vld [vmem:[%s2 + $0x34] sm:$0xf]
    %v3638 = vld [vmem:[%s2 + $0x38] sm:$0xf]
    %v3639 = vld [vmem:[%s2 + $0x3c] sm:$0xf]
    %v3640 = vld [vmem:[%s2 + $0x40] sm:$0xf]
    %v3641 = vld [vmem:[%s2 + $0x44] sm:$0xf]
    %v3642 = vld [vmem:[%s2 + $0x48] sm:$0xf]
    %v3643 = vld [vmem:[%s2 + $0x4c] sm:$0xf]
    %v3644 = vld [vmem:[%s2 + $0x50] sm:$0xf]
    %v3645 = vld [vmem:[%s2 + $0x54] sm:$0xf]
    %v3646 = vld [vmem:[%s2 + $0x58] sm:$0xf]
    %v3647 = vld [vmem:[%s2 + $0x5c] sm:$0xf]
    %v3648 = vld [vmem:[%s3 + $0x8] sm:$0x1]
    %v3649 = vlaneseq
    %v3650 = vshrl.u32 %v3649, 7
    %v3651 = vsub.s32 0, %v3650
    %v3652 = vrot.slane %v3648, %v3651
    %v3657 = vunpack.c.l.b16 %v3632
    %v3658 = vunpack.c.l.b16 %v3633
    %v3659 = vunpack.c.l.b16 %v3634
    %v3660 = vunpack.c.l.b16 %v3635
    %v3661 = vpack.c.b16 %v3658, %v3657
    %v3662 = vpack.c.b16 %v3660, %v3659
    %v3675 = vunpack.c.l.b16 %v3636
    %v3676 = vunpack.c.l.b16 %v3637
    %v3677 = vunpack.c.l.b16 %v3638
    %v3678 = vunpack.c.l.b16 %v3639
    %v3679 = vunpack.c.l.b16 %v3640
    %v3680 = vunpack.c.l.b16 %v3641
    %v3681 = vunpack.c.l.b16 %v3642
    %v3682 = vunpack.c.l.b16 %v3643
    %v3683 = vunpack.c.l.b16 %v3644
    %v3684 = vunpack.c.l.b16 %v3645
    %v3685 = vunpack.c.l.b16 %v3646
    %v3686 = vunpack.c.l.b16 %v3647
    %v3687 = vpack.c.b16 %v3676, %v3675
    %v3688 = vpack.c.b16 %v3678, %v3677
    %v3689 = vpack.c.b16 %v3680, %v3679
    %v3690 = vpack.c.b16 %v3682, %v3681
    %v3691 = vpack.c.b16 %v3684, %v3683
    %v3692 = vpack.c.b16 %v3686, %v3685
    %v3694 = vsel %vm238, %v3661, 0
    %v3697 = vsel %vm238, %v3662, 0
    %v3700 = vsel %vm238, %v3687, 0
    %v3703 = vsel %vm238, %v3688, 0
    %v3706 = vsel %vm238, %v3689, 0
    %v3709 = vsel %vm238, %v3690, 0
    %v3712 = vsel %vm238, %v3691, 0
    %v3715 = vsel %vm238, %v3692, 0
    %3717 = vmatprep.subr.bf16.mxu0 0
    %3718 = vmatpush1.bf16.xpose.msra.mxu0 0
    %3719 = vmatprep.subr.bf16.mxu0 0
    %3720 = vmatpush1.bf16.xpose.msra.mxu0 0
    %3721 = vmatprep.subr.bf16.mxu0 0
    %3722 = vmatpush1.bf16.xpose.msra.mxu0 %v3715
    %3723 = vmatprep.subr.bf16.mxu0 0
    %3724 = vmatpush1.bf16.xpose.msra.mxu0 %v3712
    %3725 = vmatprep.subr.bf16.mxu0 0
    %3726 = vmatpush1.bf16.xpose.msra.mxu0 %v3709
    %3727 = vmatprep.subr.bf16.mxu0 0
    %3728 = vmatpush1.bf16.xpose.msra.mxu0 %v3706
    %3729 = vmatprep.subr.bf16.mxu0 0
    %3730 = vmatpush1.bf16.xpose.msra.mxu0 %v3703
    %3731 = vmatprep.subr.bf16.mxu0 0
    %3732 = vmatpush1.bf16.xpose.msra.mxu0 %v3700
    %3733 = vmatprep.subr.bf16.mxu0 0
    %3734 = vmatpush2.bf16.xpose.msra.mxu0 0
    %3735 = vmatprep.subr.bf16.mxu0 0
    %3736 = vmatpush2.bf16.xpose.msra.mxu0 0
    %3737 = vmatprep.subr.bf16.mxu0 0
    %3738 = vmatpush2.bf16.xpose.msra.mxu0 0
    %3739 = vmatprep.subr.bf16.mxu0 0
    %3740 = vmatpush2.bf16.xpose.msra.mxu0 0
    %3741 = vmatprep.subr.bf16.mxu0 0
    %3742 = vmatpush2.bf16.xpose.msra.mxu0 0
    %3743 = vmatprep.subr.bf16.mxu0 0
    %3744 = vmatpush2.bf16.xpose.msra.mxu0 0
    %3745 = vmatprep.subr.bf16.mxu0 0
    %3746 = vmatpush2.bf16.xpose.msra.mxu0 0
    %3747 = vmatprep.subr.bf16.mxu0 0
    %3748 = vmatpush2.bf16.xpose.msra.mxu0 0
    %3749 = vmatprep.mubr.bf16.mxu0 0
    %3750 = vmatmul.mubr.bf16.gmra.mxu0 %v3694
    %v3751 = vpop.f32.mrf.mxu0
    %v3752 = vadd.f32 %v3652, %v3751
    %v3753 = vpop.f32.mrf.mxu0
    %v3754 = vpop.f32.mrf.mxu0
    %v3755 = vadd.f32 %v3652, %v3754
    %v3756 = vpop.f32.mrf.mxu0
    %3757 = vmatprep.mubr.bf16.mxu0 0
    %3758 = vmatmul.mubr.bf16.gmra.mxu0 %v3697
    %v3759 = vpop.f32.mrf.mxu0
    %v3760 = vadd.f32 %v3652, %v3759
    %v3761 = vpop.f32.mrf.mxu0
    %v3762 = vpop.f32.mrf.mxu0
    %v3763 = vadd.f32 %v3652, %v3762
    %v3764 = vpop.f32.mrf.mxu0
    %3765 = vdwg.mxu0
    %3767 = vrot.lane.b32.xlu0 %v3752, 96
    %v3768 = vpop.permute.xlu0 %3767
    %v3769 = vsel %vm315, %v3752, 0
    %v3771 = vsel %vm315, %v3768, 0
    %3773 = vmatprep.subr.mxu0 0.0
    %3774 = vmatpush1.xpose.msra.mxu0 0.0
    %3775 = vmatprep.subr.mxu0 0.0
    %3776 = vmatpush1.xpose.msra.mxu0 0.0
    %3777 = vmatprep.subr.mxu0 0.0
    %3778 = vmatpush1.xpose.msra.mxu0 0.0
    %3779 = vmatprep.subr.mxu0 0.0
    %3780 = vmatpush1.xpose.msra.mxu0 0.0
    %3781 = vmatprep.subr.mxu0 0.0
    %3782 = vmatpush1.xpose.msra.mxu0 0.0
    %3783 = vmatprep.subr.mxu0 0.0
    %3784 = vmatpush1.xpose.msra.mxu0 0.0
    %3785 = vmatprep.subr.mxu0 0.0
    %3786 = vmatpush1.xpose.msra.mxu0 0.0
    %3787 = vmatprep.subr.mxu0 0.0
    %3788 = vmatpush1.xpose.msra.mxu0 0.0
    %3789 = vmatprep.subr.mxu0 0.0
    %3790 = vmatpush1.xpose.msra.mxu0 0.0
    %3791 = vmatprep.subr.mxu0 0.0
    %3792 = vmatpush1.xpose.msra.mxu0 0.0
    %3793 = vmatprep.subr.mxu0 0.0
    %3794 = vmatpush1.xpose.msra.mxu0 0.0
    %3795 = vmatprep.subr.mxu0 0.0
    %3796 = vmatpush1.xpose.msra.mxu0 0.0
    %3797 = vmatprep.subr.mxu0 0.0
    %3798 = vmatpush1.xpose.msra.mxu0 0.0
    %3799 = vmatprep.subr.mxu0 0.0
    %3800 = vmatpush1.xpose.msra.mxu0 0.0
    %3801 = vmatprep.subr.mxu0 0.0
    %3802 = vmatpush1.xpose.msra.mxu0 0.0
    %3803 = vmatprep.subr.mxu0 0.0
    %3804 = vmatpush1.xpose.msra.mxu0 %v3771
    %3805 = vmatprep.subr.mxu0 0.0
    %3806 = vmatpush2.xpose.msra.mxu0 0.0
    %3807 = vmatprep.subr.mxu0 0.0
    %3808 = vmatpush2.xpose.msra.mxu0 0.0
    %3809 = vmatprep.subr.mxu0 0.0
    %3810 = vmatpush2.xpose.msra.mxu0 0.0
    %3811 = vmatprep.subr.mxu0 0.0
    %3812 = vmatpush2.xpose.msra.mxu0 0.0
    %3813 = vmatprep.subr.mxu0 0.0
    %3814 = vmatpush2.xpose.msra.mxu0 0.0
    %3815 = vmatprep.subr.mxu0 0.0
    %3816 = vmatpush2.xpose.msra.mxu0 0.0
    %3817 = vmatprep.subr.mxu0 0.0
    %3818 = vmatpush2.xpose.msra.mxu0 0.0
    %3819 = vmatprep.subr.mxu0 0.0
    %3820 = vmatpush2.xpose.msra.mxu0 0.0
    %3821 = vmatprep.subr.mxu0 0.0
    %3822 = vmatpush2.xpose.msra.mxu0 0.0
    %3823 = vmatprep.subr.mxu0 0.0
    %3824 = vmatpush2.xpose.msra.mxu0 0.0
    %3825 = vmatprep.subr.mxu0 0.0
    %3826 = vmatpush2.xpose.msra.mxu0 0.0
    %3827 = vmatprep.subr.mxu0 0.0
    %3828 = vmatpush2.xpose.msra.mxu0 0.0
    %3829 = vmatprep.subr.mxu0 0.0
    %3830 = vmatpush2.xpose.msra.mxu0 0.0
    %3831 = vmatprep.subr.mxu0 0.0
    %3832 = vmatpush2.xpose.msra.mxu0 0.0
    %3833 = vmatprep.subr.mxu0 0.0
    %3834 = vmatpush2.xpose.msra.mxu0 0.0
    %3835 = vmatprep.subr.mxu0 0.0
    %3836 = vmatpush2.xpose.msra.mxu0 0.0
    %3837 = vmatprep.mubr.f32.mxu0 0.0
    %3838 = vmatmul.mubr.f32.gmra.mxu0 %v3769
    %v3839 = vpop.f32.mrf.mxu0
    %v3840 = vadd.f32 0.0, %v3839
    %v3841 = vpop.f32.mrf.mxu0
    %3842 = vdwg.mxu0
    %3844 = vrot.lane.b32.xlu0 %v3755, 96
    %v3845 = vpop.permute.xlu0 %3844
    %v3846 = vsel %vm315, %v3755, 0
    %v3848 = vsel %vm315, %v3845, 0
    %3850 = vmatprep.subr.mxu0 0.0
    %3851 = vmatpush1.xpose.msra.mxu0 0.0
    %3852 = vmatprep.subr.mxu0 0.0
    %3853 = vmatpush1.xpose.msra.mxu0 0.0
    %3854 = vmatprep.subr.mxu0 0.0
    %3855 = vmatpush1.xpose.msra.mxu0 0.0
    %3856 = vmatprep.subr.mxu0 0.0
    %3857 = vmatpush1.xpose.msra.mxu0 0.0
    %3858 = vmatprep.subr.mxu0 0.0
    %3859 = vmatpush1.xpose.msra.mxu0 0.0
    %3860 = vmatprep.subr.mxu0 0.0
    %3861 = vmatpush1.xpose.msra.mxu0 0.0
    %3862 = vmatprep.subr.mxu0 0.0
    %3863 = vmatpush1.xpose.msra.mxu0 0.0
    %3864 = vmatprep.subr.mxu0 0.0
    %3865 = vmatpush1.xpose.msra.mxu0 0.0
    %3866 = vmatprep.subr.mxu0 0.0
    %3867 = vmatpush1.xpose.msra.mxu0 0.0
    %3868 = vmatprep.subr.mxu0 0.0
    %3869 = vmatpush1.xpose.msra.mxu0 0.0
    %3870 = vmatprep.subr.mxu0 0.0
    %3871 = vmatpush1.xpose.msra.mxu0 0.0
    %3872 = vmatprep.subr.mxu0 0.0
    %3873 = vmatpush1.xpose.msra.mxu0 0.0
    %3874 = vmatprep.subr.mxu0 0.0
    %3875 = vmatpush1.xpose.msra.mxu0 0.0
    %3876 = vmatprep.subr.mxu0 0.0
    %3877 = vmatpush1.xpose.msra.mxu0 0.0
    %3878 = vmatprep.subr.mxu0 0.0
    %3879 = vmatpush1.xpose.msra.mxu0 0.0
    %3880 = vmatprep.subr.mxu0 0.0
    %3881 = vmatpush1.xpose.msra.mxu0 %v3848
    %3882 = vmatprep.subr.mxu0 0.0
    %3883 = vmatpush2.xpose.msra.mxu0 0.0
    %3884 = vmatprep.subr.mxu0 0.0
    %3885 = vmatpush2.xpose.msra.mxu0 0.0
    %3886 = vmatprep.subr.mxu0 0.0
    %3887 = vmatpush2.xpose.msra.mxu0 0.0
    %3888 = vmatprep.subr.mxu0 0.0
    %3889 = vmatpush2.xpose.msra.mxu0 0.0
    %3890 = vmatprep.subr.mxu0 0.0
    %3891 = vmatpush2.xpose.msra.mxu0 0.0
    %3892 = vmatprep.subr.mxu0 0.0
    %3893 = vmatpush2.xpose.msra.mxu0 0.0
    %3894 = vmatprep.subr.mxu0 0.0
    %3895 = vmatpush2.xpose.msra.mxu0 0.0
    %3896 = vmatprep.subr.mxu0 0.0
    %3897 = vmatpush2.xpose.msra.mxu0 0.0
    %3898 = vmatprep.subr.mxu0 0.0
    %3899 = vmatpush2.xpose.msra.mxu0 0.0
    %3900 = vmatprep.subr.mxu0 0.0
    %3901 = vmatpush2.xpose.msra.mxu0 0.0
    %3902 = vmatprep.subr.mxu0 0.0
    %3903 = vmatpush2.xpose.msra.mxu0 0.0
    %3904 = vmatprep.subr.mxu0 0.0
    %3905 = vmatpush2.xpose.msra.mxu0 0.0
    %3906 = vmatprep.subr.mxu0 0.0
    %3907 = vmatpush2.xpose.msra.mxu0 0.0
    %3908 = vmatprep.subr.mxu0 0.0
    %3909 = vmatpush2.xpose.msra.mxu0 0.0
    %3910 = vmatprep.subr.mxu0 0.0
    %3911 = vmatpush2.xpose.msra.mxu0 0.0
    %3912 = vmatprep.subr.mxu0 0.0
    %3913 = vmatpush2.xpose.msra.mxu0 0.0
    %3914 = vmatprep.mubr.f32.mxu0 0.0
    %3915 = vmatmul.mubr.f32.gmra.mxu0 %v3846
    %v3916 = vpop.f32.mrf.mxu0
    %v3917 = vadd.f32 0.0, %v3916
    %v3918 = vpop.f32.mrf.mxu0
    %3919 = vdwg.mxu0
    %3921 = vrot.lane.b32.xlu0 %v3760, 96
    %v3922 = vpop.permute.xlu0 %3921
    %v3923 = vsel %vm315, %v3760, 0
    %v3925 = vsel %vm315, %v3922, 0
    %3927 = vmatprep.subr.mxu0 0.0
    %3928 = vmatpush1.xpose.msra.mxu0 0.0
    %3929 = vmatprep.subr.mxu0 0.0
    %3930 = vmatpush1.xpose.msra.mxu0 0.0
    %3931 = vmatprep.subr.mxu0 0.0
    %3932 = vmatpush1.xpose.msra.mxu0 0.0
    %3933 = vmatprep.subr.mxu0 0.0
    %3934 = vmatpush1.xpose.msra.mxu0 0.0
    %3935 = vmatprep.subr.mxu0 0.0
    %3936 = vmatpush1.xpose.msra.mxu0 0.0
    %3937 = vmatprep.subr.mxu0 0.0
    %3938 = vmatpush1.xpose.msra.mxu0 0.0
    %3939 = vmatprep.subr.mxu0 0.0
    %3940 = vmatpush1.xpose.msra.mxu0 0.0
    %3941 = vmatprep.subr.mxu0 0.0
    %3942 = vmatpush1.xpose.msra.mxu0 0.0
    %3943 = vmatprep.subr.mxu0 0.0
    %3944 = vmatpush1.xpose.msra.mxu0 0.0
    %3945 = vmatprep.subr.mxu0 0.0
    %3946 = vmatpush1.xpose.msra.mxu0 0.0
    %3947 = vmatprep.subr.mxu0 0.0
    %3948 = vmatpush1.xpose.msra.mxu0 0.0
    %3949 = vmatprep.subr.mxu0 0.0
    %3950 = vmatpush1.xpose.msra.mxu0 0.0
    %3951 = vmatprep.subr.mxu0 0.0
    %3952 = vmatpush1.xpose.msra.mxu0 0.0
    %3953 = vmatprep.subr.mxu0 0.0
    %3954 = vmatpush1.xpose.msra.mxu0 0.0
    %3955 = vmatprep.subr.mxu0 0.0
    %3956 = vmatpush1.xpose.msra.mxu0 0.0
    %3957 = vmatprep.subr.mxu0 0.0
    %3958 = vmatpush1.xpose.msra.mxu0 %v3925
    %3959 = vmatprep.subr.mxu0 0.0
    %3960 = vmatpush2.xpose.msra.mxu0 0.0
    %3961 = vmatprep.subr.mxu0 0.0
    %3962 = vmatpush2.xpose.msra.mxu0 0.0
    %3963 = vmatprep.subr.mxu0 0.0
    %3964 = vmatpush2.xpose.msra.mxu0 0.0
    %3965 = vmatprep.subr.mxu0 0.0
    %3966 = vmatpush2.xpose.msra.mxu0 0.0
    %3967 = vmatprep.subr.mxu0 0.0
    %3968 = vmatpush2.xpose.msra.mxu0 0.0
    %3969 = vmatprep.subr.mxu0 0.0
    %3970 = vmatpush2.xpose.msra.mxu0 0.0
    %3971 = vmatprep.subr.mxu0 0.0
    %3972 = vmatpush2.xpose.msra.mxu0 0.0
    %3973 = vmatprep.subr.mxu0 0.0
    %3974 = vmatpush2.xpose.msra.mxu0 0.0
    %3975 = vmatprep.subr.mxu0 0.0
    %3976 = vmatpush2.xpose.msra.mxu0 0.0
    %3977 = vmatprep.subr.mxu0 0.0
    %3978 = vmatpush2.xpose.msra.mxu0 0.0
    %3979 = vmatprep.subr.mxu0 0.0
    %3980 = vmatpush2.xpose.msra.mxu0 0.0
    %3981 = vmatprep.subr.mxu0 0.0
    %3982 = vmatpush2.xpose.msra.mxu0 0.0
    %3983 = vmatprep.subr.mxu0 0.0
    %3984 = vmatpush2.xpose.msra.mxu0 0.0
    %3985 = vmatprep.subr.mxu0 0.0
    %3986 = vmatpush2.xpose.msra.mxu0 0.0
    %3987 = vmatprep.subr.mxu0 0.0
    %3988 = vmatpush2.xpose.msra.mxu0 0.0
    %3989 = vmatprep.subr.mxu0 0.0
    %3990 = vmatpush2.xpose.msra.mxu0 0.0
    %3991 = vmatprep.mubr.f32.mxu0 0.0
    %3992 = vmatmul.mubr.f32.gmra.mxu0 %v3923
    %v3993 = vpop.f32.mrf.mxu0
    %v3994 = vadd.f32 0.0, %v3993
    %v3995 = vpop.f32.mrf.mxu0
    %3996 = vdwg.mxu0
    %3998 = vrot.lane.b32.xlu0 %v3763, 96
    %v3999 = vpop.permute.xlu0 %3998
    %v4000 = vsel %vm315, %v3763, 0
    %v4002 = vsel %vm315, %v3999, 0
    %4004 = vmatprep.subr.mxu0 0.0
    %4005 = vmatpush1.xpose.msra.mxu0 0.0
    %4006 = vmatprep.subr.mxu0 0.0
    %4007 = vmatpush1.xpose.msra.mxu0 0.0
    %4008 = vmatprep.subr.mxu0 0.0
    %4009 = vmatpush1.xpose.msra.mxu0 0.0
    %4010 = vmatprep.subr.mxu0 0.0
    %4011 = vmatpush1.xpose.msra.mxu0 0.0
    %4012 = vmatprep.subr.mxu0 0.0
    %4013 = vmatpush1.xpose.msra.mxu0 0.0
    %4014 = vmatprep.subr.mxu0 0.0
    %4015 = vmatpush1.xpose.msra.mxu0 0.0
    %4016 = vmatprep.subr.mxu0 0.0
    %4017 = vmatpush1.xpose.msra.mxu0 0.0
    %4018 = vmatprep.subr.mxu0 0.0
    %4019 = vmatpush1.xpose.msra.mxu0 0.0
    %4020 = vmatprep.subr.mxu0 0.0
    %4021 = vmatpush1.xpose.msra.mxu0 0.0
    %4022 = vmatprep.subr.mxu0 0.0
    %4023 = vmatpush1.xpose.msra.mxu0 0.0
    %4024 = vmatprep.subr.mxu0 0.0
    %4025 = vmatpush1.xpose.msra.mxu0 0.0
    %4026 = vmatprep.subr.mxu0 0.0
    %4027 = vmatpush1.xpose.msra.mxu0 0.0
    %4028 = vmatprep.subr.mxu0 0.0
    %4029 = vmatpush1.xpose.msra.mxu0 0.0
    %4030 = vmatprep.subr.mxu0 0.0
    %4031 = vmatpush1.xpose.msra.mxu0 0.0
    %4032 = vmatprep.subr.mxu0 0.0
    %4033 = vmatpush1.xpose.msra.mxu0 0.0
    %4034 = vmatprep.subr.mxu0 0.0
    %4035 = vmatpush1.xpose.msra.mxu0 %v4002
    %4036 = vmatprep.subr.mxu0 0.0
    %4037 = vmatpush2.xpose.msra.mxu0 0.0
    %4038 = vmatprep.subr.mxu0 0.0
    %4039 = vmatpush2.xpose.msra.mxu0 0.0
    %4040 = vmatprep.subr.mxu0 0.0
    %4041 = vmatpush2.xpose.msra.mxu0 0.0
    %4042 = vmatprep.subr.mxu0 0.0
    %4043 = vmatpush2.xpose.msra.mxu0 0.0
    %4044 = vmatprep.subr.mxu0 0.0
    %4045 = vmatpush2.xpose.msra.mxu0 0.0
    %4046 = vmatprep.subr.mxu0 0.0
    %4047 = vmatpush2.xpose.msra.mxu0 0.0
    %4048 = vmatprep.subr.mxu0 0.0
    %4049 = vmatpush2.xpose.msra.mxu0 0.0
    %4050 = vmatprep.subr.mxu0 0.0
    %4051 = vmatpush2.xpose.msra.mxu0 0.0
    %4052 = vmatprep.subr.mxu0 0.0
    %4053 = vmatpush2.xpose.msra.mxu0 0.0
    %4054 = vmatprep.subr.mxu0 0.0
    %4055 = vmatpush2.xpose.msra.mxu0 0.0
    %4056 = vmatprep.subr.mxu0 0.0
    %4057 = vmatpush2.xpose.msra.mxu0 0.0
    %4058 = vmatprep.subr.mxu0 0.0
    %4059 = vmatpush2.xpose.msra.mxu0 0.0
    %4060 = vmatprep.subr.mxu0 0.0
    %4061 = vmatpush2.xpose.msra.mxu0 0.0
    %4062 = vmatprep.subr.mxu0 0.0
    %4063 = vmatpush2.xpose.msra.mxu0 0.0
    %4064 = vmatprep.subr.mxu0 0.0
    %4065 = vmatpush2.xpose.msra.mxu0 0.0
    %4066 = vmatprep.subr.mxu0 0.0
    %4067 = vmatpush2.xpose.msra.mxu0 0.0
    %4068 = vmatprep.mubr.f32.mxu0 0.0
    %4069 = vmatmul.mubr.f32.gmra.mxu0 %v4000
    %v4070 = vpop.f32.mrf.mxu0
    %v4071 = vadd.f32 0.0, %v4070
    %v4072 = vpop.f32.mrf.mxu0
    %4073 = vdwg.mxu0
    %v4074 = vmul.f32 %v3840, 0.35355338
    %v4075 = vmul.f32 %v3917, 0.35355338
    %v4076 = vmul.f32 %v3994, 0.35355338
    %v4077 = vmul.f32 %v4071, 0.35355338
    %v4078 = vadd.f32 %v4074, %v176
    %v4079 = vadd.f32 %v4075, %v176
    %v4080 = vadd.f32 %v4076, %v176
    %v4081 = vadd.f32 %v4077, %v176
    %v4082 = vsel %vm315, %v4078, -inf
    %4083 = vmax.xlane.f32.xlu0 %v4082
    %v4084 = vpop.xlane.xlu0 %4083
    %v4085 = vsel %vm315, %v4079, -inf
    %4086 = vmax.xlane.f32.xlu0 %v4085
    %v4087 = vpop.xlane.xlu0 %4086
    %v4088 = vsel %vm315, %v4080, -inf
    %4089 = vmax.xlane.f32.xlu0 %v4088
    %v4090 = vpop.xlane.xlu0 %4089
    %v4091 = vsel %vm315, %v4081, -inf
    %4092 = vmax.xlane.f32.xlu0 %v4091
    %v4093 = vpop.xlane.xlu0 %4092
    %v4094 = vsub.f32 %v4078, %v4084
    %v4095 = vsub.f32 %v4079, %v4087
    %v4096 = vsub.f32 %v4080, %v4090
    %v4097 = vsub.f32 %v4081, %v4093
    %v4098 = vmul.f32 %v4094, 1.442695
    %v4099 = vpow.pop %v4098
    %v4100 = vmul.f32 %v4095, 1.442695
    %v4101 = vpow.pop %v4100
    %v4102 = vmul.f32 %v4096, 1.442695
    %v4103 = vpow.pop %v4102
    %v4104 = vmul.f32 %v4097, 1.442695
    %v4105 = vpow.pop %v4104
    %v4106 = vsel %vm315, %v4099, 0.0
    %4107 = vadd.xlane.f32.xlu0 %v4106
    %v4108 = vpop.xlane.xlu0 %4107
    %v4109 = vsel %vm315, %v4101, 0.0
    %4110 = vadd.xlane.f32.xlu0 %v4109
    %v4111 = vpop.xlane.xlu0 %4110
    %v4112 = vsel %vm315, %v4103, 0.0
    %4113 = vadd.xlane.f32.xlu0 %v4112
    %v4114 = vpop.xlane.xlu0 %4113
    %v4115 = vsel %vm315, %v4105, 0.0
    %4116 = vadd.xlane.f32.xlu0 %v4115
    %v4117 = vpop.xlane.xlu0 %4116
    %v4118 = vrcp.pop %v4108
    %v4119 = vrcp.pop %v4111
    %v4120 = vrcp.pop %v4114
    %v4121 = vrcp.pop %v4117
    %v4122 = vmul.f32 %v4099, %v4118
    %v4123 = vmul.f32 %v4101, %v4119
    %v4124 = vmul.f32 %v4103, %v4120
    %v4125 = vmul.f32 %v4105, %v4121
    %4126 = vrot.lane.b32.xlu0 %v3752, 64
    %v4127 = vpop.permute.xlu0 %4126
    %v4130 = vsel %vm315, %v4122, 0
    %4132 = vmatprep.subr.mxu0 0.0
    %4133 = vmatpush1.msra.mxu0 0.0
    %4134 = vmatprep.subr.mxu0 0.0
    %4135 = vmatpush1.msra.mxu0 0.0
    %4136 = vmatprep.subr.mxu0 0.0
    %4137 = vmatpush1.msra.mxu0 0.0
    %4138 = vmatprep.subr.mxu0 0.0
    %4139 = vmatpush1.msra.mxu0 0.0
    %4140 = vmatprep.subr.mxu0 0.0
    %4141 = vmatpush1.msra.mxu0 0.0
    %4142 = vmatprep.subr.mxu0 0.0
    %4143 = vmatpush1.msra.mxu0 0.0
    %4144 = vmatprep.subr.mxu0 0.0
    %4145 = vmatpush1.msra.mxu0 0.0
    %4146 = vmatprep.subr.mxu0 0.0
    %4147 = vmatpush1.msra.mxu0 0.0
    %4148 = vmatprep.subr.mxu0 0.0
    %4149 = vmatpush1.msra.mxu0 0.0
    %4150 = vmatprep.subr.mxu0 0.0
    %4151 = vmatpush1.msra.mxu0 0.0
    %4152 = vmatprep.subr.mxu0 0.0
    %4153 = vmatpush1.msra.mxu0 0.0
    %4154 = vmatprep.subr.mxu0 0.0
    %4155 = vmatpush1.msra.mxu0 0.0
    %4156 = vmatprep.subr.mxu0 0.0
    %4157 = vmatpush1.msra.mxu0 0.0
    %4158 = vmatprep.subr.mxu0 0.0
    %4159 = vmatpush1.msra.mxu0 0.0
    %4160 = vmatprep.subr.mxu0 0.0
    %4161 = vmatpush1.msra.mxu0 0.0
    %4162 = vmatprep.subr.mxu0 0.0
    %4163 = vmatpush1.msra.mxu0 %v4127
    %4164 = vmatprep.subr.mxu0 0.0
    %4165 = vmatpush2.msra.mxu0 0.0
    %4166 = vmatprep.subr.mxu0 0.0
    %4167 = vmatpush2.msra.mxu0 0.0
    %4168 = vmatprep.subr.mxu0 0.0
    %4169 = vmatpush2.msra.mxu0 0.0
    %4170 = vmatprep.subr.mxu0 0.0
    %4171 = vmatpush2.msra.mxu0 0.0
    %4172 = vmatprep.subr.mxu0 0.0
    %4173 = vmatpush2.msra.mxu0 0.0
    %4174 = vmatprep.subr.mxu0 0.0
    %4175 = vmatpush2.msra.mxu0 0.0
    %4176 = vmatprep.subr.mxu0 0.0
    %4177 = vmatpush2.msra.mxu0 0.0
    %4178 = vmatprep.subr.mxu0 0.0
    %4179 = vmatpush2.msra.mxu0 0.0
    %4180 = vmatprep.subr.mxu0 0.0
    %4181 = vmatpush2.msra.mxu0 0.0
    %4182 = vmatprep.subr.mxu0 0.0
    %4183 = vmatpush2.msra.mxu0 0.0
    %4184 = vmatprep.subr.mxu0 0.0
    %4185 = vmatpush2.msra.mxu0 0.0
    %4186 = vmatprep.subr.mxu0 0.0
    %4187 = vmatpush2.msra.mxu0 0.0
    %4188 = vmatprep.subr.mxu0 0.0
    %4189 = vmatpush2.msra.mxu0 0.0
    %4190 = vmatprep.subr.mxu0 0.0
    %4191 = vmatpush2.msra.mxu0 0.0
    %4192 = vmatprep.subr.mxu0 0.0
    %4193 = vmatpush2.msra.mxu0 0.0
    %4194 = vmatprep.subr.mxu0 0.0
    %4195 = vmatpush2.msra.mxu0 0.0
    %4196 = vmatprep.mubr.f32.mxu0 0.0
    %4197 = vmatmul.mubr.f32.gmra.mxu0 %v4130
    %v4198 = vpop.f32.mrf.mxu0
    %v4199 = vadd.f32 0.0, %v4198
    %v4200 = vpop.f32.mrf.mxu0
    %4201 = vdwg.mxu0
    %4202 = vrot.lane.b32.xlu0 %v3755, 64
    %v4203 = vpop.permute.xlu0 %4202
    %v4206 = vsel %vm315, %v4123, 0
    %4208 = vmatprep.subr.mxu0 0.0
    %4209 = vmatpush1.msra.mxu0 0.0
    %4210 = vmatprep.subr.mxu0 0.0
    %4211 = vmatpush1.msra.mxu0 0.0
    %4212 = vmatprep.subr.mxu0 0.0
    %4213 = vmatpush1.msra.mxu0 0.0
    %4214 = vmatprep.subr.mxu0 0.0
    %4215 = vmatpush1.msra.mxu0 0.0
    %4216 = vmatprep.subr.mxu0 0.0
    %4217 = vmatpush1.msra.mxu0 0.0
    %4218 = vmatprep.subr.mxu0 0.0
    %4219 = vmatpush1.msra.mxu0 0.0
    %4220 = vmatprep.subr.mxu0 0.0
    %4221 = vmatpush1.msra.mxu0 0.0
    %4222 = vmatprep.subr.mxu0 0.0
    %4223 = vmatpush1.msra.mxu0 0.0
    %4224 = vmatprep.subr.mxu0 0.0
    %4225 = vmatpush1.msra.mxu0 0.0
    %4226 = vmatprep.subr.mxu0 0.0
    %4227 = vmatpush1.msra.mxu0 0.0
    %4228 = vmatprep.subr.mxu0 0.0
    %4229 = vmatpush1.msra.mxu0 0.0
    %4230 = vmatprep.subr.mxu0 0.0
    %4231 = vmatpush1.msra.mxu0 0.0
    %4232 = vmatprep.subr.mxu0 0.0
    %4233 = vmatpush1.msra.mxu0 0.0
    %4234 = vmatprep.subr.mxu0 0.0
    %4235 = vmatpush1.msra.mxu0 0.0
    %4236 = vmatprep.subr.mxu0 0.0
    %4237 = vmatpush1.msra.mxu0 0.0
    %4238 = vmatprep.subr.mxu0 0.0
    %4239 = vmatpush1.msra.mxu0 %v4203
    %4240 = vmatprep.subr.mxu0 0.0
    %4241 = vmatpush2.msra.mxu0 0.0
    %4242 = vmatprep.subr.mxu0 0.0
    %4243 = vmatpush2.msra.mxu0 0.0
    %4244 = vmatprep.subr.mxu0 0.0
    %4245 = vmatpush2.msra.mxu0 0.0
    %4246 = vmatprep.subr.mxu0 0.0
    %4247 = vmatpush2.msra.mxu0 0.0
    %4248 = vmatprep.subr.mxu0 0.0
    %4249 = vmatpush2.msra.mxu0 0.0
    %4250 = vmatprep.subr.mxu0 0.0
    %4251 = vmatpush2.msra.mxu0 0.0
    %4252 = vmatprep.subr.mxu0 0.0
    %4253 = vmatpush2.msra.mxu0 0.0
    %4254 = vmatprep.subr.mxu0 0.0
    %4255 = vmatpush2.msra.mxu0 0.0
    %4256 = vmatprep.subr.mxu0 0.0
    %4257 = vmatpush2.msra.mxu0 0.0
    %4258 = vmatprep.subr.mxu0 0.0
    %4259 = vmatpush2.msra.mxu0 0.0
    %4260 = vmatprep.subr.mxu0 0.0
    %4261 = vmatpush2.msra.mxu0 0.0
    %4262 = vmatprep.subr.mxu0 0.0
    %4263 = vmatpush2.msra.mxu0 0.0
    %4264 = vmatprep.subr.mxu0 0.0
    %4265 = vmatpush2.msra.mxu0 0.0
    %4266 = vmatprep.subr.mxu0 0.0
    %4267 = vmatpush2.msra.mxu0 0.0
    %4268 = vmatprep.subr.mxu0 0.0
    %4269 = vmatpush2.msra.mxu0 0.0
    %4270 = vmatprep.subr.mxu0 0.0
    %4271 = vmatpush2.msra.mxu0 0.0
    %4272 = vmatprep.mubr.f32.mxu0 0.0
    %4273 = vmatmul.mubr.f32.gmra.mxu0 %v4206
    %v4274 = vpop.f32.mrf.mxu0
    %v4275 = vadd.f32 0.0, %v4274
    %v4276 = vpop.f32.mrf.mxu0
    %4277 = vdwg.mxu0
    %4278 = vrot.lane.b32.xlu0 %v3760, 64
    %v4279 = vpop.permute.xlu0 %4278
    %v4282 = vsel %vm315, %v4124, 0
    %4284 = vmatprep.subr.mxu0 0.0
    %4285 = vmatpush1.msra.mxu0 0.0
    %4286 = vmatprep.subr.mxu0 0.0
    %4287 = vmatpush1.msra.mxu0 0.0
    %4288 = vmatprep.subr.mxu0 0.0
    %4289 = vmatpush1.msra.mxu0 0.0
    %4290 = vmatprep.subr.mxu0 0.0
    %4291 = vmatpush1.msra.mxu0 0.0
    %4292 = vmatprep.subr.mxu0 0.0
    %4293 = vmatpush1.msra.mxu0 0.0
    %4294 = vmatprep.subr.mxu0 0.0
    %4295 = vmatpush1.msra.mxu0 0.0
    %4296 = vmatprep.subr.mxu0 0.0
    %4297 = vmatpush1.msra.mxu0 0.0
    %4298 = vmatprep.subr.mxu0 0.0
    %4299 = vmatpush1.msra.mxu0 0.0
    %4300 = vmatprep.subr.mxu0 0.0
    %4301 = vmatpush1.msra.mxu0 0.0
    %4302 = vmatprep.subr.mxu0 0.0
    %4303 = vmatpush1.msra.mxu0 0.0
    %4304 = vmatprep.subr.mxu0 0.0
    %4305 = vmatpush1.msra.mxu0 0.0
    %4306 = vmatprep.subr.mxu0 0.0
    %4307 = vmatpush1.msra.mxu0 0.0
    %4308 = vmatprep.subr.mxu0 0.0
    %4309 = vmatpush1.msra.mxu0 0.0
    %4310 = vmatprep.subr.mxu0 0.0
    %4311 = vmatpush1.msra.mxu0 0.0
    %4312 = vmatprep.subr.mxu0 0.0
    %4313 = vmatpush1.msra.mxu0 0.0
    %4314 = vmatprep.subr.mxu0 0.0
    %4315 = vmatpush1.msra.mxu0 %v4279
    %4316 = vmatprep.subr.mxu0 0.0
    %4317 = vmatpush2.msra.mxu0 0.0
    %4318 = vmatprep.subr.mxu0 0.0
    %4319 = vmatpush2.msra.mxu0 0.0
    %4320 = vmatprep.subr.mxu0 0.0
    %4321 = vmatpush2.msra.mxu0 0.0
    %4322 = vmatprep.subr.mxu0 0.0
    %4323 = vmatpush2.msra.mxu0 0.0
    %4324 = vmatprep.subr.mxu0 0.0
    %4325 = vmatpush2.msra.mxu0 0.0
    %4326 = vmatprep.subr.mxu0 0.0
    %4327 = vmatpush2.msra.mxu0 0.0
    %4328 = vmatprep.subr.mxu0 0.0
    %4329 = vmatpush2.msra.mxu0 0.0
    %4330 = vmatprep.subr.mxu0 0.0
    %4331 = vmatpush2.msra.mxu0 0.0
    %4332 = vmatprep.subr.mxu0 0.0
    %4333 = vmatpush2.msra.mxu0 0.0
    %4334 = vmatprep.subr.mxu0 0.0
    %4335 = vmatpush2.msra.mxu0 0.0
    %4336 = vmatprep.subr.mxu0 0.0
    %4337 = vmatpush2.msra.mxu0 0.0
    %4338 = vmatprep.subr.mxu0 0.0
    %4339 = vmatpush2.msra.mxu0 0.0
    %4340 = vmatprep.subr.mxu0 0.0
    %4341 = vmatpush2.msra.mxu0 0.0
    %4342 = vmatprep.subr.mxu0 0.0
    %4343 = vmatpush2.msra.mxu0 0.0
    %4344 = vmatprep.subr.mxu0 0.0
    %4345 = vmatpush2.msra.mxu0 0.0
    %4346 = vmatprep.subr.mxu0 0.0
    %4347 = vmatpush2.msra.mxu0 0.0
    %4348 = vmatprep.mubr.f32.mxu0 0.0
    %4349 = vmatmul.mubr.f32.gmra.mxu0 %v4282
    %v4350 = vpop.f32.mrf.mxu0
    %v4351 = vadd.f32 0.0, %v4350
    %v4352 = vpop.f32.mrf.mxu0
    %4353 = vdwg.mxu0
    %4354 = vrot.lane.b32.xlu0 %v3763, 64
    %v4355 = vpop.permute.xlu0 %4354
    %v4358 = vsel %vm315, %v4125, 0
    %4360 = vmatprep.subr.mxu0 0.0
    %4361 = vmatpush1.msra.mxu0 0.0
    %4362 = vmatprep.subr.mxu0 0.0
    %4363 = vmatpush1.msra.mxu0 0.0
    %4364 = vmatprep.subr.mxu0 0.0
    %4365 = vmatpush1.msra.mxu0 0.0
    %4366 = vmatprep.subr.mxu0 0.0
    %4367 = vmatpush1.msra.mxu0 0.0
    %4368 = vmatprep.subr.mxu0 0.0
    %4369 = vmatpush1.msra.mxu0 0.0
    %4370 = vmatprep.subr.mxu0 0.0
    %4371 = vmatpush1.msra.mxu0 0.0
    %4372 = vmatprep.subr.mxu0 0.0
    %4373 = vmatpush1.msra.mxu0 0.0
    %4374 = vmatprep.subr.mxu0 0.0
    %4375 = vmatpush1.msra.mxu0 0.0
    %4376 = vmatprep.subr.mxu0 0.0
    %4377 = vmatpush1.msra.mxu0 0.0
    %4378 = vmatprep.subr.mxu0 0.0
    %4379 = vmatpush1.msra.mxu0 0.0
    %4380 = vmatprep.subr.mxu0 0.0
    %4381 = vmatpush1.msra.mxu0 0.0
    %4382 = vmatprep.subr.mxu0 0.0
    %4383 = vmatpush1.msra.mxu0 0.0
    %4384 = vmatprep.subr.mxu0 0.0
    %4385 = vmatpush1.msra.mxu0 0.0
    %4386 = vmatprep.subr.mxu0 0.0
    %4387 = vmatpush1.msra.mxu0 0.0
    %4388 = vmatprep.subr.mxu0 0.0
    %4389 = vmatpush1.msra.mxu0 0.0
    %4390 = vmatprep.subr.mxu0 0.0
    %4391 = vmatpush1.msra.mxu0 %v4355
    %4392 = vmatprep.subr.mxu0 0.0
    %4393 = vmatpush2.msra.mxu0 0.0
    %4394 = vmatprep.subr.mxu0 0.0
    %4395 = vmatpush2.msra.mxu0 0.0
    %4396 = vmatprep.subr.mxu0 0.0
    %4397 = vmatpush2.msra.mxu0 0.0
    %4398 = vmatprep.subr.mxu0 0.0
    %4399 = vmatpush2.msra.mxu0 0.0
    %4400 = vmatprep.subr.mxu0 0.0
    %4401 = vmatpush2.msra.mxu0 0.0
    %4402 = vmatprep.subr.mxu0 0.0
    %4403 = vmatpush2.msra.mxu0 0.0
    %4404 = vmatprep.subr.mxu0 0.0
    %4405 = vmatpush2.msra.mxu0 0.0
    %4406 = vmatprep.subr.mxu0 0.0
    %4407 = vmatpush2.msra.mxu0 0.0
    %4408 = vmatprep.subr.mxu0 0.0
    %4409 = vmatpush2.msra.mxu0 0.0
    %4410 = vmatprep.subr.mxu0 0.0
    %4411 = vmatpush2.msra.mxu0 0.0
    %4412 = vmatprep.subr.mxu0 0.0
    %4413 = vmatpush2.msra.mxu0 0.0
    %4414 = vmatprep.subr.mxu0 0.0
    %4415 = vmatpush2.msra.mxu0 0.0
    %4416 = vmatprep.subr.mxu0 0.0
    %4417 = vmatpush2.msra.mxu0 0.0
    %4418 = vmatprep.subr.mxu0 0.0
    %4419 = vmatpush2.msra.mxu0 0.0
    %4420 = vmatprep.subr.mxu0 0.0
    %4421 = vmatpush2.msra.mxu0 0.0
    %4422 = vmatprep.subr.mxu0 0.0
    %4423 = vmatpush2.msra.mxu0 0.0
    %4424 = vmatprep.mubr.f32.mxu0 0.0
    %4425 = vmatmul.mubr.f32.gmra.mxu0 %v4358
    %v4426 = vpop.f32.mrf.mxu0
    %v4427 = vadd.f32 0.0, %v4426
    %v4428 = vpop.f32.mrf.mxu0
    %4429 = vdwg.mxu0
    %v4430 = vld [vmem:[%s2 + $0x70] sm:$0xf]
    %v4431 = vpack.c.bf16 %v4199, %v4199
    %v4432 = vpack.c.bf16 %v4275, %v4275
    %v4433 = vpack.c.bf16 %v4351, %v4351
    %v4434 = vpack.c.bf16 %v4427, %v4427
    %4435 = vrot.lane.b32.xlu0 %v3752, 120
    %v4436 = vpop.permute.xlu0 %4435
    %4437 = vrot.lane.b32.xlu0 %v3752, 88
    %v4438 = vpop.permute.xlu0 %4437
    %v4439 = vsel %vm315, %v4436, 0
    %v4441 = vsel %vm315, %v4438, 0
    %4443 = vmatprep.subr.mxu0 0.0
    %4444 = vmatpush1.xpose.msra.mxu0 0.0
    %4445 = vmatprep.subr.mxu0 0.0
    %4446 = vmatpush1.xpose.msra.mxu0 0.0
    %4447 = vmatprep.subr.mxu0 0.0
    %4448 = vmatpush1.xpose.msra.mxu0 0.0
    %4449 = vmatprep.subr.mxu0 0.0
    %4450 = vmatpush1.xpose.msra.mxu0 0.0
    %4451 = vmatprep.subr.mxu0 0.0
    %4452 = vmatpush1.xpose.msra.mxu0 0.0
    %4453 = vmatprep.subr.mxu0 0.0
    %4454 = vmatpush1.xpose.msra.mxu0 0.0
    %4455 = vmatprep.subr.mxu0 0.0
    %4456 = vmatpush1.xpose.msra.mxu0 0.0
    %4457 = vmatprep.subr.mxu0 0.0
    %4458 = vmatpush1.xpose.msra.mxu0 0.0
    %4459 = vmatprep.subr.mxu0 0.0
    %4460 = vmatpush1.xpose.msra.mxu0 0.0
    %4461 = vmatprep.subr.mxu0 0.0
    %4462 = vmatpush1.xpose.msra.mxu0 0.0
    %4463 = vmatprep.subr.mxu0 0.0
    %4464 = vmatpush1.xpose.msra.mxu0 0.0
    %4465 = vmatprep.subr.mxu0 0.0
    %4466 = vmatpush1.xpose.msra.mxu0 0.0
    %4467 = vmatprep.subr.mxu0 0.0
    %4468 = vmatpush1.xpose.msra.mxu0 0.0
    %4469 = vmatprep.subr.mxu0 0.0
    %4470 = vmatpush1.xpose.msra.mxu0 0.0
    %4471 = vmatprep.subr.mxu0 0.0
    %4472 = vmatpush1.xpose.msra.mxu0 0.0
    %4473 = vmatprep.subr.mxu0 0.0
    %4474 = vmatpush1.xpose.msra.mxu0 %v4441
    %4475 = vmatprep.subr.mxu0 0.0
    %4476 = vmatpush2.xpose.msra.mxu0 0.0
    %4477 = vmatprep.subr.mxu0 0.0
    %4478 = vmatpush2.xpose.msra.mxu0 0.0
    %4479 = vmatprep.subr.mxu0 0.0
    %4480 = vmatpush2.xpose.msra.mxu0 0.0
    %4481 = vmatprep.subr.mxu0 0.0
    %4482 = vmatpush2.xpose.msra.mxu0 0.0
    %4483 = vmatprep.subr.mxu0 0.0
    %4484 = vmatpush2.xpose.msra.mxu0 0.0
    %4485 = vmatprep.subr.mxu0 0.0
    %4486 = vmatpush2.xpose.msra.mxu0 0.0
    %4487 = vmatprep.subr.mxu0 0.0
    %4488 = vmatpush2.xpose.msra.mxu0 0.0
    %4489 = vmatprep.subr.mxu0 0.0
    %4490 = vmatpush2.xpose.msra.mxu0 0.0
    %4491 = vmatprep.subr.mxu0 0.0
    %4492 = vmatpush2.xpose.msra.mxu0 0.0
    %4493 = vmatprep.subr.mxu0 0.0
    %4494 = vmatpush2.xpose.msra.mxu0 0.0
    %4495 = vmatprep.subr.mxu0 0.0
    %4496 = vmatpush2.xpose.msra.mxu0 0.0
    %4497 = vmatprep.subr.mxu0 0.0
    %4498 = vmatpush2.xpose.msra.mxu0 0.0
    %4499 = vmatprep.subr.mxu0 0.0
    %4500 = vmatpush2.xpose.msra.mxu0 0.0
    %4501 = vmatprep.subr.mxu0 0.0
    %4502 = vmatpush2.xpose.msra.mxu0 0.0
    %4503 = vmatprep.subr.mxu0 0.0
    %4504 = vmatpush2.xpose.msra.mxu0 0.0
    %4505 = vmatprep.subr.mxu0 0.0
    %4506 = vmatpush2.xpose.msra.mxu0 0.0
    %4507 = vmatprep.mubr.f32.mxu0 0.0
    %4508 = vmatmul.mubr.f32.gmra.mxu0 %v4439
    %v4509 = vpop.f32.mrf.mxu0
    %v4510 = vadd.f32 0.0, %v4509
    %v4511 = vpop.f32.mrf.mxu0
    %4512 = vdwg.mxu0
    %4513 = vrot.lane.b32.xlu0 %v3755, 120
    %v4514 = vpop.permute.xlu0 %4513
    %4515 = vrot.lane.b32.xlu0 %v3755, 88
    %v4516 = vpop.permute.xlu0 %4515
    %v4517 = vsel %vm315, %v4514, 0
    %v4519 = vsel %vm315, %v4516, 0
    %4521 = vmatprep.subr.mxu0 0.0
    %4522 = vmatpush1.xpose.msra.mxu0 0.0
    %4523 = vmatprep.subr.mxu0 0.0
    %4524 = vmatpush1.xpose.msra.mxu0 0.0
    %4525 = vmatprep.subr.mxu0 0.0
    %4526 = vmatpush1.xpose.msra.mxu0 0.0
    %4527 = vmatprep.subr.mxu0 0.0
    %4528 = vmatpush1.xpose.msra.mxu0 0.0
    %4529 = vmatprep.subr.mxu0 0.0
    %4530 = vmatpush1.xpose.msra.mxu0 0.0
    %4531 = vmatprep.subr.mxu0 0.0
    %4532 = vmatpush1.xpose.msra.mxu0 0.0
    %4533 = vmatprep.subr.mxu0 0.0
    %4534 = vmatpush1.xpose.msra.mxu0 0.0
    %4535 = vmatprep.subr.mxu0 0.0
    %4536 = vmatpush1.xpose.msra.mxu0 0.0
    %4537 = vmatprep.subr.mxu0 0.0
    %4538 = vmatpush1.xpose.msra.mxu0 0.0
    %4539 = vmatprep.subr.mxu0 0.0
    %4540 = vmatpush1.xpose.msra.mxu0 0.0
    %4541 = vmatprep.subr.mxu0 0.0
    %4542 = vmatpush1.xpose.msra.mxu0 0.0
    %4543 = vmatprep.subr.mxu0 0.0
    %4544 = vmatpush1.xpose.msra.mxu0 0.0
    %4545 = vmatprep.subr.mxu0 0.0
    %4546 = vmatpush1.xpose.msra.mxu0 0.0
    %4547 = vmatprep.subr.mxu0 0.0
    %4548 = vmatpush1.xpose.msra.mxu0 0.0
    %4549 = vmatprep.subr.mxu0 0.0
    %4550 = vmatpush1.xpose.msra.mxu0 0.0
    %4551 = vmatprep.subr.mxu0 0.0
    %4552 = vmatpush1.xpose.msra.mxu0 %v4519
    %4553 = vmatprep.subr.mxu0 0.0
    %4554 = vmatpush2.xpose.msra.mxu0 0.0
    %4555 = vmatprep.subr.mxu0 0.0
    %4556 = vmatpush2.xpose.msra.mxu0 0.0
    %4557 = vmatprep.subr.mxu0 0.0
    %4558 = vmatpush2.xpose.msra.mxu0 0.0
    %4559 = vmatprep.subr.mxu0 0.0
    %4560 = vmatpush2.xpose.msra.mxu0 0.0
    %4561 = vmatprep.subr.mxu0 0.0
    %4562 = vmatpush2.xpose.msra.mxu0 0.0
    %4563 = vmatprep.subr.mxu0 0.0
    %4564 = vmatpush2.xpose.msra.mxu0 0.0
    %4565 = vmatprep.subr.mxu0 0.0
    %4566 = vmatpush2.xpose.msra.mxu0 0.0
    %4567 = vmatprep.subr.mxu0 0.0
    %4568 = vmatpush2.xpose.msra.mxu0 0.0
    %4569 = vmatprep.subr.mxu0 0.0
    %4570 = vmatpush2.xpose.msra.mxu0 0.0
    %4571 = vmatprep.subr.mxu0 0.0
    %4572 = vmatpush2.xpose.msra.mxu0 0.0
    %4573 = vmatprep.subr.mxu0 0.0
    %4574 = vmatpush2.xpose.msra.mxu0 0.0
    %4575 = vmatprep.subr.mxu0 0.0
    %4576 = vmatpush2.xpose.msra.mxu0 0.0
    %4577 = vmatprep.subr.mxu0 0.0
    %4578 = vmatpush2.xpose.msra.mxu0 0.0
    %4579 = vmatprep.subr.mxu0 0.0
    %4580 = vmatpush2.xpose.msra.mxu0 0.0
    %4581 = vmatprep.subr.mxu0 0.0
    %4582 = vmatpush2.xpose.msra.mxu0 0.0
    %4583 = vmatprep.subr.mxu0 0.0
    %4584 = vmatpush2.xpose.msra.mxu0 0.0
    %4585 = vmatprep.mubr.f32.mxu0 0.0
    %4586 = vmatmul.mubr.f32.gmra.mxu0 %v4517
    %v4587 = vpop.f32.mrf.mxu0
    %v4588 = vadd.f32 0.0, %v4587
    %v4589 = vpop.f32.mrf.mxu0
    %4590 = vdwg.mxu0
    %4591 = vrot.lane.b32.xlu0 %v3760, 120
    %v4592 = vpop.permute.xlu0 %4591
    %4593 = vrot.lane.b32.xlu0 %v3760, 88
    %v4594 = vpop.permute.xlu0 %4593
    %v4595 = vsel %vm315, %v4592, 0
    %v4597 = vsel %vm315, %v4594, 0
    %4599 = vmatprep.subr.mxu0 0.0
    %4600 = vmatpush1.xpose.msra.mxu0 0.0
    %4601 = vmatprep.subr.mxu0 0.0
    %4602 = vmatpush1.xpose.msra.mxu0 0.0
    %4603 = vmatprep.subr.mxu0 0.0
    %4604 = vmatpush1.xpose.msra.mxu0 0.0
    %4605 = vmatprep.subr.mxu0 0.0
    %4606 = vmatpush1.xpose.msra.mxu0 0.0
    %4607 = vmatprep.subr.mxu0 0.0
    %4608 = vmatpush1.xpose.msra.mxu0 0.0
    %4609 = vmatprep.subr.mxu0 0.0
    %4610 = vmatpush1.xpose.msra.mxu0 0.0
    %4611 = vmatprep.subr.mxu0 0.0
    %4612 = vmatpush1.xpose.msra.mxu0 0.0
    %4613 = vmatprep.subr.mxu0 0.0
    %4614 = vmatpush1.xpose.msra.mxu0 0.0
    %4615 = vmatprep.subr.mxu0 0.0
    %4616 = vmatpush1.xpose.msra.mxu0 0.0
    %4617 = vmatprep.subr.mxu0 0.0
    %4618 = vmatpush1.xpose.msra.mxu0 0.0
    %4619 = vmatprep.subr.mxu0 0.0
    %4620 = vmatpush1.xpose.msra.mxu0 0.0
    %4621 = vmatprep.subr.mxu0 0.0
    %4622 = vmatpush1.xpose.msra.mxu0 0.0
    %4623 = vmatprep.subr.mxu0 0.0
    %4624 = vmatpush1.xpose.msra.mxu0 0.0
    %4625 = vmatprep.subr.mxu0 0.0
    %4626 = vmatpush1.xpose.msra.mxu0 0.0
    %4627 = vmatprep.subr.mxu0 0.0
    %4628 = vmatpush1.xpose.msra.mxu0 0.0
    %4629 = vmatprep.subr.mxu0 0.0
    %4630 = vmatpush1.xpose.msra.mxu0 %v4597
    %4631 = vmatprep.subr.mxu0 0.0
    %4632 = vmatpush2.xpose.msra.mxu0 0.0
    %4633 = vmatprep.subr.mxu0 0.0
    %4634 = vmatpush2.xpose.msra.mxu0 0.0
    %4635 = vmatprep.subr.mxu0 0.0
    %4636 = vmatpush2.xpose.msra.mxu0 0.0
    %4637 = vmatprep.subr.mxu0 0.0
    %4638 = vmatpush2.xpose.msra.mxu0 0.0
    %4639 = vmatprep.subr.mxu0 0.0
    %4640 = vmatpush2.xpose.msra.mxu0 0.0
    %4641 = vmatprep.subr.mxu0 0.0
    %4642 = vmatpush2.xpose.msra.mxu0 0.0
    %4643 = vmatprep.subr.mxu0 0.0
    %4644 = vmatpush2.xpose.msra.mxu0 0.0
    %4645 = vmatprep.subr.mxu0 0.0
    %4646 = vmatpush2.xpose.msra.mxu0 0.0
    %4647 = vmatprep.subr.mxu0 0.0
    %4648 = vmatpush2.xpose.msra.mxu0 0.0
    %4649 = vmatprep.subr.mxu0 0.0
    %4650 = vmatpush2.xpose.msra.mxu0 0.0
    %4651 = vmatprep.subr.mxu0 0.0
    %4652 = vmatpush2.xpose.msra.mxu0 0.0
    %4653 = vmatprep.subr.mxu0 0.0
    %4654 = vmatpush2.xpose.msra.mxu0 0.0
    %4655 = vmatprep.subr.mxu0 0.0
    %4656 = vmatpush2.xpose.msra.mxu0 0.0
    %4657 = vmatprep.subr.mxu0 0.0
    %4658 = vmatpush2.xpose.msra.mxu0 0.0
    %4659 = vmatprep.subr.mxu0 0.0
    %4660 = vmatpush2.xpose.msra.mxu0 0.0
    %4661 = vmatprep.subr.mxu0 0.0
    %4662 = vmatpush2.xpose.msra.mxu0 0.0
    %4663 = vmatprep.mubr.f32.mxu0 0.0
    %4664 = vmatmul.mubr.f32.gmra.mxu0 %v4595
    %v4665 = vpop.f32.mrf.mxu0
    %v4666 = vadd.f32 0.0, %v4665
    %v4667 = vpop.f32.mrf.mxu0
    %4668 = vdwg.mxu0
    %4669 = vrot.lane.b32.xlu0 %v3763, 120
    %v4670 = vpop.permute.xlu0 %4669
    %4671 = vrot.lane.b32.xlu0 %v3763, 88
    %v4672 = vpop.permute.xlu0 %4671
    %v4673 = vsel %vm315, %v4670, 0
    %v4675 = vsel %vm315, %v4672, 0
    %4677 = vmatprep.subr.mxu0 0.0
    %4678 = vmatpush1.xpose.msra.mxu0 0.0
    %4679 = vmatprep.subr.mxu0 0.0
    %4680 = vmatpush1.xpose.msra.mxu0 0.0
    %4681 = vmatprep.subr.mxu0 0.0
    %4682 = vmatpush1.xpose.msra.mxu0 0.0
    %4683 = vmatprep.subr.mxu0 0.0
    %4684 = vmatpush1.xpose.msra.mxu0 0.0
    %4685 = vmatprep.subr.mxu0 0.0
    %4686 = vmatpush1.xpose.msra.mxu0 0.0
    %4687 = vmatprep.subr.mxu0 0.0
    %4688 = vmatpush1.xpose.msra.mxu0 0.0
    %4689 = vmatprep.subr.mxu0 0.0
    %4690 = vmatpush1.xpose.msra.mxu0 0.0
    %4691 = vmatprep.subr.mxu0 0.0
    %4692 = vmatpush1.xpose.msra.mxu0 0.0
    %4693 = vmatprep.subr.mxu0 0.0
    %4694 = vmatpush1.xpose.msra.mxu0 0.0
    %4695 = vmatprep.subr.mxu0 0.0
    %4696 = vmatpush1.xpose.msra.mxu0 0.0
    %4697 = vmatprep.subr.mxu0 0.0
    %4698 = vmatpush1.xpose.msra.mxu0 0.0
    %4699 = vmatprep.subr.mxu0 0.0
    %4700 = vmatpush1.xpose.msra.mxu0 0.0
    %4701 = vmatprep.subr.mxu0 0.0
    %4702 = vmatpush1.xpose.msra.mxu0 0.0
    %4703 = vmatprep.subr.mxu0 0.0
    %4704 = vmatpush1.xpose.msra.mxu0 0.0
    %4705 = vmatprep.subr.mxu0 0.0
    %4706 = vmatpush1.xpose.msra.mxu0 0.0
    %4707 = vmatprep.subr.mxu0 0.0
    %4708 = vmatpush1.xpose.msra.mxu0 %v4675
    %4709 = vmatprep.subr.mxu0 0.0
    %4710 = vmatpush2.xpose.msra.mxu0 0.0
    %4711 = vmatprep.subr.mxu0 0.0
    %4712 = vmatpush2.xpose.msra.mxu0 0.0
    %4713 = vmatprep.subr.mxu0 0.0
    %4714 = vmatpush2.xpose.msra.mxu0 0.0
    %4715 = vmatprep.subr.mxu0 0.0
    %4716 = vmatpush2.xpose.msra.mxu0 0.0
    %4717 = vmatprep.subr.mxu0 0.0
    %4718 = vmatpush2.xpose.msra.mxu0 0.0
    %4719 = vmatprep.subr.mxu0 0.0
    %4720 = vmatpush2.xpose.msra.mxu0 0.0
    %4721 = vmatprep.subr.mxu0 0.0
    %4722 = vmatpush2.xpose.msra.mxu0 0.0
    %4723 = vmatprep.subr.mxu0 0.0
    %4724 = vmatpush2.xpose.msra.mxu0 0.0
    %4725 = vmatprep.subr.mxu0 0.0
    %4726 = vmatpush2.xpose.msra.mxu0 0.0
    %4727 = vmatprep.subr.mxu0 0.0
    %4728 = vmatpush2.xpose.msra.mxu0 0.0
    %4729 = vmatprep.subr.mxu0 0.0
    %4730 = vmatpush2.xpose.msra.mxu0 0.0
    %4731 = vmatprep.subr.mxu0 0.0
    %4732 = vmatpush2.xpose.msra.mxu0 0.0
    %4733 = vmatprep.subr.mxu0 0.0
    %4734 = vmatpush2.xpose.msra.mxu0 0.0
    %4735 = vmatprep.subr.mxu0 0.0
    %4736 = vmatpush2.xpose.msra.mxu0 0.0
    %4737 = vmatprep.subr.mxu0 0.0
    %4738 = vmatpush2.xpose.msra.mxu0 0.0
    %4739 = vmatprep.subr.mxu0 0.0
    %4740 = vmatpush2.xpose.msra.mxu0 0.0
    %4741 = vmatprep.mubr.f32.mxu0 0.0
    %4742 = vmatmul.mubr.f32.gmra.mxu0 %v4673
    %v4743 = vpop.f32.mrf.mxu0
    %v4744 = vadd.f32 0.0, %v4743
    %v4745 = vpop.f32.mrf.mxu0
    %4746 = vdwg.mxu0
    %v4747 = vmul.f32 %v4510, 0.35355338
    %v4748 = vmul.f32 %v4588, 0.35355338
    %v4749 = vmul.f32 %v4666, 0.35355338
    %v4750 = vmul.f32 %v4744, 0.35355338
    %v4751 = vadd.f32 %v4747, %v176
    %v4752 = vadd.f32 %v4748, %v176
    %v4753 = vadd.f32 %v4749, %v176
    %v4754 = vadd.f32 %v4750, %v176
    %v4755 = vsel %vm315, %v4751, -inf
    %4756 = vmax.xlane.f32.xlu0 %v4755
    %v4757 = vpop.xlane.xlu0 %4756
    %v4758 = vsel %vm315, %v4752, -inf
    %4759 = vmax.xlane.f32.xlu0 %v4758
    %v4760 = vpop.xlane.xlu0 %4759
    %v4761 = vsel %vm315, %v4753, -inf
    %4762 = vmax.xlane.f32.xlu0 %v4761
    %v4763 = vpop.xlane.xlu0 %4762
    %v4764 = vsel %vm315, %v4754, -inf
    %4765 = vmax.xlane.f32.xlu0 %v4764
    %v4766 = vpop.xlane.xlu0 %4765
    %v4767 = vsub.f32 %v4751, %v4757
    %v4768 = vsub.f32 %v4752, %v4760
    %v4769 = vsub.f32 %v4753, %v4763
    %v4770 = vsub.f32 %v4754, %v4766
    %v4771 = vmul.f32 %v4767, 1.442695
    %v4772 = vpow.pop %v4771
    %v4773 = vmul.f32 %v4768, 1.442695
    %v4774 = vpow.pop %v4773
    %v4775 = vmul.f32 %v4769, 1.442695
    %v4776 = vpow.pop %v4775
    %v4777 = vmul.f32 %v4770, 1.442695
    %v4778 = vpow.pop %v4777
    %v4779 = vsel %vm315, %v4772, 0.0
    %4780 = vadd.xlane.f32.xlu0 %v4779
    %v4781 = vpop.xlane.xlu0 %4780
    %v4782 = vsel %vm315, %v4774, 0.0
    %4783 = vadd.xlane.f32.xlu0 %v4782
    %v4784 = vpop.xlane.xlu0 %4783
    %v4785 = vsel %vm315, %v4776, 0.0
    %4786 = vadd.xlane.f32.xlu0 %v4785
    %v4787 = vpop.xlane.xlu0 %4786
    %v4788 = vsel %vm315, %v4778, 0.0
    %4789 = vadd.xlane.f32.xlu0 %v4788
    %v4790 = vpop.xlane.xlu0 %4789
    %v4791 = vrcp.pop %v4781
    %v4792 = vrcp.pop %v4784
    %v4793 = vrcp.pop %v4787
    %v4794 = vrcp.pop %v4790
    %v4795 = vmul.f32 %v4772, %v4791
    %v4796 = vmul.f32 %v4774, %v4792
    %v4797 = vmul.f32 %v4776, %v4793
    %v4798 = vmul.f32 %v4778, %v4794
    %4799 = vrot.lane.b32.xlu0 %v3752, 56
    %v4800 = vpop.permute.xlu0 %4799
    %v4803 = vsel %vm315, %v4795, 0
    %4805 = vmatprep.subr.mxu0 0.0
    %4806 = vmatpush1.msra.mxu0 0.0
    %4807 = vmatprep.subr.mxu0 0.0
    %4808 = vmatpush1.msra.mxu0 0.0
    %4809 = vmatprep.subr.mxu0 0.0
    %4810 = vmatpush1.msra.mxu0 0.0
    %4811 = vmatprep.subr.mxu0 0.0
    %4812 = vmatpush1.msra.mxu0 0.0
    %4813 = vmatprep.subr.mxu0 0.0
    %4814 = vmatpush1.msra.mxu0 0.0
    %4815 = vmatprep.subr.mxu0 0.0
    %4816 = vmatpush1.msra.mxu0 0.0
    %4817 = vmatprep.subr.mxu0 0.0
    %4818 = vmatpush1.msra.mxu0 0.0
    %4819 = vmatprep.subr.mxu0 0.0
    %4820 = vmatpush1.msra.mxu0 0.0
    %4821 = vmatprep.subr.mxu0 0.0
    %4822 = vmatpush1.msra.mxu0 0.0
    %4823 = vmatprep.subr.mxu0 0.0
    %4824 = vmatpush1.msra.mxu0 0.0
    %4825 = vmatprep.subr.mxu0 0.0
    %4826 = vmatpush1.msra.mxu0 0.0
    %4827 = vmatprep.subr.mxu0 0.0
    %4828 = vmatpush1.msra.mxu0 0.0
    %4829 = vmatprep.subr.mxu0 0.0
    %4830 = vmatpush1.msra.mxu0 0.0
    %4831 = vmatprep.subr.mxu0 0.0
    %4832 = vmatpush1.msra.mxu0 0.0
    %4833 = vmatprep.subr.mxu0 0.0
    %4834 = vmatpush1.msra.mxu0 0.0
    %4835 = vmatprep.subr.mxu0 0.0
    %4836 = vmatpush1.msra.mxu0 %v4800
    %4837 = vmatprep.subr.mxu0 0.0
    %4838 = vmatpush2.msra.mxu0 0.0
    %4839 = vmatprep.subr.mxu0 0.0
    %4840 = vmatpush2.msra.mxu0 0.0
    %4841 = vmatprep.subr.mxu0 0.0
    %4842 = vmatpush2.msra.mxu0 0.0
    %4843 = vmatprep.subr.mxu0 0.0
    %4844 = vmatpush2.msra.mxu0 0.0
    %4845 = vmatprep.subr.mxu0 0.0
    %4846 = vmatpush2.msra.mxu0 0.0
    %4847 = vmatprep.subr.mxu0 0.0
    %4848 = vmatpush2.msra.mxu0 0.0
    %4849 = vmatprep.subr.mxu0 0.0
    %4850 = vmatpush2.msra.mxu0 0.0
    %4851 = vmatprep.subr.mxu0 0.0
    %4852 = vmatpush2.msra.mxu0 0.0
    %4853 = vmatprep.subr.mxu0 0.0
    %4854 = vmatpush2.msra.mxu0 0.0
    %4855 = vmatprep.subr.mxu0 0.0
    %4856 = vmatpush2.msra.mxu0 0.0
    %4857 = vmatprep.subr.mxu0 0.0
    %4858 = vmatpush2.msra.mxu0 0.0
    %4859 = vmatprep.subr.mxu0 0.0
    %4860 = vmatpush2.msra.mxu0 0.0
    %4861 = vmatprep.subr.mxu0 0.0
    %4862 = vmatpush2.msra.mxu0 0.0
    %4863 = vmatprep.subr.mxu0 0.0
    %4864 = vmatpush2.msra.mxu0 0.0
    %4865 = vmatprep.subr.mxu0 0.0
    %4866 = vmatpush2.msra.mxu0 0.0
    %4867 = vmatprep.subr.mxu0 0.0
    %4868 = vmatpush2.msra.mxu0 0.0
    %4869 = vmatprep.mubr.f32.mxu0 0.0
    %4870 = vmatmul.mubr.f32.gmra.mxu0 %v4803
    %v4871 = vpop.f32.mrf.mxu0
    %v4872 = vadd.f32 0.0, %v4871
    %v4873 = vpop.f32.mrf.mxu0
    %4874 = vdwg.mxu0
    %4875 = vrot.lane.b32.xlu0 %v3755, 56
    %v4876 = vpop.permute.xlu0 %4875
    %v4879 = vsel %vm315, %v4796, 0
    %4881 = vmatprep.subr.mxu0 0.0
    %4882 = vmatpush1.msra.mxu0 0.0
    %4883 = vmatprep.subr.mxu0 0.0
    %4884 = vmatpush1.msra.mxu0 0.0
    %4885 = vmatprep.subr.mxu0 0.0
    %4886 = vmatpush1.msra.mxu0 0.0
    %4887 = vmatprep.subr.mxu0 0.0
    %4888 = vmatpush1.msra.mxu0 0.0
    %4889 = vmatprep.subr.mxu0 0.0
    %4890 = vmatpush1.msra.mxu0 0.0
    %4891 = vmatprep.subr.mxu0 0.0
    %4892 = vmatpush1.msra.mxu0 0.0
    %4893 = vmatprep.subr.mxu0 0.0
    %4894 = vmatpush1.msra.mxu0 0.0
    %4895 = vmatprep.subr.mxu0 0.0
    %4896 = vmatpush1.msra.mxu0 0.0
    %4897 = vmatprep.subr.mxu0 0.0
    %4898 = vmatpush1.msra.mxu0 0.0
    %4899 = vmatprep.subr.mxu0 0.0
    %4900 = vmatpush1.msra.mxu0 0.0
    %4901 = vmatprep.subr.mxu0 0.0
    %4902 = vmatpush1.msra.mxu0 0.0
    %4903 = vmatprep.subr.mxu0 0.0
    %4904 = vmatpush1.msra.mxu0 0.0
    %4905 = vmatprep.subr.mxu0 0.0
    %4906 = vmatpush1.msra.mxu0 0.0
    %4907 = vmatprep.subr.mxu0 0.0
    %4908 = vmatpush1.msra.mxu0 0.0
    %4909 = vmatprep.subr.mxu0 0.0
    %4910 = vmatpush1.msra.mxu0 0.0
    %4911 = vmatprep.subr.mxu0 0.0
    %4912 = vmatpush1.msra.mxu0 %v4876
    %4913 = vmatprep.subr.mxu0 0.0
    %4914 = vmatpush2.msra.mxu0 0.0
    %4915 = vmatprep.subr.mxu0 0.0
    %4916 = vmatpush2.msra.mxu0 0.0
    %4917 = vmatprep.subr.mxu0 0.0
    %4918 = vmatpush2.msra.mxu0 0.0
    %4919 = vmatprep.subr.mxu0 0.0
    %4920 = vmatpush2.msra.mxu0 0.0
    %4921 = vmatprep.subr.mxu0 0.0
    %4922 = vmatpush2.msra.mxu0 0.0
    %4923 = vmatprep.subr.mxu0 0.0
    %4924 = vmatpush2.msra.mxu0 0.0
    %4925 = vmatprep.subr.mxu0 0.0
    %4926 = vmatpush2.msra.mxu0 0.0
    %4927 = vmatprep.subr.mxu0 0.0
    %4928 = vmatpush2.msra.mxu0 0.0
    %4929 = vmatprep.subr.mxu0 0.0
    %4930 = vmatpush2.msra.mxu0 0.0
    %4931 = vmatprep.subr.mxu0 0.0
    %4932 = vmatpush2.msra.mxu0 0.0
    %4933 = vmatprep.subr.mxu0 0.0
    %4934 = vmatpush2.msra.mxu0 0.0
    %4935 = vmatprep.subr.mxu0 0.0
    %4936 = vmatpush2.msra.mxu0 0.0
    %4937 = vmatprep.subr.mxu0 0.0
    %4938 = vmatpush2.msra.mxu0 0.0
    %4939 = vmatprep.subr.mxu0 0.0
    %4940 = vmatpush2.msra.mxu0 0.0
    %4941 = vmatprep.subr.mxu0 0.0
    %4942 = vmatpush2.msra.mxu0 0.0
    %4943 = vmatprep.subr.mxu0 0.0
    %4944 = vmatpush2.msra.mxu0 0.0
    %4945 = vmatprep.mubr.f32.mxu0 0.0
    %4946 = vmatmul.mubr.f32.gmra.mxu0 %v4879
    %v4947 = vpop.f32.mrf.mxu0
    %v4948 = vadd.f32 0.0, %v4947
    %v4949 = vpop.f32.mrf.mxu0
    %4950 = vdwg.mxu0
    %4951 = vrot.lane.b32.xlu0 %v3760, 56
    %v4952 = vpop.permute.xlu0 %4951
    %v4955 = vsel %vm315, %v4797, 0
    %4957 = vmatprep.subr.mxu0 0.0
    %4958 = vmatpush1.msra.mxu0 0.0
    %4959 = vmatprep.subr.mxu0 0.0
    %4960 = vmatpush1.msra.mxu0 0.0
    %4961 = vmatprep.subr.mxu0 0.0
    %4962 = vmatpush1.msra.mxu0 0.0
    %4963 = vmatprep.subr.mxu0 0.0
    %4964 = vmatpush1.msra.mxu0 0.0
    %4965 = vmatprep.subr.mxu0 0.0
    %4966 = vmatpush1.msra.mxu0 0.0
    %4967 = vmatprep.subr.mxu0 0.0
    %4968 = vmatpush1.msra.mxu0 0.0
    %4969 = vmatprep.subr.mxu0 0.0
    %4970 = vmatpush1.msra.mxu0 0.0
    %4971 = vmatprep.subr.mxu0 0.0
    %4972 = vmatpush1.msra.mxu0 0.0
    %4973 = vmatprep.subr.mxu0 0.0
    %4974 = vmatpush1.msra.mxu0 0.0
    %4975 = vmatprep.subr.mxu0 0.0
    %4976 = vmatpush1.msra.mxu0 0.0
    %4977 = vmatprep.subr.mxu0 0.0
    %4978 = vmatpush1.msra.mxu0 0.0
    %4979 = vmatprep.subr.mxu0 0.0
    %4980 = vmatpush1.msra.mxu0 0.0
    %4981 = vmatprep.subr.mxu0 0.0
    %4982 = vmatpush1.msra.mxu0 0.0
    %4983 = vmatprep.subr.mxu0 0.0
    %4984 = vmatpush1.msra.mxu0 0.0
    %4985 = vmatprep.subr.mxu0 0.0
    %4986 = vmatpush1.msra.mxu0 0.0
    %4987 = vmatprep.subr.mxu0 0.0
    %4988 = vmatpush1.msra.mxu0 %v4952
    %4989 = vmatprep.subr.mxu0 0.0
    %4990 = vmatpush2.msra.mxu0 0.0
    %4991 = vmatprep.subr.mxu0 0.0
    %4992 = vmatpush2.msra.mxu0 0.0
    %4993 = vmatprep.subr.mxu0 0.0
    %4994 = vmatpush2.msra.mxu0 0.0
    %4995 = vmatprep.subr.mxu0 0.0
    %4996 = vmatpush2.msra.mxu0 0.0
    %4997 = vmatprep.subr.mxu0 0.0
    %4998 = vmatpush2.msra.mxu0 0.0
    %4999 = vmatprep.subr.mxu0 0.0
    %5000 = vmatpush2.msra.mxu0 0.0
    %5001 = vmatprep.subr.mxu0 0.0
    %5002 = vmatpush2.msra.mxu0 0.0
    %5003 = vmatprep.subr.mxu0 0.0
    %5004 = vmatpush2.msra.mxu0 0.0
    %5005 = vmatprep.subr.mxu0 0.0
    %5006 = vmatpush2.msra.mxu0 0.0
    %5007 = vmatprep.subr.mxu0 0.0
    %5008 = vmatpush2.msra.mxu0 0.0
    %5009 = vmatprep.subr.mxu0 0.0
    %5010 = vmatpush2.msra.mxu0 0.0
    %5011 = vmatprep.subr.mxu0 0.0
    %5012 = vmatpush2.msra.mxu0 0.0
    %5013 = vmatprep.subr.mxu0 0.0
    %5014 = vmatpush2.msra.mxu0 0.0
    %5015 = vmatprep.subr.mxu0 0.0
    %5016 = vmatpush2.msra.mxu0 0.0
    %5017 = vmatprep.subr.mxu0 0.0
    %5018 = vmatpush2.msra.mxu0 0.0
    %5019 = vmatprep.subr.mxu0 0.0
    %5020 = vmatpush2.msra.mxu0 0.0
    %5021 = vmatprep.mubr.f32.mxu0 0.0
    %5022 = vmatmul.mubr.f32.gmra.mxu0 %v4955
    %v5023 = vpop.f32.mrf.mxu0
    %v5024 = vadd.f32 0.0, %v5023
    %v5025 = vpop.f32.mrf.mxu0
    %5026 = vdwg.mxu0
    %5027 = vrot.lane.b32.xlu0 %v3763, 56
    %v5028 = vpop.permute.xlu0 %5027
    %v5031 = vsel %vm315, %v4798, 0
    %5033 = vmatprep.subr.mxu0 0.0
    %5034 = vmatpush1.msra.mxu0 0.0
    %5035 = vmatprep.subr.mxu0 0.0
    %5036 = vmatpush1.msra.mxu0 0.0
    %5037 = vmatprep.subr.mxu0 0.0
    %5038 = vmatpush1.msra.mxu0 0.0
    %5039 = vmatprep.subr.mxu0 0.0
    %5040 = vmatpush1.msra.mxu0 0.0
    %5041 = vmatprep.subr.mxu0 0.0
    %5042 = vmatpush1.msra.mxu0 0.0
    %5043 = vmatprep.subr.mxu0 0.0
    %5044 = vmatpush1.msra.mxu0 0.0
    %5045 = vmatprep.subr.mxu0 0.0
    %5046 = vmatpush1.msra.mxu0 0.0
    %5047 = vmatprep.subr.mxu0 0.0
    %5048 = vmatpush1.msra.mxu0 0.0
    %5049 = vmatprep.subr.mxu0 0.0
    %5050 = vmatpush1.msra.mxu0 0.0
    %5051 = vmatprep.subr.mxu0 0.0
    %5052 = vmatpush1.msra.mxu0 0.0
    %5053 = vmatprep.subr.mxu0 0.0
    %5054 = vmatpush1.msra.mxu0 0.0
    %5055 = vmatprep.subr.mxu0 0.0
    %5056 = vmatpush1.msra.mxu0 0.0
    %5057 = vmatprep.subr.mxu0 0.0
    %5058 = vmatpush1.msra.mxu0 0.0
    %5059 = vmatprep.subr.mxu0 0.0
    %5060 = vmatpush1.msra.mxu0 0.0
    %5061 = vmatprep.subr.mxu0 0.0
    %5062 = vmatpush1.msra.mxu0 0.0
    %5063 = vmatprep.subr.mxu0 0.0
    %5064 = vmatpush1.msra.mxu0 %v5028
    %5065 = vmatprep.subr.mxu0 0.0
    %5066 = vmatpush2.msra.mxu0 0.0
    %5067 = vmatprep.subr.mxu0 0.0
    %5068 = vmatpush2.msra.mxu0 0.0
    %5069 = vmatprep.subr.mxu0 0.0
    %5070 = vmatpush2.msra.mxu0 0.0
    %5071 = vmatprep.subr.mxu0 0.0
    %5072 = vmatpush2.msra.mxu0 0.0
    %5073 = vmatprep.subr.mxu0 0.0
    %5074 = vmatpush2.msra.mxu0 0.0
    %5075 = vmatprep.subr.mxu0 0.0
    %5076 = vmatpush2.msra.mxu0 0.0
    %5077 = vmatprep.subr.mxu0 0.0
    %5078 = vmatpush2.msra.mxu0 0.0
    %5079 = vmatprep.subr.mxu0 0.0
    %5080 = vmatpush2.msra.mxu0 0.0
    %5081 = vmatprep.subr.mxu0 0.0
    %5082 = vmatpush2.msra.mxu0 0.0
    %5083 = vmatprep.subr.mxu0 0.0
    %5084 = vmatpush2.msra.mxu0 0.0
    %5085 = vmatprep.subr.mxu0 0.0
    %5086 = vmatpush2.msra.mxu0 0.0
    %5087 = vmatprep.subr.mxu0 0.0
    %5088 = vmatpush2.msra.mxu0 0.0
    %5089 = vmatprep.subr.mxu0 0.0
    %5090 = vmatpush2.msra.mxu0 0.0
    %5091 = vmatprep.subr.mxu0 0.0
    %5092 = vmatpush2.msra.mxu0 0.0
    %5093 = vmatprep.subr.mxu0 0.0
    %5094 = vmatpush2.msra.mxu0 0.0
    %5095 = vmatprep.subr.mxu0 0.0
    %5096 = vmatpush2.msra.mxu0 0.0
    %5097 = vmatprep.mubr.f32.mxu0 0.0
    %5098 = vmatmul.mubr.f32.gmra.mxu0 %v5031
    %v5099 = vpop.f32.mrf.mxu0
    %v5100 = vadd.f32 0.0, %v5099
    %v5101 = vpop.f32.mrf.mxu0
    %5102 = vdwg.mxu0
    %v5103 = vld [vmem:[%s2 + $0x74] sm:$0xf]
    %v5104 = vpack.c.bf16 %v4872, %v4872
    %v5105 = vpack.c.bf16 %v4948, %v4948
    %v5106 = vpack.c.bf16 %v5024, %v5024
    %v5107 = vpack.c.bf16 %v5100, %v5100
    %v5112 = vunpack.c.l.b16 %v5104
    %v5113 = vunpack.c.l.b16 %v5105
    %v5114 = vunpack.c.l.b16 %v5106
    %v5115 = vunpack.c.l.b16 %v5107
    %v5116 = vpack.c.b16 %v5113, %v5112
    %v5117 = vpack.c.b16 %v5115, %v5114
    %v5119 = vsel %vm315, %v5116, 0
    %v5122 = vsel %vm315, %v5117, 0
    %v5125 = vsel %vm1671, %v5103, 0
    %5127 = vmatprep.subr.bf16.mxu0 0
    %5128 = vmatpush1.bf16.msra.mxu0 0
    %5129 = vmatprep.subr.bf16.mxu0 0
    %5130 = vmatpush1.bf16.msra.mxu0 0
    %5131 = vmatprep.subr.bf16.mxu0 0
    %5132 = vmatpush1.bf16.msra.mxu0 0
    %5133 = vmatprep.subr.bf16.mxu0 0
    %5134 = vmatpush1.bf16.msra.mxu0 0
    %5135 = vmatprep.subr.bf16.mxu0 0
    %5136 = vmatpush1.bf16.msra.mxu0 0
    %5137 = vmatprep.subr.bf16.mxu0 0
    %5138 = vmatpush1.bf16.msra.mxu0 0
    %5139 = vmatprep.subr.bf16.mxu0 0
    %5140 = vmatpush1.bf16.msra.mxu0 0
    %5141 = vmatprep.subr.bf16.mxu0 0
    %5142 = vmatpush1.bf16.msra.mxu0 %v5125
    %5143 = vmatprep.subr.bf16.mxu0 0
    %5144 = vmatpush2.bf16.msra.mxu0 0
    %5145 = vmatprep.subr.bf16.mxu0 0
    %5146 = vmatpush2.bf16.msra.mxu0 0
    %5147 = vmatprep.subr.bf16.mxu0 0
    %5148 = vmatpush2.bf16.msra.mxu0 0
    %5149 = vmatprep.subr.bf16.mxu0 0
    %5150 = vmatpush2.bf16.msra.mxu0 0
    %5151 = vmatprep.subr.bf16.mxu0 0
    %5152 = vmatpush2.bf16.msra.mxu0 0
    %5153 = vmatprep.subr.bf16.mxu0 0
    %5154 = vmatpush2.bf16.msra.mxu0 0
    %5155 = vmatprep.subr.bf16.mxu0 0
    %5156 = vmatpush2.bf16.msra.mxu0 0
    %5157 = vmatprep.subr.bf16.mxu0 0
    %5158 = vmatpush2.bf16.msra.mxu0 0
    %5159 = vmatprep.mubr.bf16.mxu0 0
    %5160 = vmatmul.mubr.bf16.gmra.mxu0 %v5119
    %v5161 = vpop.f32.mrf.mxu0
    %v5162 = vadd.f32 0.0, %v5161
    %v5163 = vpop.f32.mrf.mxu0
    %v5164 = vpop.f32.mrf.mxu0
    %v5165 = vadd.f32 0.0, %v5164
    %v5166 = vpop.f32.mrf.mxu0
    %5167 = vmatprep.mubr.bf16.mxu0 0
    %5168 = vmatmul.mubr.bf16.gmra.mxu0 %v5122
    %v5169 = vpop.f32.mrf.mxu0
    %v5170 = vadd.f32 0.0, %v5169
    %v5171 = vpop.f32.mrf.mxu0
    %v5172 = vpop.f32.mrf.mxu0
    %v5173 = vadd.f32 0.0, %v5172
    %v5174 = vpop.f32.mrf.mxu0
    %5175 = vdwg.mxu0
    %v5180 = vunpack.c.l.b16 %v4431
    %v5181 = vunpack.c.l.b16 %v4432
    %v5182 = vunpack.c.l.b16 %v4433
    %v5183 = vunpack.c.l.b16 %v4434
    %v5184 = vpack.c.b16 %v5181, %v5180
    %v5185 = vpack.c.b16 %v5183, %v5182
    %v5187 = vsel %vm315, %v5184, 0
    %v5190 = vsel %vm315, %v5185, 0
    %v5193 = vsel %vm1671, %v4430, 0
    %5195 = vmatprep.subr.bf16.mxu0 0
    %5196 = vmatpush1.bf16.msra.mxu0 0
    %5197 = vmatprep.subr.bf16.mxu0 0
    %5198 = vmatpush1.bf16.msra.mxu0 0
    %5199 = vmatprep.subr.bf16.mxu0 0
    %5200 = vmatpush1.bf16.msra.mxu0 0
    %5201 = vmatprep.subr.bf16.mxu0 0
    %5202 = vmatpush1.bf16.msra.mxu0 0
    %5203 = vmatprep.subr.bf16.mxu0 0
    %5204 = vmatpush1.bf16.msra.mxu0 0
    %5205 = vmatprep.subr.bf16.mxu0 0
    %5206 = vmatpush1.bf16.msra.mxu0 0
    %5207 = vmatprep.subr.bf16.mxu0 0
    %5208 = vmatpush1.bf16.msra.mxu0 0
    %5209 = vmatprep.subr.bf16.mxu0 0
    %5210 = vmatpush1.bf16.msra.mxu0 %v5193
    %5211 = vmatprep.subr.bf16.mxu0 0
    %5212 = vmatpush2.bf16.msra.mxu0 0
    %5213 = vmatprep.subr.bf16.mxu0 0
    %5214 = vmatpush2.bf16.msra.mxu0 0
    %5215 = vmatprep.subr.bf16.mxu0 0
    %5216 = vmatpush2.bf16.msra.mxu0 0
    %5217 = vmatprep.subr.bf16.mxu0 0
    %5218 = vmatpush2.bf16.msra.mxu0 0
    %5219 = vmatprep.subr.bf16.mxu0 0
    %5220 = vmatpush2.bf16.msra.mxu0 0
    %5221 = vmatprep.subr.bf16.mxu0 0
    %5222 = vmatpush2.bf16.msra.mxu0 0
    %5223 = vmatprep.subr.bf16.mxu0 0
    %5224 = vmatpush2.bf16.msra.mxu0 0
    %5225 = vmatprep.subr.bf16.mxu0 0
    %5226 = vmatpush2.bf16.msra.mxu0 0
    %5227 = vmatprep.mubr.bf16.mxu0 0
    %5228 = vmatmul.mubr.bf16.gmra.mxu0 %v5187
    %v5229 = vpop.f32.mrf.mxu0
    %v5230 = vadd.f32 %v5162, %v5229
    %v5231 = vpop.f32.mrf.mxu0
    %v5232 = vpop.f32.mrf.mxu0
    %v5233 = vadd.f32 %v5165, %v5232
    %v5234 = vpop.f32.mrf.mxu0
    %5235 = vmatprep.mubr.bf16.mxu0 0
    %5236 = vmatmul.mubr.bf16.gmra.mxu0 %v5190
    %v5237 = vpop.f32.mrf.mxu0
    %v5238 = vadd.f32 %v5170, %v5237
    %v5239 = vpop.f32.mrf.mxu0
    %v5240 = vpop.f32.mrf.mxu0
    %v5241 = vadd.f32 %v5173, %v5240
    %v5242 = vpop.f32.mrf.mxu0
    %5243 = vdwg.mxu0
    %5244 = vrot.lane.b32.xlu0 %v3752, 112
    %v5245 = vpop.permute.xlu0 %5244
    %5246 = vrot.lane.b32.xlu0 %v3752, 80
    %v5247 = vpop.permute.xlu0 %5246
    %v5248 = vsel %vm315, %v5245, 0
    %v5250 = vsel %vm315, %v5247, 0
    %5252 = vmatprep.subr.mxu0 0.0
    %5253 = vmatpush1.xpose.msra.mxu0 0.0
    %5254 = vmatprep.subr.mxu0 0.0
    %5255 = vmatpush1.xpose.msra.mxu0 0.0
    %5256 = vmatprep.subr.mxu0 0.0
    %5257 = vmatpush1.xpose.msra.mxu0 0.0
    %5258 = vmatprep.subr.mxu0 0.0
    %5259 = vmatpush1.xpose.msra.mxu0 0.0
    %5260 = vmatprep.subr.mxu0 0.0
    %5261 = vmatpush1.xpose.msra.mxu0 0.0
    %5262 = vmatprep.subr.mxu0 0.0
    %5263 = vmatpush1.xpose.msra.mxu0 0.0
    %5264 = vmatprep.subr.mxu0 0.0
    %5265 = vmatpush1.xpose.msra.mxu0 0.0
    %5266 = vmatprep.subr.mxu0 0.0
    %5267 = vmatpush1.xpose.msra.mxu0 0.0
    %5268 = vmatprep.subr.mxu0 0.0
    %5269 = vmatpush1.xpose.msra.mxu0 0.0
    %5270 = vmatprep.subr.mxu0 0.0
    %5271 = vmatpush1.xpose.msra.mxu0 0.0
    %5272 = vmatprep.subr.mxu0 0.0
    %5273 = vmatpush1.xpose.msra.mxu0 0.0
    %5274 = vmatprep.subr.mxu0 0.0
    %5275 = vmatpush1.xpose.msra.mxu0 0.0
    %5276 = vmatprep.subr.mxu0 0.0
    %5277 = vmatpush1.xpose.msra.mxu0 0.0
    %5278 = vmatprep.subr.mxu0 0.0
    %5279 = vmatpush1.xpose.msra.mxu0 0.0
    %5280 = vmatprep.subr.mxu0 0.0
    %5281 = vmatpush1.xpose.msra.mxu0 0.0
    %5282 = vmatprep.subr.mxu0 0.0
    %5283 = vmatpush1.xpose.msra.mxu0 %v5250
    %5284 = vmatprep.subr.mxu0 0.0
    %5285 = vmatpush2.xpose.msra.mxu0 0.0
    %5286 = vmatprep.subr.mxu0 0.0
    %5287 = vmatpush2.xpose.msra.mxu0 0.0
    %5288 = vmatprep.subr.mxu0 0.0
    %5289 = vmatpush2.xpose.msra.mxu0 0.0
    %5290 = vmatprep.subr.mxu0 0.0
    %5291 = vmatpush2.xpose.msra.mxu0 0.0
    %5292 = vmatprep.subr.mxu0 0.0
    %5293 = vmatpush2.xpose.msra.mxu0 0.0
    %5294 = vmatprep.subr.mxu0 0.0
    %5295 = vmatpush2.xpose.msra.mxu0 0.0
    %5296 = vmatprep.subr.mxu0 0.0
    %5297 = vmatpush2.xpose.msra.mxu0 0.0
    %5298 = vmatprep.subr.mxu0 0.0
    %5299 = vmatpush2.xpose.msra.mxu0 0.0
    %5300 = vmatprep.subr.mxu0 0.0
    %5301 = vmatpush2.xpose.msra.mxu0 0.0
    %5302 = vmatprep.subr.mxu0 0.0
    %5303 = vmatpush2.xpose.msra.mxu0 0.0
    %5304 = vmatprep.subr.mxu0 0.0
    %5305 = vmatpush2.xpose.msra.mxu0 0.0
    %5306 = vmatprep.subr.mxu0 0.0
    %5307 = vmatpush2.xpose.msra.mxu0 0.0
    %5308 = vmatprep.subr.mxu0 0.0
    %5309 = vmatpush2.xpose.msra.mxu0 0.0
    %5310 = vmatprep.subr.mxu0 0.0
    %5311 = vmatpush2.xpose.msra.mxu0 0.0
    %5312 = vmatprep.subr.mxu0 0.0
    %5313 = vmatpush2.xpose.msra.mxu0 0.0
    %5314 = vmatprep.subr.mxu0 0.0
    %5315 = vmatpush2.xpose.msra.mxu0 0.0
    %5316 = vmatprep.mubr.f32.mxu0 0.0
    %5317 = vmatmul.mubr.f32.gmra.mxu0 %v5248
    %v5318 = vpop.f32.mrf.mxu0
    %v5319 = vadd.f32 0.0, %v5318
    %v5320 = vpop.f32.mrf.mxu0
    %5321 = vdwg.mxu0
    %5322 = vrot.lane.b32.xlu0 %v3755, 112
    %v5323 = vpop.permute.xlu0 %5322
    %5324 = vrot.lane.b32.xlu0 %v3755, 80
    %v5325 = vpop.permute.xlu0 %5324
    %v5326 = vsel %vm315, %v5323, 0
    %v5328 = vsel %vm315, %v5325, 0
    %5330 = vmatprep.subr.mxu0 0.0
    %5331 = vmatpush1.xpose.msra.mxu0 0.0
    %5332 = vmatprep.subr.mxu0 0.0
    %5333 = vmatpush1.xpose.msra.mxu0 0.0
    %5334 = vmatprep.subr.mxu0 0.0
    %5335 = vmatpush1.xpose.msra.mxu0 0.0
    %5336 = vmatprep.subr.mxu0 0.0
    %5337 = vmatpush1.xpose.msra.mxu0 0.0
    %5338 = vmatprep.subr.mxu0 0.0
    %5339 = vmatpush1.xpose.msra.mxu0 0.0
    %5340 = vmatprep.subr.mxu0 0.0
    %5341 = vmatpush1.xpose.msra.mxu0 0.0
    %5342 = vmatprep.subr.mxu0 0.0
    %5343 = vmatpush1.xpose.msra.mxu0 0.0
    %5344 = vmatprep.subr.mxu0 0.0
    %5345 = vmatpush1.xpose.msra.mxu0 0.0
    %5346 = vmatprep.subr.mxu0 0.0
    %5347 = vmatpush1.xpose.msra.mxu0 0.0
    %5348 = vmatprep.subr.mxu0 0.0
    %5349 = vmatpush1.xpose.msra.mxu0 0.0
    %5350 = vmatprep.subr.mxu0 0.0
    %5351 = vmatpush1.xpose.msra.mxu0 0.0
    %5352 = vmatprep.subr.mxu0 0.0
    %5353 = vmatpush1.xpose.msra.mxu0 0.0
    %5354 = vmatprep.subr.mxu0 0.0
    %5355 = vmatpush1.xpose.msra.mxu0 0.0
    %5356 = vmatprep.subr.mxu0 0.0
    %5357 = vmatpush1.xpose.msra.mxu0 0.0
    %5358 = vmatprep.subr.mxu0 0.0
    %5359 = vmatpush1.xpose.msra.mxu0 0.0
    %5360 = vmatprep.subr.mxu0 0.0
    %5361 = vmatpush1.xpose.msra.mxu0 %v5328
    %5362 = vmatprep.subr.mxu0 0.0
    %5363 = vmatpush2.xpose.msra.mxu0 0.0
    %5364 = vmatprep.subr.mxu0 0.0
    %5365 = vmatpush2.xpose.msra.mxu0 0.0
    %5366 = vmatprep.subr.mxu0 0.0
    %5367 = vmatpush2.xpose.msra.mxu0 0.0
    %5368 = vmatprep.subr.mxu0 0.0
    %5369 = vmatpush2.xpose.msra.mxu0 0.0
    %5370 = vmatprep.subr.mxu0 0.0
    %5371 = vmatpush2.xpose.msra.mxu0 0.0
    %5372 = vmatprep.subr.mxu0 0.0
    %5373 = vmatpush2.xpose.msra.mxu0 0.0
    %5374 = vmatprep.subr.mxu0 0.0
    %5375 = vmatpush2.xpose.msra.mxu0 0.0
    %5376 = vmatprep.subr.mxu0 0.0
    %5377 = vmatpush2.xpose.msra.mxu0 0.0
    %5378 = vmatprep.subr.mxu0 0.0
    %5379 = vmatpush2.xpose.msra.mxu0 0.0
    %5380 = vmatprep.subr.mxu0 0.0
    %5381 = vmatpush2.xpose.msra.mxu0 0.0
    %5382 = vmatprep.subr.mxu0 0.0
    %5383 = vmatpush2.xpose.msra.mxu0 0.0
    %5384 = vmatprep.subr.mxu0 0.0
    %5385 = vmatpush2.xpose.msra.mxu0 0.0
    %5386 = vmatprep.subr.mxu0 0.0
    %5387 = vmatpush2.xpose.msra.mxu0 0.0
    %5388 = vmatprep.subr.mxu0 0.0
    %5389 = vmatpush2.xpose.msra.mxu0 0.0
    %5390 = vmatprep.subr.mxu0 0.0
    %5391 = vmatpush2.xpose.msra.mxu0 0.0
    %5392 = vmatprep.subr.mxu0 0.0
    %5393 = vmatpush2.xpose.msra.mxu0 0.0
    %5394 = vmatprep.mubr.f32.mxu0 0.0
    %5395 = vmatmul.mubr.f32.gmra.mxu0 %v5326
    %v5396 = vpop.f32.mrf.mxu0
    %v5397 = vadd.f32 0.0, %v5396
    %v5398 = vpop.f32.mrf.mxu0
    %5399 = vdwg.mxu0
    %5400 = vrot.lane.b32.xlu0 %v3760, 112
    %v5401 = vpop.permute.xlu0 %5400
    %5402 = vrot.lane.b32.xlu0 %v3760, 80
    %v5403 = vpop.permute.xlu0 %5402
    %v5404 = vsel %vm315, %v5401, 0
    %v5406 = vsel %vm315, %v5403, 0
    %5408 = vmatprep.subr.mxu0 0.0
    %5409 = vmatpush1.xpose.msra.mxu0 0.0
    %5410 = vmatprep.subr.mxu0 0.0
    %5411 = vmatpush1.xpose.msra.mxu0 0.0
    %5412 = vmatprep.subr.mxu0 0.0
    %5413 = vmatpush1.xpose.msra.mxu0 0.0
    %5414 = vmatprep.subr.mxu0 0.0
    %5415 = vmatpush1.xpose.msra.mxu0 0.0
    %5416 = vmatprep.subr.mxu0 0.0
    %5417 = vmatpush1.xpose.msra.mxu0 0.0
    %5418 = vmatprep.subr.mxu0 0.0
    %5419 = vmatpush1.xpose.msra.mxu0 0.0
    %5420 = vmatprep.subr.mxu0 0.0
    %5421 = vmatpush1.xpose.msra.mxu0 0.0
    %5422 = vmatprep.subr.mxu0 0.0
    %5423 = vmatpush1.xpose.msra.mxu0 0.0
    %5424 = vmatprep.subr.mxu0 0.0
    %5425 = vmatpush1.xpose.msra.mxu0 0.0
    %5426 = vmatprep.subr.mxu0 0.0
    %5427 = vmatpush1.xpose.msra.mxu0 0.0
    %5428 = vmatprep.subr.mxu0 0.0
    %5429 = vmatpush1.xpose.msra.mxu0 0.0
    %5430 = vmatprep.subr.mxu0 0.0
    %5431 = vmatpush1.xpose.msra.mxu0 0.0
    %5432 = vmatprep.subr.mxu0 0.0
    %5433 = vmatpush1.xpose.msra.mxu0 0.0
    %5434 = vmatprep.subr.mxu0 0.0
    %5435 = vmatpush1.xpose.msra.mxu0 0.0
    %5436 = vmatprep.subr.mxu0 0.0
    %5437 = vmatpush1.xpose.msra.mxu0 0.0
    %5438 = vmatprep.subr.mxu0 0.0
    %5439 = vmatpush1.xpose.msra.mxu0 %v5406
    %5440 = vmatprep.subr.mxu0 0.0
    %5441 = vmatpush2.xpose.msra.mxu0 0.0
    %5442 = vmatprep.subr.mxu0 0.0
    %5443 = vmatpush2.xpose.msra.mxu0 0.0
    %5444 = vmatprep.subr.mxu0 0.0
    %5445 = vmatpush2.xpose.msra.mxu0 0.0
    %5446 = vmatprep.subr.mxu0 0.0
    %5447 = vmatpush2.xpose.msra.mxu0 0.0
    %5448 = vmatprep.subr.mxu0 0.0
    %5449 = vmatpush2.xpose.msra.mxu0 0.0
    %5450 = vmatprep.subr.mxu0 0.0
    %5451 = vmatpush2.xpose.msra.mxu0 0.0
    %5452 = vmatprep.subr.mxu0 0.0
    %5453 = vmatpush2.xpose.msra.mxu0 0.0
    %5454 = vmatprep.subr.mxu0 0.0
    %5455 = vmatpush2.xpose.msra.mxu0 0.0
    %5456 = vmatprep.subr.mxu0 0.0
    %5457 = vmatpush2.xpose.msra.mxu0 0.0
    %5458 = vmatprep.subr.mxu0 0.0
    %5459 = vmatpush2.xpose.msra.mxu0 0.0
    %5460 = vmatprep.subr.mxu0 0.0
    %5461 = vmatpush2.xpose.msra.mxu0 0.0
    %5462 = vmatprep.subr.mxu0 0.0
    %5463 = vmatpush2.xpose.msra.mxu0 0.0
    %5464 = vmatprep.subr.mxu0 0.0
    %5465 = vmatpush2.xpose.msra.mxu0 0.0
    %5466 = vmatprep.subr.mxu0 0.0
    %5467 = vmatpush2.xpose.msra.mxu0 0.0
    %5468 = vmatprep.subr.mxu0 0.0
    %5469 = vmatpush2.xpose.msra.mxu0 0.0
    %5470 = vmatprep.subr.mxu0 0.0
    %5471 = vmatpush2.xpose.msra.mxu0 0.0
    %5472 = vmatprep.mubr.f32.mxu0 0.0
    %5473 = vmatmul.mubr.f32.gmra.mxu0 %v5404
    %v5474 = vpop.f32.mrf.mxu0
    %v5475 = vadd.f32 0.0, %v5474
    %v5476 = vpop.f32.mrf.mxu0
    %5477 = vdwg.mxu0
    %5478 = vrot.lane.b32.xlu0 %v3763, 112
    %v5479 = vpop.permute.xlu0 %5478
    %5480 = vrot.lane.b32.xlu0 %v3763, 80
    %v5481 = vpop.permute.xlu0 %5480
    %v5482 = vsel %vm315, %v5479, 0
    %v5484 = vsel %vm315, %v5481, 0
    %5486 = vmatprep.subr.mxu0 0.0
    %5487 = vmatpush1.xpose.msra.mxu0 0.0
    %5488 = vmatprep.subr.mxu0 0.0
    %5489 = vmatpush1.xpose.msra.mxu0 0.0
    %5490 = vmatprep.subr.mxu0 0.0
    %5491 = vmatpush1.xpose.msra.mxu0 0.0
    %5492 = vmatprep.subr.mxu0 0.0
    %5493 = vmatpush1.xpose.msra.mxu0 0.0
    %5494 = vmatprep.subr.mxu0 0.0
    %5495 = vmatpush1.xpose.msra.mxu0 0.0
    %5496 = vmatprep.subr.mxu0 0.0
    %5497 = vmatpush1.xpose.msra.mxu0 0.0
    %5498 = vmatprep.subr.mxu0 0.0
    %5499 = vmatpush1.xpose.msra.mxu0 0.0
    %5500 = vmatprep.subr.mxu0 0.0
    %5501 = vmatpush1.xpose.msra.mxu0 0.0
    %5502 = vmatprep.subr.mxu0 0.0
    %5503 = vmatpush1.xpose.msra.mxu0 0.0
    %5504 = vmatprep.subr.mxu0 0.0
    %5505 = vmatpush1.xpose.msra.mxu0 0.0
    %5506 = vmatprep.subr.mxu0 0.0
    %5507 = vmatpush1.xpose.msra.mxu0 0.0
    %5508 = vmatprep.subr.mxu0 0.0
    %5509 = vmatpush1.xpose.msra.mxu0 0.0
    %5510 = vmatprep.subr.mxu0 0.0
    %5511 = vmatpush1.xpose.msra.mxu0 0.0
    %5512 = vmatprep.subr.mxu0 0.0
    %5513 = vmatpush1.xpose.msra.mxu0 0.0
    %5514 = vmatprep.subr.mxu0 0.0
    %5515 = vmatpush1.xpose.msra.mxu0 0.0
    %5516 = vmatprep.subr.mxu0 0.0
    %5517 = vmatpush1.xpose.msra.mxu0 %v5484
    %5518 = vmatprep.subr.mxu0 0.0
    %5519 = vmatpush2.xpose.msra.mxu0 0.0
    %5520 = vmatprep.subr.mxu0 0.0
    %5521 = vmatpush2.xpose.msra.mxu0 0.0
    %5522 = vmatprep.subr.mxu0 0.0
    %5523 = vmatpush2.xpose.msra.mxu0 0.0
    %5524 = vmatprep.subr.mxu0 0.0
    %5525 = vmatpush2.xpose.msra.mxu0 0.0
    %5526 = vmatprep.subr.mxu0 0.0
    %5527 = vmatpush2.xpose.msra.mxu0 0.0
    %5528 = vmatprep.subr.mxu0 0.0
    %5529 = vmatpush2.xpose.msra.mxu0 0.0
    %5530 = vmatprep.subr.mxu0 0.0
    %5531 = vmatpush2.xpose.msra.mxu0 0.0
    %5532 = vmatprep.subr.mxu0 0.0
    %5533 = vmatpush2.xpose.msra.mxu0 0.0
    %5534 = vmatprep.subr.mxu0 0.0
    %5535 = vmatpush2.xpose.msra.mxu0 0.0
    %5536 = vmatprep.subr.mxu0 0.0
    %5537 = vmatpush2.xpose.msra.mxu0 0.0
    %5538 = vmatprep.subr.mxu0 0.0
    %5539 = vmatpush2.xpose.msra.mxu0 0.0
    %5540 = vmatprep.subr.mxu0 0.0
    %5541 = vmatpush2.xpose.msra.mxu0 0.0
    %5542 = vmatprep.subr.mxu0 0.0
    %5543 = vmatpush2.xpose.msra.mxu0 0.0
    %5544 = vmatprep.subr.mxu0 0.0
    %5545 = vmatpush2.xpose.msra.mxu0 0.0
    %5546 = vmatprep.subr.mxu0 0.0
    %5547 = vmatpush2.xpose.msra.mxu0 0.0
    %5548 = vmatprep.subr.mxu0 0.0
    %5549 = vmatpush2.xpose.msra.mxu0 0.0
    %5550 = vmatprep.mubr.f32.mxu0 0.0
    %5551 = vmatmul.mubr.f32.gmra.mxu0 %v5482
    %v5552 = vpop.f32.mrf.mxu0
    %v5553 = vadd.f32 0.0, %v5552
    %v5554 = vpop.f32.mrf.mxu0
    %5555 = vdwg.mxu0
    %v5556 = vmul.f32 %v5319, 0.35355338
    %v5557 = vmul.f32 %v5397, 0.35355338
    %v5558 = vmul.f32 %v5475, 0.35355338
    %v5559 = vmul.f32 %v5553, 0.35355338
    %v5560 = vadd.f32 %v5556, %v176
    %v5561 = vadd.f32 %v5557, %v176
    %v5562 = vadd.f32 %v5558, %v176
    %v5563 = vadd.f32 %v5559, %v176
    %v5564 = vsel %vm315, %v5560, -inf
    %5565 = vmax.xlane.f32.xlu0 %v5564
    %v5566 = vpop.xlane.xlu0 %5565
    %v5567 = vsel %vm315, %v5561, -inf
    %5568 = vmax.xlane.f32.xlu0 %v5567
    %v5569 = vpop.xlane.xlu0 %5568
    %v5570 = vsel %vm315, %v5562, -inf
    %5571 = vmax.xlane.f32.xlu0 %v5570
    %v5572 = vpop.xlane.xlu0 %5571
    %v5573 = vsel %vm315, %v5563, -inf
    %5574 = vmax.xlane.f32.xlu0 %v5573
    %v5575 = vpop.xlane.xlu0 %5574
    %v5576 = vsub.f32 %v5560, %v5566
    %v5577 = vsub.f32 %v5561, %v5569
    %v5578 = vsub.f32 %v5562, %v5572
    %v5579 = vsub.f32 %v5563, %v5575
    %v5580 = vmul.f32 %v5576, 1.442695
    %v5581 = vpow.pop %v5580
    %v5582 = vmul.f32 %v5577, 1.442695
    %v5583 = vpow.pop %v5582
    %v5584 = vmul.f32 %v5578, 1.442695
    %v5585 = vpow.pop %v5584
    %v5586 = vmul.f32 %v5579, 1.442695
    %v5587 = vpow.pop %v5586
    %v5588 = vsel %vm315, %v5581, 0.0
    %5589 = vadd.xlane.f32.xlu0 %v5588
    %v5590 = vpop.xlane.xlu0 %5589
    %v5591 = vsel %vm315, %v5583, 0.0
    %5592 = vadd.xlane.f32.xlu0 %v5591
    %v5593 = vpop.xlane.xlu0 %5592
    %v5594 = vsel %vm315, %v5585, 0.0
    %5595 = vadd.xlane.f32.xlu0 %v5594
    %v5596 = vpop.xlane.xlu0 %5595
    %v5597 = vsel %vm315, %v5587, 0.0
    %5598 = vadd.xlane.f32.xlu0 %v5597
    %v5599 = vpop.xlane.xlu0 %5598
    %v5600 = vrcp.pop %v5590
    %v5601 = vrcp.pop %v5593
    %v5602 = vrcp.pop %v5596
    %v5603 = vrcp.pop %v5599
    %v5604 = vmul.f32 %v5581, %v5600
    %v5605 = vmul.f32 %v5583, %v5601
    %v5606 = vmul.f32 %v5585, %v5602
    %v5607 = vmul.f32 %v5587, %v5603
    %5608 = vrot.lane.b32.xlu0 %v3752, 48
    %v5609 = vpop.permute.xlu0 %5608
    %v5612 = vsel %vm315, %v5604, 0
    %5614 = vmatprep.subr.mxu0 0.0
    %5615 = vmatpush1.msra.mxu0 0.0
    %5616 = vmatprep.subr.mxu0 0.0
    %5617 = vmatpush1.msra.mxu0 0.0
    %5618 = vmatprep.subr.mxu0 0.0
    %5619 = vmatpush1.msra.mxu0 0.0
    %5620 = vmatprep.subr.mxu0 0.0
    %5621 = vmatpush1.msra.mxu0 0.0
    %5622 = vmatprep.subr.mxu0 0.0
    %5623 = vmatpush1.msra.mxu0 0.0
    %5624 = vmatprep.subr.mxu0 0.0
    %5625 = vmatpush1.msra.mxu0 0.0
    %5626 = vmatprep.subr.mxu0 0.0
    %5627 = vmatpush1.msra.mxu0 0.0
    %5628 = vmatprep.subr.mxu0 0.0
    %5629 = vmatpush1.msra.mxu0 0.0
    %5630 = vmatprep.subr.mxu0 0.0
    %5631 = vmatpush1.msra.mxu0 0.0
    %5632 = vmatprep.subr.mxu0 0.0
    %5633 = vmatpush1.msra.mxu0 0.0
    %5634 = vmatprep.subr.mxu0 0.0
    %5635 = vmatpush1.msra.mxu0 0.0
    %5636 = vmatprep.subr.mxu0 0.0
    %5637 = vmatpush1.msra.mxu0 0.0
    %5638 = vmatprep.subr.mxu0 0.0
    %5639 = vmatpush1.msra.mxu0 0.0
    %5640 = vmatprep.subr.mxu0 0.0
    %5641 = vmatpush1.msra.mxu0 0.0
    %5642 = vmatprep.subr.mxu0 0.0
    %5643 = vmatpush1.msra.mxu0 0.0
    %5644 = vmatprep.subr.mxu0 0.0
    %5645 = vmatpush1.msra.mxu0 %v5609
    %5646 = vmatprep.subr.mxu0 0.0
    %5647 = vmatpush2.msra.mxu0 0.0
    %5648 = vmatprep.subr.mxu0 0.0
    %5649 = vmatpush2.msra.mxu0 0.0
    %5650 = vmatprep.subr.mxu0 0.0
    %5651 = vmatpush2.msra.mxu0 0.0
    %5652 = vmatprep.subr.mxu0 0.0
    %5653 = vmatpush2.msra.mxu0 0.0
    %5654 = vmatprep.subr.mxu0 0.0
    %5655 = vmatpush2.msra.mxu0 0.0
    %5656 = vmatprep.subr.mxu0 0.0
    %5657 = vmatpush2.msra.mxu0 0.0
    %5658 = vmatprep.subr.mxu0 0.0
    %5659 = vmatpush2.msra.mxu0 0.0
    %5660 = vmatprep.subr.mxu0 0.0
    %5661 = vmatpush2.msra.mxu0 0.0
    %5662 = vmatprep.subr.mxu0 0.0
    %5663 = vmatpush2.msra.mxu0 0.0
    %5664 = vmatprep.subr.mxu0 0.0
    %5665 = vmatpush2.msra.mxu0 0.0
    %5666 = vmatprep.subr.mxu0 0.0
    %5667 = vmatpush2.msra.mxu0 0.0
    %5668 = vmatprep.subr.mxu0 0.0
    %5669 = vmatpush2.msra.mxu0 0.0
    %5670 = vmatprep.subr.mxu0 0.0
    %5671 = vmatpush2.msra.mxu0 0.0
    %5672 = vmatprep.subr.mxu0 0.0
    %5673 = vmatpush2.msra.mxu0 0.0
    %5674 = vmatprep.subr.mxu0 0.0
    %5675 = vmatpush2.msra.mxu0 0.0
    %5676 = vmatprep.subr.mxu0 0.0
    %5677 = vmatpush2.msra.mxu0 0.0
    %5678 = vmatprep.mubr.f32.mxu0 0.0
    %5679 = vmatmul.mubr.f32.gmra.mxu0 %v5612
    %v5680 = vpop.f32.mrf.mxu0
    %v5681 = vadd.f32 0.0, %v5680
    %v5682 = vpop.f32.mrf.mxu0
    %5683 = vdwg.mxu0
    %5684 = vrot.lane.b32.xlu0 %v3755, 48
    %v5685 = vpop.permute.xlu0 %5684
    %v5688 = vsel %vm315, %v5605, 0
    %5690 = vmatprep.subr.mxu0 0.0
    %5691 = vmatpush1.msra.mxu0 0.0
    %5692 = vmatprep.subr.mxu0 0.0
    %5693 = vmatpush1.msra.mxu0 0.0
    %5694 = vmatprep.subr.mxu0 0.0
    %5695 = vmatpush1.msra.mxu0 0.0
    %5696 = vmatprep.subr.mxu0 0.0
    %5697 = vmatpush1.msra.mxu0 0.0
    %5698 = vmatprep.subr.mxu0 0.0
    %5699 = vmatpush1.msra.mxu0 0.0
    %5700 = vmatprep.subr.mxu0 0.0
    %5701 = vmatpush1.msra.mxu0 0.0
    %5702 = vmatprep.subr.mxu0 0.0
    %5703 = vmatpush1.msra.mxu0 0.0
    %5704 = vmatprep.subr.mxu0 0.0
    %5705 = vmatpush1.msra.mxu0 0.0
    %5706 = vmatprep.subr.mxu0 0.0
    %5707 = vmatpush1.msra.mxu0 0.0
    %5708 = vmatprep.subr.mxu0 0.0
    %5709 = vmatpush1.msra.mxu0 0.0
    %5710 = vmatprep.subr.mxu0 0.0
    %5711 = vmatpush1.msra.mxu0 0.0
    %5712 = vmatprep.subr.mxu0 0.0
    %5713 = vmatpush1.msra.mxu0 0.0
    %5714 = vmatprep.subr.mxu0 0.0
    %5715 = vmatpush1.msra.mxu0 0.0
    %5716 = vmatprep.subr.mxu0 0.0
    %5717 = vmatpush1.msra.mxu0 0.0
    %5718 = vmatprep.subr.mxu0 0.0
    %5719 = vmatpush1.msra.mxu0 0.0
    %5720 = vmatprep.subr.mxu0 0.0
    %5721 = vmatpush1.msra.mxu0 %v5685
    %5722 = vmatprep.subr.mxu0 0.0
    %5723 = vmatpush2.msra.mxu0 0.0
    %5724 = vmatprep.subr.mxu0 0.0
    %5725 = vmatpush2.msra.mxu0 0.0
    %5726 = vmatprep.subr.mxu0 0.0
    %5727 = vmatpush2.msra.mxu0 0.0
    %5728 = vmatprep.subr.mxu0 0.0
    %5729 = vmatpush2.msra.mxu0 0.0
    %5730 = vmatprep.subr.mxu0 0.0
    %5731 = vmatpush2.msra.mxu0 0.0
    %5732 = vmatprep.subr.mxu0 0.0
    %5733 = vmatpush2.msra.mxu0 0.0
    %5734 = vmatprep.subr.mxu0 0.0
    %5735 = vmatpush2.msra.mxu0 0.0
    %5736 = vmatprep.subr.mxu0 0.0
    %5737 = vmatpush2.msra.mxu0 0.0
    %5738 = vmatprep.subr.mxu0 0.0
    %5739 = vmatpush2.msra.mxu0 0.0
    %5740 = vmatprep.subr.mxu0 0.0
    %5741 = vmatpush2.msra.mxu0 0.0
    %5742 = vmatprep.subr.mxu0 0.0
    %5743 = vmatpush2.msra.mxu0 0.0
    %5744 = vmatprep.subr.mxu0 0.0
    %5745 = vmatpush2.msra.mxu0 0.0
    %5746 = vmatprep.subr.mxu0 0.0
    %5747 = vmatpush2.msra.mxu0 0.0
    %5748 = vmatprep.subr.mxu0 0.0
    %5749 = vmatpush2.msra.mxu0 0.0
    %5750 = vmatprep.subr.mxu0 0.0
    %5751 = vmatpush2.msra.mxu0 0.0
    %5752 = vmatprep.subr.mxu0 0.0
    %5753 = vmatpush2.msra.mxu0 0.0
    %5754 = vmatprep.mubr.f32.mxu0 0.0
    %5755 = vmatmul.mubr.f32.gmra.mxu0 %v5688
    %v5756 = vpop.f32.mrf.mxu0
    %v5757 = vadd.f32 0.0, %v5756
    %v5758 = vpop.f32.mrf.mxu0
    %5759 = vdwg.mxu0
    %5760 = vrot.lane.b32.xlu0 %v3760, 48
    %v5761 = vpop.permute.xlu0 %5760
    %v5764 = vsel %vm315, %v5606, 0
    %5766 = vmatprep.subr.mxu0 0.0
    %5767 = vmatpush1.msra.mxu0 0.0
    %5768 = vmatprep.subr.mxu0 0.0
    %5769 = vmatpush1.msra.mxu0 0.0
    %5770 = vmatprep.subr.mxu0 0.0
    %5771 = vmatpush1.msra.mxu0 0.0
    %5772 = vmatprep.subr.mxu0 0.0
    %5773 = vmatpush1.msra.mxu0 0.0
    %5774 = vmatprep.subr.mxu0 0.0
    %5775 = vmatpush1.msra.mxu0 0.0
    %5776 = vmatprep.subr.mxu0 0.0
    %5777 = vmatpush1.msra.mxu0 0.0
    %5778 = vmatprep.subr.mxu0 0.0
    %5779 = vmatpush1.msra.mxu0 0.0
    %5780 = vmatprep.subr.mxu0 0.0
    %5781 = vmatpush1.msra.mxu0 0.0
    %5782 = vmatprep.subr.mxu0 0.0
    %5783 = vmatpush1.msra.mxu0 0.0
    %5784 = vmatprep.subr.mxu0 0.0
    %5785 = vmatpush1.msra.mxu0 0.0
    %5786 = vmatprep.subr.mxu0 0.0
    %5787 = vmatpush1.msra.mxu0 0.0
    %5788 = vmatprep.subr.mxu0 0.0
    %5789 = vmatpush1.msra.mxu0 0.0
    %5790 = vmatprep.subr.mxu0 0.0
    %5791 = vmatpush1.msra.mxu0 0.0
    %5792 = vmatprep.subr.mxu0 0.0
    %5793 = vmatpush1.msra.mxu0 0.0
    %5794 = vmatprep.subr.mxu0 0.0
    %5795 = vmatpush1.msra.mxu0 0.0
    %5796 = vmatprep.subr.mxu0 0.0
    %5797 = vmatpush1.msra.mxu0 %v5761
    %5798 = vmatprep.subr.mxu0 0.0
    %5799 = vmatpush2.msra.mxu0 0.0
    %5800 = vmatprep.subr.mxu0 0.0
    %5801 = vmatpush2.msra.mxu0 0.0
    %5802 = vmatprep.subr.mxu0 0.0
    %5803 = vmatpush2.msra.mxu0 0.0
    %5804 = vmatprep.subr.mxu0 0.0
    %5805 = vmatpush2.msra.mxu0 0.0
    %5806 = vmatprep.subr.mxu0 0.0
    %5807 = vmatpush2.msra.mxu0 0.0
    %5808 = vmatprep.subr.mxu0 0.0
    %5809 = vmatpush2.msra.mxu0 0.0
    %5810 = vmatprep.subr.mxu0 0.0
    %5811 = vmatpush2.msra.mxu0 0.0
    %5812 = vmatprep.subr.mxu0 0.0
    %5813 = vmatpush2.msra.mxu0 0.0
    %5814 = vmatprep.subr.mxu0 0.0
    %5815 = vmatpush2.msra.mxu0 0.0
    %5816 = vmatprep.subr.mxu0 0.0
    %5817 = vmatpush2.msra.mxu0 0.0
    %5818 = vmatprep.subr.mxu0 0.0
    %5819 = vmatpush2.msra.mxu0 0.0
    %5820 = vmatprep.subr.mxu0 0.0
    %5821 = vmatpush2.msra.mxu0 0.0
    %5822 = vmatprep.subr.mxu0 0.0
    %5823 = vmatpush2.msra.mxu0 0.0
    %5824 = vmatprep.subr.mxu0 0.0
    %5825 = vmatpush2.msra.mxu0 0.0
    %5826 = vmatprep.subr.mxu0 0.0
    %5827 = vmatpush2.msra.mxu0 0.0
    %5828 = vmatprep.subr.mxu0 0.0
    %5829 = vmatpush2.msra.mxu0 0.0
    %5830 = vmatprep.mubr.f32.mxu0 0.0
    %5831 = vmatmul.mubr.f32.gmra.mxu0 %v5764
    %v5832 = vpop.f32.mrf.mxu0
    %v5833 = vadd.f32 0.0, %v5832
    %v5834 = vpop.f32.mrf.mxu0
    %5835 = vdwg.mxu0
    %5836 = vrot.lane.b32.xlu0 %v3763, 48
    %v5837 = vpop.permute.xlu0 %5836
    %v5840 = vsel %vm315, %v5607, 0
    %5842 = vmatprep.subr.mxu0 0.0
    %5843 = vmatpush1.msra.mxu0 0.0
    %5844 = vmatprep.subr.mxu0 0.0
    %5845 = vmatpush1.msra.mxu0 0.0
    %5846 = vmatprep.subr.mxu0 0.0
    %5847 = vmatpush1.msra.mxu0 0.0
    %5848 = vmatprep.subr.mxu0 0.0
    %5849 = vmatpush1.msra.mxu0 0.0
    %5850 = vmatprep.subr.mxu0 0.0
    %5851 = vmatpush1.msra.mxu0 0.0
    %5852 = vmatprep.subr.mxu0 0.0
    %5853 = vmatpush1.msra.mxu0 0.0
    %5854 = vmatprep.subr.mxu0 0.0
    %5855 = vmatpush1.msra.mxu0 0.0
    %5856 = vmatprep.subr.mxu0 0.0
    %5857 = vmatpush1.msra.mxu0 0.0
    %5858 = vmatprep.subr.mxu0 0.0
    %5859 = vmatpush1.msra.mxu0 0.0
    %5860 = vmatprep.subr.mxu0 0.0
    %5861 = vmatpush1.msra.mxu0 0.0
    %5862 = vmatprep.subr.mxu0 0.0
    %5863 = vmatpush1.msra.mxu0 0.0
    %5864 = vmatprep.subr.mxu0 0.0
    %5865 = vmatpush1.msra.mxu0 0.0
    %5866 = vmatprep.subr.mxu0 0.0
    %5867 = vmatpush1.msra.mxu0 0.0
    %5868 = vmatprep.subr.mxu0 0.0
    %5869 = vmatpush1.msra.mxu0 0.0
    %5870 = vmatprep.subr.mxu0 0.0
    %5871 = vmatpush1.msra.mxu0 0.0
    %5872 = vmatprep.subr.mxu0 0.0
    %5873 = vmatpush1.msra.mxu0 %v5837
    %5874 = vmatprep.subr.mxu0 0.0
    %5875 = vmatpush2.msra.mxu0 0.0
    %5876 = vmatprep.subr.mxu0 0.0
    %5877 = vmatpush2.msra.mxu0 0.0
    %5878 = vmatprep.subr.mxu0 0.0
    %5879 = vmatpush2.msra.mxu0 0.0
    %5880 = vmatprep.subr.mxu0 0.0
    %5881 = vmatpush2.msra.mxu0 0.0
    %5882 = vmatprep.subr.mxu0 0.0
    %5883 = vmatpush2.msra.mxu0 0.0
    %5884 = vmatprep.subr.mxu0 0.0
    %5885 = vmatpush2.msra.mxu0 0.0
    %5886 = vmatprep.subr.mxu0 0.0
    %5887 = vmatpush2.msra.mxu0 0.0
    %5888 = vmatprep.subr.mxu0 0.0
    %5889 = vmatpush2.msra.mxu0 0.0
    %5890 = vmatprep.subr.mxu0 0.0
    %5891 = vmatpush2.msra.mxu0 0.0
    %5892 = vmatprep.subr.mxu0 0.0
    %5893 = vmatpush2.msra.mxu0 0.0
    %5894 = vmatprep.subr.mxu0 0.0
    %5895 = vmatpush2.msra.mxu0 0.0
    %5896 = vmatprep.subr.mxu0 0.0
    %5897 = vmatpush2.msra.mxu0 0.0
    %5898 = vmatprep.subr.mxu0 0.0
    %5899 = vmatpush2.msra.mxu0 0.0
    %5900 = vmatprep.subr.mxu0 0.0
    %5901 = vmatpush2.msra.mxu0 0.0
    %5902 = vmatprep.subr.mxu0 0.0
    %5903 = vmatpush2.msra.mxu0 0.0
    %5904 = vmatprep.subr.mxu0 0.0
    %5905 = vmatpush2.msra.mxu0 0.0
    %5906 = vmatprep.mubr.f32.mxu0 0.0
    %5907 = vmatmul.mubr.f32.gmra.mxu0 %v5840
    %v5908 = vpop.f32.mrf.mxu0
    %v5909 = vadd.f32 0.0, %v5908
    %v5910 = vpop.f32.mrf.mxu0
    %5911 = vdwg.mxu0
    %v5912 = vld [vmem:[%s2 + $0x78] sm:$0xf]
    %v5913 = vpack.c.bf16 %v5681, %v5681
    %v5914 = vpack.c.bf16 %v5757, %v5757
    %v5915 = vpack.c.bf16 %v5833, %v5833
    %v5916 = vpack.c.bf16 %v5909, %v5909
    %v5921 = vunpack.c.l.b16 %v5913
    %v5922 = vunpack.c.l.b16 %v5914
    %v5923 = vunpack.c.l.b16 %v5915
    %v5924 = vunpack.c.l.b16 %v5916
    %v5925 = vpack.c.b16 %v5922, %v5921
    %v5926 = vpack.c.b16 %v5924, %v5923
    %v5928 = vsel %vm315, %v5925, 0
    %v5931 = vsel %vm315, %v5926, 0
    %v5934 = vsel %vm1671, %v5912, 0
    %5936 = vmatprep.subr.bf16.mxu0 0
    %5937 = vmatpush1.bf16.msra.mxu0 0
    %5938 = vmatprep.subr.bf16.mxu0 0
    %5939 = vmatpush1.bf16.msra.mxu0 0
    %5940 = vmatprep.subr.bf16.mxu0 0
    %5941 = vmatpush1.bf16.msra.mxu0 0
    %5942 = vmatprep.subr.bf16.mxu0 0
    %5943 = vmatpush1.bf16.msra.mxu0 0
    %5944 = vmatprep.subr.bf16.mxu0 0
    %5945 = vmatpush1.bf16.msra.mxu0 0
    %5946 = vmatprep.subr.bf16.mxu0 0
    %5947 = vmatpush1.bf16.msra.mxu0 0
    %5948 = vmatprep.subr.bf16.mxu0 0
    %5949 = vmatpush1.bf16.msra.mxu0 0
    %5950 = vmatprep.subr.bf16.mxu0 0
    %5951 = vmatpush1.bf16.msra.mxu0 %v5934
    %5952 = vmatprep.subr.bf16.mxu0 0
    %5953 = vmatpush2.bf16.msra.mxu0 0
    %5954 = vmatprep.subr.bf16.mxu0 0
    %5955 = vmatpush2.bf16.msra.mxu0 0
    %5956 = vmatprep.subr.bf16.mxu0 0
    %5957 = vmatpush2.bf16.msra.mxu0 0
    %5958 = vmatprep.subr.bf16.mxu0 0
    %5959 = vmatpush2.bf16.msra.mxu0 0
    %5960 = vmatprep.subr.bf16.mxu0 0
    %5961 = vmatpush2.bf16.msra.mxu0 0
    %5962 = vmatprep.subr.bf16.mxu0 0
    %5963 = vmatpush2.bf16.msra.mxu0 0
    %5964 = vmatprep.subr.bf16.mxu0 0
    %5965 = vmatpush2.bf16.msra.mxu0 0
    %5966 = vmatprep.subr.bf16.mxu0 0
    %5967 = vmatpush2.bf16.msra.mxu0 0
    %5968 = vmatprep.mubr.bf16.mxu0 0
    %5969 = vmatmul.mubr.bf16.gmra.mxu0 %v5928
    %v5970 = vpop.f32.mrf.mxu0
    %v5971 = vadd.f32 0.0, %v5970
    %v5972 = vpop.f32.mrf.mxu0
    %v5973 = vpop.f32.mrf.mxu0
    %v5974 = vadd.f32 0.0, %v5973
    %v5975 = vpop.f32.mrf.mxu0
    %5976 = vmatprep.mubr.bf16.mxu0 0
    %5977 = vmatmul.mubr.bf16.gmra.mxu0 %v5931
    %v5978 = vpop.f32.mrf.mxu0
    %v5979 = vadd.f32 0.0, %v5978
    %v5980 = vpop.f32.mrf.mxu0
    %v5981 = vpop.f32.mrf.mxu0
    %v5982 = vadd.f32 0.0, %v5981
    %v5983 = vpop.f32.mrf.mxu0
    %5984 = vdwg.mxu0
    %v5985 = vadd.f32 %v5230, %v5971
    %v5986 = vadd.f32 %v5233, %v5974
    %v5987 = vadd.f32 %v5238, %v5979
    %v5988 = vadd.f32 %v5241, %v5982
    %5989 = vrot.lane.b32.xlu0 %v3752, 104
    %v5990 = vpop.permute.xlu0 %5989
    %5991 = vrot.lane.b32.xlu0 %v3752, 72
    %v5992 = vpop.permute.xlu0 %5991
    %v5993 = vsel %vm315, %v5990, 0
    %v5995 = vsel %vm315, %v5992, 0
    %5997 = vmatprep.subr.mxu0 0.0
    %5998 = vmatpush1.xpose.msra.mxu0 0.0
    %5999 = vmatprep.subr.mxu0 0.0
    %6000 = vmatpush1.xpose.msra.mxu0 0.0
    %6001 = vmatprep.subr.mxu0 0.0
    %6002 = vmatpush1.xpose.msra.mxu0 0.0
    %6003 = vmatprep.subr.mxu0 0.0
    %6004 = vmatpush1.xpose.msra.mxu0 0.0
    %6005 = vmatprep.subr.mxu0 0.0
    %6006 = vmatpush1.xpose.msra.mxu0 0.0
    %6007 = vmatprep.subr.mxu0 0.0
    %6008 = vmatpush1.xpose.msra.mxu0 0.0
    %6009 = vmatprep.subr.mxu0 0.0
    %6010 = vmatpush1.xpose.msra.mxu0 0.0
    %6011 = vmatprep.subr.mxu0 0.0
    %6012 = vmatpush1.xpose.msra.mxu0 0.0
    %6013 = vmatprep.subr.mxu0 0.0
    %6014 = vmatpush1.xpose.msra.mxu0 0.0
    %6015 = vmatprep.subr.mxu0 0.0
    %6016 = vmatpush1.xpose.msra.mxu0 0.0
    %6017 = vmatprep.subr.mxu0 0.0
    %6018 = vmatpush1.xpose.msra.mxu0 0.0
    %6019 = vmatprep.subr.mxu0 0.0
    %6020 = vmatpush1.xpose.msra.mxu0 0.0
    %6021 = vmatprep.subr.mxu0 0.0
    %6022 = vmatpush1.xpose.msra.mxu0 0.0
    %6023 = vmatprep.subr.mxu0 0.0
    %6024 = vmatpush1.xpose.msra.mxu0 0.0
    %6025 = vmatprep.subr.mxu0 0.0
    %6026 = vmatpush1.xpose.msra.mxu0 0.0
    %6027 = vmatprep.subr.mxu0 0.0
    %6028 = vmatpush1.xpose.msra.mxu0 %v5995
    %6029 = vmatprep.subr.mxu0 0.0
    %6030 = vmatpush2.xpose.msra.mxu0 0.0
    %6031 = vmatprep.subr.mxu0 0.0
    %6032 = vmatpush2.xpose.msra.mxu0 0.0
    %6033 = vmatprep.subr.mxu0 0.0
    %6034 = vmatpush2.xpose.msra.mxu0 0.0
    %6035 = vmatprep.subr.mxu0 0.0
    %6036 = vmatpush2.xpose.msra.mxu0 0.0
    %6037 = vmatprep.subr.mxu0 0.0
    %6038 = vmatpush2.xpose.msra.mxu0 0.0
    %6039 = vmatprep.subr.mxu0 0.0
    %6040 = vmatpush2.xpose.msra.mxu0 0.0
    %6041 = vmatprep.subr.mxu0 0.0
    %6042 = vmatpush2.xpose.msra.mxu0 0.0
    %6043 = vmatprep.subr.mxu0 0.0
    %6044 = vmatpush2.xpose.msra.mxu0 0.0
    %6045 = vmatprep.subr.mxu0 0.0
    %6046 = vmatpush2.xpose.msra.mxu0 0.0
    %6047 = vmatprep.subr.mxu0 0.0
    %6048 = vmatpush2.xpose.msra.mxu0 0.0
    %6049 = vmatprep.subr.mxu0 0.0
    %6050 = vmatpush2.xpose.msra.mxu0 0.0
    %6051 = vmatprep.subr.mxu0 0.0
    %6052 = vmatpush2.xpose.msra.mxu0 0.0
    %6053 = vmatprep.subr.mxu0 0.0
    %6054 = vmatpush2.xpose.msra.mxu0 0.0
    %6055 = vmatprep.subr.mxu0 0.0
    %6056 = vmatpush2.xpose.msra.mxu0 0.0
    %6057 = vmatprep.subr.mxu0 0.0
    %6058 = vmatpush2.xpose.msra.mxu0 0.0
    %6059 = vmatprep.subr.mxu0 0.0
    %6060 = vmatpush2.xpose.msra.mxu0 0.0
    %6061 = vmatprep.mubr.f32.mxu0 0.0
    %6062 = vmatmul.mubr.f32.gmra.mxu0 %v5993
    %v6063 = vpop.f32.mrf.mxu0
    %v6064 = vadd.f32 0.0, %v6063
    %v6065 = vpop.f32.mrf.mxu0
    %6066 = vdwg.mxu0
    %6067 = vrot.lane.b32.xlu0 %v3755, 104
    %v6068 = vpop.permute.xlu0 %6067
    %6069 = vrot.lane.b32.xlu0 %v3755, 72
    %v6070 = vpop.permute.xlu0 %6069
    %v6071 = vsel %vm315, %v6068, 0
    %v6073 = vsel %vm315, %v6070, 0
    %6075 = vmatprep.subr.mxu0 0.0
    %6076 = vmatpush1.xpose.msra.mxu0 0.0
    %6077 = vmatprep.subr.mxu0 0.0
    %6078 = vmatpush1.xpose.msra.mxu0 0.0
    %6079 = vmatprep.subr.mxu0 0.0
    %6080 = vmatpush1.xpose.msra.mxu0 0.0
    %6081 = vmatprep.subr.mxu0 0.0
    %6082 = vmatpush1.xpose.msra.mxu0 0.0
    %6083 = vmatprep.subr.mxu0 0.0
    %6084 = vmatpush1.xpose.msra.mxu0 0.0
    %6085 = vmatprep.subr.mxu0 0.0
    %6086 = vmatpush1.xpose.msra.mxu0 0.0
    %6087 = vmatprep.subr.mxu0 0.0
    %6088 = vmatpush1.xpose.msra.mxu0 0.0
    %6089 = vmatprep.subr.mxu0 0.0
    %6090 = vmatpush1.xpose.msra.mxu0 0.0
    %6091 = vmatprep.subr.mxu0 0.0
    %6092 = vmatpush1.xpose.msra.mxu0 0.0
    %6093 = vmatprep.subr.mxu0 0.0
    %6094 = vmatpush1.xpose.msra.mxu0 0.0
    %6095 = vmatprep.subr.mxu0 0.0
    %6096 = vmatpush1.xpose.msra.mxu0 0.0
    %6097 = vmatprep.subr.mxu0 0.0
    %6098 = vmatpush1.xpose.msra.mxu0 0.0
    %6099 = vmatprep.subr.mxu0 0.0
    %6100 = vmatpush1.xpose.msra.mxu0 0.0
    %6101 = vmatprep.subr.mxu0 0.0
    %6102 = vmatpush1.xpose.msra.mxu0 0.0
    %6103 = vmatprep.subr.mxu0 0.0
    %6104 = vmatpush1.xpose.msra.mxu0 0.0
    %6105 = vmatprep.subr.mxu0 0.0
    %6106 = vmatpush1.xpose.msra.mxu0 %v6073
    %6107 = vmatprep.subr.mxu0 0.0
    %6108 = vmatpush2.xpose.msra.mxu0 0.0
    %6109 = vmatprep.subr.mxu0 0.0
    %6110 = vmatpush2.xpose.msra.mxu0 0.0
    %6111 = vmatprep.subr.mxu0 0.0
    %6112 = vmatpush2.xpose.msra.mxu0 0.0
    %6113 = vmatprep.subr.mxu0 0.0
    %6114 = vmatpush2.xpose.msra.mxu0 0.0
    %6115 = vmatprep.subr.mxu0 0.0
    %6116 = vmatpush2.xpose.msra.mxu0 0.0
    %6117 = vmatprep.subr.mxu0 0.0
    %6118 = vmatpush2.xpose.msra.mxu0 0.0
    %6119 = vmatprep.subr.mxu0 0.0
    %6120 = vmatpush2.xpose.msra.mxu0 0.0
    %6121 = vmatprep.subr.mxu0 0.0
    %6122 = vmatpush2.xpose.msra.mxu0 0.0
    %6123 = vmatprep.subr.mxu0 0.0
    %6124 = vmatpush2.xpose.msra.mxu0 0.0
    %6125 = vmatprep.subr.mxu0 0.0
    %6126 = vmatpush2.xpose.msra.mxu0 0.0
    %6127 = vmatprep.subr.mxu0 0.0
    %6128 = vmatpush2.xpose.msra.mxu0 0.0
    %6129 = vmatprep.subr.mxu0 0.0
    %6130 = vmatpush2.xpose.msra.mxu0 0.0
    %6131 = vmatprep.subr.mxu0 0.0
    %6132 = vmatpush2.xpose.msra.mxu0 0.0
    %6133 = vmatprep.subr.mxu0 0.0
    %6134 = vmatpush2.xpose.msra.mxu0 0.0
    %6135 = vmatprep.subr.mxu0 0.0
    %6136 = vmatpush2.xpose.msra.mxu0 0.0
    %6137 = vmatprep.subr.mxu0 0.0
    %6138 = vmatpush2.xpose.msra.mxu0 0.0
    %6139 = vmatprep.mubr.f32.mxu0 0.0
    %6140 = vmatmul.mubr.f32.gmra.mxu0 %v6071
    %v6141 = vpop.f32.mrf.mxu0
    %v6142 = vadd.f32 0.0, %v6141
    %v6143 = vpop.f32.mrf.mxu0
    %6144 = vdwg.mxu0
    %6145 = vrot.lane.b32.xlu0 %v3760, 104
    %v6146 = vpop.permute.xlu0 %6145
    %6147 = vrot.lane.b32.xlu0 %v3760, 72
    %v6148 = vpop.permute.xlu0 %6147
    %v6149 = vsel %vm315, %v6146, 0
    %v6151 = vsel %vm315, %v6148, 0
    %6153 = vmatprep.subr.mxu0 0.0
    %6154 = vmatpush1.xpose.msra.mxu0 0.0
    %6155 = vmatprep.subr.mxu0 0.0
    %6156 = vmatpush1.xpose.msra.mxu0 0.0
    %6157 = vmatprep.subr.mxu0 0.0
    %6158 = vmatpush1.xpose.msra.mxu0 0.0
    %6159 = vmatprep.subr.mxu0 0.0
    %6160 = vmatpush1.xpose.msra.mxu0 0.0
    %6161 = vmatprep.subr.mxu0 0.0
    %6162 = vmatpush1.xpose.msra.mxu0 0.0
    %6163 = vmatprep.subr.mxu0 0.0
    %6164 = vmatpush1.xpose.msra.mxu0 0.0
    %6165 = vmatprep.subr.mxu0 0.0
    %6166 = vmatpush1.xpose.msra.mxu0 0.0
    %6167 = vmatprep.subr.mxu0 0.0
    %6168 = vmatpush1.xpose.msra.mxu0 0.0
    %6169 = vmatprep.subr.mxu0 0.0
    %6170 = vmatpush1.xpose.msra.mxu0 0.0
    %6171 = vmatprep.subr.mxu0 0.0
    %6172 = vmatpush1.xpose.msra.mxu0 0.0
    %6173 = vmatprep.subr.mxu0 0.0
    %6174 = vmatpush1.xpose.msra.mxu0 0.0
    %6175 = vmatprep.subr.mxu0 0.0
    %6176 = vmatpush1.xpose.msra.mxu0 0.0
    %6177 = vmatprep.subr.mxu0 0.0
    %6178 = vmatpush1.xpose.msra.mxu0 0.0
    %6179 = vmatprep.subr.mxu0 0.0
    %6180 = vmatpush1.xpose.msra.mxu0 0.0
    %6181 = vmatprep.subr.mxu0 0.0
    %6182 = vmatpush1.xpose.msra.mxu0 0.0
    %6183 = vmatprep.subr.mxu0 0.0
    %6184 = vmatpush1.xpose.msra.mxu0 %v6151
    %6185 = vmatprep.subr.mxu0 0.0
    %6186 = vmatpush2.xpose.msra.mxu0 0.0
    %6187 = vmatprep.subr.mxu0 0.0
    %6188 = vmatpush2.xpose.msra.mxu0 0.0
    %6189 = vmatprep.subr.mxu0 0.0
    %6190 = vmatpush2.xpose.msra.mxu0 0.0
    %6191 = vmatprep.subr.mxu0 0.0
    %6192 = vmatpush2.xpose.msra.mxu0 0.0
    %6193 = vmatprep.subr.mxu0 0.0
    %6194 = vmatpush2.xpose.msra.mxu0 0.0
    %6195 = vmatprep.subr.mxu0 0.0
    %6196 = vmatpush2.xpose.msra.mxu0 0.0
    %6197 = vmatprep.subr.mxu0 0.0
    %6198 = vmatpush2.xpose.msra.mxu0 0.0
    %6199 = vmatprep.subr.mxu0 0.0
    %6200 = vmatpush2.xpose.msra.mxu0 0.0
    %6201 = vmatprep.subr.mxu0 0.0
    %6202 = vmatpush2.xpose.msra.mxu0 0.0
    %6203 = vmatprep.subr.mxu0 0.0
    %6204 = vmatpush2.xpose.msra.mxu0 0.0
    %6205 = vmatprep.subr.mxu0 0.0
    %6206 = vmatpush2.xpose.msra.mxu0 0.0
    %6207 = vmatprep.subr.mxu0 0.0
    %6208 = vmatpush2.xpose.msra.mxu0 0.0
    %6209 = vmatprep.subr.mxu0 0.0
    %6210 = vmatpush2.xpose.msra.mxu0 0.0
    %6211 = vmatprep.subr.mxu0 0.0
    %6212 = vmatpush2.xpose.msra.mxu0 0.0
    %6213 = vmatprep.subr.mxu0 0.0
    %6214 = vmatpush2.xpose.msra.mxu0 0.0
    %6215 = vmatprep.subr.mxu0 0.0
    %6216 = vmatpush2.xpose.msra.mxu0 0.0
    %6217 = vmatprep.mubr.f32.mxu0 0.0
    %6218 = vmatmul.mubr.f32.gmra.mxu0 %v6149
    %v6219 = vpop.f32.mrf.mxu0
    %v6220 = vadd.f32 0.0, %v6219
    %v6221 = vpop.f32.mrf.mxu0
    %6222 = vdwg.mxu0
    %6223 = vrot.lane.b32.xlu0 %v3763, 104
    %v6224 = vpop.permute.xlu0 %6223
    %6225 = vrot.lane.b32.xlu0 %v3763, 72
    %v6226 = vpop.permute.xlu0 %6225
    %v6227 = vsel %vm315, %v6224, 0
    %v6229 = vsel %vm315, %v6226, 0
    %6231 = vmatprep.subr.mxu0 0.0
    %6232 = vmatpush1.xpose.msra.mxu0 0.0
    %6233 = vmatprep.subr.mxu0 0.0
    %6234 = vmatpush1.xpose.msra.mxu0 0.0
    %6235 = vmatprep.subr.mxu0 0.0
    %6236 = vmatpush1.xpose.msra.mxu0 0.0
    %6237 = vmatprep.subr.mxu0 0.0
    %6238 = vmatpush1.xpose.msra.mxu0 0.0
    %6239 = vmatprep.subr.mxu0 0.0
    %6240 = vmatpush1.xpose.msra.mxu0 0.0
    %6241 = vmatprep.subr.mxu0 0.0
    %6242 = vmatpush1.xpose.msra.mxu0 0.0
    %6243 = vmatprep.subr.mxu0 0.0
    %6244 = vmatpush1.xpose.msra.mxu0 0.0
    %6245 = vmatprep.subr.mxu0 0.0
    %6246 = vmatpush1.xpose.msra.mxu0 0.0
    %6247 = vmatprep.subr.mxu0 0.0
    %6248 = vmatpush1.xpose.msra.mxu0 0.0
    %6249 = vmatprep.subr.mxu0 0.0
    %6250 = vmatpush1.xpose.msra.mxu0 0.0
    %6251 = vmatprep.subr.mxu0 0.0
    %6252 = vmatpush1.xpose.msra.mxu0 0.0
    %6253 = vmatprep.subr.mxu0 0.0
    %6254 = vmatpush1.xpose.msra.mxu0 0.0
    %6255 = vmatprep.subr.mxu0 0.0
    %6256 = vmatpush1.xpose.msra.mxu0 0.0
    %6257 = vmatprep.subr.mxu0 0.0
    %6258 = vmatpush1.xpose.msra.mxu0 0.0
    %6259 = vmatprep.subr.mxu0 0.0
    %6260 = vmatpush1.xpose.msra.mxu0 0.0
    %6261 = vmatprep.subr.mxu0 0.0
    %6262 = vmatpush1.xpose.msra.mxu0 %v6229
    %6263 = vmatprep.subr.mxu0 0.0
    %6264 = vmatpush2.xpose.msra.mxu0 0.0
    %6265 = vmatprep.subr.mxu0 0.0
    %6266 = vmatpush2.xpose.msra.mxu0 0.0
    %6267 = vmatprep.subr.mxu0 0.0
    %6268 = vmatpush2.xpose.msra.mxu0 0.0
    %6269 = vmatprep.subr.mxu0 0.0
    %6270 = vmatpush2.xpose.msra.mxu0 0.0
    %6271 = vmatprep.subr.mxu0 0.0
    %6272 = vmatpush2.xpose.msra.mxu0 0.0
    %6273 = vmatprep.subr.mxu0 0.0
    %6274 = vmatpush2.xpose.msra.mxu0 0.0
    %6275 = vmatprep.subr.mxu0 0.0
    %6276 = vmatpush2.xpose.msra.mxu0 0.0
    %6277 = vmatprep.subr.mxu0 0.0
    %6278 = vmatpush2.xpose.msra.mxu0 0.0
    %6279 = vmatprep.subr.mxu0 0.0
    %6280 = vmatpush2.xpose.msra.mxu0 0.0
    %6281 = vmatprep.subr.mxu0 0.0
    %6282 = vmatpush2.xpose.msra.mxu0 0.0
    %6283 = vmatprep.subr.mxu0 0.0
    %6284 = vmatpush2.xpose.msra.mxu0 0.0
    %6285 = vmatprep.subr.mxu0 0.0
    %6286 = vmatpush2.xpose.msra.mxu0 0.0
    %6287 = vmatprep.subr.mxu0 0.0
    %6288 = vmatpush2.xpose.msra.mxu0 0.0
    %6289 = vmatprep.subr.mxu0 0.0
    %6290 = vmatpush2.xpose.msra.mxu0 0.0
    %6291 = vmatprep.subr.mxu0 0.0
    %6292 = vmatpush2.xpose.msra.mxu0 0.0
    %6293 = vmatprep.subr.mxu0 0.0
    %6294 = vmatpush2.xpose.msra.mxu0 0.0
    %6295 = vmatprep.mubr.f32.mxu0 0.0
    %6296 = vmatmul.mubr.f32.gmra.mxu0 %v6227
    %v6297 = vpop.f32.mrf.mxu0
    %v6298 = vadd.f32 0.0, %v6297
    %v6299 = vpop.f32.mrf.mxu0
    %6300 = vdwg.mxu0
    %v6301 = vmul.f32 %v6064, 0.35355338
    %v6302 = vmul.f32 %v6142, 0.35355338
    %v6303 = vmul.f32 %v6220, 0.35355338
    %v6304 = vmul.f32 %v6298, 0.35355338
    %v6305 = vadd.f32 %v6301, %v176
    %v6306 = vadd.f32 %v6302, %v176
    %v6307 = vadd.f32 %v6303, %v176
    %v6308 = vadd.f32 %v6304, %v176
    %v6309 = vsel %vm315, %v6305, -inf
    %6310 = vmax.xlane.f32.xlu0 %v6309
    %v6311 = vpop.xlane.xlu0 %6310
    %v6312 = vsel %vm315, %v6306, -inf
    %6313 = vmax.xlane.f32.xlu0 %v6312
    %v6314 = vpop.xlane.xlu0 %6313
    %v6315 = vsel %vm315, %v6307, -inf
    %6316 = vmax.xlane.f32.xlu0 %v6315
    %v6317 = vpop.xlane.xlu0 %6316
    %v6318 = vsel %vm315, %v6308, -inf
    %6319 = vmax.xlane.f32.xlu0 %v6318
    %v6320 = vpop.xlane.xlu0 %6319
    %v6321 = vsub.f32 %v6305, %v6311
    %v6322 = vsub.f32 %v6306, %v6314
    %v6323 = vsub.f32 %v6307, %v6317
    %v6324 = vsub.f32 %v6308, %v6320
    %v6325 = vmul.f32 %v6321, 1.442695
    %v6326 = vpow.pop %v6325
    %v6327 = vmul.f32 %v6322, 1.442695
    %v6328 = vpow.pop %v6327
    %v6329 = vmul.f32 %v6323, 1.442695
    %v6330 = vpow.pop %v6329
    %v6331 = vmul.f32 %v6324, 1.442695
    %v6332 = vpow.pop %v6331
    %v6333 = vsel %vm315, %v6326, 0.0
    %6334 = vadd.xlane.f32.xlu0 %v6333
    %v6335 = vpop.xlane.xlu0 %6334
    %v6336 = vsel %vm315, %v6328, 0.0
    %6337 = vadd.xlane.f32.xlu0 %v6336
    %v6338 = vpop.xlane.xlu0 %6337
    %v6339 = vsel %vm315, %v6330, 0.0
    %6340 = vadd.xlane.f32.xlu0 %v6339
    %v6341 = vpop.xlane.xlu0 %6340
    %v6342 = vsel %vm315, %v6332, 0.0
    %6343 = vadd.xlane.f32.xlu0 %v6342
    %v6344 = vpop.xlane.xlu0 %6343
    %v6345 = vrcp.pop %v6335
    %v6346 = vrcp.pop %v6338
    %v6347 = vrcp.pop %v6341
    %v6348 = vrcp.pop %v6344
    %v6349 = vmul.f32 %v6326, %v6345
    %v6350 = vmul.f32 %v6328, %v6346
    %v6351 = vmul.f32 %v6330, %v6347
    %v6352 = vmul.f32 %v6332, %v6348
    %6353 = vrot.lane.b32.xlu0 %v3752, 40
    %v6354 = vpop.permute.xlu0 %6353
    %v6357 = vsel %vm315, %v6349, 0
    %6359 = vmatprep.subr.mxu0 0.0
    %6360 = vmatpush1.msra.mxu0 0.0
    %6361 = vmatprep.subr.mxu0 0.0
    %6362 = vmatpush1.msra.mxu0 0.0
    %6363 = vmatprep.subr.mxu0 0.0
    %6364 = vmatpush1.msra.mxu0 0.0
    %6365 = vmatprep.subr.mxu0 0.0
    %6366 = vmatpush1.msra.mxu0 0.0
    %6367 = vmatprep.subr.mxu0 0.0
    %6368 = vmatpush1.msra.mxu0 0.0
    %6369 = vmatprep.subr.mxu0 0.0
    %6370 = vmatpush1.msra.mxu0 0.0
    %6371 = vmatprep.subr.mxu0 0.0
    %6372 = vmatpush1.msra.mxu0 0.0
    %6373 = vmatprep.subr.mxu0 0.0
    %6374 = vmatpush1.msra.mxu0 0.0
    %6375 = vmatprep.subr.mxu0 0.0
    %6376 = vmatpush1.msra.mxu0 0.0
    %6377 = vmatprep.subr.mxu0 0.0
    %6378 = vmatpush1.msra.mxu0 0.0
    %6379 = vmatprep.subr.mxu0 0.0
    %6380 = vmatpush1.msra.mxu0 0.0
    %6381 = vmatprep.subr.mxu0 0.0
    %6382 = vmatpush1.msra.mxu0 0.0
    %6383 = vmatprep.subr.mxu0 0.0
    %6384 = vmatpush1.msra.mxu0 0.0
    %6385 = vmatprep.subr.mxu0 0.0
    %6386 = vmatpush1.msra.mxu0 0.0
    %6387 = vmatprep.subr.mxu0 0.0
    %6388 = vmatpush1.msra.mxu0 0.0
    %6389 = vmatprep.subr.mxu0 0.0
    %6390 = vmatpush1.msra.mxu0 %v6354
    %6391 = vmatprep.subr.mxu0 0.0
    %6392 = vmatpush2.msra.mxu0 0.0
    %6393 = vmatprep.subr.mxu0 0.0
    %6394 = vmatpush2.msra.mxu0 0.0
    %6395 = vmatprep.subr.mxu0 0.0
    %6396 = vmatpush2.msra.mxu0 0.0
    %6397 = vmatprep.subr.mxu0 0.0
    %6398 = vmatpush2.msra.mxu0 0.0
    %6399 = vmatprep.subr.mxu0 0.0
    %6400 = vmatpush2.msra.mxu0 0.0
    %6401 = vmatprep.subr.mxu0 0.0
    %6402 = vmatpush2.msra.mxu0 0.0
    %6403 = vmatprep.subr.mxu0 0.0
    %6404 = vmatpush2.msra.mxu0 0.0
    %6405 = vmatprep.subr.mxu0 0.0
    %6406 = vmatpush2.msra.mxu0 0.0
    %6407 = vmatprep.subr.mxu0 0.0
    %6408 = vmatpush2.msra.mxu0 0.0
    %6409 = vmatprep.subr.mxu0 0.0
    %6410 = vmatpush2.msra.mxu0 0.0
    %6411 = vmatprep.subr.mxu0 0.0
    %6412 = vmatpush2.msra.mxu0 0.0
    %6413 = vmatprep.subr.mxu0 0.0
    %6414 = vmatpush2.msra.mxu0 0.0
    %6415 = vmatprep.subr.mxu0 0.0
    %6416 = vmatpush2.msra.mxu0 0.0
    %6417 = vmatprep.subr.mxu0 0.0
    %6418 = vmatpush2.msra.mxu0 0.0
    %6419 = vmatprep.subr.mxu0 0.0
    %6420 = vmatpush2.msra.mxu0 0.0
    %6421 = vmatprep.subr.mxu0 0.0
    %6422 = vmatpush2.msra.mxu0 0.0
    %6423 = vmatprep.mubr.f32.mxu0 0.0
    %6424 = vmatmul.mubr.f32.gmra.mxu0 %v6357
    %v6425 = vpop.f32.mrf.mxu0
    %v6426 = vadd.f32 0.0, %v6425
    %v6427 = vpop.f32.mrf.mxu0
    %6428 = vdwg.mxu0
    %6429 = vrot.lane.b32.xlu0 %v3755, 40
    %v6430 = vpop.permute.xlu0 %6429
    %v6433 = vsel %vm315, %v6350, 0
    %6435 = vmatprep.subr.mxu0 0.0
    %6436 = vmatpush1.msra.mxu0 0.0
    %6437 = vmatprep.subr.mxu0 0.0
    %6438 = vmatpush1.msra.mxu0 0.0
    %6439 = vmatprep.subr.mxu0 0.0
    %6440 = vmatpush1.msra.mxu0 0.0
    %6441 = vmatprep.subr.mxu0 0.0
    %6442 = vmatpush1.msra.mxu0 0.0
    %6443 = vmatprep.subr.mxu0 0.0
    %6444 = vmatpush1.msra.mxu0 0.0
    %6445 = vmatprep.subr.mxu0 0.0
    %6446 = vmatpush1.msra.mxu0 0.0
    %6447 = vmatprep.subr.mxu0 0.0
    %6448 = vmatpush1.msra.mxu0 0.0
    %6449 = vmatprep.subr.mxu0 0.0
    %6450 = vmatpush1.msra.mxu0 0.0
    %6451 = vmatprep.subr.mxu0 0.0
    %6452 = vmatpush1.msra.mxu0 0.0
    %6453 = vmatprep.subr.mxu0 0.0
    %6454 = vmatpush1.msra.mxu0 0.0
    %6455 = vmatprep.subr.mxu0 0.0
    %6456 = vmatpush1.msra.mxu0 0.0
    %6457 = vmatprep.subr.mxu0 0.0
    %6458 = vmatpush1.msra.mxu0 0.0
    %6459 = vmatprep.subr.mxu0 0.0
    %6460 = vmatpush1.msra.mxu0 0.0
    %6461 = vmatprep.subr.mxu0 0.0
    %6462 = vmatpush1.msra.mxu0 0.0
    %6463 = vmatprep.subr.mxu0 0.0
    %6464 = vmatpush1.msra.mxu0 0.0
    %6465 = vmatprep.subr.mxu0 0.0
    %6466 = vmatpush1.msra.mxu0 %v6430
    %6467 = vmatprep.subr.mxu0 0.0
    %6468 = vmatpush2.msra.mxu0 0.0
    %6469 = vmatprep.subr.mxu0 0.0
    %6470 = vmatpush2.msra.mxu0 0.0
    %6471 = vmatprep.subr.mxu0 0.0
    %6472 = vmatpush2.msra.mxu0 0.0
    %6473 = vmatprep.subr.mxu0 0.0
    %6474 = vmatpush2.msra.mxu0 0.0
    %6475 = vmatprep.subr.mxu0 0.0
    %6476 = vmatpush2.msra.mxu0 0.0
    %6477 = vmatprep.subr.mxu0 0.0
    %6478 = vmatpush2.msra.mxu0 0.0
    %6479 = vmatprep.subr.mxu0 0.0
    %6480 = vmatpush2.msra.mxu0 0.0
    %6481 = vmatprep.subr.mxu0 0.0
    %6482 = vmatpush2.msra.mxu0 0.0
    %6483 = vmatprep.subr.mxu0 0.0
    %6484 = vmatpush2.msra.mxu0 0.0
    %6485 = vmatprep.subr.mxu0 0.0
    %6486 = vmatpush2.msra.mxu0 0.0
    %6487 = vmatprep.subr.mxu0 0.0
    %6488 = vmatpush2.msra.mxu0 0.0
    %6489 = vmatprep.subr.mxu0 0.0
    %6490 = vmatpush2.msra.mxu0 0.0
    %6491 = vmatprep.subr.mxu0 0.0
    %6492 = vmatpush2.msra.mxu0 0.0
    %6493 = vmatprep.subr.mxu0 0.0
    %6494 = vmatpush2.msra.mxu0 0.0
    %6495 = vmatprep.subr.mxu0 0.0
    %6496 = vmatpush2.msra.mxu0 0.0
    %6497 = vmatprep.subr.mxu0 0.0
    %6498 = vmatpush2.msra.mxu0 0.0
    %6499 = vmatprep.mubr.f32.mxu0 0.0
    %6500 = vmatmul.mubr.f32.gmra.mxu0 %v6433
    %v6501 = vpop.f32.mrf.mxu0
    %v6502 = vadd.f32 0.0, %v6501
    %v6503 = vpop.f32.mrf.mxu0
    %6504 = vdwg.mxu0
    %6505 = vrot.lane.b32.xlu0 %v3760, 40
    %v6506 = vpop.permute.xlu0 %6505
    %v6509 = vsel %vm315, %v6351, 0
    %6511 = vmatprep.subr.mxu0 0.0
    %6512 = vmatpush1.msra.mxu0 0.0
    %6513 = vmatprep.subr.mxu0 0.0
    %6514 = vmatpush1.msra.mxu0 0.0
    %6515 = vmatprep.subr.mxu0 0.0
    %6516 = vmatpush1.msra.mxu0 0.0
    %6517 = vmatprep.subr.mxu0 0.0
    %6518 = vmatpush1.msra.mxu0 0.0
    %6519 = vmatprep.subr.mxu0 0.0
    %6520 = vmatpush1.msra.mxu0 0.0
    %6521 = vmatprep.subr.mxu0 0.0
    %6522 = vmatpush1.msra.mxu0 0.0
    %6523 = vmatprep.subr.mxu0 0.0
    %6524 = vmatpush1.msra.mxu0 0.0
    %6525 = vmatprep.subr.mxu0 0.0
    %6526 = vmatpush1.msra.mxu0 0.0
    %6527 = vmatprep.subr.mxu0 0.0
    %6528 = vmatpush1.msra.mxu0 0.0
    %6529 = vmatprep.subr.mxu0 0.0
    %6530 = vmatpush1.msra.mxu0 0.0
    %6531 = vmatprep.subr.mxu0 0.0
    %6532 = vmatpush1.msra.mxu0 0.0
    %6533 = vmatprep.subr.mxu0 0.0
    %6534 = vmatpush1.msra.mxu0 0.0
    %6535 = vmatprep.subr.mxu0 0.0
    %6536 = vmatpush1.msra.mxu0 0.0
    %6537 = vmatprep.subr.mxu0 0.0
    %6538 = vmatpush1.msra.mxu0 0.0
    %6539 = vmatprep.subr.mxu0 0.0
    %6540 = vmatpush1.msra.mxu0 0.0
    %6541 = vmatprep.subr.mxu0 0.0
    %6542 = vmatpush1.msra.mxu0 %v6506
    %6543 = vmatprep.subr.mxu0 0.0
    %6544 = vmatpush2.msra.mxu0 0.0
    %6545 = vmatprep.subr.mxu0 0.0
    %6546 = vmatpush2.msra.mxu0 0.0
    %6547 = vmatprep.subr.mxu0 0.0
    %6548 = vmatpush2.msra.mxu0 0.0
    %6549 = vmatprep.subr.mxu0 0.0
    %6550 = vmatpush2.msra.mxu0 0.0
    %6551 = vmatprep.subr.mxu0 0.0
    %6552 = vmatpush2.msra.mxu0 0.0
    %6553 = vmatprep.subr.mxu0 0.0
    %6554 = vmatpush2.msra.mxu0 0.0
    %6555 = vmatprep.subr.mxu0 0.0
    %6556 = vmatpush2.msra.mxu0 0.0
    %6557 = vmatprep.subr.mxu0 0.0
    %6558 = vmatpush2.msra.mxu0 0.0
    %6559 = vmatprep.subr.mxu0 0.0
    %6560 = vmatpush2.msra.mxu0 0.0
    %6561 = vmatprep.subr.mxu0 0.0
    %6562 = vmatpush2.msra.mxu0 0.0
    %6563 = vmatprep.subr.mxu0 0.0
    %6564 = vmatpush2.msra.mxu0 0.0
    %6565 = vmatprep.subr.mxu0 0.0
    %6566 = vmatpush2.msra.mxu0 0.0
    %6567 = vmatprep.subr.mxu0 0.0
    %6568 = vmatpush2.msra.mxu0 0.0
    %6569 = vmatprep.subr.mxu0 0.0
    %6570 = vmatpush2.msra.mxu0 0.0
    %6571 = vmatprep.subr.mxu0 0.0
    %6572 = vmatpush2.msra.mxu0 0.0
    %6573 = vmatprep.subr.mxu0 0.0
    %6574 = vmatpush2.msra.mxu0 0.0
    %6575 = vmatprep.mubr.f32.mxu0 0.0
    %6576 = vmatmul.mubr.f32.gmra.mxu0 %v6509
    %v6577 = vpop.f32.mrf.mxu0
    %v6578 = vadd.f32 0.0, %v6577
    %v6579 = vpop.f32.mrf.mxu0
    %6580 = vdwg.mxu0
    %6581 = vrot.lane.b32.xlu0 %v3763, 40
    %v6582 = vpop.permute.xlu0 %6581
    %v6585 = vsel %vm315, %v6352, 0
    %6587 = vmatprep.subr.mxu0 0.0
    %6588 = vmatpush1.msra.mxu0 0.0
    %6589 = vmatprep.subr.mxu0 0.0
    %6590 = vmatpush1.msra.mxu0 0.0
    %6591 = vmatprep.subr.mxu0 0.0
    %6592 = vmatpush1.msra.mxu0 0.0
    %6593 = vmatprep.subr.mxu0 0.0
    %6594 = vmatpush1.msra.mxu0 0.0
    %6595 = vmatprep.subr.mxu0 0.0
    %6596 = vmatpush1.msra.mxu0 0.0
    %6597 = vmatprep.subr.mxu0 0.0
    %6598 = vmatpush1.msra.mxu0 0.0
    %6599 = vmatprep.subr.mxu0 0.0
    %6600 = vmatpush1.msra.mxu0 0.0
    %6601 = vmatprep.subr.mxu0 0.0
    %6602 = vmatpush1.msra.mxu0 0.0
    %6603 = vmatprep.subr.mxu0 0.0
    %6604 = vmatpush1.msra.mxu0 0.0
    %6605 = vmatprep.subr.mxu0 0.0
    %6606 = vmatpush1.msra.mxu0 0.0
    %6607 = vmatprep.subr.mxu0 0.0
    %6608 = vmatpush1.msra.mxu0 0.0
    %6609 = vmatprep.subr.mxu0 0.0
    %6610 = vmatpush1.msra.mxu0 0.0
    %6611 = vmatprep.subr.mxu0 0.0
    %6612 = vmatpush1.msra.mxu0 0.0
    %6613 = vmatprep.subr.mxu0 0.0
    %6614 = vmatpush1.msra.mxu0 0.0
    %6615 = vmatprep.subr.mxu0 0.0
    %6616 = vmatpush1.msra.mxu0 0.0
    %6617 = vmatprep.subr.mxu0 0.0
    %6618 = vmatpush1.msra.mxu0 %v6582
    %6619 = vmatprep.subr.mxu0 0.0
    %6620 = vmatpush2.msra.mxu0 0.0
    %6621 = vmatprep.subr.mxu0 0.0
    %6622 = vmatpush2.msra.mxu0 0.0
    %6623 = vmatprep.subr.mxu0 0.0
    %6624 = vmatpush2.msra.mxu0 0.0
    %6625 = vmatprep.subr.mxu0 0.0
    %6626 = vmatpush2.msra.mxu0 0.0
    %6627 = vmatprep.subr.mxu0 0.0
    %6628 = vmatpush2.msra.mxu0 0.0
    %6629 = vmatprep.subr.mxu0 0.0
    %6630 = vmatpush2.msra.mxu0 0.0
    %6631 = vmatprep.subr.mxu0 0.0
    %6632 = vmatpush2.msra.mxu0 0.0
    %6633 = vmatprep.subr.mxu0 0.0
    %6634 = vmatpush2.msra.mxu0 0.0
    %6635 = vmatprep.subr.mxu0 0.0
    %6636 = vmatpush2.msra.mxu0 0.0
    %6637 = vmatprep.subr.mxu0 0.0
    %6638 = vmatpush2.msra.mxu0 0.0
    %6639 = vmatprep.subr.mxu0 0.0
    %6640 = vmatpush2.msra.mxu0 0.0
    %6641 = vmatprep.subr.mxu0 0.0
    %6642 = vmatpush2.msra.mxu0 0.0
    %6643 = vmatprep.subr.mxu0 0.0
    %6644 = vmatpush2.msra.mxu0 0.0
    %6645 = vmatprep.subr.mxu0 0.0
    %6646 = vmatpush2.msra.mxu0 0.0
    %6647 = vmatprep.subr.mxu0 0.0
    %6648 = vmatpush2.msra.mxu0 0.0
    %6649 = vmatprep.subr.mxu0 0.0
    %6650 = vmatpush2.msra.mxu0 0.0
    %6651 = vmatprep.mubr.f32.mxu0 0.0
    %6652 = vmatmul.mubr.f32.gmra.mxu0 %v6585
    %v6653 = vpop.f32.mrf.mxu0
    %v6654 = vadd.f32 0.0, %v6653
    %v6655 = vpop.f32.mrf.mxu0
    %6656 = vdwg.mxu0
    %v6657 = vld [vmem:[%s2 + $0x7c] sm:$0xf]
    %v6658 = vpack.c.bf16 %v6426, %v6426
    %v6659 = vpack.c.bf16 %v6502, %v6502
    %v6660 = vpack.c.bf16 %v6578, %v6578
    %v6661 = vpack.c.bf16 %v6654, %v6654
    %v6666 = vunpack.c.l.b16 %v6658
    %v6667 = vunpack.c.l.b16 %v6659
    %v6668 = vunpack.c.l.b16 %v6660
    %v6669 = vunpack.c.l.b16 %v6661
    %v6670 = vpack.c.b16 %v6667, %v6666
    %v6671 = vpack.c.b16 %v6669, %v6668
    %v6673 = vsel %vm315, %v6670, 0
    %v6676 = vsel %vm315, %v6671, 0
    %v6679 = vsel %vm1671, %v6657, 0
    %6681 = vmatprep.subr.bf16.mxu0 0
    %6682 = vmatpush1.bf16.msra.mxu0 0
    %6683 = vmatprep.subr.bf16.mxu0 0
    %6684 = vmatpush1.bf16.msra.mxu0 0
    %6685 = vmatprep.subr.bf16.mxu0 0
    %6686 = vmatpush1.bf16.msra.mxu0 0
    %6687 = vmatprep.subr.bf16.mxu0 0
    %6688 = vmatpush1.bf16.msra.mxu0 0
    %6689 = vmatprep.subr.bf16.mxu0 0
    %6690 = vmatpush1.bf16.msra.mxu0 0
    %6691 = vmatprep.subr.bf16.mxu0 0
    %6692 = vmatpush1.bf16.msra.mxu0 0
    %6693 = vmatprep.subr.bf16.mxu0 0
    %6694 = vmatpush1.bf16.msra.mxu0 0
    %6695 = vmatprep.subr.bf16.mxu0 0
    %6696 = vmatpush1.bf16.msra.mxu0 %v6679
    %6697 = vmatprep.subr.bf16.mxu0 0
    %6698 = vmatpush2.bf16.msra.mxu0 0
    %6699 = vmatprep.subr.bf16.mxu0 0
    %6700 = vmatpush2.bf16.msra.mxu0 0
    %6701 = vmatprep.subr.bf16.mxu0 0
    %6702 = vmatpush2.bf16.msra.mxu0 0
    %6703 = vmatprep.subr.bf16.mxu0 0
    %6704 = vmatpush2.bf16.msra.mxu0 0
    %6705 = vmatprep.subr.bf16.mxu0 0
    %6706 = vmatpush2.bf16.msra.mxu0 0
    %6707 = vmatprep.subr.bf16.mxu0 0
    %6708 = vmatpush2.bf16.msra.mxu0 0
    %6709 = vmatprep.subr.bf16.mxu0 0
    %6710 = vmatpush2.bf16.msra.mxu0 0
    %6711 = vmatprep.subr.bf16.mxu0 0
    %6712 = vmatpush2.bf16.msra.mxu0 0
    %6713 = vmatprep.mubr.bf16.mxu0 0
    %6714 = vmatmul.mubr.bf16.gmra.mxu0 %v6673
    %v6715 = vpop.f32.mrf.mxu0
    %v6716 = vadd.f32 0.0, %v6715
    %v6717 = vpop.f32.mrf.mxu0
    %v6718 = vpop.f32.mrf.mxu0
    %v6719 = vadd.f32 0.0, %v6718
    %v6720 = vpop.f32.mrf.mxu0
    %6721 = vmatprep.mubr.bf16.mxu0 0
    %6722 = vmatmul.mubr.bf16.gmra.mxu0 %v6676
    %v6723 = vpop.f32.mrf.mxu0
    %v6724 = vadd.f32 0.0, %v6723
    %v6725 = vpop.f32.mrf.mxu0
    %v6726 = vpop.f32.mrf.mxu0
    %v6727 = vadd.f32 0.0, %v6726
    %v6728 = vpop.f32.mrf.mxu0
    %6729 = vdwg.mxu0
    %v6730 = vadd.f32 %v5985, %v6716
    %v6731 = vadd.f32 %v5986, %v6719
    %v6732 = vadd.f32 %v5987, %v6724
    %v6733 = vadd.f32 %v5988, %v6727
    %v6734 = vld [vmem:[%s3 + $0x9] sm:$0x1]
    %v6735 = vlaneseq
    %v6736 = vshrl.u32 %v6735, 7
    %v6737 = vsub.s32 0, %v6736
    %v6738 = vrot.slane %v6734, %v6737
    %v6739 = vadd.f32 %v6730, %v6738
    %v6740 = vadd.f32 %v6731, %v6738
    %v6741 = vadd.f32 %v6732, %v6738
    %v6742 = vadd.f32 %v6733, %v6738
    %v6743 = vadd.f32 %v3628, %v6739
    %v6744 = vadd.f32 %v3629, %v6740
    %v6745 = vadd.f32 %v3630, %v6741
    %v6746 = vadd.f32 %v3631, %v6742
    %v6747 = vld [vmem:[%s3 + $0xc] sm:$0x1]
    %v6748 = vld [vmem:[%s3 + $0xd] sm:$0x1]
    %v6749 = vsel %vm238, %v6743, 0.0
    %6750 = vadd.xlane.f32.xlu0 %v6749
    %v6751 = vpop.xlane.xlu0 %6750
    %v6752 = vsel %vm238, %v6744, 0.0
    %6753 = vadd.xlane.f32.xlu0 %v6752
    %v6754 = vpop.xlane.xlu0 %6753
    %v6755 = vsel %vm238, %v6745, 0.0
    %6756 = vadd.xlane.f32.xlu0 %v6755
    %v6757 = vpop.xlane.xlu0 %6756
    %v6758 = vsel %vm238, %v6746, 0.0
    %6759 = vadd.xlane.f32.xlu0 %v6758
    %v6760 = vpop.xlane.xlu0 %6759
    %v6761 = vmul.f32 %v6751, %v3309
    %v6762 = vmul.f32 %v6754, %v3309
    %v6763 = vmul.f32 %v6757, %v3309
    %v6764 = vmul.f32 %v6760, %v3309
    %v6765 = vsub.f32 %v6743, %v6761
    %v6766 = vsub.f32 %v6744, %v6762
    %v6767 = vsub.f32 %v6745, %v6763
    %v6768 = vsub.f32 %v6746, %v6764
    %v6769 = vmul.f32 %v6765, %v6765
    %v6770 = vmul.f32 %v6766, %v6766
    %v6771 = vmul.f32 %v6767, %v6767
    %v6772 = vmul.f32 %v6768, %v6768
    %v6773 = vsel %vm238, %v6769, 0.0
    %6774 = vadd.xlane.f32.xlu0 %v6773
    %v6775 = vpop.xlane.xlu0 %6774
    %v6776 = vsel %vm238, %v6770, 0.0
    %6777 = vadd.xlane.f32.xlu0 %v6776
    %v6778 = vpop.xlane.xlu0 %6777
    %v6779 = vsel %vm238, %v6771, 0.0
    %6780 = vadd.xlane.f32.xlu0 %v6779
    %v6781 = vpop.xlane.xlu0 %6780
    %v6782 = vsel %vm238, %v6772, 0.0
    %6783 = vadd.xlane.f32.xlu0 %v6782
    %v6784 = vpop.xlane.xlu0 %6783
    %v6785 = vmul.f32 %v6775, %v3309
    %v6786 = vmul.f32 %v6778, %v3309
    %v6787 = vmul.f32 %v6781, %v3309
    %v6788 = vmul.f32 %v6784, %v3309
    %v6789 = vadd.f32 %v6785, 1e-05
    %v6790 = vadd.f32 %v6786, 1e-05
    %v6791 = vadd.f32 %v6787, 1e-05
    %v6792 = vadd.f32 %v6788, 1e-05
    %v6793 = vrsqrt.pop %v6789
    %v6794 = vrsqrt.pop %v6790
    %v6795 = vrsqrt.pop %v6791
    %v6796 = vrsqrt.pop %v6792
    %v6797 = vmul.f32 %v6765, %v6793
    %v6798 = vmul.f32 %v6766, %v6794
    %v6799 = vmul.f32 %v6767, %v6795
    %v6800 = vmul.f32 %v6768, %v6796
    %v6801 = vlaneseq
    %v6802 = vshrl.u32 %v6801, 7
    %v6803 = vsub.s32 0, %v6802
    %v6804 = vrot.slane %v6747, %v6803
    %v6805 = vmul.f32 %v6797, %v6804
    %v6806 = vmul.f32 %v6798, %v6804
    %v6807 = vmul.f32 %v6799, %v6804
    %v6808 = vmul.f32 %v6800, %v6804
    %v6809 = vlaneseq
    %v6810 = vshrl.u32 %v6809, 7
    %v6811 = vsub.s32 0, %v6810
    %v6812 = vrot.slane %v6748, %v6811
    %v6813 = vadd.f32 %v6805, %v6812
    %v6814 = vadd.f32 %v6806, %v6812
    %v6815 = vadd.f32 %v6807, %v6812
    %v6816 = vadd.f32 %v6808, %v6812
    %v6817 = vld [vmem:[%s2 + $0x90] sm:$0xf]
    %v6818 = vld [vmem:[%s2 + $0x94] sm:$0xf]
    %v6819 = vld [vmem:[%s2 + $0x98] sm:$0xf]
    %v6820 = vld [vmem:[%s2 + $0x9c] sm:$0xf]
    %v6821 = vpack.c.bf16 %v6813, %v6813
    %v6822 = vpack.c.bf16 %v6814, %v6814
    %v6823 = vpack.c.bf16 %v6815, %v6815
    %v6824 = vpack.c.bf16 %v6816, %v6816
    %v6825 = vld [vmem:[%s3 + $0xa] sm:$0x1]
    %v6826 = vlaneseq
    %v6827 = vshrl.u32 %v6826, 7
    %v6828 = vsub.s32 0, %v6827
    %v6829 = vrot.slane %v6825, %v6828
    %v6834 = vunpack.c.l.b16 %v6821
    %v6835 = vunpack.c.l.b16 %v6822
    %v6836 = vunpack.c.l.b16 %v6823
    %v6837 = vunpack.c.l.b16 %v6824
    %v6838 = vpack.c.b16 %v6835, %v6834
    %v6839 = vpack.c.b16 %v6837, %v6836
    %v6844 = vunpack.c.l.b16 %v6817
    %v6845 = vunpack.c.l.b16 %v6818
    %v6846 = vunpack.c.l.b16 %v6819
    %v6847 = vunpack.c.l.b16 %v6820
    %v6848 = vpack.c.b16 %v6845, %v6844
    %v6849 = vpack.c.b16 %v6847, %v6846
    %v6851 = vsel %vm238, %v6838, 0
    %v6854 = vsel %vm238, %v6839, 0
    %v6857 = vsel %vm238, %v6848, 0
    %v6860 = vsel %vm238, %v6849, 0
    %6862 = vmatprep.subr.bf16.mxu0 0
    %6863 = vmatpush1.bf16.xpose.msra.mxu0 0
    %6864 = vmatprep.subr.bf16.mxu0 0
    %6865 = vmatpush1.bf16.xpose.msra.mxu0 0
    %6866 = vmatprep.subr.bf16.mxu0 0
    %6867 = vmatpush1.bf16.xpose.msra.mxu0 0
    %6868 = vmatprep.subr.bf16.mxu0 0
    %6869 = vmatpush1.bf16.xpose.msra.mxu0 0
    %6870 = vmatprep.subr.bf16.mxu0 0
    %6871 = vmatpush1.bf16.xpose.msra.mxu0 0
    %6872 = vmatprep.subr.bf16.mxu0 0
    %6873 = vmatpush1.bf16.xpose.msra.mxu0 0
    %6874 = vmatprep.subr.bf16.mxu0 0
    %6875 = vmatpush1.bf16.xpose.msra.mxu0 %v6860
    %6876 = vmatprep.subr.bf16.mxu0 0
    %6877 = vmatpush1.bf16.xpose.msra.mxu0 %v6857
    %6878 = vmatprep.subr.bf16.mxu0 0
    %6879 = vmatpush2.bf16.xpose.msra.mxu0 0
    %6880 = vmatprep.subr.bf16.mxu0 0
    %6881 = vmatpush2.bf16.xpose.msra.mxu0 0
    %6882 = vmatprep.subr.bf16.mxu0 0
    %6883 = vmatpush2.bf16.xpose.msra.mxu0 0
    %6884 = vmatprep.subr.bf16.mxu0 0
    %6885 = vmatpush2.bf16.xpose.msra.mxu0 0
    %6886 = vmatprep.subr.bf16.mxu0 0
    %6887 = vmatpush2.bf16.xpose.msra.mxu0 0
    %6888 = vmatprep.subr.bf16.mxu0 0
    %6889 = vmatpush2.bf16.xpose.msra.mxu0 0
    %6890 = vmatprep.subr.bf16.mxu0 0
    %6891 = vmatpush2.bf16.xpose.msra.mxu0 0
    %6892 = vmatprep.subr.bf16.mxu0 0
    %6893 = vmatpush2.bf16.xpose.msra.mxu0 0
    %6894 = vmatprep.mubr.bf16.mxu0 0
    %6895 = vmatmul.mubr.bf16.gmra.mxu0 %v6851
    %v6896 = vpop.f32.mrf.mxu0
    %v6897 = vadd.f32 %v6829, %v6896
    %v6898 = vpop.f32.mrf.mxu0
    %v6899 = vpop.f32.mrf.mxu0
    %v6900 = vadd.f32 %v6829, %v6899
    %v6901 = vpop.f32.mrf.mxu0
    %6902 = vmatprep.mubr.bf16.mxu0 0
    %6903 = vmatmul.mubr.bf16.gmra.mxu0 %v6854
    %v6904 = vpop.f32.mrf.mxu0
    %v6905 = vadd.f32 %v6829, %v6904
    %v6906 = vpop.f32.mrf.mxu0
    %v6907 = vpop.f32.mrf.mxu0
    %v6908 = vadd.f32 %v6829, %v6907
    %v6909 = vpop.f32.mrf.mxu0
    %6910 = vdwg.mxu0
    %v6911 = vmax.f32 %v6897, 0.0
    %v6912 = vmax.f32 %v6900, 0.0
    %v6913 = vmax.f32 %v6905, 0.0
    %v6914 = vmax.f32 %v6908, 0.0
    %v6915 = vld [vmem:[%s2 + $0xb0] sm:$0xf]
    %v6916 = vld [vmem:[%s2 + $0xb4] sm:$0xf]
    %v6917 = vld [vmem:[%s2 + $0xb8] sm:$0xf]
    %v6918 = vld [vmem:[%s2 + $0xbc] sm:$0xf]
    %v6919 = vpack.c.bf16 %v6911, %v6911
    %v6920 = vpack.c.bf16 %v6912, %v6912
    %v6921 = vpack.c.bf16 %v6913, %v6913
    %v6922 = vpack.c.bf16 %v6914, %v6914
    %v6923 = vld [vmem:[%s3 + $0xb] sm:$0x1]
    %v6924 = vlaneseq
    %v6925 = vshrl.u32 %v6924, 7
    %v6926 = vsub.s32 0, %v6925
    %v6927 = vrot.slane %v6923, %v6926
    %v6932 = vunpack.c.l.b16 %v6919
    %v6933 = vunpack.c.l.b16 %v6920
    %v6934 = vunpack.c.l.b16 %v6921
    %v6935 = vunpack.c.l.b16 %v6922
    %v6936 = vpack.c.b16 %v6933, %v6932
    %v6937 = vpack.c.b16 %v6935, %v6934
    %v6942 = vunpack.c.l.b16 %v6915
    %v6943 = vunpack.c.l.b16 %v6916
    %v6944 = vunpack.c.l.b16 %v6917
    %v6945 = vunpack.c.l.b16 %v6918
    %v6946 = vpack.c.b16 %v6943, %v6942
    %v6947 = vpack.c.b16 %v6945, %v6944
    %v6949 = vsel %vm238, %v6936, 0
    %v6952 = vsel %vm238, %v6937, 0
    %v6955 = vsel %vm238, %v6946, 0
    %v6958 = vsel %vm238, %v6947, 0
    %6960 = vmatprep.subr.bf16.mxu0 0
    %6961 = vmatpush1.bf16.xpose.msra.mxu0 0
    %6962 = vmatprep.subr.bf16.mxu0 0
    %6963 = vmatpush1.bf16.xpose.msra.mxu0 0
    %6964 = vmatprep.subr.bf16.mxu0 0
    %6965 = vmatpush1.bf16.xpose.msra.mxu0 0
    %6966 = vmatprep.subr.bf16.mxu0 0
    %6967 = vmatpush1.bf16.xpose.msra.mxu0 0
    %6968 = vmatprep.subr.bf16.mxu0 0
    %6969 = vmatpush1.bf16.xpose.msra.mxu0 0
    %6970 = vmatprep.subr.bf16.mxu0 0
    %6971 = vmatpush1.bf16.xpose.msra.mxu0 0
    %6972 = vmatprep.subr.bf16.mxu0 0
    %6973 = vmatpush1.bf16.xpose.msra.mxu0 %v6958
    %6974 = vmatprep.subr.bf16.mxu0 0
    %6975 = vmatpush1.bf16.xpose.msra.mxu0 %v6955
    %6976 = vmatprep.subr.bf16.mxu0 0
    %6977 = vmatpush2.bf16.xpose.msra.mxu0 0
    %6978 = vmatprep.subr.bf16.mxu0 0
    %6979 = vmatpush2.bf16.xpose.msra.mxu0 0
    %6980 = vmatprep.subr.bf16.mxu0 0
    %6981 = vmatpush2.bf16.xpose.msra.mxu0 0
    %6982 = vmatprep.subr.bf16.mxu0 0
    %6983 = vmatpush2.bf16.xpose.msra.mxu0 0
    %6984 = vmatprep.subr.bf16.mxu0 0
    %6985 = vmatpush2.bf16.xpose.msra.mxu0 0
    %6986 = vmatprep.subr.bf16.mxu0 0
    %6987 = vmatpush2.bf16.xpose.msra.mxu0 0
    %6988 = vmatprep.subr.bf16.mxu0 0
    %6989 = vmatpush2.bf16.xpose.msra.mxu0 0
    %6990 = vmatprep.subr.bf16.mxu0 0
    %6991 = vmatpush2.bf16.xpose.msra.mxu0 0
    %6992 = vmatprep.mubr.bf16.mxu0 0
    %6993 = vmatmul.mubr.bf16.gmra.mxu0 %v6949
    %v6994 = vpop.f32.mrf.mxu0
    %v6995 = vadd.f32 %v6927, %v6994
    %v6996 = vpop.f32.mrf.mxu0
    %v6997 = vpop.f32.mrf.mxu0
    %v6998 = vadd.f32 %v6927, %v6997
    %v6999 = vpop.f32.mrf.mxu0
    %7000 = vmatprep.mubr.bf16.mxu0 0
    %7001 = vmatmul.mubr.bf16.gmra.mxu0 %v6952
    %v7002 = vpop.f32.mrf.mxu0
    %v7003 = vadd.f32 %v6927, %v7002
    %v7004 = vpop.f32.mrf.mxu0
    %v7005 = vpop.f32.mrf.mxu0
    %v7006 = vadd.f32 %v6927, %v7005
    %v7007 = vpop.f32.mrf.mxu0
    %7008 = vdwg.mxu0
    %v7009 = vadd.f32 %v6813, %v6995
    %v7010 = vadd.f32 %v6814, %v6998
    %v7011 = vadd.f32 %v6815, %v7003
    %v7012 = vadd.f32 %v6816, %v7006
    %v7013 = vld [vmem:[%s3 + $0xe] sm:$0x1]
    %v7014 = vld [vmem:[%s3 + $0xf] sm:$0x1]
    %v7015 = vsel %vm238, %v7009, 0.0
    %7016 = vadd.xlane.f32.xlu0 %v7015
    %v7017 = vpop.xlane.xlu0 %7016
    %v7018 = vsel %vm238, %v7010, 0.0
    %7019 = vadd.xlane.f32.xlu0 %v7018
    %v7020 = vpop.xlane.xlu0 %7019
    %v7021 = vsel %vm238, %v7011, 0.0
    %7022 = vadd.xlane.f32.xlu0 %v7021
    %v7023 = vpop.xlane.xlu0 %7022
    %v7024 = vsel %vm238, %v7012, 0.0
    %7025 = vadd.xlane.f32.xlu0 %v7024
    %v7026 = vpop.xlane.xlu0 %7025
    %v7027 = vmul.f32 %v7017, %v3309
    %v7028 = vmul.f32 %v7020, %v3309
    %v7029 = vmul.f32 %v7023, %v3309
    %v7030 = vmul.f32 %v7026, %v3309
    %v7031 = vsub.f32 %v7009, %v7027
    %v7032 = vsub.f32 %v7010, %v7028
    %v7033 = vsub.f32 %v7011, %v7029
    %v7034 = vsub.f32 %v7012, %v7030
    %v7035 = vmul.f32 %v7031, %v7031
    %v7036 = vmul.f32 %v7032, %v7032
    %v7037 = vmul.f32 %v7033, %v7033
    %v7038 = vmul.f32 %v7034, %v7034
    %v7039 = vsel %vm238, %v7035, 0.0
    %7040 = vadd.xlane.f32.xlu0 %v7039
    %v7041 = vpop.xlane.xlu0 %7040
    %v7042 = vsel %vm238, %v7036, 0.0
    %7043 = vadd.xlane.f32.xlu0 %v7042
    %v7044 = vpop.xlane.xlu0 %7043
    %v7045 = vsel %vm238, %v7037, 0.0
    %7046 = vadd.xlane.f32.xlu0 %v7045
    %v7047 = vpop.xlane.xlu0 %7046
    %v7048 = vsel %vm238, %v7038, 0.0
    %7049 = vadd.xlane.f32.xlu0 %v7048
    %v7050 = vpop.xlane.xlu0 %7049
    %v7051 = vmul.f32 %v7041, %v3309
    %v7052 = vmul.f32 %v7044, %v3309
    %v7053 = vmul.f32 %v7047, %v3309
    %v7054 = vmul.f32 %v7050, %v3309
    %v7055 = vadd.f32 %v7051, 1e-05
    %v7056 = vadd.f32 %v7052, 1e-05
    %v7057 = vadd.f32 %v7053, 1e-05
    %v7058 = vadd.f32 %v7054, 1e-05
    %v7059 = vrsqrt.pop %v7055
    %v7060 = vrsqrt.pop %v7056
    %v7061 = vrsqrt.pop %v7057
    %v7062 = vrsqrt.pop %v7058
    %v7063 = vmul.f32 %v7031, %v7059
    %v7064 = vmul.f32 %v7032, %v7060
    %v7065 = vmul.f32 %v7033, %v7061
    %v7066 = vmul.f32 %v7034, %v7062
    %v7067 = vlaneseq
    %v7068 = vshrl.u32 %v7067, 7
    %v7069 = vsub.s32 0, %v7068
    %v7070 = vrot.slane %v7013, %v7069
    %v7071 = vmul.f32 %v7063, %v7070
    %v7072 = vmul.f32 %v7064, %v7070
    %v7073 = vmul.f32 %v7065, %v7070
    %v7074 = vmul.f32 %v7066, %v7070
    %v7075 = vlaneseq
    %v7076 = vshrl.u32 %v7075, 7
    %v7077 = vsub.s32 0, %v7076
    %v7078 = vrot.slane %v7014, %v7077
    %v7079 = vadd.f32 %v7071, %v7078
    %v7080 = vadd.f32 %v7072, %v7078
    %v7081 = vadd.f32 %v7073, %v7078
    %v7082 = vadd.f32 %v7074, %v7078
    %v7083 = vpack.c.bf16 %v7079, %v7079
    %v7084 = vpack.c.bf16 %v7080, %v7080
    %v7085 = vpack.c.bf16 %v7081, %v7081
    %v7086 = vpack.c.bf16 %v7082, %v7082
    %v7087 = vld [vmem:[%s2 + $0xc0] sm:$0xf]
    %v7088 = vld [vmem:[%s2 + $0xc4] sm:$0xf]
    %v7089 = vld [vmem:[%s2 + $0xc8] sm:$0xf]
    %v7090 = vld [vmem:[%s2 + $0xcc] sm:$0xf]
    %v7091 = vld [vmem:[%s2 + $0xd0] sm:$0xf]
    %v7092 = vld [vmem:[%s2 + $0xd4] sm:$0xf]
    %v7093 = vld [vmem:[%s2 + $0xd8] sm:$0xf]
    %v7094 = vld [vmem:[%s2 + $0xdc] sm:$0xf]
    %v7098 = vunpack.c.l.b16 %v7084
    %v7099 = vunpack.c.l.b16 %v7085
    %v7100 = vunpack.c.l.b16 %v7086
    %v7101 = vpack.c.b16 %v7099, %v7098
    %v7102 = vpack.c.b16 %v7100, %v7100
    %v7107 = vunpack.c.l.b16 %v7091
    %v7108 = vunpack.c.l.b16 %v7092
    %v7109 = vunpack.c.l.b16 %v7093
    %v7110 = vunpack.c.l.b16 %v7094
    %v7111 = vpack.c.b16 %v7108, %v7107
    %v7112 = vpack.c.b16 %v7110, %v7109
    %v7114 = vsel %vm238, %v7101, 0
    %v7117 = vsel %vm238, %v7102, 0
    %v7120 = vsel %vm238, %v7111, 0
    %v7123 = vsel %vm238, %v7112, 0
    %7125 = vmatprep.subr.bf16.mxu0 0
    %7126 = vmatpush1.bf16.xpose.msra.mxu0 0
    %7127 = vmatprep.subr.bf16.mxu0 0
    %7128 = vmatpush1.bf16.xpose.msra.mxu0 0
    %7129 = vmatprep.subr.bf16.mxu0 0
    %7130 = vmatpush1.bf16.xpose.msra.mxu0 0
    %7131 = vmatprep.subr.bf16.mxu0 0
    %7132 = vmatpush1.bf16.xpose.msra.mxu0 0
    %7133 = vmatprep.subr.bf16.mxu0 0
    %7134 = vmatpush1.bf16.xpose.msra.mxu0 0
    %7135 = vmatprep.subr.bf16.mxu0 0
    %7136 = vmatpush1.bf16.xpose.msra.mxu0 0
    %7137 = vmatprep.subr.bf16.mxu0 0
    %7138 = vmatpush1.bf16.xpose.msra.mxu0 %v7123
    %7139 = vmatprep.subr.bf16.mxu0 0
    %7140 = vmatpush1.bf16.xpose.msra.mxu0 %v7120
    %7141 = vmatprep.subr.bf16.mxu0 0
    %7142 = vmatpush2.bf16.xpose.msra.mxu0 0
    %7143 = vmatprep.subr.bf16.mxu0 0
    %7144 = vmatpush2.bf16.xpose.msra.mxu0 0
    %7145 = vmatprep.subr.bf16.mxu0 0
    %7146 = vmatpush2.bf16.xpose.msra.mxu0 0
    %7147 = vmatprep.subr.bf16.mxu0 0
    %7148 = vmatpush2.bf16.xpose.msra.mxu0 0
    %7149 = vmatprep.subr.bf16.mxu0 0
    %7150 = vmatpush2.bf16.xpose.msra.mxu0 0
    %7151 = vmatprep.subr.bf16.mxu0 0
    %7152 = vmatpush2.bf16.xpose.msra.mxu0 0
    %7153 = vmatprep.subr.bf16.mxu0 0
    %7154 = vmatpush2.bf16.xpose.msra.mxu0 0
    %7155 = vmatprep.subr.bf16.mxu0 0
    %7156 = vmatpush2.bf16.xpose.msra.mxu0 0
    %7157 = vmatprep.mubr.bf16.mxu0 0
    %7158 = vmatmul.mubr.bf16.gmra.mxu0 %v7114
    %v7159 = vpop.f32.mrf.mxu0
    %v7160 = vadd.f32 0.0, %v7159
    %v7161 = vpop.f32.mrf.mxu0
    %v7162 = vpop.f32.mrf.mxu0
    %v7163 = vadd.f32 0.0, %v7162
    %v7164 = vpop.f32.mrf.mxu0
    %7165 = vmatprep.mubr.bf16.mxu0 0
    %7166 = vmatmul.mubr.bf16.gmra.mxu0 %v7117
    %v7167 = vpop.f32.mrf.mxu0
    %v7168 = vadd.f32 0.0, %v7167
    %v7169 = vpop.f32.mrf.mxu0
    %v7170 = vpop.f32.mrf.mxu0
    %v7171 = vpop.f32.mrf.mxu0
    %7172 = vdwg.mxu0
    %v7174 = vunpack.c.l.b16 %v7083
    %v7175 = vpack.c.b16 %v7098, %v7174
    %v7176 = vpack.c.b16 %v7099, %v7099
    %v7181 = vunpack.c.l.b16 %v7087
    %v7182 = vunpack.c.l.b16 %v7088
    %v7183 = vunpack.c.l.b16 %v7089
    %v7184 = vunpack.c.l.b16 %v7090
    %v7185 = vpack.c.b16 %v7182, %v7181
    %v7186 = vpack.c.b16 %v7184, %v7183
    %v7188 = vsel %vm238, %v7175, 0
    %v7191 = vsel %vm238, %v7176, 0
    %v7194 = vsel %vm238, %v7185, 0
    %v7197 = vsel %vm238, %v7186, 0
    %7199 = vmatprep.subr.bf16.mxu0 0
    %7200 = vmatpush1.bf16.xpose.msra.mxu0 0
    %7201 = vmatprep.subr.bf16.mxu0 0
    %7202 = vmatpush1.bf16.xpose.msra.mxu0 0
    %7203 = vmatprep.subr.bf16.mxu0 0
    %7204 = vmatpush1.bf16.xpose.msra.mxu0 0
    %7205 = vmatprep.subr.bf16.mxu0 0
    %7206 = vmatpush1.bf16.xpose.msra.mxu0 0
    %7207 = vmatprep.subr.bf16.mxu0 0
    %7208 = vmatpush1.bf16.xpose.msra.mxu0 0
    %7209 = vmatprep.subr.bf16.mxu0 0
    %7210 = vmatpush1.bf16.xpose.msra.mxu0 0
    %7211 = vmatprep.subr.bf16.mxu0 0
    %7212 = vmatpush1.bf16.xpose.msra.mxu0 %v7197
    %7213 = vmatprep.subr.bf16.mxu0 0
    %7214 = vmatpush1.bf16.xpose.msra.mxu0 %v7194
    %7215 = vmatprep.subr.bf16.mxu0 0
    %7216 = vmatpush2.bf16.xpose.msra.mxu0 0
    %7217 = vmatprep.subr.bf16.mxu0 0
    %7218 = vmatpush2.bf16.xpose.msra.mxu0 0
    %7219 = vmatprep.subr.bf16.mxu0 0
    %7220 = vmatpush2.bf16.xpose.msra.mxu0 0
    %7221 = vmatprep.subr.bf16.mxu0 0
    %7222 = vmatpush2.bf16.xpose.msra.mxu0 0
    %7223 = vmatprep.subr.bf16.mxu0 0
    %7224 = vmatpush2.bf16.xpose.msra.mxu0 0
    %7225 = vmatprep.subr.bf16.mxu0 0
    %7226 = vmatpush2.bf16.xpose.msra.mxu0 0
    %7227 = vmatprep.subr.bf16.mxu0 0
    %7228 = vmatpush2.bf16.xpose.msra.mxu0 0
    %7229 = vmatprep.subr.bf16.mxu0 0
    %7230 = vmatpush2.bf16.xpose.msra.mxu0 0
    %7231 = vmatprep.mubr.bf16.mxu0 0
    %7232 = vmatmul.mubr.bf16.gmra.mxu0 %v7188
    %v7233 = vpop.f32.mrf.mxu0
    %v7234 = vadd.f32 %v7160, %v7233
    %v7235 = vpop.f32.mrf.mxu0
    %v7236 = vpop.f32.mrf.mxu0
    %v7237 = vadd.f32 %v7163, %v7236
    %v7238 = vpop.f32.mrf.mxu0
    %7239 = vmatprep.mubr.bf16.mxu0 0
    %7240 = vmatmul.mubr.bf16.gmra.mxu0 %v7191
    %v7241 = vpop.f32.mrf.mxu0
    %v7242 = vadd.f32 %v7168, %v7241
    %v7243 = vpop.f32.mrf.mxu0
    %v7244 = vpop.f32.mrf.mxu0
    %v7245 = vpop.f32.mrf.mxu0
    %7246 = vdwg.mxu0
    %v7247 = vld [vmem:[%s3 + $0x10] sm:$0x1]
    %v7248 = vlaneseq
    %v7249 = vshrl.u32 %v7248, 7
    %v7250 = vsub.s32 0, %v7249
    %v7251 = vrot.slane %v7247, %v7250
    %v7252 = vadd.f32 %v7234, %v7251
    %v7253 = vadd.f32 %v7237, %v7251
    %v7254 = vadd.f32 %v7242, %v7251
    %v7255 = vmax.f32 %v7252, 0.0
    %v7256 = vmax.f32 %v7253, 0.0
    %v7257 = vmax.f32 %v7254, 0.0
    %v7258 = vsel %vm238, %v7255, -inf
    %v7259 = vsel %vm238, %v7256, -inf
    %v7260 = vsel %vm238, %v7257, -inf
    %v7261 = vmax.f32 %v7258, %v7259
    %v7262 = vmax.f32 %v7261, %v7260
    %v7263 = vld [vmem:[%s2 + $0xe0] sm:$0xf]
    %v7264 = vld [vmem:[%s2 + $0xe4] sm:$0xf]
    %v7265 = vld [vmem:[%s2 + $0xe8] sm:$0xf]
    %v7266 = vld [vmem:[%s2 + $0xec] sm:$0xf]
    %v7267 = vld [vmem:[%s2 + $0xf0] sm:$0xf]
    %v7268 = vld [vmem:[%s2 + $0xf4] sm:$0xf]
    %v7269 = vld [vmem:[%s2 + $0xf8] sm:$0xf]
    %v7270 = vld [vmem:[%s2 + $0xfc] sm:$0xf]
    %v7271 = vld [vmem:[%s2 + $0x100] sm:$0xf]
    %v7272 = vld [vmem:[%s2 + $0x104] sm:$0xf]
    %v7273 = vld [vmem:[%s2 + $0x108] sm:$0xf]
    %v7274 = vld [vmem:[%s2 + $0x10c] sm:$0xf]
    %v7275 = vld [vmem:[%s2 + $0x110] sm:$0xf]
    %v7276 = vld [vmem:[%s2 + $0x114] sm:$0xf]
    %v7277 = vld [vmem:[%s2 + $0x118] sm:$0xf]
    %v7278 = vld [vmem:[%s2 + $0x11c] sm:$0xf]
    %v7279 = vpack.c.bf16 %v7262, %v7262
    %v7280 = vld [vmem:[%s3 + $0x11] sm:$0x1]
    %v7281 = vlaneseq
    %v7282 = vshrl.u32 %v7281, 7
    %v7283 = vsub.s32 0, %v7282
    %v7284 = vrot.slane %v7280, %v7283
    %v7301 = vunpack.c.l.b16 %v7263
    %v7302 = vunpack.c.l.b16 %v7264
    %v7303 = vunpack.c.l.b16 %v7265
    %v7304 = vunpack.c.l.b16 %v7266
    %v7305 = vunpack.c.l.b16 %v7267
    %v7306 = vunpack.c.l.b16 %v7268
    %v7307 = vunpack.c.l.b16 %v7269
    %v7308 = vunpack.c.l.b16 %v7270
    %v7309 = vunpack.c.l.b16 %v7271
    %v7310 = vunpack.c.l.b16 %v7272
    %v7311 = vunpack.c.l.b16 %v7273
    %v7312 = vunpack.c.l.b16 %v7274
    %v7313 = vunpack.c.l.b16 %v7275
    %v7314 = vunpack.c.l.b16 %v7276
    %v7315 = vunpack.c.l.b16 %v7277
    %v7316 = vunpack.c.l.b16 %v7278
    %v7317 = vpack.c.b16 %v7302, %v7301
    %v7318 = vpack.c.b16 %v7304, %v7303
    %v7319 = vpack.c.b16 %v7306, %v7305
    %v7320 = vpack.c.b16 %v7308, %v7307
    %v7321 = vpack.c.b16 %v7310, %v7309
    %v7322 = vpack.c.b16 %v7312, %v7311
    %v7323 = vpack.c.b16 %v7314, %v7313
    %v7324 = vpack.c.b16 %v7316, %v7315
    %v7326 = vsel %vm238, %v7279, 0
    %v7329 = vsel %vm238, %v7317, 0
    %v7332 = vsel %vm238, %v7318, 0
    %v7335 = vsel %vm238, %v7319, 0
    %v7338 = vsel %vm238, %v7320, 0
    %v7341 = vsel %vm238, %v7321, 0
    %v7344 = vsel %vm238, %v7322, 0
    %v7347 = vsel %vm238, %v7323, 0
    %v7350 = vsel %vm238, %v7324, 0
    %7352 = vmatprep.subr.bf16.mxu0 0
    %7353 = vmatpush1.bf16.xpose.msra.mxu0 %v7350
    %7354 = vmatprep.subr.bf16.mxu0 0
    %7355 = vmatpush1.bf16.xpose.msra.mxu0 %v7347
    %7356 = vmatprep.subr.bf16.mxu0 0
    %7357 = vmatpush1.bf16.xpose.msra.mxu0 %v7344
    %7358 = vmatprep.subr.bf16.mxu0 0
    %7359 = vmatpush1.bf16.xpose.msra.mxu0 %v7341
    %7360 = vmatprep.subr.bf16.mxu0 0
    %7361 = vmatpush1.bf16.xpose.msra.mxu0 %v7338
    %7362 = vmatprep.subr.bf16.mxu0 0
    %7363 = vmatpush1.bf16.xpose.msra.mxu0 %v7335
    %7364 = vmatprep.subr.bf16.mxu0 0
    %7365 = vmatpush1.bf16.xpose.msra.mxu0 %v7332
    %7366 = vmatprep.subr.bf16.mxu0 0
    %7367 = vmatpush1.bf16.xpose.msra.mxu0 %v7329
    %7368 = vmatprep.subr.bf16.mxu0 0
    %7369 = vmatpush2.bf16.xpose.msra.mxu0 0
    %7370 = vmatprep.subr.bf16.mxu0 0
    %7371 = vmatpush2.bf16.xpose.msra.mxu0 0
    %7372 = vmatprep.subr.bf16.mxu0 0
    %7373 = vmatpush2.bf16.xpose.msra.mxu0 0
    %7374 = vmatprep.subr.bf16.mxu0 0
    %7375 = vmatpush2.bf16.xpose.msra.mxu0 0
    %7376 = vmatprep.subr.bf16.mxu0 0
    %7377 = vmatpush2.bf16.xpose.msra.mxu0 0
    %7378 = vmatprep.subr.bf16.mxu0 0
    %7379 = vmatpush2.bf16.xpose.msra.mxu0 0
    %7380 = vmatprep.subr.bf16.mxu0 0
    %7381 = vmatpush2.bf16.xpose.msra.mxu0 0
    %7382 = vmatprep.subr.bf16.mxu0 0
    %7383 = vmatpush2.bf16.xpose.msra.mxu0 0
    %7384 = vmatprep.mubr.bf16.mxu0 0
    %7385 = vmatmul.mubr.bf16.gmra.mxu0 %v7326
    %v7386 = vpop.f32.mrf.mxu0
    %v7387 = vadd.f32 %v7284, %v7386
    %v7388 = vpop.f32.mrf.mxu0
    %v7389 = vpop.f32.mrf.mxu0
    %v7390 = vpop.f32.mrf.mxu0
    %7391 = vdwg.mxu0
    %7392 = vst [vmem:[#allocation2] sm:$0xff] %v7387
    // Predicated region
    $region18: #{transformer_model_forward.1} parent=1 // pred_check
      _
    $region19: #{transformer_model_forward.1} parent=1 // pred_check_branch
      %7394 = sbr.rel (0) target = $region21
    $region20: #{transformer_model_forward.1} parent=1 // pred_region
      %s7396 = ssub.s32 128, 128
      %7397 = vsyncadd [#allocation3], %s7396
      %s7399 = sshll.u32 [#allocation2], 4
      %s7400 = int_to_ptr.vmem [resolvable:$true] %s7399
      %7402 = dma.vmem_to_hbm [thread:$0]  %s7400, 128, %s4, [#allocation3]
    $region21: #{transformer_model_forward.1} parent=1 // pred_fallthru
      _
    // Predicated region
    $region22: #{transformer_model_forward.1} parent=1 // pred_check
      _
    $region23: #{transformer_model_forward.1} parent=1 // pred_check_branch
      %7404 = sbr.rel (0) target = $region25
    $region24: #{transformer_model_forward.1} parent=1 // pred_region
      %7405 = dma.done [#allocation3], 128
    $region25: #{transformer_model_forward.1} parent=1 // pred_fallthru
      _
    %7406 = vsyncpa [#allocation3], 1

</llo_original>
